<compile_context>
chip_gen: v6e
topology: v6e:2x2x1
jax: 0.10.0
libtpu: 0.0.40
codegen_flags: <defaults>
</compile_context>

<pallas_src>
import functools

import numpy as np
import jax
import jax.numpy as jnp
from jax.experimental import pallas as pl
from jax.experimental.pallas import tpu as pltpu

# ---- SSIM / loss constants (pytorch_msssim defaults) -------------------------
WIN_SIZE = 11
WIN_SIGMA = 1.5
K1, K2 = 0.01, 0.03
DATA_RANGE = 1.0
ALPHA, BETA, GAMMA = 1.0, 1.0, 0.1


def _gauss_win(size=WIN_SIZE, sigma=WIN_SIGMA):
    coords = np.arange(size, dtype=np.float64) - size // 2
    g = np.exp(-(coords ** 2) / (2.0 * sigma * sigma))
    g /= g.sum()
    return g


_GWIN = _gauss_win()                                  # np.float64[11]
_GWIN_F = tuple(float(v) for v in _GWIN)              # python floats for the reference


def _band_matrices(H, W):
    """Static Toeplitz bands so the 'valid' separable gaussian is two matmuls.

    BW[w, j] = g[w - j]  (shape (W, wo)):  (x @ BW)[.., j] = sum_k g[k] x[.., j+k]
    BH[i, h] = g[h - i]  (shape (ho, H)):  (BH @ x)[i, ..] = sum_k g[k] x[i+k, ..]
    """
    ho, wo = H - WIN_SIZE + 1, W - WIN_SIZE + 1
    bw = np.zeros((W, wo), np.float32)
    for j in range(wo):
        bw[j:j + WIN_SIZE, j] = _GWIN
    bh = np.zeros((ho, H), np.float32)
    for i in range(ho):
        bh[i, i:i + WIN_SIZE] = _GWIN
    return jnp.asarray(bw), jnp.asarray(bh)


def _ae_loss_kernel(r_ref, t_ref, bw_ref, bh_ref, out_ref, *, nc, tb):
    """One batch tile: emit (l1_sum, ssim_sum) partial sums for this tile."""
    x = r_ref[...].astype(jnp.float32)          # (tb, H, W) -- upcast in-kernel
    y = t_ref[...].astype(jnp.float32)
    _, H, W = x.shape
    ho = H - WIN_SIZE + 1
    wo = W - WIN_SIZE + 1

    # Rows of this tile that belong to the real (un-padded) batch.
    n_valid = jnp.minimum(tb, nc - pl.program_id(0) * tb)

    # ---------------- L1 partial sum ------------------------------------------
    l1_rows = jnp.sum(jnp.abs(x - y), axis=2)                                # (tb, H)
    m1 = jax.lax.broadcasted_iota(jnp.int32, l1_rows.shape, 0) < n_valid
    l1_sum = jnp.sum(jnp.where(m1, l1_rows, 0.0))

    # ---------------- SSIM partial sum (banded matmuls on the MXU) ------------
    # Batch the five filter inputs into one pass: [x, y, x*x, y*y, x*y].
    maps = jnp.concatenate([x, y, x * x, y * y, x * y], axis=0)              # (5tb, H, W)
    bw = jnp.broadcast_to(bw_ref[...], (5 * tb, W, wo))                      # (5tb, W, wo)
    bh = jnp.broadcast_to(bh_ref[...], (5 * tb, ho, H))                      # (5tb, ho, H)
    # W-direction 'valid' conv: contract lanes with the (W, wo) band.
    acc_w = jnp.einsum('bhw,bwj->bhj', maps, bw,
                       preferred_element_type=jnp.float32)                   # (5tb, H, wo)
    # H-direction 'valid' conv: band on the left keeps natural (b, ho, wo) order
    # (no in-kernel transpose/reshape needed).
    filt = jnp.einsum('bih,bhj->bij', bh, acc_w,
                      preferred_element_type=jnp.float32)                    # (5tb, ho, wo)

    mu1 = filt[0 * tb:1 * tb]
    mu2 = filt[1 * tb:2 * tb]
    ex2 = filt[2 * tb:3 * tb]
    ey2 = filt[3 * tb:4 * tb]
    exy = filt[4 * tb:5 * tb]

    mu1_sq = mu1 * mu1
    mu2_sq = mu2 * mu2
    mu1_mu2 = mu1 * mu2
    sigma1_sq = ex2 - mu1_sq
    sigma2_sq = ey2 - mu2_sq
    sigma12 = exy - mu1_mu2

    C1 = (K1 * DATA_RANGE) ** 2
    C2 = (K2 * DATA_RANGE) ** 2
    d1 = mu1_sq + mu2_sq + C1
    d2 = sigma1_sq + sigma2_sq + C2
    # EUP approximate reciprocal + one Newton step instead of two divides.
    inv1 = pl.reciprocal(d1, approx=True)
    inv1 = inv1 * (2.0 - d1 * inv1)
    inv2 = pl.reciprocal(d2, approx=True)
    inv2 = inv2 * (2.0 - d2 * inv2)
    ssim_map = (2.0 * mu1_mu2 + C1) * (2.0 * sigma12 + C2) * (inv1 * inv2)   # (tb, ho, wo)

    ssim_rows = jnp.sum(ssim_map, axis=2)                                    # (tb, ho)
    m2 = jax.lax.broadcasted_iota(jnp.int32, ssim_rows.shape, 0) < n_valid
    ssim_sum = jnp.sum(jnp.where(m2, ssim_rows, 0.0))

    # Lane-dense (1, 8, 128) per-tile output: lane 0 = l1 sum, lane 1 = ssim sum.
    lane = jax.lax.broadcasted_iota(jnp.int32, out_ref.shape, 2)
    out_ref[...] = (jnp.where(lane == 0, l1_sum, 0.0)
                    + jnp.where(lane == 1, ssim_sum, 0.0))


def ae_composite_loss(reconstruction, target, *, tile_b=None):
    """reconstruction/target: (N, C, H, W) arrays (f32 or bf16). Returns scalar f32 loss."""
    N, C, H, W = reconstruction.shape
    assert target.shape == reconstruction.shape
    if H < WIN_SIZE or W < WIN_SIZE:
        raise ValueError(f"SSIM needs spatial dims >= {WIN_SIZE}, got {(H, W)}")
    NC = N * C
    ho, wo = H - WIN_SIZE + 1, W - WIN_SIZE + 1

    # Keep native dtype through the HBM->VMEM DMA (upcast happens inside the kernel).
    r = reconstruction.reshape(NC, H, W)
    t = target.reshape(NC, H, W)

    if tile_b is None:
        # ~40 live f32 copies of one (H, W) image per batch row through the conv
        # pipeline; keep the working set ~<= 10 MiB and cap the batch tile at 8
        # (the batched MXU dots are unrolled over this dim).
        tile_b = max(1, min(NC, 8, (10 * 1024 * 1024) // (40 * H * W * 4)))
    tile_b = int(max(1, min(int(tile_b), NC)))

    num_tiles = int(pl.cdiv(NC, tile_b))
    nc_pad = num_tiles * tile_b
    if nc_pad != NC:
        # Zero-pad the ragged last tile; the kernel masks padded rows out of both sums.
        r = jnp.pad(r, ((0, nc_pad - NC), (0, 0), (0, 0)))
        t = jnp.pad(t, ((0, nc_pad - NC), (0, 0), (0, 0)))

    bw, bh = _band_matrices(H, W)
    kernel = functools.partial(_ae_loss_kernel, nc=NC, tb=tile_b)

    partials = pl.pallas_call(
        kernel,
        out_shape=jax.ShapeDtypeStruct((num_tiles, 8, 128), jnp.float32),
        grid=(num_tiles,),
        in_specs=[
            pl.BlockSpec((tile_b, H, W), lambda i: (i, 0, 0)),
            pl.BlockSpec((tile_b, H, W), lambda i: (i, 0, 0)),
            pl.BlockSpec((W, wo), lambda i: (0, 0)),   # static W-band, VMEM resident
            pl.BlockSpec((ho, H), lambda i: (0, 0)),   # static H-band, VMEM resident
        ],
        out_specs=pl.BlockSpec((1, 8, 128), lambda i: (i, 0, 0)),
        compiler_params=pltpu.CompilerParams(
            dimension_semantics=("parallel",),          # per-tile partial sums -> megacore OK
            vmem_limit_bytes=48 * 1024 * 1024,          # explicit; fits v7x's 64 MiB physical
        ),
    )(r, t, bw, bh)

    # Exact (sum, count) combination -- correct for any NC / tile_b.
    l1 = jnp.sum(partials[:, 0, 0]) / (NC * H * W)
    ssim_val = jnp.sum(partials[:, 0, 1]) / (NC * ho * wo)

    # TODO(synk): perceptual (VGG16 features[:16]) term is identically 0 in the
    # reference (target is overwritten by the interpolated input), so we add
    # gamma * 0.0 and never load pretrained weights.
    perceptual = 0.0
    return ALPHA * l1 + BETA * (1.0 - ssim_val) + GAMMA * perceptual


# ---- pure-JAX reference (same math, no Pallas) for a sanity check -------------
def _gaussian_filter_ref(x, ho, wo):
    acc_h = _GWIN_F[0] * x[:, 0:ho, :]
    for k in range(1, WIN_SIZE):
        acc_h = acc_h + _GWIN_F[k] * x[:, k:k + ho, :]
    acc = _GWIN_F[0] * acc_h[:, :, 0:wo]
    for k in range(1, WIN_SIZE):
        acc = acc + _GWIN_F[k] * acc_h[:, :, k:k + wo]
    return acc


def _reference_loss(reconstruction, target):
    x = reconstruction.reshape(-1, *reconstruction.shape[2:]).astype(jnp.float32)
    y = target.reshape(-1, *target.shape[2:]).astype(jnp.float32)
    H, W = x.shape[-2:]
    ho, wo = H - WIN_SIZE + 1, W - WIN_SIZE + 1
    l1 = jnp.mean(jnp.abs(x - y))
    C1 = (K1 * DATA_RANGE) ** 2
    C2 = (K2 * DATA_RANGE) ** 2
    mu1 = _gaussian_filter_ref(x, ho, wo)
    mu2 = _gaussian_filter_ref(y, ho, wo)
    s1 = _gaussian_filter_ref(x * x, ho, wo) - mu1 * mu1
    s2 = _gaussian_filter_ref(y * y, ho, wo) - mu2 * mu2
    s12 = _gaussian_filter_ref(x * y, ho, wo) - mu1 * mu2
    cs = (2 * s12 + C2) / (s1 + s2 + C2)
    ssim_map = ((2 * mu1 * mu2 + C1) / (mu1 * mu1 + mu2 * mu2 + C1)) * cs
    return ALPHA * l1 + BETA * (1.0 - jnp.mean(ssim_map)) + GAMMA * 0.0


if __name__ == "__main__":
    key = jax.random.PRNGKey(0)
    k1, k2 = jax.random.split(key)
    N, C, H, W = 2, 4, 16, 16               # spatial > win_size=11, data_range=1.0
    recon = jax.random.uniform(k1, (N, C, H, W), dtype=jnp.float32)
    target = jax.random.uniform(k2, (N, C, H, W), dtype=jnp.float32)

    ref = jax.block_until_ready(_reference_loss(recon, target))

    # auto tile (single tile of 8) and a forced ragged tiling (3+3+2) to exercise
    # the grid / padded-row masking path.
    loss_full = jax.block_until_ready(ae_composite_loss(recon, target))
    loss_ragged = jax.block_until_ready(ae_composite_loss(recon, target, tile_b=3))

    # Tolerance leaves margin for the approximate-reciprocal + MXU path; observed
    # error is far smaller, while real bugs show up at the 1e-1 level.
    np.testing.assert_allclose(np.asarray(loss_full), np.asarray(ref), rtol=2e-3, atol=1e-3)
    np.testing.assert_allclose(np.asarray(loss_ragged), np.asarray(ref), rtol=2e-3, atol=1e-3)
    np.testing.assert_allclose(np.asarray(loss_full), np.asarray(loss_ragged), rtol=1e-4, atol=1e-5)

    print("KERNEL_OK")
</pallas_src>

<mosaic_0001>
module attributes {stable_mosaic.version = 11 : i64} {
  func.func @_ae_loss_kernel(%arg0: i32, %arg1: memref<8x16x16xf32, #tpu.memory_space<vmem>>, %arg2: memref<8x16x16xf32, #tpu.memory_space<vmem>>, %arg3: memref<16x6xf32, #tpu.memory_space<vmem>>, %arg4: memref<6x16xf32, #tpu.memory_space<vmem>>, %arg5: memref<1x8x128xf32, #tpu.memory_space<vmem>>) attributes {dimension_semantics = [#tpu.dimension_semantics<parallel>], iteration_bounds = array<i64: 1>, scalar_prefetch = 0 : i64, scratch_operands = 0 : i64, tpu.core_type = #tpu.core_type<tc>, window_params = [{transform_indices = @transform_0, window_bounds = array<i64: 8, 16, 16>}, {transform_indices = @transform_1, window_bounds = array<i64: 8, 16, 16>}, {pipeline_mode = #tpu.pipeline_mode<synchronous>, transform_indices = @transform_2, window_bounds = array<i64: 16, 6>}, {pipeline_mode = #tpu.pipeline_mode<synchronous>, transform_indices = @transform_3, window_bounds = array<i64: 6, 16>}, {transform_indices = @transform_4, window_bounds = array<i64: 1, 8, 128>}]} {
    %c0 = arith.constant 0 : index
    %c0_0 = arith.constant 0 : index
    %c0_1 = arith.constant 0 : index
    %0 = vector.load %arg1[%c0, %c0_0, %c0_1] : memref<8x16x16xf32, #tpu.memory_space<vmem>>, vector<8x16x16xf32>
    %c0_2 = arith.constant 0 : index
    %c0_3 = arith.constant 0 : index
    %c0_4 = arith.constant 0 : index
    %1 = vector.load %arg2[%c0_2, %c0_3, %c0_4] : memref<8x16x16xf32, #tpu.memory_space<vmem>>, vector<8x16x16xf32>
    %c8_i32 = arith.constant 8 : i32
    %2 = arith.muli %arg0, %c8_i32 : i32
    %c8_i32_5 = arith.constant 8 : i32
    %3 = arith.subi %c8_i32_5, %2 : i32
    %c8_i32_6 = arith.constant 8 : i32
    %4 = arith.minsi %c8_i32_6, %3 : i32
    %5 = arith.subf %0, %1 : vector<8x16x16xf32>
    %6 = math.absf %5 : vector<8x16x16xf32>
    %cst = arith.constant dense<0.000000e+00> : vector<8x16xf32>
    %7 = vector.multi_reduction <add>, %6, %cst [2] : vector<8x16x16xf32> to vector<8x16xf32>
    %8 = tpu.iota {dimensions = array<i32: 0>} : vector<8x16xi32>
    %9 = vector.broadcast %4 : i32 to vector<8x16xi32>
    %10 = arith.cmpi slt, %8, %9 : vector<8x16xi32>
    %cst_7 = arith.constant 0.000000e+00 : f32
    %11 = vector.broadcast %cst_7 : f32 to vector<8x16xf32>
    %12 = arith.select %10, %7, %11 : vector<8x16xi1>, vector<8x16xf32>
    %13 = vector.shape_cast %12 : vector<8x16xf32> to vector<1x8x16xf32>
    %cst_8 = arith.constant dense<0.000000e+00> : vector<1xf32>
    %14 = vector.multi_reduction <add>, %13, %cst_8 [1, 2] : vector<1x8x16xf32> to vector<1xf32>
    %15 = vector.shape_cast %14 : vector<1xf32> to vector<1x1x1xf32>
    %16 = vector.extract %15[0, 0, 0] : f32 from vector<1x1x1xf32>
    %17 = arith.mulf %0, %0 : vector<8x16x16xf32>
    %18 = arith.mulf %1, %1 : vector<8x16x16xf32>
    %19 = arith.mulf %0, %1 : vector<8x16x16xf32>
    %20 = tpu.concatenate %0, %1, %17, %18, %19 in 0 : vector<8x16x16xf32>, vector<8x16x16xf32>, vector<8x16x16xf32>, vector<8x16x16xf32>, vector<8x16x16xf32> -> vector<40x16x16xf32>
    %c0_9 = arith.constant 0 : index
    %c0_10 = arith.constant 0 : index
    %21 = vector.load %arg3[%c0_9, %c0_10] : memref<16x6xf32, #tpu.memory_space<vmem>>, vector<16x6xf32>
    %22 = vector.shape_cast %21 : vector<16x6xf32> to vector<1x16x6xf32>
    %23 = vector.broadcast %22 : vector<1x16x6xf32> to vector<40x16x6xf32>
    %c0_11 = arith.constant 0 : index
    %c0_12 = arith.constant 0 : index
    %24 = vector.load %arg4[%c0_11, %c0_12] : memref<6x16xf32, #tpu.memory_space<vmem>>, vector<6x16xf32>
    %25 = vector.shape_cast %24 : vector<6x16xf32> to vector<1x6x16xf32>
    %26 = vector.broadcast %25 : vector<1x6x16xf32> to vector<40x6x16xf32>
    "tpu.trace_start"() <{level = 10 : i32, message = "bhw,bwj->bhj"}> : () -> ()
    %cst_13 = arith.constant dense<0.000000e+00> : vector<40x16x6xf32>
    %27 = tpu.matmul %20, %23, %cst_13 {dimension_numbers = #tpu.dot_dimension_numbers<[2], [1], [1], [2], [0, 0, 0, 1, 1, 2], [0], [0]>} : vector<40x16x16xf32>, vector<40x16x6xf32>, vector<40x16x6xf32> -> vector<40x16x6xf32>
    "tpu.trace_stop"() : () -> ()
    "tpu.trace_start"() <{level = 10 : i32, message = "bih,bhj->bij"}> : () -> ()
    %cst_14 = arith.constant dense<0.000000e+00> : vector<40x6x6xf32>
    %28 = tpu.matmul %26, %27, %cst_14 {dimension_numbers = #tpu.dot_dimension_numbers<[2], [1], [1], [2], [0, 0, 0, 1, 1, 2], [0], [0]>} : vector<40x6x16xf32>, vector<40x16x6xf32>, vector<40x6x6xf32> -> vector<40x6x6xf32>
    "tpu.trace_stop"() : () -> ()
    %29 = vector.extract_strided_slice %28 {offsets = [0, 0, 0], sizes = [8, 6, 6], strides = [1, 1, 1]} : vector<40x6x6xf32> to vector<8x6x6xf32>
    %30 = vector.extract_strided_slice %28 {offsets = [8, 0, 0], sizes = [8, 6, 6], strides = [1, 1, 1]} : vector<40x6x6xf32> to vector<8x6x6xf32>
    %31 = vector.extract_strided_slice %28 {offsets = [16, 0, 0], sizes = [8, 6, 6], strides = [1, 1, 1]} : vector<40x6x6xf32> to vector<8x6x6xf32>
    %32 = vector.extract_strided_slice %28 {offsets = [24, 0, 0], sizes = [8, 6, 6], strides = [1, 1, 1]} : vector<40x6x6xf32> to vector<8x6x6xf32>
    %33 = vector.extract_strided_slice %28 {offsets = [32, 0, 0], sizes = [8, 6, 6], strides = [1, 1, 1]} : vector<40x6x6xf32> to vector<8x6x6xf32>
    %34 = arith.mulf %29, %29 : vector<8x6x6xf32>
    %35 = arith.mulf %30, %30 : vector<8x6x6xf32>
    %36 = arith.mulf %29, %30 : vector<8x6x6xf32>
    %37 = arith.subf %31, %34 : vector<8x6x6xf32>
    %38 = arith.subf %32, %35 : vector<8x6x6xf32>
    %39 = arith.subf %33, %36 : vector<8x6x6xf32>
    %40 = arith.addf %34, %35 : vector<8x6x6xf32>
    %cst_15 = arith.constant 9.99999974E-5 : f32
    %41 = vector.broadcast %cst_15 : f32 to vector<8x6x6xf32>
    %42 = arith.addf %40, %41 : vector<8x6x6xf32>
    %43 = arith.addf %37, %38 : vector<8x6x6xf32>
    %cst_16 = arith.constant 8.99999984E-4 : f32
    %44 = vector.broadcast %cst_16 : f32 to vector<8x6x6xf32>
    %45 = arith.addf %43, %44 : vector<8x6x6xf32>
    %46 = tpu.reciprocal %42 {approx = true} : vector<8x6x6xf32> -> vector<8x6x6xf32>
    %47 = arith.mulf %42, %46 : vector<8x6x6xf32>
    %cst_17 = arith.constant 2.000000e+00 : f32
    %48 = vector.broadcast %cst_17 : f32 to vector<8x6x6xf32>
    %49 = arith.subf %48, %47 : vector<8x6x6xf32>
    %50 = arith.mulf %46, %49 : vector<8x6x6xf32>
    %51 = tpu.reciprocal %45 {approx = true} : vector<8x6x6xf32> -> vector<8x6x6xf32>
    %52 = arith.mulf %45, %51 : vector<8x6x6xf32>
    %cst_18 = arith.constant 2.000000e+00 : f32
    %53 = vector.broadcast %cst_18 : f32 to vector<8x6x6xf32>
    %54 = arith.subf %53, %52 : vector<8x6x6xf32>
    %55 = arith.mulf %51, %54 : vector<8x6x6xf32>
    %cst_19 = arith.constant 2.000000e+00 : f32
    %56 = vector.broadcast %cst_19 : f32 to vector<8x6x6xf32>
    %57 = arith.mulf %56, %36 : vector<8x6x6xf32>
    %cst_20 = arith.constant 9.99999974E-5 : f32
    %58 = vector.broadcast %cst_20 : f32 to vector<8x6x6xf32>
    %59 = arith.addf %57, %58 : vector<8x6x6xf32>
    %cst_21 = arith.constant 2.000000e+00 : f32
    %60 = vector.broadcast %cst_21 : f32 to vector<8x6x6xf32>
    %61 = arith.mulf %60, %39 : vector<8x6x6xf32>
    %cst_22 = arith.constant 8.99999984E-4 : f32
    %62 = vector.broadcast %cst_22 : f32 to vector<8x6x6xf32>
    %63 = arith.addf %61, %62 : vector<8x6x6xf32>
    %64 = arith.mulf %59, %63 : vector<8x6x6xf32>
    %65 = arith.mulf %50, %55 : vector<8x6x6xf32>
    %66 = arith.mulf %64, %65 : vector<8x6x6xf32>
    %cst_23 = arith.constant dense<0.000000e+00> : vector<8x6xf32>
    %67 = vector.multi_reduction <add>, %66, %cst_23 [2] : vector<8x6x6xf32> to vector<8x6xf32>
    %68 = tpu.iota {dimensions = array<i32: 0>} : vector<8x6xi32>
    %69 = vector.broadcast %4 : i32 to vector<8x6xi32>
    %70 = arith.cmpi slt, %68, %69 : vector<8x6xi32>
    %cst_24 = arith.constant 0.000000e+00 : f32
    %71 = vector.broadcast %cst_24 : f32 to vector<8x6xf32>
    %72 = arith.select %70, %67, %71 : vector<8x6xi1>, vector<8x6xf32>
    %73 = vector.shape_cast %72 : vector<8x6xf32> to vector<1x8x6xf32>
    %cst_25 = arith.constant dense<0.000000e+00> : vector<1xf32>
    %74 = vector.multi_reduction <add>, %73, %cst_25 [1, 2] : vector<1x8x6xf32> to vector<1xf32>
    %75 = vector.shape_cast %74 : vector<1xf32> to vector<1x1x1xf32>
    %76 = vector.extract %75[0, 0, 0] : f32 from vector<1x1x1xf32>
    %77 = tpu.iota {dimensions = array<i32: 2>} : vector<1x8x128xi32>
    %c0_i32 = arith.constant 0 : i32
    %78 = vector.broadcast %c0_i32 : i32 to vector<1x8x128xi32>
    %79 = arith.cmpi eq, %77, %78 : vector<1x8x128xi32>
    %cst_26 = arith.constant 0.000000e+00 : f32
    %80 = vector.broadcast %16 : f32 to vector<1x8x128xf32>
    %81 = vector.broadcast %cst_26 : f32 to vector<1x8x128xf32>
    %82 = arith.select %79, %80, %81 : vector<1x8x128xi1>, vector<1x8x128xf32>
    %c1_i32 = arith.constant 1 : i32
    %83 = vector.broadcast %c1_i32 : i32 to vector<1x8x128xi32>
    %84 = arith.cmpi eq, %77, %83 : vector<1x8x128xi32>
    %cst_27 = arith.constant 0.000000e+00 : f32
    %85 = vector.broadcast %76 : f32 to vector<1x8x128xf32>
    %86 = vector.broadcast %cst_27 : f32 to vector<1x8x128xf32>
    %87 = arith.select %84, %85, %86 : vector<1x8x128xi1>, vector<1x8x128xf32>
    %88 = arith.addf %82, %87 : vector<1x8x128xf32>
    %c0_28 = arith.constant 0 : index
    %c0_29 = arith.constant 0 : index
    %c0_30 = arith.constant 0 : index
    %89 = vector.load %arg5[%c0_28, %c0_29, %c0_30] : memref<1x8x128xf32, #tpu.memory_space<vmem>>, vector<1x8x128xf32>
    tpu.vector_store %arg5[%c0_28, %c0_29, %c0_30], %88 {strides = array<i32>} : memref<1x8x128xf32, #tpu.memory_space<vmem>>, vector<1x8x128xf32>,
    return
  }
  func.func @transform_0(%arg0: i32) -> (i32, i32, i32) {
    %c0_i32 = arith.constant 0 : i32
    %c0_i32_0 = arith.constant 0 : i32
    %c0_i32_1 = arith.constant 0 : i32
    return %arg0, %c0_i32, %c0_i32_0 : i32, i32, i32
  }
  func.func @transform_1(%arg0: i32) -> (i32, i32, i32) {
    %c0_i32 = arith.constant 0 : i32
    %c0_i32_0 = arith.constant 0 : i32
    %c0_i32_1 = arith.constant 0 : i32
    return %arg0, %c0_i32, %c0_i32_0 : i32, i32, i32
  }
  func.func @transform_2(%arg0: i32) -> (i32, i32) {
    %c0_i32 = arith.constant 0 : i32
    %c0_i32_0 = arith.constant 0 : i32
    %c0_i32_1 = arith.constant 0 : i32
    return %c0_i32, %c0_i32_0 : i32, i32
  }
  func.func @transform_3(%arg0: i32) -> (i32, i32) {
    %c0_i32 = arith.constant 0 : i32
    %c0_i32_0 = arith.constant 0 : i32
    %c0_i32_1 = arith.constant 0 : i32
    return %c0_i32, %c0_i32_0 : i32, i32
  }
  func.func @transform_4(%arg0: i32) -> (i32, i32, i32) {
    %c0_i32 = arith.constant 0 : i32
    %c0_i32_0 = arith.constant 0 : i32
    %c0_i32_1 = arith.constant 0 : i32
    return %arg0, %c0_i32, %c0_i32_0 : i32, i32, i32
  }
}

</mosaic_0001>

<llo_original>
// kernel: tpu_custom_call.1
$region0: #{tpu_custom_call.1}
  #allocation0 [shape = 'u32[]', space=smem, size = 0x4, offset = 0x4, fixed_abs, tag = 'smem constant byte address 0x4 - core index']
  #allocation1 [shape = 'u32[144,128]{1,0:T(1,128)}', space=vmem, size = 0x12000, scoped, tag = 'internal scratch']
  %s0 = inlined_call_operand.hbm [shape: f32[8,16,16], index: 0, kind: input, shape index: {}]
  %s1 = inlined_call_operand.hbm [shape: f32[8,16,16], index: 1, kind: input, shape index: {}]
  %s2 = inlined_call_operand.vmem [shape: f32[16,6], index: 2, kind: input, shape index: {}]
  %s3 = inlined_call_operand.vmem [shape: f32[6,16], index: 3, kind: input, shape index: {}]
  %s4 = inlined_call_operand.hbm [shape: f32[1,8,128], index: 4, kind: output, shape index: {}]
  %s5 = sld [smem:[#allocation0]]
  $region34: #{tpu_custom_call.1} parent=0
    _
  %s7 = ssub.s32 1, %s5
  %s8 = scalar_select 0, %s7, %s5
  $region1: #{tpu_custom_call.1} parent=0
    #allocation2 [shape = 'u8[65536]{0}', space=vmem, size = 0x10000, scoped, tag = 'input window, operand 0, single buffered']
    #allocation3 [shape = 's32[1]{0}', space=sflag, size = 0x4, scoped, tag = 'scoped memory for tpu_custom_call.1']
    #allocation4 [shape = 's32[1]{0}', space=sflag, size = 0x4, scoped, tag = 'scoped memory for tpu_custom_call.1']
    #allocation5 [shape = 'u8[65536]{0}', space=vmem, size = 0x10000, scoped, tag = 'input window, operand 1, single buffered']
    #allocation6 [shape = 's32[1]{0}', space=sflag, size = 0x4, scoped, tag = 'scoped memory for tpu_custom_call.1']
    #allocation7 [shape = 'u8[4096]{0}', space=vmem, size = 0x1000, scoped, tag = 'output window, operand 0, single buffered']
    %9 = vsyncpa [#allocation3], 0
    %10 = vsyncpa [#allocation6], 0
    %11 = vsyncpa [#allocation4], 0
    // Predicated region
    $region2: #{tpu_custom_call.1} parent=1 // pred_check
      _
    $region3: #{tpu_custom_call.1} parent=1 // pred_check_branch
      %13 = sbr.rel (0) target = $region5
    $region4: #{tpu_custom_call.1} parent=1 // pred_region
      %s15 = ssub.s32 2048, 2048
      %16 = vsyncadd [#allocation3], %s15
      %s17 = sshll.u32 [#allocation2], 4
      %s18 = int_to_ptr.vmem [resolvable:$true] %s17
      %23 = dma.hbm_to_vmem [thread:$0]  %s0, 2048, %s18, [#allocation3], 128, 128, 8
    $region5: #{tpu_custom_call.1} parent=1 // pred_fallthru
      _
    // Predicated region
    $region6: #{tpu_custom_call.1} parent=1 // pred_check
      _
    $region7: #{tpu_custom_call.1} parent=1 // pred_check_branch
      %25 = sbr.rel (0) target = $region9
    $region8: #{tpu_custom_call.1} parent=1 // pred_region
      %s27 = ssub.s32 2048, 2048
      %28 = vsyncadd [#allocation6], %s27
      %s29 = sshll.u32 [#allocation5], 4
      %s30 = int_to_ptr.vmem [resolvable:$true] %s29
      %35 = dma.hbm_to_vmem [thread:$0]  %s1, 2048, %s30, [#allocation6], 128, 128, 8
    $region9: #{tpu_custom_call.1} parent=1 // pred_fallthru
      _
    // Predicated region
    $region10: #{tpu_custom_call.1} parent=1 // pred_check
      _
    $region11: #{tpu_custom_call.1} parent=1 // pred_check_branch
      %37 = sbr.rel (0) target = $region13
    $region12: #{tpu_custom_call.1} parent=1 // pred_region
      _
    $region13: #{tpu_custom_call.1} parent=1 // pred_fallthru
      _
    // Predicated region
    $region14: #{tpu_custom_call.1} parent=1 // pred_check
      _
    $region15: #{tpu_custom_call.1} parent=1 // pred_check_branch
      %39 = sbr.rel (0) target = $region17
    $region16: #{tpu_custom_call.1} parent=1 // pred_region
      _
    $region17: #{tpu_custom_call.1} parent=1 // pred_fallthru
      _
    // Predicated region
    $region18: #{tpu_custom_call.1} parent=1 // pred_check
      _
    $region19: #{tpu_custom_call.1} parent=1 // pred_check_branch
      %41 = sbr.rel (0) target = $region21
    $region20: #{tpu_custom_call.1} parent=1 // pred_region
      %42 = dma.done [#allocation3], 2048
    $region21: #{tpu_custom_call.1} parent=1 // pred_fallthru
      _
    // Predicated region
    $region22: #{tpu_custom_call.1} parent=1 // pred_check
      _
    $region23: #{tpu_custom_call.1} parent=1 // pred_check_branch
      %44 = sbr.rel (0) target = $region25
    $region24: #{tpu_custom_call.1} parent=1 // pred_region
      %45 = dma.done [#allocation6], 2048
    $region25: #{tpu_custom_call.1} parent=1 // pred_fallthru
      _
    %v46 = vld [vmem:[#allocation2] sm:$0xff]
    %v47 = vld [vmem:[#allocation2 + $0x8] sm:$0xff]
    %v48 = vld [vmem:[#allocation2 + $0x10] sm:$0xff]
    %v49 = vld [vmem:[#allocation2 + $0x18] sm:$0xff]
    %v50 = vld [vmem:[#allocation2 + $0x20] sm:$0xff]
    %v51 = vld [vmem:[#allocation2 + $0x28] sm:$0xff]
    %v52 = vld [vmem:[#allocation2 + $0x30] sm:$0xff]
    %v53 = vld [vmem:[#allocation2 + $0x38] sm:$0xff]
    %v54 = vld [vmem:[#allocation2 + $0x40] sm:$0xff]
    %v55 = vld [vmem:[#allocation2 + $0x48] sm:$0xff]
    %v56 = vld [vmem:[#allocation2 + $0x50] sm:$0xff]
    %v57 = vld [vmem:[#allocation2 + $0x58] sm:$0xff]
    %v58 = vld [vmem:[#allocation2 + $0x60] sm:$0xff]
    %v59 = vld [vmem:[#allocation2 + $0x68] sm:$0xff]
    %v60 = vld [vmem:[#allocation2 + $0x70] sm:$0xff]
    %v61 = vld [vmem:[#allocation2 + $0x78] sm:$0xff]
    %v62 = vld [vmem:[#allocation5] sm:$0xff]
    %v63 = vld [vmem:[#allocation5 + $0x8] sm:$0xff]
    %v64 = vld [vmem:[#allocation5 + $0x10] sm:$0xff]
    %v65 = vld [vmem:[#allocation5 + $0x18] sm:$0xff]
    %v66 = vld [vmem:[#allocation5 + $0x20] sm:$0xff]
    %v67 = vld [vmem:[#allocation5 + $0x28] sm:$0xff]
    %v68 = vld [vmem:[#allocation5 + $0x30] sm:$0xff]
    %v69 = vld [vmem:[#allocation5 + $0x38] sm:$0xff]
    %v70 = vld [vmem:[#allocation5 + $0x40] sm:$0xff]
    %v71 = vld [vmem:[#allocation5 + $0x48] sm:$0xff]
    %v72 = vld [vmem:[#allocation5 + $0x50] sm:$0xff]
    %v73 = vld [vmem:[#allocation5 + $0x58] sm:$0xff]
    %v74 = vld [vmem:[#allocation5 + $0x60] sm:$0xff]
    %v75 = vld [vmem:[#allocation5 + $0x68] sm:$0xff]
    %v76 = vld [vmem:[#allocation5 + $0x70] sm:$0xff]
    %v77 = vld [vmem:[#allocation5 + $0x78] sm:$0xff]
    %s78 = smul.u32 0, 8
    %s79 = ssub.s32 8, %s78
    %p80 = scmp.lt.s32.totalorder %s79, 8
    %s81 = scalar_select %p80, %s79, 8
    %v82 = vsub.f32 %v46, %v62
    %v83 = vsub.f32 %v47, %v63
    %v84 = vsub.f32 %v48, %v64
    %v85 = vsub.f32 %v49, %v65
    %v86 = vsub.f32 %v50, %v66
    %v87 = vsub.f32 %v51, %v67
    %v88 = vsub.f32 %v52, %v68
    %v89 = vsub.f32 %v53, %v69
    %v90 = vsub.f32 %v54, %v70
    %v91 = vsub.f32 %v55, %v71
    %v92 = vsub.f32 %v56, %v72
    %v93 = vsub.f32 %v57, %v73
    %v94 = vsub.f32 %v58, %v74
    %v95 = vsub.f32 %v59, %v75
    %v96 = vsub.f32 %v60, %v76
    %v97 = vsub.f32 %v61, %v77
    %v98 = vand.u32 2147483647, %v82
    %v99 = vand.u32 2147483647, %v83
    %v100 = vand.u32 2147483647, %v84
    %v101 = vand.u32 2147483647, %v85
    %v102 = vand.u32 2147483647, %v86
    %v103 = vand.u32 2147483647, %v87
    %v104 = vand.u32 2147483647, %v88
    %v105 = vand.u32 2147483647, %v89
    %v106 = vand.u32 2147483647, %v90
    %v107 = vand.u32 2147483647, %v91
    %v108 = vand.u32 2147483647, %v92
    %v109 = vand.u32 2147483647, %v93
    %v110 = vand.u32 2147483647, %v94
    %v111 = vand.u32 2147483647, %v95
    %v112 = vand.u32 2147483647, %v96
    %v113 = vand.u32 2147483647, %v97
    %vm114 = vcmask 130048
    %v115 = vsel %vm114, %v98, 0.0
    %116 = vadd.xlane.f32.xlu0 %v115
    %v117 = vpop.xlane.xlu0 %116
    %v118 = vsel %vm114, %v99, 0.0
    %119 = vadd.xlane.f32.xlu0 %v118
    %v120 = vpop.xlane.xlu0 %119
    %v121 = vsel %vm114, %v100, 0.0
    %122 = vadd.xlane.f32.xlu0 %v121
    %v123 = vpop.xlane.xlu0 %122
    %v124 = vsel %vm114, %v101, 0.0
    %125 = vadd.xlane.f32.xlu0 %v124
    %v126 = vpop.xlane.xlu0 %125
    %v127 = vsel %vm114, %v102, 0.0
    %128 = vadd.xlane.f32.xlu0 %v127
    %v129 = vpop.xlane.xlu0 %128
    %v130 = vsel %vm114, %v103, 0.0
    %131 = vadd.xlane.f32.xlu0 %v130
    %v132 = vpop.xlane.xlu0 %131
    %v133 = vsel %vm114, %v104, 0.0
    %134 = vadd.xlane.f32.xlu0 %v133
    %v135 = vpop.xlane.xlu0 %134
    %v136 = vsel %vm114, %v105, 0.0
    %137 = vadd.xlane.f32.xlu0 %v136
    %v138 = vpop.xlane.xlu0 %137
    %v139 = vsel %vm114, %v106, 0.0
    %140 = vadd.xlane.f32.xlu0 %v139
    %v141 = vpop.xlane.xlu0 %140
    %v142 = vsel %vm114, %v107, 0.0
    %143 = vadd.xlane.f32.xlu0 %v142
    %v144 = vpop.xlane.xlu0 %143
    %v145 = vsel %vm114, %v108, 0.0
    %146 = vadd.xlane.f32.xlu0 %v145
    %v147 = vpop.xlane.xlu0 %146
    %v148 = vsel %vm114, %v109, 0.0
    %149 = vadd.xlane.f32.xlu0 %v148
    %v150 = vpop.xlane.xlu0 %149
    %v151 = vsel %vm114, %v110, 0.0
    %152 = vadd.xlane.f32.xlu0 %v151
    %v153 = vpop.xlane.xlu0 %152
    %v154 = vsel %vm114, %v111, 0.0
    %155 = vadd.xlane.f32.xlu0 %v154
    %v156 = vpop.xlane.xlu0 %155
    %v157 = vsel %vm114, %v112, 0.0
    %158 = vadd.xlane.f32.xlu0 %v157
    %v159 = vpop.xlane.xlu0 %158
    %v160 = vsel %vm114, %v113, 0.0
    %161 = vadd.xlane.f32.xlu0 %v160
    %v162 = vpop.xlane.xlu0 %161
    %v163 = vlaneseq
    %v164 = vshrl.u32 %v163, 7
    %v165 = vstv %s81
    %vm166 = vcmp.lt.s32.totalorder %v164, %v165
    %v183 = vlaneseq
    %v184 = vand.u32 %v183, 127
    %v185 = vlaneseq
    %v186 = vshrl.u32 %v185, 7
    %v187 = vsub.s32 %v184, %v186
    %v188 = vrot.slane %v117, %v187
    %v189 = vadd.s32 %v184, 4294967288
    %v190 = vlaneseq
    %v191 = vshrl.u32 %v190, 7
    %v192 = vsub.s32 %v189, %v191
    %v193 = vrot.slane %v120, %v192
    %vm194 = vcmask 130112
    %v195 = vsel %vm194, %v193, %v188
    %v196 = vlaneseq
    %v197 = vshrl.u32 %v196, 7
    %v198 = vsub.s32 %v184, %v197
    %v199 = vrot.slane %v123, %v198
    %v200 = vlaneseq
    %v201 = vshrl.u32 %v200, 7
    %v202 = vsub.s32 %v189, %v201
    %v203 = vrot.slane %v126, %v202
    %v204 = vsel %vm194, %v203, %v199
    %v205 = vlaneseq
    %v206 = vshrl.u32 %v205, 7
    %v207 = vsub.s32 %v184, %v206
    %v208 = vrot.slane %v129, %v207
    %v209 = vlaneseq
    %v210 = vshrl.u32 %v209, 7
    %v211 = vsub.s32 %v189, %v210
    %v212 = vrot.slane %v132, %v211
    %v213 = vsel %vm194, %v212, %v208
    %v214 = vlaneseq
    %v215 = vshrl.u32 %v214, 7
    %v216 = vsub.s32 %v184, %v215
    %v217 = vrot.slane %v135, %v216
    %v218 = vlaneseq
    %v219 = vshrl.u32 %v218, 7
    %v220 = vsub.s32 %v189, %v219
    %v221 = vrot.slane %v138, %v220
    %v222 = vsel %vm194, %v221, %v217
    %v223 = vlaneseq
    %v224 = vshrl.u32 %v223, 7
    %v225 = vsub.s32 %v184, %v224
    %v226 = vrot.slane %v141, %v225
    %v227 = vlaneseq
    %v228 = vshrl.u32 %v227, 7
    %v229 = vsub.s32 %v189, %v228
    %v230 = vrot.slane %v144, %v229
    %v231 = vsel %vm194, %v230, %v226
    %v232 = vlaneseq
    %v233 = vshrl.u32 %v232, 7
    %v234 = vsub.s32 %v184, %v233
    %v235 = vrot.slane %v147, %v234
    %v236 = vlaneseq
    %v237 = vshrl.u32 %v236, 7
    %v238 = vsub.s32 %v189, %v237
    %v239 = vrot.slane %v150, %v238
    %v240 = vsel %vm194, %v239, %v235
    %v241 = vlaneseq
    %v242 = vshrl.u32 %v241, 7
    %v243 = vsub.s32 %v184, %v242
    %v244 = vrot.slane %v153, %v243
    %v245 = vlaneseq
    %v246 = vshrl.u32 %v245, 7
    %v247 = vsub.s32 %v189, %v246
    %v248 = vrot.slane %v156, %v247
    %v249 = vsel %vm194, %v248, %v244
    %v250 = vlaneseq
    %v251 = vshrl.u32 %v250, 7
    %v252 = vsub.s32 %v184, %v251
    %v253 = vrot.slane %v159, %v252
    %v254 = vlaneseq
    %v255 = vshrl.u32 %v254, 7
    %v256 = vsub.s32 %v189, %v255
    %v257 = vrot.slane %v162, %v256
    %v258 = vsel %vm194, %v257, %v253
    %vm259 = vcmask 1041409
    %v260 = vsel %vm259, %v204, %v195
    %vm261 = vcmask 1042434
    %v262 = vsel %vm261, %v213, %v260
    %vm263 = vcmask 1043459
    %v264 = vsel %vm263, %v222, %v262
    %vm265 = vcmask 1044484
    %v266 = vsel %vm265, %v231, %v264
    %vm267 = vcmask 1045509
    %v268 = vsel %vm267, %v240, %v266
    %vm269 = vcmask 1046534
    %v270 = vsel %vm269, %v249, %v268
    %vm271 = vcmask 1047559
    %v272 = vsel %vm271, %v258, %v270
    %v274 = vsel %vm166, %v272, 0.0
    %v275 = vsel %vm114, %v274, 0.0
    %276 = vadd.xlane.f32.xlu0 %v275
    %v277 = vpop.xlane.xlu0 %276
    %v278 = vrot.slane %v277, 4
    %v279 = vadd.f32 %v277, %v278
    %v280 = vrot.slane %v279, 2
    %v281 = vadd.f32 %v279, %v280
    %v282 = vrot.slane %v281, 1
    %v283 = vadd.f32 %v281, %v282
    %s284 = vtos %v283
    %v285 = vmul.f32 %v46, %v46
    %v286 = vmul.f32 %v47, %v47
    %v287 = vmul.f32 %v48, %v48
    %v288 = vmul.f32 %v49, %v49
    %v289 = vmul.f32 %v50, %v50
    %v290 = vmul.f32 %v51, %v51
    %v291 = vmul.f32 %v52, %v52
    %v292 = vmul.f32 %v53, %v53
    %v293 = vmul.f32 %v54, %v54
    %v294 = vmul.f32 %v55, %v55
    %v295 = vmul.f32 %v56, %v56
    %v296 = vmul.f32 %v57, %v57
    %v297 = vmul.f32 %v58, %v58
    %v298 = vmul.f32 %v59, %v59
    %v299 = vmul.f32 %v60, %v60
    %v300 = vmul.f32 %v61, %v61
    %v301 = vmul.f32 %v62, %v62
    %v302 = vmul.f32 %v63, %v63
    %v303 = vmul.f32 %v64, %v64
    %v304 = vmul.f32 %v65, %v65
    %v305 = vmul.f32 %v66, %v66
    %v306 = vmul.f32 %v67, %v67
    %v307 = vmul.f32 %v68, %v68
    %v308 = vmul.f32 %v69, %v69
    %v309 = vmul.f32 %v70, %v70
    %v310 = vmul.f32 %v71, %v71
    %v311 = vmul.f32 %v72, %v72
    %v312 = vmul.f32 %v73, %v73
    %v313 = vmul.f32 %v74, %v74
    %v314 = vmul.f32 %v75, %v75
    %v315 = vmul.f32 %v76, %v76
    %v316 = vmul.f32 %v77, %v77
    %v317 = vmul.f32 %v46, %v62
    %v318 = vmul.f32 %v47, %v63
    %v319 = vmul.f32 %v48, %v64
    %v320 = vmul.f32 %v49, %v65
    %v321 = vmul.f32 %v50, %v66
    %v322 = vmul.f32 %v51, %v67
    %v323 = vmul.f32 %v52, %v68
    %v324 = vmul.f32 %v53, %v69
    %v325 = vmul.f32 %v54, %v70
    %v326 = vmul.f32 %v55, %v71
    %v327 = vmul.f32 %v56, %v72
    %v328 = vmul.f32 %v57, %v73
    %v329 = vmul.f32 %v58, %v74
    %v330 = vmul.f32 %v59, %v75
    %v331 = vmul.f32 %v60, %v76
    %v332 = vmul.f32 %v61, %v77
    %v333 = vld [vmem:[%s2] sm:$0xff]
    %v334 = vld [vmem:[%s2 + $0x8] sm:$0xff]
    %v335 = vld [vmem:[%s3] sm:$0x3f]
    %v337 = vsel %vm114, %v46, 0
    %v340 = vsel %vm114, %v47, 0
    %342 = vmatprep.subr.mxu0 0.0
    %343 = vmatpush1.msra.mxu0 0.0
    %344 = vmatprep.subr.mxu0 0.0
    %345 = vmatpush1.msra.mxu0 0.0
    %346 = vmatprep.subr.mxu0 0.0
    %347 = vmatpush1.msra.mxu0 0.0
    %348 = vmatprep.subr.mxu0 0.0
    %349 = vmatpush1.msra.mxu0 0.0
    %350 = vmatprep.subr.mxu0 0.0
    %351 = vmatpush1.msra.mxu0 0.0
    %352 = vmatprep.subr.mxu0 0.0
    %353 = vmatpush1.msra.mxu0 0.0
    %354 = vmatprep.subr.mxu0 0.0
    %355 = vmatpush1.msra.mxu0 0.0
    %356 = vmatprep.subr.mxu0 0.0
    %357 = vmatpush1.msra.mxu0 0.0
    %358 = vmatprep.subr.mxu0 0.0
    %359 = vmatpush1.msra.mxu0 0.0
    %360 = vmatprep.subr.mxu0 0.0
    %361 = vmatpush1.msra.mxu0 0.0
    %362 = vmatprep.subr.mxu0 0.0
    %363 = vmatpush1.msra.mxu0 0.0
    %364 = vmatprep.subr.mxu0 0.0
    %365 = vmatpush1.msra.mxu0 0.0
    %366 = vmatprep.subr.mxu0 0.0
    %367 = vmatpush1.msra.mxu0 0.0
    %368 = vmatprep.subr.mxu0 0.0
    %369 = vmatpush1.msra.mxu0 0.0
    %370 = vmatprep.subr.mxu0 0.0
    %371 = vmatpush1.msra.mxu0 %v334
    %372 = vmatprep.subr.mxu0 0.0
    %373 = vmatpush1.msra.mxu0 %v333
    %374 = vmatprep.subr.mxu0 0.0
    %375 = vmatpush2.msra.mxu0 0.0
    %376 = vmatprep.subr.mxu0 0.0
    %377 = vmatpush2.msra.mxu0 0.0
    %378 = vmatprep.subr.mxu0 0.0
    %379 = vmatpush2.msra.mxu0 0.0
    %380 = vmatprep.subr.mxu0 0.0
    %381 = vmatpush2.msra.mxu0 0.0
    %382 = vmatprep.subr.mxu0 0.0
    %383 = vmatpush2.msra.mxu0 0.0
    %384 = vmatprep.subr.mxu0 0.0
    %385 = vmatpush2.msra.mxu0 0.0
    %386 = vmatprep.subr.mxu0 0.0
    %387 = vmatpush2.msra.mxu0 0.0
    %388 = vmatprep.subr.mxu0 0.0
    %389 = vmatpush2.msra.mxu0 0.0
    %390 = vmatprep.subr.mxu0 0.0
    %391 = vmatpush2.msra.mxu0 0.0
    %392 = vmatprep.subr.mxu0 0.0
    %393 = vmatpush2.msra.mxu0 0.0
    %394 = vmatprep.subr.mxu0 0.0
    %395 = vmatpush2.msra.mxu0 0.0
    %396 = vmatprep.subr.mxu0 0.0
    %397 = vmatpush2.msra.mxu0 0.0
    %398 = vmatprep.subr.mxu0 0.0
    %399 = vmatpush2.msra.mxu0 0.0
    %400 = vmatprep.subr.mxu0 0.0
    %401 = vmatpush2.msra.mxu0 0.0
    %402 = vmatprep.subr.mxu0 0.0
    %403 = vmatpush2.msra.mxu0 0.0
    %404 = vmatprep.subr.mxu0 0.0
    %405 = vmatpush2.msra.mxu0 0.0
    %406 = vmatprep.mubr.f32.mxu0 0.0
    %407 = vmatmul.mubr.f32.gmra.mxu0 %v337
    %v408 = vpop.f32.mrf.mxu0
    %v409 = vadd.f32 0.0, %v408
    %v410 = vpop.f32.mrf.mxu0
    %411 = vmatprep.mubr.f32.mxu0 0.0
    %412 = vmatmul.mubr.f32.gmra.mxu0 %v340
    %v413 = vpop.f32.mrf.mxu0
    %v414 = vadd.f32 0.0, %v413
    %v415 = vpop.f32.mrf.mxu0
    %416 = vdwg.mxu0
    %v418 = vsel %vm114, %v48, 0
    %v421 = vsel %vm114, %v49, 0
    %423 = vmatprep.subr.mxu0 0.0
    %424 = vmatpush1.msra.mxu0 0.0
    %425 = vmatprep.subr.mxu0 0.0
    %426 = vmatpush1.msra.mxu0 0.0
    %427 = vmatprep.subr.mxu0 0.0
    %428 = vmatpush1.msra.mxu0 0.0
    %429 = vmatprep.subr.mxu0 0.0
    %430 = vmatpush1.msra.mxu0 0.0
    %431 = vmatprep.subr.mxu0 0.0
    %432 = vmatpush1.msra.mxu0 0.0
    %433 = vmatprep.subr.mxu0 0.0
    %434 = vmatpush1.msra.mxu0 0.0
    %435 = vmatprep.subr.mxu0 0.0
    %436 = vmatpush1.msra.mxu0 0.0
    %437 = vmatprep.subr.mxu0 0.0
    %438 = vmatpush1.msra.mxu0 0.0
    %439 = vmatprep.subr.mxu0 0.0
    %440 = vmatpush1.msra.mxu0 0.0
    %441 = vmatprep.subr.mxu0 0.0
    %442 = vmatpush1.msra.mxu0 0.0
    %443 = vmatprep.subr.mxu0 0.0
    %444 = vmatpush1.msra.mxu0 0.0
    %445 = vmatprep.subr.mxu0 0.0
    %446 = vmatpush1.msra.mxu0 0.0
    %447 = vmatprep.subr.mxu0 0.0
    %448 = vmatpush1.msra.mxu0 0.0
    %449 = vmatprep.subr.mxu0 0.0
    %450 = vmatpush1.msra.mxu0 0.0
    %451 = vmatprep.subr.mxu0 0.0
    %452 = vmatpush1.msra.mxu0 %v334
    %453 = vmatprep.subr.mxu0 0.0
    %454 = vmatpush1.msra.mxu0 %v333
    %455 = vmatprep.subr.mxu0 0.0
    %456 = vmatpush2.msra.mxu0 0.0
    %457 = vmatprep.subr.mxu0 0.0
    %458 = vmatpush2.msra.mxu0 0.0
    %459 = vmatprep.subr.mxu0 0.0
    %460 = vmatpush2.msra.mxu0 0.0
    %461 = vmatprep.subr.mxu0 0.0
    %462 = vmatpush2.msra.mxu0 0.0
    %463 = vmatprep.subr.mxu0 0.0
    %464 = vmatpush2.msra.mxu0 0.0
    %465 = vmatprep.subr.mxu0 0.0
    %466 = vmatpush2.msra.mxu0 0.0
    %467 = vmatprep.subr.mxu0 0.0
    %468 = vmatpush2.msra.mxu0 0.0
    %469 = vmatprep.subr.mxu0 0.0
    %470 = vmatpush2.msra.mxu0 0.0
    %471 = vmatprep.subr.mxu0 0.0
    %472 = vmatpush2.msra.mxu0 0.0
    %473 = vmatprep.subr.mxu0 0.0
    %474 = vmatpush2.msra.mxu0 0.0
    %475 = vmatprep.subr.mxu0 0.0
    %476 = vmatpush2.msra.mxu0 0.0
    %477 = vmatprep.subr.mxu0 0.0
    %478 = vmatpush2.msra.mxu0 0.0
    %479 = vmatprep.subr.mxu0 0.0
    %480 = vmatpush2.msra.mxu0 0.0
    %481 = vmatprep.subr.mxu0 0.0
    %482 = vmatpush2.msra.mxu0 0.0
    %483 = vmatprep.subr.mxu0 0.0
    %484 = vmatpush2.msra.mxu0 0.0
    %485 = vmatprep.subr.mxu0 0.0
    %486 = vmatpush2.msra.mxu0 0.0
    %487 = vmatprep.mubr.f32.mxu0 0.0
    %488 = vmatmul.mubr.f32.gmra.mxu0 %v418
    %v489 = vpop.f32.mrf.mxu0
    %v490 = vadd.f32 0.0, %v489
    %v491 = vpop.f32.mrf.mxu0
    %492 = vmatprep.mubr.f32.mxu0 0.0
    %493 = vmatmul.mubr.f32.gmra.mxu0 %v421
    %v494 = vpop.f32.mrf.mxu0
    %v495 = vadd.f32 0.0, %v494
    %v496 = vpop.f32.mrf.mxu0
    %497 = vdwg.mxu0
    %v499 = vsel %vm114, %v50, 0
    %v502 = vsel %vm114, %v51, 0
    %504 = vmatprep.subr.mxu0 0.0
    %505 = vmatpush1.msra.mxu0 0.0
    %506 = vmatprep.subr.mxu0 0.0
    %507 = vmatpush1.msra.mxu0 0.0
    %508 = vmatprep.subr.mxu0 0.0
    %509 = vmatpush1.msra.mxu0 0.0
    %510 = vmatprep.subr.mxu0 0.0
    %511 = vmatpush1.msra.mxu0 0.0
    %512 = vmatprep.subr.mxu0 0.0
    %513 = vmatpush1.msra.mxu0 0.0
    %514 = vmatprep.subr.mxu0 0.0
    %515 = vmatpush1.msra.mxu0 0.0
    %516 = vmatprep.subr.mxu0 0.0
    %517 = vmatpush1.msra.mxu0 0.0
    %518 = vmatprep.subr.mxu0 0.0
    %519 = vmatpush1.msra.mxu0 0.0
    %520 = vmatprep.subr.mxu0 0.0
    %521 = vmatpush1.msra.mxu0 0.0
    %522 = vmatprep.subr.mxu0 0.0
    %523 = vmatpush1.msra.mxu0 0.0
    %524 = vmatprep.subr.mxu0 0.0
    %525 = vmatpush1.msra.mxu0 0.0
    %526 = vmatprep.subr.mxu0 0.0
    %527 = vmatpush1.msra.mxu0 0.0
    %528 = vmatprep.subr.mxu0 0.0
    %529 = vmatpush1.msra.mxu0 0.0
    %530 = vmatprep.subr.mxu0 0.0
    %531 = vmatpush1.msra.mxu0 0.0
    %532 = vmatprep.subr.mxu0 0.0
    %533 = vmatpush1.msra.mxu0 %v334
    %534 = vmatprep.subr.mxu0 0.0
    %535 = vmatpush1.msra.mxu0 %v333
    %536 = vmatprep.subr.mxu0 0.0
    %537 = vmatpush2.msra.mxu0 0.0
    %538 = vmatprep.subr.mxu0 0.0
    %539 = vmatpush2.msra.mxu0 0.0
    %540 = vmatprep.subr.mxu0 0.0
    %541 = vmatpush2.msra.mxu0 0.0
    %542 = vmatprep.subr.mxu0 0.0
    %543 = vmatpush2.msra.mxu0 0.0
    %544 = vmatprep.subr.mxu0 0.0
    %545 = vmatpush2.msra.mxu0 0.0
    %546 = vmatprep.subr.mxu0 0.0
    %547 = vmatpush2.msra.mxu0 0.0
    %548 = vmatprep.subr.mxu0 0.0
    %549 = vmatpush2.msra.mxu0 0.0
    %550 = vmatprep.subr.mxu0 0.0
    %551 = vmatpush2.msra.mxu0 0.0
    %552 = vmatprep.subr.mxu0 0.0
    %553 = vmatpush2.msra.mxu0 0.0
    %554 = vmatprep.subr.mxu0 0.0
    %555 = vmatpush2.msra.mxu0 0.0
    %556 = vmatprep.subr.mxu0 0.0
    %557 = vmatpush2.msra.mxu0 0.0
    %558 = vmatprep.subr.mxu0 0.0
    %559 = vmatpush2.msra.mxu0 0.0
    %560 = vmatprep.subr.mxu0 0.0
    %561 = vmatpush2.msra.mxu0 0.0
    %562 = vmatprep.subr.mxu0 0.0
    %563 = vmatpush2.msra.mxu0 0.0
    %564 = vmatprep.subr.mxu0 0.0
    %565 = vmatpush2.msra.mxu0 0.0
    %566 = vmatprep.subr.mxu0 0.0
    %567 = vmatpush2.msra.mxu0 0.0
    %568 = vmatprep.mubr.f32.mxu0 0.0
    %569 = vmatmul.mubr.f32.gmra.mxu0 %v499
    %v570 = vpop.f32.mrf.mxu0
    %v571 = vadd.f32 0.0, %v570
    %v572 = vpop.f32.mrf.mxu0
    %573 = vmatprep.mubr.f32.mxu0 0.0
    %574 = vmatmul.mubr.f32.gmra.mxu0 %v502
    %v575 = vpop.f32.mrf.mxu0
    %v576 = vadd.f32 0.0, %v575
    %v577 = vpop.f32.mrf.mxu0
    %578 = vdwg.mxu0
    %v580 = vsel %vm114, %v52, 0
    %v583 = vsel %vm114, %v53, 0
    %585 = vmatprep.subr.mxu0 0.0
    %586 = vmatpush1.msra.mxu0 0.0
    %587 = vmatprep.subr.mxu0 0.0
    %588 = vmatpush1.msra.mxu0 0.0
    %589 = vmatprep.subr.mxu0 0.0
    %590 = vmatpush1.msra.mxu0 0.0
    %591 = vmatprep.subr.mxu0 0.0
    %592 = vmatpush1.msra.mxu0 0.0
    %593 = vmatprep.subr.mxu0 0.0
    %594 = vmatpush1.msra.mxu0 0.0
    %595 = vmatprep.subr.mxu0 0.0
    %596 = vmatpush1.msra.mxu0 0.0
    %597 = vmatprep.subr.mxu0 0.0
    %598 = vmatpush1.msra.mxu0 0.0
    %599 = vmatprep.subr.mxu0 0.0
    %600 = vmatpush1.msra.mxu0 0.0
    %601 = vmatprep.subr.mxu0 0.0
    %602 = vmatpush1.msra.mxu0 0.0
    %603 = vmatprep.subr.mxu0 0.0
    %604 = vmatpush1.msra.mxu0 0.0
    %605 = vmatprep.subr.mxu0 0.0
    %606 = vmatpush1.msra.mxu0 0.0
    %607 = vmatprep.subr.mxu0 0.0
    %608 = vmatpush1.msra.mxu0 0.0
    %609 = vmatprep.subr.mxu0 0.0
    %610 = vmatpush1.msra.mxu0 0.0
    %611 = vmatprep.subr.mxu0 0.0
    %612 = vmatpush1.msra.mxu0 0.0
    %613 = vmatprep.subr.mxu0 0.0
    %614 = vmatpush1.msra.mxu0 %v334
    %615 = vmatprep.subr.mxu0 0.0
    %616 = vmatpush1.msra.mxu0 %v333
    %617 = vmatprep.subr.mxu0 0.0
    %618 = vmatpush2.msra.mxu0 0.0
    %619 = vmatprep.subr.mxu0 0.0
    %620 = vmatpush2.msra.mxu0 0.0
    %621 = vmatprep.subr.mxu0 0.0
    %622 = vmatpush2.msra.mxu0 0.0
    %623 = vmatprep.subr.mxu0 0.0
    %624 = vmatpush2.msra.mxu0 0.0
    %625 = vmatprep.subr.mxu0 0.0
    %626 = vmatpush2.msra.mxu0 0.0
    %627 = vmatprep.subr.mxu0 0.0
    %628 = vmatpush2.msra.mxu0 0.0
    %629 = vmatprep.subr.mxu0 0.0
    %630 = vmatpush2.msra.mxu0 0.0
    %631 = vmatprep.subr.mxu0 0.0
    %632 = vmatpush2.msra.mxu0 0.0
    %633 = vmatprep.subr.mxu0 0.0
    %634 = vmatpush2.msra.mxu0 0.0
    %635 = vmatprep.subr.mxu0 0.0
    %636 = vmatpush2.msra.mxu0 0.0
    %637 = vmatprep.subr.mxu0 0.0
    %638 = vmatpush2.msra.mxu0 0.0
    %639 = vmatprep.subr.mxu0 0.0
    %640 = vmatpush2.msra.mxu0 0.0
    %641 = vmatprep.subr.mxu0 0.0
    %642 = vmatpush2.msra.mxu0 0.0
    %643 = vmatprep.subr.mxu0 0.0
    %644 = vmatpush2.msra.mxu0 0.0
    %645 = vmatprep.subr.mxu0 0.0
    %646 = vmatpush2.msra.mxu0 0.0
    %647 = vmatprep.subr.mxu0 0.0
    %648 = vmatpush2.msra.mxu0 0.0
    %649 = vmatprep.mubr.f32.mxu0 0.0
    %650 = vmatmul.mubr.f32.gmra.mxu0 %v580
    %v651 = vpop.f32.mrf.mxu0
    %v652 = vadd.f32 0.0, %v651
    %v653 = vpop.f32.mrf.mxu0
    %654 = vmatprep.mubr.f32.mxu0 0.0
    %655 = vmatmul.mubr.f32.gmra.mxu0 %v583
    %v656 = vpop.f32.mrf.mxu0
    %v657 = vadd.f32 0.0, %v656
    %v658 = vpop.f32.mrf.mxu0
    %659 = vdwg.mxu0
    %v661 = vsel %vm114, %v54, 0
    %v664 = vsel %vm114, %v55, 0
    %666 = vmatprep.subr.mxu0 0.0
    %667 = vmatpush1.msra.mxu0 0.0
    %668 = vmatprep.subr.mxu0 0.0
    %669 = vmatpush1.msra.mxu0 0.0
    %670 = vmatprep.subr.mxu0 0.0
    %671 = vmatpush1.msra.mxu0 0.0
    %672 = vmatprep.subr.mxu0 0.0
    %673 = vmatpush1.msra.mxu0 0.0
    %674 = vmatprep.subr.mxu0 0.0
    %675 = vmatpush1.msra.mxu0 0.0
    %676 = vmatprep.subr.mxu0 0.0
    %677 = vmatpush1.msra.mxu0 0.0
    %678 = vmatprep.subr.mxu0 0.0
    %679 = vmatpush1.msra.mxu0 0.0
    %680 = vmatprep.subr.mxu0 0.0
    %681 = vmatpush1.msra.mxu0 0.0
    %682 = vmatprep.subr.mxu0 0.0
    %683 = vmatpush1.msra.mxu0 0.0
    %684 = vmatprep.subr.mxu0 0.0
    %685 = vmatpush1.msra.mxu0 0.0
    %686 = vmatprep.subr.mxu0 0.0
    %687 = vmatpush1.msra.mxu0 0.0
    %688 = vmatprep.subr.mxu0 0.0
    %689 = vmatpush1.msra.mxu0 0.0
    %690 = vmatprep.subr.mxu0 0.0
    %691 = vmatpush1.msra.mxu0 0.0
    %692 = vmatprep.subr.mxu0 0.0
    %693 = vmatpush1.msra.mxu0 0.0
    %694 = vmatprep.subr.mxu0 0.0
    %695 = vmatpush1.msra.mxu0 %v334
    %696 = vmatprep.subr.mxu0 0.0
    %697 = vmatpush1.msra.mxu0 %v333
    %698 = vmatprep.subr.mxu0 0.0
    %699 = vmatpush2.msra.mxu0 0.0
    %700 = vmatprep.subr.mxu0 0.0
    %701 = vmatpush2.msra.mxu0 0.0
    %702 = vmatprep.subr.mxu0 0.0
    %703 = vmatpush2.msra.mxu0 0.0
    %704 = vmatprep.subr.mxu0 0.0
    %705 = vmatpush2.msra.mxu0 0.0
    %706 = vmatprep.subr.mxu0 0.0
    %707 = vmatpush2.msra.mxu0 0.0
    %708 = vmatprep.subr.mxu0 0.0
    %709 = vmatpush2.msra.mxu0 0.0
    %710 = vmatprep.subr.mxu0 0.0
    %711 = vmatpush2.msra.mxu0 0.0
    %712 = vmatprep.subr.mxu0 0.0
    %713 = vmatpush2.msra.mxu0 0.0
    %714 = vmatprep.subr.mxu0 0.0
    %715 = vmatpush2.msra.mxu0 0.0
    %716 = vmatprep.subr.mxu0 0.0
    %717 = vmatpush2.msra.mxu0 0.0
    %718 = vmatprep.subr.mxu0 0.0
    %719 = vmatpush2.msra.mxu0 0.0
    %720 = vmatprep.subr.mxu0 0.0
    %721 = vmatpush2.msra.mxu0 0.0
    %722 = vmatprep.subr.mxu0 0.0
    %723 = vmatpush2.msra.mxu0 0.0
    %724 = vmatprep.subr.mxu0 0.0
    %725 = vmatpush2.msra.mxu0 0.0
    %726 = vmatprep.subr.mxu0 0.0
    %727 = vmatpush2.msra.mxu0 0.0
    %728 = vmatprep.subr.mxu0 0.0
    %729 = vmatpush2.msra.mxu0 0.0
    %730 = vmatprep.mubr.f32.mxu0 0.0
    %731 = vmatmul.mubr.f32.gmra.mxu0 %v661
    %v732 = vpop.f32.mrf.mxu0
    %v733 = vadd.f32 0.0, %v732
    %v734 = vpop.f32.mrf.mxu0
    %735 = vmatprep.mubr.f32.mxu0 0.0
    %736 = vmatmul.mubr.f32.gmra.mxu0 %v664
    %v737 = vpop.f32.mrf.mxu0
    %v738 = vadd.f32 0.0, %v737
    %v739 = vpop.f32.mrf.mxu0
    %740 = vdwg.mxu0
    %v742 = vsel %vm114, %v56, 0
    %v745 = vsel %vm114, %v57, 0
    %747 = vmatprep.subr.mxu0 0.0
    %748 = vmatpush1.msra.mxu0 0.0
    %749 = vmatprep.subr.mxu0 0.0
    %750 = vmatpush1.msra.mxu0 0.0
    %751 = vmatprep.subr.mxu0 0.0
    %752 = vmatpush1.msra.mxu0 0.0
    %753 = vmatprep.subr.mxu0 0.0
    %754 = vmatpush1.msra.mxu0 0.0
    %755 = vmatprep.subr.mxu0 0.0
    %756 = vmatpush1.msra.mxu0 0.0
    %757 = vmatprep.subr.mxu0 0.0
    %758 = vmatpush1.msra.mxu0 0.0
    %759 = vmatprep.subr.mxu0 0.0
    %760 = vmatpush1.msra.mxu0 0.0
    %761 = vmatprep.subr.mxu0 0.0
    %762 = vmatpush1.msra.mxu0 0.0
    %763 = vmatprep.subr.mxu0 0.0
    %764 = vmatpush1.msra.mxu0 0.0
    %765 = vmatprep.subr.mxu0 0.0
    %766 = vmatpush1.msra.mxu0 0.0
    %767 = vmatprep.subr.mxu0 0.0
    %768 = vmatpush1.msra.mxu0 0.0
    %769 = vmatprep.subr.mxu0 0.0
    %770 = vmatpush1.msra.mxu0 0.0
    %771 = vmatprep.subr.mxu0 0.0
    %772 = vmatpush1.msra.mxu0 0.0
    %773 = vmatprep.subr.mxu0 0.0
    %774 = vmatpush1.msra.mxu0 0.0
    %775 = vmatprep.subr.mxu0 0.0
    %776 = vmatpush1.msra.mxu0 %v334
    %777 = vmatprep.subr.mxu0 0.0
    %778 = vmatpush1.msra.mxu0 %v333
    %779 = vmatprep.subr.mxu0 0.0
    %780 = vmatpush2.msra.mxu0 0.0
    %781 = vmatprep.subr.mxu0 0.0
    %782 = vmatpush2.msra.mxu0 0.0
    %783 = vmatprep.subr.mxu0 0.0
    %784 = vmatpush2.msra.mxu0 0.0
    %785 = vmatprep.subr.mxu0 0.0
    %786 = vmatpush2.msra.mxu0 0.0
    %787 = vmatprep.subr.mxu0 0.0
    %788 = vmatpush2.msra.mxu0 0.0
    %789 = vmatprep.subr.mxu0 0.0
    %790 = vmatpush2.msra.mxu0 0.0
    %791 = vmatprep.subr.mxu0 0.0
    %792 = vmatpush2.msra.mxu0 0.0
    %793 = vmatprep.subr.mxu0 0.0
    %794 = vmatpush2.msra.mxu0 0.0
    %795 = vmatprep.subr.mxu0 0.0
    %796 = vmatpush2.msra.mxu0 0.0
    %797 = vmatprep.subr.mxu0 0.0
    %798 = vmatpush2.msra.mxu0 0.0
    %799 = vmatprep.subr.mxu0 0.0
    %800 = vmatpush2.msra.mxu0 0.0
    %801 = vmatprep.subr.mxu0 0.0
    %802 = vmatpush2.msra.mxu0 0.0
    %803 = vmatprep.subr.mxu0 0.0
    %804 = vmatpush2.msra.mxu0 0.0
    %805 = vmatprep.subr.mxu0 0.0
    %806 = vmatpush2.msra.mxu0 0.0
    %807 = vmatprep.subr.mxu0 0.0
    %808 = vmatpush2.msra.mxu0 0.0
    %809 = vmatprep.subr.mxu0 0.0
    %810 = vmatpush2.msra.mxu0 0.0
    %811 = vmatprep.mubr.f32.mxu0 0.0
    %812 = vmatmul.mubr.f32.gmra.mxu0 %v742
    %v813 = vpop.f32.mrf.mxu0
    %v814 = vadd.f32 0.0, %v813
    %v815 = vpop.f32.mrf.mxu0
    %816 = vmatprep.mubr.f32.mxu0 0.0
    %817 = vmatmul.mubr.f32.gmra.mxu0 %v745
    %v818 = vpop.f32.mrf.mxu0
    %v819 = vadd.f32 0.0, %v818
    %v820 = vpop.f32.mrf.mxu0
    %821 = vdwg.mxu0
    %v823 = vsel %vm114, %v58, 0
    %v826 = vsel %vm114, %v59, 0
    %828 = vmatprep.subr.mxu0 0.0
    %829 = vmatpush1.msra.mxu0 0.0
    %830 = vmatprep.subr.mxu0 0.0
    %831 = vmatpush1.msra.mxu0 0.0
    %832 = vmatprep.subr.mxu0 0.0
    %833 = vmatpush1.msra.mxu0 0.0
    %834 = vmatprep.subr.mxu0 0.0
    %835 = vmatpush1.msra.mxu0 0.0
    %836 = vmatprep.subr.mxu0 0.0
    %837 = vmatpush1.msra.mxu0 0.0
    %838 = vmatprep.subr.mxu0 0.0
    %839 = vmatpush1.msra.mxu0 0.0
    %840 = vmatprep.subr.mxu0 0.0
    %841 = vmatpush1.msra.mxu0 0.0
    %842 = vmatprep.subr.mxu0 0.0
    %843 = vmatpush1.msra.mxu0 0.0
    %844 = vmatprep.subr.mxu0 0.0
    %845 = vmatpush1.msra.mxu0 0.0
    %846 = vmatprep.subr.mxu0 0.0
    %847 = vmatpush1.msra.mxu0 0.0
    %848 = vmatprep.subr.mxu0 0.0
    %849 = vmatpush1.msra.mxu0 0.0
    %850 = vmatprep.subr.mxu0 0.0
    %851 = vmatpush1.msra.mxu0 0.0
    %852 = vmatprep.subr.mxu0 0.0
    %853 = vmatpush1.msra.mxu0 0.0
    %854 = vmatprep.subr.mxu0 0.0
    %855 = vmatpush1.msra.mxu0 0.0
    %856 = vmatprep.subr.mxu0 0.0
    %857 = vmatpush1.msra.mxu0 %v334
    %858 = vmatprep.subr.mxu0 0.0
    %859 = vmatpush1.msra.mxu0 %v333
    %860 = vmatprep.subr.mxu0 0.0
    %861 = vmatpush2.msra.mxu0 0.0
    %862 = vmatprep.subr.mxu0 0.0
    %863 = vmatpush2.msra.mxu0 0.0
    %864 = vmatprep.subr.mxu0 0.0
    %865 = vmatpush2.msra.mxu0 0.0
    %866 = vmatprep.subr.mxu0 0.0
    %867 = vmatpush2.msra.mxu0 0.0
    %868 = vmatprep.subr.mxu0 0.0
    %869 = vmatpush2.msra.mxu0 0.0
    %870 = vmatprep.subr.mxu0 0.0
    %871 = vmatpush2.msra.mxu0 0.0
    %872 = vmatprep.subr.mxu0 0.0
    %873 = vmatpush2.msra.mxu0 0.0
    %874 = vmatprep.subr.mxu0 0.0
    %875 = vmatpush2.msra.mxu0 0.0
    %876 = vmatprep.subr.mxu0 0.0
    %877 = vmatpush2.msra.mxu0 0.0
    %878 = vmatprep.subr.mxu0 0.0
    %879 = vmatpush2.msra.mxu0 0.0
    %880 = vmatprep.subr.mxu0 0.0
    %881 = vmatpush2.msra.mxu0 0.0
    %882 = vmatprep.subr.mxu0 0.0
    %883 = vmatpush2.msra.mxu0 0.0
    %884 = vmatprep.subr.mxu0 0.0
    %885 = vmatpush2.msra.mxu0 0.0
    %886 = vmatprep.subr.mxu0 0.0
    %887 = vmatpush2.msra.mxu0 0.0
    %888 = vmatprep.subr.mxu0 0.0
    %889 = vmatpush2.msra.mxu0 0.0
    %890 = vmatprep.subr.mxu0 0.0
    %891 = vmatpush2.msra.mxu0 0.0
    %892 = vmatprep.mubr.f32.mxu0 0.0
    %893 = vmatmul.mubr.f32.gmra.mxu0 %v823
    %v894 = vpop.f32.mrf.mxu0
    %v895 = vadd.f32 0.0, %v894
    %v896 = vpop.f32.mrf.mxu0
    %897 = vmatprep.mubr.f32.mxu0 0.0
    %898 = vmatmul.mubr.f32.gmra.mxu0 %v826
    %v899 = vpop.f32.mrf.mxu0
    %v900 = vadd.f32 0.0, %v899
    %v901 = vpop.f32.mrf.mxu0
    %902 = vdwg.mxu0
    %v904 = vsel %vm114, %v60, 0
    %v907 = vsel %vm114, %v61, 0
    %909 = vmatprep.subr.mxu0 0.0
    %910 = vmatpush1.msra.mxu0 0.0
    %911 = vmatprep.subr.mxu0 0.0
    %912 = vmatpush1.msra.mxu0 0.0
    %913 = vmatprep.subr.mxu0 0.0
    %914 = vmatpush1.msra.mxu0 0.0
    %915 = vmatprep.subr.mxu0 0.0
    %916 = vmatpush1.msra.mxu0 0.0
    %917 = vmatprep.subr.mxu0 0.0
    %918 = vmatpush1.msra.mxu0 0.0
    %919 = vmatprep.subr.mxu0 0.0
    %920 = vmatpush1.msra.mxu0 0.0
    %921 = vmatprep.subr.mxu0 0.0
    %922 = vmatpush1.msra.mxu0 0.0
    %923 = vmatprep.subr.mxu0 0.0
    %924 = vmatpush1.msra.mxu0 0.0
    %925 = vmatprep.subr.mxu0 0.0
    %926 = vmatpush1.msra.mxu0 0.0
    %927 = vmatprep.subr.mxu0 0.0
    %928 = vmatpush1.msra.mxu0 0.0
    %929 = vmatprep.subr.mxu0 0.0
    %930 = vmatpush1.msra.mxu0 0.0
    %931 = vmatprep.subr.mxu0 0.0
    %932 = vmatpush1.msra.mxu0 0.0
    %933 = vmatprep.subr.mxu0 0.0
    %934 = vmatpush1.msra.mxu0 0.0
    %935 = vmatprep.subr.mxu0 0.0
    %936 = vmatpush1.msra.mxu0 0.0
    %937 = vmatprep.subr.mxu0 0.0
    %938 = vmatpush1.msra.mxu0 %v334
    %939 = vmatprep.subr.mxu0 0.0
    %940 = vmatpush1.msra.mxu0 %v333
    %941 = vmatprep.subr.mxu0 0.0
    %942 = vmatpush2.msra.mxu0 0.0
    %943 = vmatprep.subr.mxu0 0.0
    %944 = vmatpush2.msra.mxu0 0.0
    %945 = vmatprep.subr.mxu0 0.0
    %946 = vmatpush2.msra.mxu0 0.0
    %947 = vmatprep.subr.mxu0 0.0
    %948 = vmatpush2.msra.mxu0 0.0
    %949 = vmatprep.subr.mxu0 0.0
    %950 = vmatpush2.msra.mxu0 0.0
    %951 = vmatprep.subr.mxu0 0.0
    %952 = vmatpush2.msra.mxu0 0.0
    %953 = vmatprep.subr.mxu0 0.0
    %954 = vmatpush2.msra.mxu0 0.0
    %955 = vmatprep.subr.mxu0 0.0
    %956 = vmatpush2.msra.mxu0 0.0
    %957 = vmatprep.subr.mxu0 0.0
    %958 = vmatpush2.msra.mxu0 0.0
    %959 = vmatprep.subr.mxu0 0.0
    %960 = vmatpush2.msra.mxu0 0.0
    %961 = vmatprep.subr.mxu0 0.0
    %962 = vmatpush2.msra.mxu0 0.0
    %963 = vmatprep.subr.mxu0 0.0
    %964 = vmatpush2.msra.mxu0 0.0
    %965 = vmatprep.subr.mxu0 0.0
    %966 = vmatpush2.msra.mxu0 0.0
    %967 = vmatprep.subr.mxu0 0.0
    %968 = vmatpush2.msra.mxu0 0.0
    %969 = vmatprep.subr.mxu0 0.0
    %970 = vmatpush2.msra.mxu0 0.0
    %971 = vmatprep.subr.mxu0 0.0
    %972 = vmatpush2.msra.mxu0 0.0
    %973 = vmatprep.mubr.f32.mxu0 0.0
    %974 = vmatmul.mubr.f32.gmra.mxu0 %v904
    %v975 = vpop.f32.mrf.mxu0
    %v976 = vadd.f32 0.0, %v975
    %v977 = vpop.f32.mrf.mxu0
    %978 = vmatprep.mubr.f32.mxu0 0.0
    %979 = vmatmul.mubr.f32.gmra.mxu0 %v907
    %v980 = vpop.f32.mrf.mxu0
    %v981 = vadd.f32 0.0, %v980
    %v982 = vpop.f32.mrf.mxu0
    %983 = vdwg.mxu0
    %v985 = vsel %vm114, %v62, 0
    %v988 = vsel %vm114, %v63, 0
    %990 = vmatprep.subr.mxu0 0.0
    %991 = vmatpush1.msra.mxu0 0.0
    %992 = vmatprep.subr.mxu0 0.0
    %993 = vmatpush1.msra.mxu0 0.0
    %994 = vmatprep.subr.mxu0 0.0
    %995 = vmatpush1.msra.mxu0 0.0
    %996 = vmatprep.subr.mxu0 0.0
    %997 = vmatpush1.msra.mxu0 0.0
    %998 = vmatprep.subr.mxu0 0.0
    %999 = vmatpush1.msra.mxu0 0.0
    %1000 = vmatprep.subr.mxu0 0.0
    %1001 = vmatpush1.msra.mxu0 0.0
    %1002 = vmatprep.subr.mxu0 0.0
    %1003 = vmatpush1.msra.mxu0 0.0
    %1004 = vmatprep.subr.mxu0 0.0
    %1005 = vmatpush1.msra.mxu0 0.0
    %1006 = vmatprep.subr.mxu0 0.0
    %1007 = vmatpush1.msra.mxu0 0.0
    %1008 = vmatprep.subr.mxu0 0.0
    %1009 = vmatpush1.msra.mxu0 0.0
    %1010 = vmatprep.subr.mxu0 0.0
    %1011 = vmatpush1.msra.mxu0 0.0
    %1012 = vmatprep.subr.mxu0 0.0
    %1013 = vmatpush1.msra.mxu0 0.0
    %1014 = vmatprep.subr.mxu0 0.0
    %1015 = vmatpush1.msra.mxu0 0.0
    %1016 = vmatprep.subr.mxu0 0.0
    %1017 = vmatpush1.msra.mxu0 0.0
    %1018 = vmatprep.subr.mxu0 0.0
    %1019 = vmatpush1.msra.mxu0 %v334
    %1020 = vmatprep.subr.mxu0 0.0
    %1021 = vmatpush1.msra.mxu0 %v333
    %1022 = vmatprep.subr.mxu0 0.0
    %1023 = vmatpush2.msra.mxu0 0.0
    %1024 = vmatprep.subr.mxu0 0.0
    %1025 = vmatpush2.msra.mxu0 0.0
    %1026 = vmatprep.subr.mxu0 0.0
    %1027 = vmatpush2.msra.mxu0 0.0
    %1028 = vmatprep.subr.mxu0 0.0
    %1029 = vmatpush2.msra.mxu0 0.0
    %1030 = vmatprep.subr.mxu0 0.0
    %1031 = vmatpush2.msra.mxu0 0.0
    %1032 = vmatprep.subr.mxu0 0.0
    %1033 = vmatpush2.msra.mxu0 0.0
    %1034 = vmatprep.subr.mxu0 0.0
    %1035 = vmatpush2.msra.mxu0 0.0
    %1036 = vmatprep.subr.mxu0 0.0
    %1037 = vmatpush2.msra.mxu0 0.0
    %1038 = vmatprep.subr.mxu0 0.0
    %1039 = vmatpush2.msra.mxu0 0.0
    %1040 = vmatprep.subr.mxu0 0.0
    %1041 = vmatpush2.msra.mxu0 0.0
    %1042 = vmatprep.subr.mxu0 0.0
    %1043 = vmatpush2.msra.mxu0 0.0
    %1044 = vmatprep.subr.mxu0 0.0
    %1045 = vmatpush2.msra.mxu0 0.0
    %1046 = vmatprep.subr.mxu0 0.0
    %1047 = vmatpush2.msra.mxu0 0.0
    %1048 = vmatprep.subr.mxu0 0.0
    %1049 = vmatpush2.msra.mxu0 0.0
    %1050 = vmatprep.subr.mxu0 0.0
    %1051 = vmatpush2.msra.mxu0 0.0
    %1052 = vmatprep.subr.mxu0 0.0
    %1053 = vmatpush2.msra.mxu0 0.0
    %1054 = vmatprep.mubr.f32.mxu0 0.0
    %1055 = vmatmul.mubr.f32.gmra.mxu0 %v985
    %v1056 = vpop.f32.mrf.mxu0
    %v1057 = vadd.f32 0.0, %v1056
    %v1058 = vpop.f32.mrf.mxu0
    %1059 = vmatprep.mubr.f32.mxu0 0.0
    %1060 = vmatmul.mubr.f32.gmra.mxu0 %v988
    %v1061 = vpop.f32.mrf.mxu0
    %v1062 = vadd.f32 0.0, %v1061
    %v1063 = vpop.f32.mrf.mxu0
    %1064 = vdwg.mxu0
    %v1066 = vsel %vm114, %v64, 0
    %v1069 = vsel %vm114, %v65, 0
    %1071 = vmatprep.subr.mxu0 0.0
    %1072 = vmatpush1.msra.mxu0 0.0
    %1073 = vmatprep.subr.mxu0 0.0
    %1074 = vmatpush1.msra.mxu0 0.0
    %1075 = vmatprep.subr.mxu0 0.0
    %1076 = vmatpush1.msra.mxu0 0.0
    %1077 = vmatprep.subr.mxu0 0.0
    %1078 = vmatpush1.msra.mxu0 0.0
    %1079 = vmatprep.subr.mxu0 0.0
    %1080 = vmatpush1.msra.mxu0 0.0
    %1081 = vmatprep.subr.mxu0 0.0
    %1082 = vmatpush1.msra.mxu0 0.0
    %1083 = vmatprep.subr.mxu0 0.0
    %1084 = vmatpush1.msra.mxu0 0.0
    %1085 = vmatprep.subr.mxu0 0.0
    %1086 = vmatpush1.msra.mxu0 0.0
    %1087 = vmatprep.subr.mxu0 0.0
    %1088 = vmatpush1.msra.mxu0 0.0
    %1089 = vmatprep.subr.mxu0 0.0
    %1090 = vmatpush1.msra.mxu0 0.0
    %1091 = vmatprep.subr.mxu0 0.0
    %1092 = vmatpush1.msra.mxu0 0.0
    %1093 = vmatprep.subr.mxu0 0.0
    %1094 = vmatpush1.msra.mxu0 0.0
    %1095 = vmatprep.subr.mxu0 0.0
    %1096 = vmatpush1.msra.mxu0 0.0
    %1097 = vmatprep.subr.mxu0 0.0
    %1098 = vmatpush1.msra.mxu0 0.0
    %1099 = vmatprep.subr.mxu0 0.0
    %1100 = vmatpush1.msra.mxu0 %v334
    %1101 = vmatprep.subr.mxu0 0.0
    %1102 = vmatpush1.msra.mxu0 %v333
    %1103 = vmatprep.subr.mxu0 0.0
    %1104 = vmatpush2.msra.mxu0 0.0
    %1105 = vmatprep.subr.mxu0 0.0
    %1106 = vmatpush2.msra.mxu0 0.0
    %1107 = vmatprep.subr.mxu0 0.0
    %1108 = vmatpush2.msra.mxu0 0.0
    %1109 = vmatprep.subr.mxu0 0.0
    %1110 = vmatpush2.msra.mxu0 0.0
    %1111 = vmatprep.subr.mxu0 0.0
    %1112 = vmatpush2.msra.mxu0 0.0
    %1113 = vmatprep.subr.mxu0 0.0
    %1114 = vmatpush2.msra.mxu0 0.0
    %1115 = vmatprep.subr.mxu0 0.0
    %1116 = vmatpush2.msra.mxu0 0.0
    %1117 = vmatprep.subr.mxu0 0.0
    %1118 = vmatpush2.msra.mxu0 0.0
    %1119 = vmatprep.subr.mxu0 0.0
    %1120 = vmatpush2.msra.mxu0 0.0
    %1121 = vmatprep.subr.mxu0 0.0
    %1122 = vmatpush2.msra.mxu0 0.0
    %1123 = vmatprep.subr.mxu0 0.0
    %1124 = vmatpush2.msra.mxu0 0.0
    %1125 = vmatprep.subr.mxu0 0.0
    %1126 = vmatpush2.msra.mxu0 0.0
    %1127 = vmatprep.subr.mxu0 0.0
    %1128 = vmatpush2.msra.mxu0 0.0
    %1129 = vmatprep.subr.mxu0 0.0
    %1130 = vmatpush2.msra.mxu0 0.0
    %1131 = vmatprep.subr.mxu0 0.0
    %1132 = vmatpush2.msra.mxu0 0.0
    %1133 = vmatprep.subr.mxu0 0.0
    %1134 = vmatpush2.msra.mxu0 0.0
    %1135 = vmatprep.mubr.f32.mxu0 0.0
    %1136 = vmatmul.mubr.f32.gmra.mxu0 %v1066
    %v1137 = vpop.f32.mrf.mxu0
    %v1138 = vadd.f32 0.0, %v1137
    %v1139 = vpop.f32.mrf.mxu0
    %1140 = vmatprep.mubr.f32.mxu0 0.0
    %1141 = vmatmul.mubr.f32.gmra.mxu0 %v1069
    %v1142 = vpop.f32.mrf.mxu0
    %v1143 = vadd.f32 0.0, %v1142
    %v1144 = vpop.f32.mrf.mxu0
    %1145 = vdwg.mxu0
    %v1147 = vsel %vm114, %v66, 0
    %v1150 = vsel %vm114, %v67, 0
    %1152 = vmatprep.subr.mxu0 0.0
    %1153 = vmatpush1.msra.mxu0 0.0
    %1154 = vmatprep.subr.mxu0 0.0
    %1155 = vmatpush1.msra.mxu0 0.0
    %1156 = vmatprep.subr.mxu0 0.0
    %1157 = vmatpush1.msra.mxu0 0.0
    %1158 = vmatprep.subr.mxu0 0.0
    %1159 = vmatpush1.msra.mxu0 0.0
    %1160 = vmatprep.subr.mxu0 0.0
    %1161 = vmatpush1.msra.mxu0 0.0
    %1162 = vmatprep.subr.mxu0 0.0
    %1163 = vmatpush1.msra.mxu0 0.0
    %1164 = vmatprep.subr.mxu0 0.0
    %1165 = vmatpush1.msra.mxu0 0.0
    %1166 = vmatprep.subr.mxu0 0.0
    %1167 = vmatpush1.msra.mxu0 0.0
    %1168 = vmatprep.subr.mxu0 0.0
    %1169 = vmatpush1.msra.mxu0 0.0
    %1170 = vmatprep.subr.mxu0 0.0
    %1171 = vmatpush1.msra.mxu0 0.0
    %1172 = vmatprep.subr.mxu0 0.0
    %1173 = vmatpush1.msra.mxu0 0.0
    %1174 = vmatprep.subr.mxu0 0.0
    %1175 = vmatpush1.msra.mxu0 0.0
    %1176 = vmatprep.subr.mxu0 0.0
    %1177 = vmatpush1.msra.mxu0 0.0
    %1178 = vmatprep.subr.mxu0 0.0
    %1179 = vmatpush1.msra.mxu0 0.0
    %1180 = vmatprep.subr.mxu0 0.0
    %1181 = vmatpush1.msra.mxu0 %v334
    %1182 = vmatprep.subr.mxu0 0.0
    %1183 = vmatpush1.msra.mxu0 %v333
    %1184 = vmatprep.subr.mxu0 0.0
    %1185 = vmatpush2.msra.mxu0 0.0
    %1186 = vmatprep.subr.mxu0 0.0
    %1187 = vmatpush2.msra.mxu0 0.0
    %1188 = vmatprep.subr.mxu0 0.0
    %1189 = vmatpush2.msra.mxu0 0.0
    %1190 = vmatprep.subr.mxu0 0.0
    %1191 = vmatpush2.msra.mxu0 0.0
    %1192 = vmatprep.subr.mxu0 0.0
    %1193 = vmatpush2.msra.mxu0 0.0
    %1194 = vmatprep.subr.mxu0 0.0
    %1195 = vmatpush2.msra.mxu0 0.0
    %1196 = vmatprep.subr.mxu0 0.0
    %1197 = vmatpush2.msra.mxu0 0.0
    %1198 = vmatprep.subr.mxu0 0.0
    %1199 = vmatpush2.msra.mxu0 0.0
    %1200 = vmatprep.subr.mxu0 0.0
    %1201 = vmatpush2.msra.mxu0 0.0
    %1202 = vmatprep.subr.mxu0 0.0
    %1203 = vmatpush2.msra.mxu0 0.0
    %1204 = vmatprep.subr.mxu0 0.0
    %1205 = vmatpush2.msra.mxu0 0.0
    %1206 = vmatprep.subr.mxu0 0.0
    %1207 = vmatpush2.msra.mxu0 0.0
    %1208 = vmatprep.subr.mxu0 0.0
    %1209 = vmatpush2.msra.mxu0 0.0
    %1210 = vmatprep.subr.mxu0 0.0
    %1211 = vmatpush2.msra.mxu0 0.0
    %1212 = vmatprep.subr.mxu0 0.0
    %1213 = vmatpush2.msra.mxu0 0.0
    %1214 = vmatprep.subr.mxu0 0.0
    %1215 = vmatpush2.msra.mxu0 0.0
    %1216 = vmatprep.mubr.f32.mxu0 0.0
    %1217 = vmatmul.mubr.f32.gmra.mxu0 %v1147
    %v1218 = vpop.f32.mrf.mxu0
    %v1219 = vadd.f32 0.0, %v1218
    %v1220 = vpop.f32.mrf.mxu0
    %1221 = vmatprep.mubr.f32.mxu0 0.0
    %1222 = vmatmul.mubr.f32.gmra.mxu0 %v1150
    %v1223 = vpop.f32.mrf.mxu0
    %v1224 = vadd.f32 0.0, %v1223
    %v1225 = vpop.f32.mrf.mxu0
    %1226 = vdwg.mxu0
    %v1228 = vsel %vm114, %v68, 0
    %v1231 = vsel %vm114, %v69, 0
    %1233 = vmatprep.subr.mxu0 0.0
    %1234 = vmatpush1.msra.mxu0 0.0
    %1235 = vmatprep.subr.mxu0 0.0
    %1236 = vmatpush1.msra.mxu0 0.0
    %1237 = vmatprep.subr.mxu0 0.0
    %1238 = vmatpush1.msra.mxu0 0.0
    %1239 = vmatprep.subr.mxu0 0.0
    %1240 = vmatpush1.msra.mxu0 0.0
    %1241 = vmatprep.subr.mxu0 0.0
    %1242 = vmatpush1.msra.mxu0 0.0
    %1243 = vmatprep.subr.mxu0 0.0
    %1244 = vmatpush1.msra.mxu0 0.0
    %1245 = vmatprep.subr.mxu0 0.0
    %1246 = vmatpush1.msra.mxu0 0.0
    %1247 = vmatprep.subr.mxu0 0.0
    %1248 = vmatpush1.msra.mxu0 0.0
    %1249 = vmatprep.subr.mxu0 0.0
    %1250 = vmatpush1.msra.mxu0 0.0
    %1251 = vmatprep.subr.mxu0 0.0
    %1252 = vmatpush1.msra.mxu0 0.0
    %1253 = vmatprep.subr.mxu0 0.0
    %1254 = vmatpush1.msra.mxu0 0.0
    %1255 = vmatprep.subr.mxu0 0.0
    %1256 = vmatpush1.msra.mxu0 0.0
    %1257 = vmatprep.subr.mxu0 0.0
    %1258 = vmatpush1.msra.mxu0 0.0
    %1259 = vmatprep.subr.mxu0 0.0
    %1260 = vmatpush1.msra.mxu0 0.0
    %1261 = vmatprep.subr.mxu0 0.0
    %1262 = vmatpush1.msra.mxu0 %v334
    %1263 = vmatprep.subr.mxu0 0.0
    %1264 = vmatpush1.msra.mxu0 %v333
    %1265 = vmatprep.subr.mxu0 0.0
    %1266 = vmatpush2.msra.mxu0 0.0
    %1267 = vmatprep.subr.mxu0 0.0
    %1268 = vmatpush2.msra.mxu0 0.0
    %1269 = vmatprep.subr.mxu0 0.0
    %1270 = vmatpush2.msra.mxu0 0.0
    %1271 = vmatprep.subr.mxu0 0.0
    %1272 = vmatpush2.msra.mxu0 0.0
    %1273 = vmatprep.subr.mxu0 0.0
    %1274 = vmatpush2.msra.mxu0 0.0
    %1275 = vmatprep.subr.mxu0 0.0
    %1276 = vmatpush2.msra.mxu0 0.0
    %1277 = vmatprep.subr.mxu0 0.0
    %1278 = vmatpush2.msra.mxu0 0.0
    %1279 = vmatprep.subr.mxu0 0.0
    %1280 = vmatpush2.msra.mxu0 0.0
    %1281 = vmatprep.subr.mxu0 0.0
    %1282 = vmatpush2.msra.mxu0 0.0
    %1283 = vmatprep.subr.mxu0 0.0
    %1284 = vmatpush2.msra.mxu0 0.0
    %1285 = vmatprep.subr.mxu0 0.0
    %1286 = vmatpush2.msra.mxu0 0.0
    %1287 = vmatprep.subr.mxu0 0.0
    %1288 = vmatpush2.msra.mxu0 0.0
    %1289 = vmatprep.subr.mxu0 0.0
    %1290 = vmatpush2.msra.mxu0 0.0
    %1291 = vmatprep.subr.mxu0 0.0
    %1292 = vmatpush2.msra.mxu0 0.0
    %1293 = vmatprep.subr.mxu0 0.0
    %1294 = vmatpush2.msra.mxu0 0.0
    %1295 = vmatprep.subr.mxu0 0.0
    %1296 = vmatpush2.msra.mxu0 0.0
    %1297 = vmatprep.mubr.f32.mxu0 0.0
    %1298 = vmatmul.mubr.f32.gmra.mxu0 %v1228
    %v1299 = vpop.f32.mrf.mxu0
    %v1300 = vadd.f32 0.0, %v1299
    %v1301 = vpop.f32.mrf.mxu0
    %1302 = vmatprep.mubr.f32.mxu0 0.0
    %1303 = vmatmul.mubr.f32.gmra.mxu0 %v1231
    %v1304 = vpop.f32.mrf.mxu0
    %v1305 = vadd.f32 0.0, %v1304
    %v1306 = vpop.f32.mrf.mxu0
    %1307 = vdwg.mxu0
    %v1309 = vsel %vm114, %v70, 0
    %v1312 = vsel %vm114, %v71, 0
    %1314 = vmatprep.subr.mxu0 0.0
    %1315 = vmatpush1.msra.mxu0 0.0
    %1316 = vmatprep.subr.mxu0 0.0
    %1317 = vmatpush1.msra.mxu0 0.0
    %1318 = vmatprep.subr.mxu0 0.0
    %1319 = vmatpush1.msra.mxu0 0.0
    %1320 = vmatprep.subr.mxu0 0.0
    %1321 = vmatpush1.msra.mxu0 0.0
    %1322 = vmatprep.subr.mxu0 0.0
    %1323 = vmatpush1.msra.mxu0 0.0
    %1324 = vmatprep.subr.mxu0 0.0
    %1325 = vmatpush1.msra.mxu0 0.0
    %1326 = vmatprep.subr.mxu0 0.0
    %1327 = vmatpush1.msra.mxu0 0.0
    %1328 = vmatprep.subr.mxu0 0.0
    %1329 = vmatpush1.msra.mxu0 0.0
    %1330 = vmatprep.subr.mxu0 0.0
    %1331 = vmatpush1.msra.mxu0 0.0
    %1332 = vmatprep.subr.mxu0 0.0
    %1333 = vmatpush1.msra.mxu0 0.0
    %1334 = vmatprep.subr.mxu0 0.0
    %1335 = vmatpush1.msra.mxu0 0.0
    %1336 = vmatprep.subr.mxu0 0.0
    %1337 = vmatpush1.msra.mxu0 0.0
    %1338 = vmatprep.subr.mxu0 0.0
    %1339 = vmatpush1.msra.mxu0 0.0
    %1340 = vmatprep.subr.mxu0 0.0
    %1341 = vmatpush1.msra.mxu0 0.0
    %1342 = vmatprep.subr.mxu0 0.0
    %1343 = vmatpush1.msra.mxu0 %v334
    %1344 = vmatprep.subr.mxu0 0.0
    %1345 = vmatpush1.msra.mxu0 %v333
    %1346 = vmatprep.subr.mxu0 0.0
    %1347 = vmatpush2.msra.mxu0 0.0
    %1348 = vmatprep.subr.mxu0 0.0
    %1349 = vmatpush2.msra.mxu0 0.0
    %1350 = vmatprep.subr.mxu0 0.0
    %1351 = vmatpush2.msra.mxu0 0.0
    %1352 = vmatprep.subr.mxu0 0.0
    %1353 = vmatpush2.msra.mxu0 0.0
    %1354 = vmatprep.subr.mxu0 0.0
    %1355 = vmatpush2.msra.mxu0 0.0
    %1356 = vmatprep.subr.mxu0 0.0
    %1357 = vmatpush2.msra.mxu0 0.0
    %1358 = vmatprep.subr.mxu0 0.0
    %1359 = vmatpush2.msra.mxu0 0.0
    %1360 = vmatprep.subr.mxu0 0.0
    %1361 = vmatpush2.msra.mxu0 0.0
    %1362 = vmatprep.subr.mxu0 0.0
    %1363 = vmatpush2.msra.mxu0 0.0
    %1364 = vmatprep.subr.mxu0 0.0
    %1365 = vmatpush2.msra.mxu0 0.0
    %1366 = vmatprep.subr.mxu0 0.0
    %1367 = vmatpush2.msra.mxu0 0.0
    %1368 = vmatprep.subr.mxu0 0.0
    %1369 = vmatpush2.msra.mxu0 0.0
    %1370 = vmatprep.subr.mxu0 0.0
    %1371 = vmatpush2.msra.mxu0 0.0
    %1372 = vmatprep.subr.mxu0 0.0
    %1373 = vmatpush2.msra.mxu0 0.0
    %1374 = vmatprep.subr.mxu0 0.0
    %1375 = vmatpush2.msra.mxu0 0.0
    %1376 = vmatprep.subr.mxu0 0.0
    %1377 = vmatpush2.msra.mxu0 0.0
    %1378 = vmatprep.mubr.f32.mxu0 0.0
    %1379 = vmatmul.mubr.f32.gmra.mxu0 %v1309
    %v1380 = vpop.f32.mrf.mxu0
    %v1381 = vadd.f32 0.0, %v1380
    %v1382 = vpop.f32.mrf.mxu0
    %1383 = vmatprep.mubr.f32.mxu0 0.0
    %1384 = vmatmul.mubr.f32.gmra.mxu0 %v1312
    %v1385 = vpop.f32.mrf.mxu0
    %v1386 = vadd.f32 0.0, %v1385
    %v1387 = vpop.f32.mrf.mxu0
    %1388 = vdwg.mxu0
    %v1390 = vsel %vm114, %v72, 0
    %v1393 = vsel %vm114, %v73, 0
    %1395 = vmatprep.subr.mxu0 0.0
    %1396 = vmatpush1.msra.mxu0 0.0
    %1397 = vmatprep.subr.mxu0 0.0
    %1398 = vmatpush1.msra.mxu0 0.0
    %1399 = vmatprep.subr.mxu0 0.0
    %1400 = vmatpush1.msra.mxu0 0.0
    %1401 = vmatprep.subr.mxu0 0.0
    %1402 = vmatpush1.msra.mxu0 0.0
    %1403 = vmatprep.subr.mxu0 0.0
    %1404 = vmatpush1.msra.mxu0 0.0
    %1405 = vmatprep.subr.mxu0 0.0
    %1406 = vmatpush1.msra.mxu0 0.0
    %1407 = vmatprep.subr.mxu0 0.0
    %1408 = vmatpush1.msra.mxu0 0.0
    %1409 = vmatprep.subr.mxu0 0.0
    %1410 = vmatpush1.msra.mxu0 0.0
    %1411 = vmatprep.subr.mxu0 0.0
    %1412 = vmatpush1.msra.mxu0 0.0
    %1413 = vmatprep.subr.mxu0 0.0
    %1414 = vmatpush1.msra.mxu0 0.0
    %1415 = vmatprep.subr.mxu0 0.0
    %1416 = vmatpush1.msra.mxu0 0.0
    %1417 = vmatprep.subr.mxu0 0.0
    %1418 = vmatpush1.msra.mxu0 0.0
    %1419 = vmatprep.subr.mxu0 0.0
    %1420 = vmatpush1.msra.mxu0 0.0
    %1421 = vmatprep.subr.mxu0 0.0
    %1422 = vmatpush1.msra.mxu0 0.0
    %1423 = vmatprep.subr.mxu0 0.0
    %1424 = vmatpush1.msra.mxu0 %v334
    %1425 = vmatprep.subr.mxu0 0.0
    %1426 = vmatpush1.msra.mxu0 %v333
    %1427 = vmatprep.subr.mxu0 0.0
    %1428 = vmatpush2.msra.mxu0 0.0
    %1429 = vmatprep.subr.mxu0 0.0
    %1430 = vmatpush2.msra.mxu0 0.0
    %1431 = vmatprep.subr.mxu0 0.0
    %1432 = vmatpush2.msra.mxu0 0.0
    %1433 = vmatprep.subr.mxu0 0.0
    %1434 = vmatpush2.msra.mxu0 0.0
    %1435 = vmatprep.subr.mxu0 0.0
    %1436 = vmatpush2.msra.mxu0 0.0
    %1437 = vmatprep.subr.mxu0 0.0
    %1438 = vmatpush2.msra.mxu0 0.0
    %1439 = vmatprep.subr.mxu0 0.0
    %1440 = vmatpush2.msra.mxu0 0.0
    %1441 = vmatprep.subr.mxu0 0.0
    %1442 = vmatpush2.msra.mxu0 0.0
    %1443 = vmatprep.subr.mxu0 0.0
    %1444 = vmatpush2.msra.mxu0 0.0
    %1445 = vmatprep.subr.mxu0 0.0
    %1446 = vmatpush2.msra.mxu0 0.0
    %1447 = vmatprep.subr.mxu0 0.0
    %1448 = vmatpush2.msra.mxu0 0.0
    %1449 = vmatprep.subr.mxu0 0.0
    %1450 = vmatpush2.msra.mxu0 0.0
    %1451 = vmatprep.subr.mxu0 0.0
    %1452 = vmatpush2.msra.mxu0 0.0
    %1453 = vmatprep.subr.mxu0 0.0
    %1454 = vmatpush2.msra.mxu0 0.0
    %1455 = vmatprep.subr.mxu0 0.0
    %1456 = vmatpush2.msra.mxu0 0.0
    %1457 = vmatprep.subr.mxu0 0.0
    %1458 = vmatpush2.msra.mxu0 0.0
    %1459 = vmatprep.mubr.f32.mxu0 0.0
    %1460 = vmatmul.mubr.f32.gmra.mxu0 %v1390
    %v1461 = vpop.f32.mrf.mxu0
    %v1462 = vadd.f32 0.0, %v1461
    %v1463 = vpop.f32.mrf.mxu0
    %1464 = vmatprep.mubr.f32.mxu0 0.0
    %1465 = vmatmul.mubr.f32.gmra.mxu0 %v1393
    %v1466 = vpop.f32.mrf.mxu0
    %v1467 = vadd.f32 0.0, %v1466
    %v1468 = vpop.f32.mrf.mxu0
    %1469 = vdwg.mxu0
    %v1471 = vsel %vm114, %v74, 0
    %v1474 = vsel %vm114, %v75, 0
    %1476 = vmatprep.subr.mxu0 0.0
    %1477 = vmatpush1.msra.mxu0 0.0
    %1478 = vmatprep.subr.mxu0 0.0
    %1479 = vmatpush1.msra.mxu0 0.0
    %1480 = vmatprep.subr.mxu0 0.0
    %1481 = vmatpush1.msra.mxu0 0.0
    %1482 = vmatprep.subr.mxu0 0.0
    %1483 = vmatpush1.msra.mxu0 0.0
    %1484 = vmatprep.subr.mxu0 0.0
    %1485 = vmatpush1.msra.mxu0 0.0
    %1486 = vmatprep.subr.mxu0 0.0
    %1487 = vmatpush1.msra.mxu0 0.0
    %1488 = vmatprep.subr.mxu0 0.0
    %1489 = vmatpush1.msra.mxu0 0.0
    %1490 = vmatprep.subr.mxu0 0.0
    %1491 = vmatpush1.msra.mxu0 0.0
    %1492 = vmatprep.subr.mxu0 0.0
    %1493 = vmatpush1.msra.mxu0 0.0
    %1494 = vmatprep.subr.mxu0 0.0
    %1495 = vmatpush1.msra.mxu0 0.0
    %1496 = vmatprep.subr.mxu0 0.0
    %1497 = vmatpush1.msra.mxu0 0.0
    %1498 = vmatprep.subr.mxu0 0.0
    %1499 = vmatpush1.msra.mxu0 0.0
    %1500 = vmatprep.subr.mxu0 0.0
    %1501 = vmatpush1.msra.mxu0 0.0
    %1502 = vmatprep.subr.mxu0 0.0
    %1503 = vmatpush1.msra.mxu0 0.0
    %1504 = vmatprep.subr.mxu0 0.0
    %1505 = vmatpush1.msra.mxu0 %v334
    %1506 = vmatprep.subr.mxu0 0.0
    %1507 = vmatpush1.msra.mxu0 %v333
    %1508 = vmatprep.subr.mxu0 0.0
    %1509 = vmatpush2.msra.mxu0 0.0
    %1510 = vmatprep.subr.mxu0 0.0
    %1511 = vmatpush2.msra.mxu0 0.0
    %1512 = vmatprep.subr.mxu0 0.0
    %1513 = vmatpush2.msra.mxu0 0.0
    %1514 = vmatprep.subr.mxu0 0.0
    %1515 = vmatpush2.msra.mxu0 0.0
    %1516 = vmatprep.subr.mxu0 0.0
    %1517 = vmatpush2.msra.mxu0 0.0
    %1518 = vmatprep.subr.mxu0 0.0
    %1519 = vmatpush2.msra.mxu0 0.0
    %1520 = vmatprep.subr.mxu0 0.0
    %1521 = vmatpush2.msra.mxu0 0.0
    %1522 = vmatprep.subr.mxu0 0.0
    %1523 = vmatpush2.msra.mxu0 0.0
    %1524 = vmatprep.subr.mxu0 0.0
    %1525 = vmatpush2.msra.mxu0 0.0
    %1526 = vmatprep.subr.mxu0 0.0
    %1527 = vmatpush2.msra.mxu0 0.0
    %1528 = vmatprep.subr.mxu0 0.0
    %1529 = vmatpush2.msra.mxu0 0.0
    %1530 = vmatprep.subr.mxu0 0.0
    %1531 = vmatpush2.msra.mxu0 0.0
    %1532 = vmatprep.subr.mxu0 0.0
    %1533 = vmatpush2.msra.mxu0 0.0
    %1534 = vmatprep.subr.mxu0 0.0
    %1535 = vmatpush2.msra.mxu0 0.0
    %1536 = vmatprep.subr.mxu0 0.0
    %1537 = vmatpush2.msra.mxu0 0.0
    %1538 = vmatprep.subr.mxu0 0.0
    %1539 = vmatpush2.msra.mxu0 0.0
    %1540 = vmatprep.mubr.f32.mxu0 0.0
    %1541 = vmatmul.mubr.f32.gmra.mxu0 %v1471
    %v1542 = vpop.f32.mrf.mxu0
    %v1543 = vadd.f32 0.0, %v1542
    %v1544 = vpop.f32.mrf.mxu0
    %1545 = vmatprep.mubr.f32.mxu0 0.0
    %1546 = vmatmul.mubr.f32.gmra.mxu0 %v1474
    %v1547 = vpop.f32.mrf.mxu0
    %v1548 = vadd.f32 0.0, %v1547
    %v1549 = vpop.f32.mrf.mxu0
    %1550 = vdwg.mxu0
    %v1552 = vsel %vm114, %v76, 0
    %v1555 = vsel %vm114, %v77, 0
    %1557 = vmatprep.subr.mxu0 0.0
    %1558 = vmatpush1.msra.mxu0 0.0
    %1559 = vmatprep.subr.mxu0 0.0
    %1560 = vmatpush1.msra.mxu0 0.0
    %1561 = vmatprep.subr.mxu0 0.0
    %1562 = vmatpush1.msra.mxu0 0.0
    %1563 = vmatprep.subr.mxu0 0.0
    %1564 = vmatpush1.msra.mxu0 0.0
    %1565 = vmatprep.subr.mxu0 0.0
    %1566 = vmatpush1.msra.mxu0 0.0
    %1567 = vmatprep.subr.mxu0 0.0
    %1568 = vmatpush1.msra.mxu0 0.0
    %1569 = vmatprep.subr.mxu0 0.0
    %1570 = vmatpush1.msra.mxu0 0.0
    %1571 = vmatprep.subr.mxu0 0.0
    %1572 = vmatpush1.msra.mxu0 0.0
    %1573 = vmatprep.subr.mxu0 0.0
    %1574 = vmatpush1.msra.mxu0 0.0
    %1575 = vmatprep.subr.mxu0 0.0
    %1576 = vmatpush1.msra.mxu0 0.0
    %1577 = vmatprep.subr.mxu0 0.0
    %1578 = vmatpush1.msra.mxu0 0.0
    %1579 = vmatprep.subr.mxu0 0.0
    %1580 = vmatpush1.msra.mxu0 0.0
    %1581 = vmatprep.subr.mxu0 0.0
    %1582 = vmatpush1.msra.mxu0 0.0
    %1583 = vmatprep.subr.mxu0 0.0
    %1584 = vmatpush1.msra.mxu0 0.0
    %1585 = vmatprep.subr.mxu0 0.0
    %1586 = vmatpush1.msra.mxu0 %v334
    %1587 = vmatprep.subr.mxu0 0.0
    %1588 = vmatpush1.msra.mxu0 %v333
    %1589 = vmatprep.subr.mxu0 0.0
    %1590 = vmatpush2.msra.mxu0 0.0
    %1591 = vmatprep.subr.mxu0 0.0
    %1592 = vmatpush2.msra.mxu0 0.0
    %1593 = vmatprep.subr.mxu0 0.0
    %1594 = vmatpush2.msra.mxu0 0.0
    %1595 = vmatprep.subr.mxu0 0.0
    %1596 = vmatpush2.msra.mxu0 0.0
    %1597 = vmatprep.subr.mxu0 0.0
    %1598 = vmatpush2.msra.mxu0 0.0
    %1599 = vmatprep.subr.mxu0 0.0
    %1600 = vmatpush2.msra.mxu0 0.0
    %1601 = vmatprep.subr.mxu0 0.0
    %1602 = vmatpush2.msra.mxu0 0.0
    %1603 = vmatprep.subr.mxu0 0.0
    %1604 = vmatpush2.msra.mxu0 0.0
    %1605 = vmatprep.subr.mxu0 0.0
    %1606 = vmatpush2.msra.mxu0 0.0
    %1607 = vmatprep.subr.mxu0 0.0
    %1608 = vmatpush2.msra.mxu0 0.0
    %1609 = vmatprep.subr.mxu0 0.0
    %1610 = vmatpush2.msra.mxu0 0.0
    %1611 = vmatprep.subr.mxu0 0.0
    %1612 = vmatpush2.msra.mxu0 0.0
    %1613 = vmatprep.subr.mxu0 0.0
    %1614 = vmatpush2.msra.mxu0 0.0
    %1615 = vmatprep.subr.mxu0 0.0
    %1616 = vmatpush2.msra.mxu0 0.0
    %1617 = vmatprep.subr.mxu0 0.0
    %1618 = vmatpush2.msra.mxu0 0.0
    %1619 = vmatprep.subr.mxu0 0.0
    %1620 = vmatpush2.msra.mxu0 0.0
    %1621 = vmatprep.mubr.f32.mxu0 0.0
    %1622 = vmatmul.mubr.f32.gmra.mxu0 %v1552
    %v1623 = vpop.f32.mrf.mxu0
    %v1624 = vadd.f32 0.0, %v1623
    %v1625 = vpop.f32.mrf.mxu0
    %1626 = vmatprep.mubr.f32.mxu0 0.0
    %1627 = vmatmul.mubr.f32.gmra.mxu0 %v1555
    %v1628 = vpop.f32.mrf.mxu0
    %v1629 = vadd.f32 0.0, %v1628
    %v1630 = vpop.f32.mrf.mxu0
    %1631 = vdwg.mxu0
    %v1633 = vsel %vm114, %v285, 0
    %v1636 = vsel %vm114, %v286, 0
    %1638 = vmatprep.subr.mxu0 0.0
    %1639 = vmatpush1.msra.mxu0 0.0
    %1640 = vmatprep.subr.mxu0 0.0
    %1641 = vmatpush1.msra.mxu0 0.0
    %1642 = vmatprep.subr.mxu0 0.0
    %1643 = vmatpush1.msra.mxu0 0.0
    %1644 = vmatprep.subr.mxu0 0.0
    %1645 = vmatpush1.msra.mxu0 0.0
    %1646 = vmatprep.subr.mxu0 0.0
    %1647 = vmatpush1.msra.mxu0 0.0
    %1648 = vmatprep.subr.mxu0 0.0
    %1649 = vmatpush1.msra.mxu0 0.0
    %1650 = vmatprep.subr.mxu0 0.0
    %1651 = vmatpush1.msra.mxu0 0.0
    %1652 = vmatprep.subr.mxu0 0.0
    %1653 = vmatpush1.msra.mxu0 0.0
    %1654 = vmatprep.subr.mxu0 0.0
    %1655 = vmatpush1.msra.mxu0 0.0
    %1656 = vmatprep.subr.mxu0 0.0
    %1657 = vmatpush1.msra.mxu0 0.0
    %1658 = vmatprep.subr.mxu0 0.0
    %1659 = vmatpush1.msra.mxu0 0.0
    %1660 = vmatprep.subr.mxu0 0.0
    %1661 = vmatpush1.msra.mxu0 0.0
    %1662 = vmatprep.subr.mxu0 0.0
    %1663 = vmatpush1.msra.mxu0 0.0
    %1664 = vmatprep.subr.mxu0 0.0
    %1665 = vmatpush1.msra.mxu0 0.0
    %1666 = vmatprep.subr.mxu0 0.0
    %1667 = vmatpush1.msra.mxu0 %v334
    %1668 = vmatprep.subr.mxu0 0.0
    %1669 = vmatpush1.msra.mxu0 %v333
    %1670 = vmatprep.subr.mxu0 0.0
    %1671 = vmatpush2.msra.mxu0 0.0
    %1672 = vmatprep.subr.mxu0 0.0
    %1673 = vmatpush2.msra.mxu0 0.0
    %1674 = vmatprep.subr.mxu0 0.0
    %1675 = vmatpush2.msra.mxu0 0.0
    %1676 = vmatprep.subr.mxu0 0.0
    %1677 = vmatpush2.msra.mxu0 0.0
    %1678 = vmatprep.subr.mxu0 0.0
    %1679 = vmatpush2.msra.mxu0 0.0
    %1680 = vmatprep.subr.mxu0 0.0
    %1681 = vmatpush2.msra.mxu0 0.0
    %1682 = vmatprep.subr.mxu0 0.0
    %1683 = vmatpush2.msra.mxu0 0.0
    %1684 = vmatprep.subr.mxu0 0.0
    %1685 = vmatpush2.msra.mxu0 0.0
    %1686 = vmatprep.subr.mxu0 0.0
    %1687 = vmatpush2.msra.mxu0 0.0
    %1688 = vmatprep.subr.mxu0 0.0
    %1689 = vmatpush2.msra.mxu0 0.0
    %1690 = vmatprep.subr.mxu0 0.0
    %1691 = vmatpush2.msra.mxu0 0.0
    %1692 = vmatprep.subr.mxu0 0.0
    %1693 = vmatpush2.msra.mxu0 0.0
    %1694 = vmatprep.subr.mxu0 0.0
    %1695 = vmatpush2.msra.mxu0 0.0
    %1696 = vmatprep.subr.mxu0 0.0
    %1697 = vmatpush2.msra.mxu0 0.0
    %1698 = vmatprep.subr.mxu0 0.0
    %1699 = vmatpush2.msra.mxu0 0.0
    %1700 = vmatprep.subr.mxu0 0.0
    %1701 = vmatpush2.msra.mxu0 0.0
    %1702 = vmatprep.mubr.f32.mxu0 0.0
    %1703 = vmatmul.mubr.f32.gmra.mxu0 %v1633
    %v1704 = vpop.f32.mrf.mxu0
    %v1705 = vadd.f32 0.0, %v1704
    %v1706 = vpop.f32.mrf.mxu0
    %1707 = vmatprep.mubr.f32.mxu0 0.0
    %1708 = vmatmul.mubr.f32.gmra.mxu0 %v1636
    %v1709 = vpop.f32.mrf.mxu0
    %v1710 = vadd.f32 0.0, %v1709
    %v1711 = vpop.f32.mrf.mxu0
    %1712 = vdwg.mxu0
    %v1714 = vsel %vm114, %v287, 0
    %v1717 = vsel %vm114, %v288, 0
    %1719 = vmatprep.subr.mxu0 0.0
    %1720 = vmatpush1.msra.mxu0 0.0
    %1721 = vmatprep.subr.mxu0 0.0
    %1722 = vmatpush1.msra.mxu0 0.0
    %1723 = vmatprep.subr.mxu0 0.0
    %1724 = vmatpush1.msra.mxu0 0.0
    %1725 = vmatprep.subr.mxu0 0.0
    %1726 = vmatpush1.msra.mxu0 0.0
    %1727 = vmatprep.subr.mxu0 0.0
    %1728 = vmatpush1.msra.mxu0 0.0
    %1729 = vmatprep.subr.mxu0 0.0
    %1730 = vmatpush1.msra.mxu0 0.0
    %1731 = vmatprep.subr.mxu0 0.0
    %1732 = vmatpush1.msra.mxu0 0.0
    %1733 = vmatprep.subr.mxu0 0.0
    %1734 = vmatpush1.msra.mxu0 0.0
    %1735 = vmatprep.subr.mxu0 0.0
    %1736 = vmatpush1.msra.mxu0 0.0
    %1737 = vmatprep.subr.mxu0 0.0
    %1738 = vmatpush1.msra.mxu0 0.0
    %1739 = vmatprep.subr.mxu0 0.0
    %1740 = vmatpush1.msra.mxu0 0.0
    %1741 = vmatprep.subr.mxu0 0.0
    %1742 = vmatpush1.msra.mxu0 0.0
    %1743 = vmatprep.subr.mxu0 0.0
    %1744 = vmatpush1.msra.mxu0 0.0
    %1745 = vmatprep.subr.mxu0 0.0
    %1746 = vmatpush1.msra.mxu0 0.0
    %1747 = vmatprep.subr.mxu0 0.0
    %1748 = vmatpush1.msra.mxu0 %v334
    %1749 = vmatprep.subr.mxu0 0.0
    %1750 = vmatpush1.msra.mxu0 %v333
    %1751 = vmatprep.subr.mxu0 0.0
    %1752 = vmatpush2.msra.mxu0 0.0
    %1753 = vmatprep.subr.mxu0 0.0
    %1754 = vmatpush2.msra.mxu0 0.0
    %1755 = vmatprep.subr.mxu0 0.0
    %1756 = vmatpush2.msra.mxu0 0.0
    %1757 = vmatprep.subr.mxu0 0.0
    %1758 = vmatpush2.msra.mxu0 0.0
    %1759 = vmatprep.subr.mxu0 0.0
    %1760 = vmatpush2.msra.mxu0 0.0
    %1761 = vmatprep.subr.mxu0 0.0
    %1762 = vmatpush2.msra.mxu0 0.0
    %1763 = vmatprep.subr.mxu0 0.0
    %1764 = vmatpush2.msra.mxu0 0.0
    %1765 = vmatprep.subr.mxu0 0.0
    %1766 = vmatpush2.msra.mxu0 0.0
    %1767 = vmatprep.subr.mxu0 0.0
    %1768 = vmatpush2.msra.mxu0 0.0
    %1769 = vmatprep.subr.mxu0 0.0
    %1770 = vmatpush2.msra.mxu0 0.0
    %1771 = vmatprep.subr.mxu0 0.0
    %1772 = vmatpush2.msra.mxu0 0.0
    %1773 = vmatprep.subr.mxu0 0.0
    %1774 = vmatpush2.msra.mxu0 0.0
    %1775 = vmatprep.subr.mxu0 0.0
    %1776 = vmatpush2.msra.mxu0 0.0
    %1777 = vmatprep.subr.mxu0 0.0
    %1778 = vmatpush2.msra.mxu0 0.0
    %1779 = vmatprep.subr.mxu0 0.0
    %1780 = vmatpush2.msra.mxu0 0.0
    %1781 = vmatprep.subr.mxu0 0.0
    %1782 = vmatpush2.msra.mxu0 0.0
    %1783 = vmatprep.mubr.f32.mxu0 0.0
    %1784 = vmatmul.mubr.f32.gmra.mxu0 %v1714
    %v1785 = vpop.f32.mrf.mxu0
    %v1786 = vadd.f32 0.0, %v1785
    %v1787 = vpop.f32.mrf.mxu0
    %1788 = vmatprep.mubr.f32.mxu0 0.0
    %1789 = vmatmul.mubr.f32.gmra.mxu0 %v1717
    %v1790 = vpop.f32.mrf.mxu0
    %v1791 = vadd.f32 0.0, %v1790
    %v1792 = vpop.f32.mrf.mxu0
    %1793 = vdwg.mxu0
    %v1795 = vsel %vm114, %v289, 0
    %v1798 = vsel %vm114, %v290, 0
    %1800 = vmatprep.subr.mxu0 0.0
    %1801 = vmatpush1.msra.mxu0 0.0
    %1802 = vmatprep.subr.mxu0 0.0
    %1803 = vmatpush1.msra.mxu0 0.0
    %1804 = vmatprep.subr.mxu0 0.0
    %1805 = vmatpush1.msra.mxu0 0.0
    %1806 = vmatprep.subr.mxu0 0.0
    %1807 = vmatpush1.msra.mxu0 0.0
    %1808 = vmatprep.subr.mxu0 0.0
    %1809 = vmatpush1.msra.mxu0 0.0
    %1810 = vmatprep.subr.mxu0 0.0
    %1811 = vmatpush1.msra.mxu0 0.0
    %1812 = vmatprep.subr.mxu0 0.0
    %1813 = vmatpush1.msra.mxu0 0.0
    %1814 = vmatprep.subr.mxu0 0.0
    %1815 = vmatpush1.msra.mxu0 0.0
    %1816 = vmatprep.subr.mxu0 0.0
    %1817 = vmatpush1.msra.mxu0 0.0
    %1818 = vmatprep.subr.mxu0 0.0
    %1819 = vmatpush1.msra.mxu0 0.0
    %1820 = vmatprep.subr.mxu0 0.0
    %1821 = vmatpush1.msra.mxu0 0.0
    %1822 = vmatprep.subr.mxu0 0.0
    %1823 = vmatpush1.msra.mxu0 0.0
    %1824 = vmatprep.subr.mxu0 0.0
    %1825 = vmatpush1.msra.mxu0 0.0
    %1826 = vmatprep.subr.mxu0 0.0
    %1827 = vmatpush1.msra.mxu0 0.0
    %1828 = vmatprep.subr.mxu0 0.0
    %1829 = vmatpush1.msra.mxu0 %v334
    %1830 = vmatprep.subr.mxu0 0.0
    %1831 = vmatpush1.msra.mxu0 %v333
    %1832 = vmatprep.subr.mxu0 0.0
    %1833 = vmatpush2.msra.mxu0 0.0
    %1834 = vmatprep.subr.mxu0 0.0
    %1835 = vmatpush2.msra.mxu0 0.0
    %1836 = vmatprep.subr.mxu0 0.0
    %1837 = vmatpush2.msra.mxu0 0.0
    %1838 = vmatprep.subr.mxu0 0.0
    %1839 = vmatpush2.msra.mxu0 0.0
    %1840 = vmatprep.subr.mxu0 0.0
    %1841 = vmatpush2.msra.mxu0 0.0
    %1842 = vmatprep.subr.mxu0 0.0
    %1843 = vmatpush2.msra.mxu0 0.0
    %1844 = vmatprep.subr.mxu0 0.0
    %1845 = vmatpush2.msra.mxu0 0.0
    %1846 = vmatprep.subr.mxu0 0.0
    %1847 = vmatpush2.msra.mxu0 0.0
    %1848 = vmatprep.subr.mxu0 0.0
    %1849 = vmatpush2.msra.mxu0 0.0
    %1850 = vmatprep.subr.mxu0 0.0
    %1851 = vmatpush2.msra.mxu0 0.0
    %1852 = vmatprep.subr.mxu0 0.0
    %1853 = vmatpush2.msra.mxu0 0.0
    %1854 = vmatprep.subr.mxu0 0.0
    %1855 = vmatpush2.msra.mxu0 0.0
    %1856 = vmatprep.subr.mxu0 0.0
    %1857 = vmatpush2.msra.mxu0 0.0
    %1858 = vmatprep.subr.mxu0 0.0
    %1859 = vmatpush2.msra.mxu0 0.0
    %1860 = vmatprep.subr.mxu0 0.0
    %1861 = vmatpush2.msra.mxu0 0.0
    %1862 = vmatprep.subr.mxu0 0.0
    %1863 = vmatpush2.msra.mxu0 0.0
    %1864 = vmatprep.mubr.f32.mxu0 0.0
    %1865 = vmatmul.mubr.f32.gmra.mxu0 %v1795
    %v1866 = vpop.f32.mrf.mxu0
    %v1867 = vadd.f32 0.0, %v1866
    %v1868 = vpop.f32.mrf.mxu0
    %1869 = vmatprep.mubr.f32.mxu0 0.0
    %1870 = vmatmul.mubr.f32.gmra.mxu0 %v1798
    %v1871 = vpop.f32.mrf.mxu0
    %v1872 = vadd.f32 0.0, %v1871
    %v1873 = vpop.f32.mrf.mxu0
    %1874 = vdwg.mxu0
    %v1876 = vsel %vm114, %v291, 0
    %v1879 = vsel %vm114, %v292, 0
    %1881 = vmatprep.subr.mxu0 0.0
    %1882 = vmatpush1.msra.mxu0 0.0
    %1883 = vmatprep.subr.mxu0 0.0
    %1884 = vmatpush1.msra.mxu0 0.0
    %1885 = vmatprep.subr.mxu0 0.0
    %1886 = vmatpush1.msra.mxu0 0.0
    %1887 = vmatprep.subr.mxu0 0.0
    %1888 = vmatpush1.msra.mxu0 0.0
    %1889 = vmatprep.subr.mxu0 0.0
    %1890 = vmatpush1.msra.mxu0 0.0
    %1891 = vmatprep.subr.mxu0 0.0
    %1892 = vmatpush1.msra.mxu0 0.0
    %1893 = vmatprep.subr.mxu0 0.0
    %1894 = vmatpush1.msra.mxu0 0.0
    %1895 = vmatprep.subr.mxu0 0.0
    %1896 = vmatpush1.msra.mxu0 0.0
    %1897 = vmatprep.subr.mxu0 0.0
    %1898 = vmatpush1.msra.mxu0 0.0
    %1899 = vmatprep.subr.mxu0 0.0
    %1900 = vmatpush1.msra.mxu0 0.0
    %1901 = vmatprep.subr.mxu0 0.0
    %1902 = vmatpush1.msra.mxu0 0.0
    %1903 = vmatprep.subr.mxu0 0.0
    %1904 = vmatpush1.msra.mxu0 0.0
    %1905 = vmatprep.subr.mxu0 0.0
    %1906 = vmatpush1.msra.mxu0 0.0
    %1907 = vmatprep.subr.mxu0 0.0
    %1908 = vmatpush1.msra.mxu0 0.0
    %1909 = vmatprep.subr.mxu0 0.0
    %1910 = vmatpush1.msra.mxu0 %v334
    %1911 = vmatprep.subr.mxu0 0.0
    %1912 = vmatpush1.msra.mxu0 %v333
    %1913 = vmatprep.subr.mxu0 0.0
    %1914 = vmatpush2.msra.mxu0 0.0
    %1915 = vmatprep.subr.mxu0 0.0
    %1916 = vmatpush2.msra.mxu0 0.0
    %1917 = vmatprep.subr.mxu0 0.0
    %1918 = vmatpush2.msra.mxu0 0.0
    %1919 = vmatprep.subr.mxu0 0.0
    %1920 = vmatpush2.msra.mxu0 0.0
    %1921 = vmatprep.subr.mxu0 0.0
    %1922 = vmatpush2.msra.mxu0 0.0
    %1923 = vmatprep.subr.mxu0 0.0
    %1924 = vmatpush2.msra.mxu0 0.0
    %1925 = vmatprep.subr.mxu0 0.0
    %1926 = vmatpush2.msra.mxu0 0.0
    %1927 = vmatprep.subr.mxu0 0.0
    %1928 = vmatpush2.msra.mxu0 0.0
    %1929 = vmatprep.subr.mxu0 0.0
    %1930 = vmatpush2.msra.mxu0 0.0
    %1931 = vmatprep.subr.mxu0 0.0
    %1932 = vmatpush2.msra.mxu0 0.0
    %1933 = vmatprep.subr.mxu0 0.0
    %1934 = vmatpush2.msra.mxu0 0.0
    %1935 = vmatprep.subr.mxu0 0.0
    %1936 = vmatpush2.msra.mxu0 0.0
    %1937 = vmatprep.subr.mxu0 0.0
    %1938 = vmatpush2.msra.mxu0 0.0
    %1939 = vmatprep.subr.mxu0 0.0
    %1940 = vmatpush2.msra.mxu0 0.0
    %1941 = vmatprep.subr.mxu0 0.0
    %1942 = vmatpush2.msra.mxu0 0.0
    %1943 = vmatprep.subr.mxu0 0.0
    %1944 = vmatpush2.msra.mxu0 0.0
    %1945 = vmatprep.mubr.f32.mxu0 0.0
    %1946 = vmatmul.mubr.f32.gmra.mxu0 %v1876
    %v1947 = vpop.f32.mrf.mxu0
    %v1948 = vadd.f32 0.0, %v1947
    %v1949 = vpop.f32.mrf.mxu0
    %1950 = vmatprep.mubr.f32.mxu0 0.0
    %1951 = vmatmul.mubr.f32.gmra.mxu0 %v1879
    %v1952 = vpop.f32.mrf.mxu0
    %v1953 = vadd.f32 0.0, %v1952
    %v1954 = vpop.f32.mrf.mxu0
    %1955 = vdwg.mxu0
    %v1957 = vsel %vm114, %v293, 0
    %v1960 = vsel %vm114, %v294, 0
    %1962 = vmatprep.subr.mxu0 0.0
    %1963 = vmatpush1.msra.mxu0 0.0
    %1964 = vmatprep.subr.mxu0 0.0
    %1965 = vmatpush1.msra.mxu0 0.0
    %1966 = vmatprep.subr.mxu0 0.0
    %1967 = vmatpush1.msra.mxu0 0.0
    %1968 = vmatprep.subr.mxu0 0.0
    %1969 = vmatpush1.msra.mxu0 0.0
    %1970 = vmatprep.subr.mxu0 0.0
    %1971 = vmatpush1.msra.mxu0 0.0
    %1972 = vmatprep.subr.mxu0 0.0
    %1973 = vmatpush1.msra.mxu0 0.0
    %1974 = vmatprep.subr.mxu0 0.0
    %1975 = vmatpush1.msra.mxu0 0.0
    %1976 = vmatprep.subr.mxu0 0.0
    %1977 = vmatpush1.msra.mxu0 0.0
    %1978 = vmatprep.subr.mxu0 0.0
    %1979 = vmatpush1.msra.mxu0 0.0
    %1980 = vmatprep.subr.mxu0 0.0
    %1981 = vmatpush1.msra.mxu0 0.0
    %1982 = vmatprep.subr.mxu0 0.0
    %1983 = vmatpush1.msra.mxu0 0.0
    %1984 = vmatprep.subr.mxu0 0.0
    %1985 = vmatpush1.msra.mxu0 0.0
    %1986 = vmatprep.subr.mxu0 0.0
    %1987 = vmatpush1.msra.mxu0 0.0
    %1988 = vmatprep.subr.mxu0 0.0
    %1989 = vmatpush1.msra.mxu0 0.0
    %1990 = vmatprep.subr.mxu0 0.0
    %1991 = vmatpush1.msra.mxu0 %v334
    %1992 = vmatprep.subr.mxu0 0.0
    %1993 = vmatpush1.msra.mxu0 %v333
    %1994 = vmatprep.subr.mxu0 0.0
    %1995 = vmatpush2.msra.mxu0 0.0
    %1996 = vmatprep.subr.mxu0 0.0
    %1997 = vmatpush2.msra.mxu0 0.0
    %1998 = vmatprep.subr.mxu0 0.0
    %1999 = vmatpush2.msra.mxu0 0.0
    %2000 = vmatprep.subr.mxu0 0.0
    %2001 = vmatpush2.msra.mxu0 0.0
    %2002 = vmatprep.subr.mxu0 0.0
    %2003 = vmatpush2.msra.mxu0 0.0
    %2004 = vmatprep.subr.mxu0 0.0
    %2005 = vmatpush2.msra.mxu0 0.0
    %2006 = vmatprep.subr.mxu0 0.0
    %2007 = vmatpush2.msra.mxu0 0.0
    %2008 = vmatprep.subr.mxu0 0.0
    %2009 = vmatpush2.msra.mxu0 0.0
    %2010 = vmatprep.subr.mxu0 0.0
    %2011 = vmatpush2.msra.mxu0 0.0
    %2012 = vmatprep.subr.mxu0 0.0
    %2013 = vmatpush2.msra.mxu0 0.0
    %2014 = vmatprep.subr.mxu0 0.0
    %2015 = vmatpush2.msra.mxu0 0.0
    %2016 = vmatprep.subr.mxu0 0.0
    %2017 = vmatpush2.msra.mxu0 0.0
    %2018 = vmatprep.subr.mxu0 0.0
    %2019 = vmatpush2.msra.mxu0 0.0
    %2020 = vmatprep.subr.mxu0 0.0
    %2021 = vmatpush2.msra.mxu0 0.0
    %2022 = vmatprep.subr.mxu0 0.0
    %2023 = vmatpush2.msra.mxu0 0.0
    %2024 = vmatprep.subr.mxu0 0.0
    %2025 = vmatpush2.msra.mxu0 0.0
    %2026 = vmatprep.mubr.f32.mxu0 0.0
    %2027 = vmatmul.mubr.f32.gmra.mxu0 %v1957
    %v2028 = vpop.f32.mrf.mxu0
    %v2029 = vadd.f32 0.0, %v2028
    %v2030 = vpop.f32.mrf.mxu0
    %2031 = vmatprep.mubr.f32.mxu0 0.0
    %2032 = vmatmul.mubr.f32.gmra.mxu0 %v1960
    %v2033 = vpop.f32.mrf.mxu0
    %v2034 = vadd.f32 0.0, %v2033
    %v2035 = vpop.f32.mrf.mxu0
    %2036 = vdwg.mxu0
    %v2038 = vsel %vm114, %v295, 0
    %v2041 = vsel %vm114, %v296, 0
    %2043 = vmatprep.subr.mxu0 0.0
    %2044 = vmatpush1.msra.mxu0 0.0
    %2045 = vmatprep.subr.mxu0 0.0
    %2046 = vmatpush1.msra.mxu0 0.0
    %2047 = vmatprep.subr.mxu0 0.0
    %2048 = vmatpush1.msra.mxu0 0.0
    %2049 = vmatprep.subr.mxu0 0.0
    %2050 = vmatpush1.msra.mxu0 0.0
    %2051 = vmatprep.subr.mxu0 0.0
    %2052 = vmatpush1.msra.mxu0 0.0
    %2053 = vmatprep.subr.mxu0 0.0
    %2054 = vmatpush1.msra.mxu0 0.0
    %2055 = vmatprep.subr.mxu0 0.0
    %2056 = vmatpush1.msra.mxu0 0.0
    %2057 = vmatprep.subr.mxu0 0.0
    %2058 = vmatpush1.msra.mxu0 0.0
    %2059 = vmatprep.subr.mxu0 0.0
    %2060 = vmatpush1.msra.mxu0 0.0
    %2061 = vmatprep.subr.mxu0 0.0
    %2062 = vmatpush1.msra.mxu0 0.0
    %2063 = vmatprep.subr.mxu0 0.0
    %2064 = vmatpush1.msra.mxu0 0.0
    %2065 = vmatprep.subr.mxu0 0.0
    %2066 = vmatpush1.msra.mxu0 0.0
    %2067 = vmatprep.subr.mxu0 0.0
    %2068 = vmatpush1.msra.mxu0 0.0
    %2069 = vmatprep.subr.mxu0 0.0
    %2070 = vmatpush1.msra.mxu0 0.0
    %2071 = vmatprep.subr.mxu0 0.0
    %2072 = vmatpush1.msra.mxu0 %v334
    %2073 = vmatprep.subr.mxu0 0.0
    %2074 = vmatpush1.msra.mxu0 %v333
    %2075 = vmatprep.subr.mxu0 0.0
    %2076 = vmatpush2.msra.mxu0 0.0
    %2077 = vmatprep.subr.mxu0 0.0
    %2078 = vmatpush2.msra.mxu0 0.0
    %2079 = vmatprep.subr.mxu0 0.0
    %2080 = vmatpush2.msra.mxu0 0.0
    %2081 = vmatprep.subr.mxu0 0.0
    %2082 = vmatpush2.msra.mxu0 0.0
    %2083 = vmatprep.subr.mxu0 0.0
    %2084 = vmatpush2.msra.mxu0 0.0
    %2085 = vmatprep.subr.mxu0 0.0
    %2086 = vmatpush2.msra.mxu0 0.0
    %2087 = vmatprep.subr.mxu0 0.0
    %2088 = vmatpush2.msra.mxu0 0.0
    %2089 = vmatprep.subr.mxu0 0.0
    %2090 = vmatpush2.msra.mxu0 0.0
    %2091 = vmatprep.subr.mxu0 0.0
    %2092 = vmatpush2.msra.mxu0 0.0
    %2093 = vmatprep.subr.mxu0 0.0
    %2094 = vmatpush2.msra.mxu0 0.0
    %2095 = vmatprep.subr.mxu0 0.0
    %2096 = vmatpush2.msra.mxu0 0.0
    %2097 = vmatprep.subr.mxu0 0.0
    %2098 = vmatpush2.msra.mxu0 0.0
    %2099 = vmatprep.subr.mxu0 0.0
    %2100 = vmatpush2.msra.mxu0 0.0
    %2101 = vmatprep.subr.mxu0 0.0
    %2102 = vmatpush2.msra.mxu0 0.0
    %2103 = vmatprep.subr.mxu0 0.0
    %2104 = vmatpush2.msra.mxu0 0.0
    %2105 = vmatprep.subr.mxu0 0.0
    %2106 = vmatpush2.msra.mxu0 0.0
    %2107 = vmatprep.mubr.f32.mxu0 0.0
    %2108 = vmatmul.mubr.f32.gmra.mxu0 %v2038
    %v2109 = vpop.f32.mrf.mxu0
    %v2110 = vadd.f32 0.0, %v2109
    %v2111 = vpop.f32.mrf.mxu0
    %2112 = vmatprep.mubr.f32.mxu0 0.0
    %2113 = vmatmul.mubr.f32.gmra.mxu0 %v2041
    %v2114 = vpop.f32.mrf.mxu0
    %v2115 = vadd.f32 0.0, %v2114
    %v2116 = vpop.f32.mrf.mxu0
    %2117 = vdwg.mxu0
    %v2119 = vsel %vm114, %v297, 0
    %v2122 = vsel %vm114, %v298, 0
    %2124 = vmatprep.subr.mxu0 0.0
    %2125 = vmatpush1.msra.mxu0 0.0
    %2126 = vmatprep.subr.mxu0 0.0
    %2127 = vmatpush1.msra.mxu0 0.0
    %2128 = vmatprep.subr.mxu0 0.0
    %2129 = vmatpush1.msra.mxu0 0.0
    %2130 = vmatprep.subr.mxu0 0.0
    %2131 = vmatpush1.msra.mxu0 0.0
    %2132 = vmatprep.subr.mxu0 0.0
    %2133 = vmatpush1.msra.mxu0 0.0
    %2134 = vmatprep.subr.mxu0 0.0
    %2135 = vmatpush1.msra.mxu0 0.0
    %2136 = vmatprep.subr.mxu0 0.0
    %2137 = vmatpush1.msra.mxu0 0.0
    %2138 = vmatprep.subr.mxu0 0.0
    %2139 = vmatpush1.msra.mxu0 0.0
    %2140 = vmatprep.subr.mxu0 0.0
    %2141 = vmatpush1.msra.mxu0 0.0
    %2142 = vmatprep.subr.mxu0 0.0
    %2143 = vmatpush1.msra.mxu0 0.0
    %2144 = vmatprep.subr.mxu0 0.0
    %2145 = vmatpush1.msra.mxu0 0.0
    %2146 = vmatprep.subr.mxu0 0.0
    %2147 = vmatpush1.msra.mxu0 0.0
    %2148 = vmatprep.subr.mxu0 0.0
    %2149 = vmatpush1.msra.mxu0 0.0
    %2150 = vmatprep.subr.mxu0 0.0
    %2151 = vmatpush1.msra.mxu0 0.0
    %2152 = vmatprep.subr.mxu0 0.0
    %2153 = vmatpush1.msra.mxu0 %v334
    %2154 = vmatprep.subr.mxu0 0.0
    %2155 = vmatpush1.msra.mxu0 %v333
    %2156 = vmatprep.subr.mxu0 0.0
    %2157 = vmatpush2.msra.mxu0 0.0
    %2158 = vmatprep.subr.mxu0 0.0
    %2159 = vmatpush2.msra.mxu0 0.0
    %2160 = vmatprep.subr.mxu0 0.0
    %2161 = vmatpush2.msra.mxu0 0.0
    %2162 = vmatprep.subr.mxu0 0.0
    %2163 = vmatpush2.msra.mxu0 0.0
    %2164 = vmatprep.subr.mxu0 0.0
    %2165 = vmatpush2.msra.mxu0 0.0
    %2166 = vmatprep.subr.mxu0 0.0
    %2167 = vmatpush2.msra.mxu0 0.0
    %2168 = vmatprep.subr.mxu0 0.0
    %2169 = vmatpush2.msra.mxu0 0.0
    %2170 = vmatprep.subr.mxu0 0.0
    %2171 = vmatpush2.msra.mxu0 0.0
    %2172 = vmatprep.subr.mxu0 0.0
    %2173 = vmatpush2.msra.mxu0 0.0
    %2174 = vmatprep.subr.mxu0 0.0
    %2175 = vmatpush2.msra.mxu0 0.0
    %2176 = vmatprep.subr.mxu0 0.0
    %2177 = vmatpush2.msra.mxu0 0.0
    %2178 = vmatprep.subr.mxu0 0.0
    %2179 = vmatpush2.msra.mxu0 0.0
    %2180 = vmatprep.subr.mxu0 0.0
    %2181 = vmatpush2.msra.mxu0 0.0
    %2182 = vmatprep.subr.mxu0 0.0
    %2183 = vmatpush2.msra.mxu0 0.0
    %2184 = vmatprep.subr.mxu0 0.0
    %2185 = vmatpush2.msra.mxu0 0.0
    %2186 = vmatprep.subr.mxu0 0.0
    %2187 = vmatpush2.msra.mxu0 0.0
    %2188 = vmatprep.mubr.f32.mxu0 0.0
    %2189 = vmatmul.mubr.f32.gmra.mxu0 %v2119
    %v2190 = vpop.f32.mrf.mxu0
    %v2191 = vadd.f32 0.0, %v2190
    %v2192 = vpop.f32.mrf.mxu0
    %2193 = vmatprep.mubr.f32.mxu0 0.0
    %2194 = vmatmul.mubr.f32.gmra.mxu0 %v2122
    %v2195 = vpop.f32.mrf.mxu0
    %v2196 = vadd.f32 0.0, %v2195
    %v2197 = vpop.f32.mrf.mxu0
    %2198 = vdwg.mxu0
    %v2200 = vsel %vm114, %v299, 0
    %v2203 = vsel %vm114, %v300, 0
    %2205 = vmatprep.subr.mxu0 0.0
    %2206 = vmatpush1.msra.mxu0 0.0
    %2207 = vmatprep.subr.mxu0 0.0
    %2208 = vmatpush1.msra.mxu0 0.0
    %2209 = vmatprep.subr.mxu0 0.0
    %2210 = vmatpush1.msra.mxu0 0.0
    %2211 = vmatprep.subr.mxu0 0.0
    %2212 = vmatpush1.msra.mxu0 0.0
    %2213 = vmatprep.subr.mxu0 0.0
    %2214 = vmatpush1.msra.mxu0 0.0
    %2215 = vmatprep.subr.mxu0 0.0
    %2216 = vmatpush1.msra.mxu0 0.0
    %2217 = vmatprep.subr.mxu0 0.0
    %2218 = vmatpush1.msra.mxu0 0.0
    %2219 = vmatprep.subr.mxu0 0.0
    %2220 = vmatpush1.msra.mxu0 0.0
    %2221 = vmatprep.subr.mxu0 0.0
    %2222 = vmatpush1.msra.mxu0 0.0
    %2223 = vmatprep.subr.mxu0 0.0
    %2224 = vmatpush1.msra.mxu0 0.0
    %2225 = vmatprep.subr.mxu0 0.0
    %2226 = vmatpush1.msra.mxu0 0.0
    %2227 = vmatprep.subr.mxu0 0.0
    %2228 = vmatpush1.msra.mxu0 0.0
    %2229 = vmatprep.subr.mxu0 0.0
    %2230 = vmatpush1.msra.mxu0 0.0
    %2231 = vmatprep.subr.mxu0 0.0
    %2232 = vmatpush1.msra.mxu0 0.0
    %2233 = vmatprep.subr.mxu0 0.0
    %2234 = vmatpush1.msra.mxu0 %v334
    %2235 = vmatprep.subr.mxu0 0.0
    %2236 = vmatpush1.msra.mxu0 %v333
    %2237 = vmatprep.subr.mxu0 0.0
    %2238 = vmatpush2.msra.mxu0 0.0
    %2239 = vmatprep.subr.mxu0 0.0
    %2240 = vmatpush2.msra.mxu0 0.0
    %2241 = vmatprep.subr.mxu0 0.0
    %2242 = vmatpush2.msra.mxu0 0.0
    %2243 = vmatprep.subr.mxu0 0.0
    %2244 = vmatpush2.msra.mxu0 0.0
    %2245 = vmatprep.subr.mxu0 0.0
    %2246 = vmatpush2.msra.mxu0 0.0
    %2247 = vmatprep.subr.mxu0 0.0
    %2248 = vmatpush2.msra.mxu0 0.0
    %2249 = vmatprep.subr.mxu0 0.0
    %2250 = vmatpush2.msra.mxu0 0.0
    %2251 = vmatprep.subr.mxu0 0.0
    %2252 = vmatpush2.msra.mxu0 0.0
    %2253 = vmatprep.subr.mxu0 0.0
    %2254 = vmatpush2.msra.mxu0 0.0
    %2255 = vmatprep.subr.mxu0 0.0
    %2256 = vmatpush2.msra.mxu0 0.0
    %2257 = vmatprep.subr.mxu0 0.0
    %2258 = vmatpush2.msra.mxu0 0.0
    %2259 = vmatprep.subr.mxu0 0.0
    %2260 = vmatpush2.msra.mxu0 0.0
    %2261 = vmatprep.subr.mxu0 0.0
    %2262 = vmatpush2.msra.mxu0 0.0
    %2263 = vmatprep.subr.mxu0 0.0
    %2264 = vmatpush2.msra.mxu0 0.0
    %2265 = vmatprep.subr.mxu0 0.0
    %2266 = vmatpush2.msra.mxu0 0.0
    %2267 = vmatprep.subr.mxu0 0.0
    %2268 = vmatpush2.msra.mxu0 0.0
    %2269 = vmatprep.mubr.f32.mxu0 0.0
    %2270 = vmatmul.mubr.f32.gmra.mxu0 %v2200
    %v2271 = vpop.f32.mrf.mxu0
    %v2272 = vadd.f32 0.0, %v2271
    %v2273 = vpop.f32.mrf.mxu0
    %2274 = vmatprep.mubr.f32.mxu0 0.0
    %2275 = vmatmul.mubr.f32.gmra.mxu0 %v2203
    %v2276 = vpop.f32.mrf.mxu0
    %v2277 = vadd.f32 0.0, %v2276
    %v2278 = vpop.f32.mrf.mxu0
    %2279 = vdwg.mxu0
    %v2281 = vsel %vm114, %v301, 0
    %v2284 = vsel %vm114, %v302, 0
    %2286 = vmatprep.subr.mxu0 0.0
    %2287 = vmatpush1.msra.mxu0 0.0
    %2288 = vmatprep.subr.mxu0 0.0
    %2289 = vmatpush1.msra.mxu0 0.0
    %2290 = vmatprep.subr.mxu0 0.0
    %2291 = vmatpush1.msra.mxu0 0.0
    %2292 = vmatprep.subr.mxu0 0.0
    %2293 = vmatpush1.msra.mxu0 0.0
    %2294 = vmatprep.subr.mxu0 0.0
    %2295 = vmatpush1.msra.mxu0 0.0
    %2296 = vmatprep.subr.mxu0 0.0
    %2297 = vmatpush1.msra.mxu0 0.0
    %2298 = vmatprep.subr.mxu0 0.0
    %2299 = vmatpush1.msra.mxu0 0.0
    %2300 = vmatprep.subr.mxu0 0.0
    %2301 = vmatpush1.msra.mxu0 0.0
    %2302 = vmatprep.subr.mxu0 0.0
    %2303 = vmatpush1.msra.mxu0 0.0
    %2304 = vmatprep.subr.mxu0 0.0
    %2305 = vmatpush1.msra.mxu0 0.0
    %2306 = vmatprep.subr.mxu0 0.0
    %2307 = vmatpush1.msra.mxu0 0.0
    %2308 = vmatprep.subr.mxu0 0.0
    %2309 = vmatpush1.msra.mxu0 0.0
    %2310 = vmatprep.subr.mxu0 0.0
    %2311 = vmatpush1.msra.mxu0 0.0
    %2312 = vmatprep.subr.mxu0 0.0
    %2313 = vmatpush1.msra.mxu0 0.0
    %2314 = vmatprep.subr.mxu0 0.0
    %2315 = vmatpush1.msra.mxu0 %v334
    %2316 = vmatprep.subr.mxu0 0.0
    %2317 = vmatpush1.msra.mxu0 %v333
    %2318 = vmatprep.subr.mxu0 0.0
    %2319 = vmatpush2.msra.mxu0 0.0
    %2320 = vmatprep.subr.mxu0 0.0
    %2321 = vmatpush2.msra.mxu0 0.0
    %2322 = vmatprep.subr.mxu0 0.0
    %2323 = vmatpush2.msra.mxu0 0.0
    %2324 = vmatprep.subr.mxu0 0.0
    %2325 = vmatpush2.msra.mxu0 0.0
    %2326 = vmatprep.subr.mxu0 0.0
    %2327 = vmatpush2.msra.mxu0 0.0
    %2328 = vmatprep.subr.mxu0 0.0
    %2329 = vmatpush2.msra.mxu0 0.0
    %2330 = vmatprep.subr.mxu0 0.0
    %2331 = vmatpush2.msra.mxu0 0.0
    %2332 = vmatprep.subr.mxu0 0.0
    %2333 = vmatpush2.msra.mxu0 0.0
    %2334 = vmatprep.subr.mxu0 0.0
    %2335 = vmatpush2.msra.mxu0 0.0
    %2336 = vmatprep.subr.mxu0 0.0
    %2337 = vmatpush2.msra.mxu0 0.0
    %2338 = vmatprep.subr.mxu0 0.0
    %2339 = vmatpush2.msra.mxu0 0.0
    %2340 = vmatprep.subr.mxu0 0.0
    %2341 = vmatpush2.msra.mxu0 0.0
    %2342 = vmatprep.subr.mxu0 0.0
    %2343 = vmatpush2.msra.mxu0 0.0
    %2344 = vmatprep.subr.mxu0 0.0
    %2345 = vmatpush2.msra.mxu0 0.0
    %2346 = vmatprep.subr.mxu0 0.0
    %2347 = vmatpush2.msra.mxu0 0.0
    %2348 = vmatprep.subr.mxu0 0.0
    %2349 = vmatpush2.msra.mxu0 0.0
    %2350 = vmatprep.mubr.f32.mxu0 0.0
    %2351 = vmatmul.mubr.f32.gmra.mxu0 %v2281
    %v2352 = vpop.f32.mrf.mxu0
    %v2353 = vadd.f32 0.0, %v2352
    %v2354 = vpop.f32.mrf.mxu0
    %2355 = vmatprep.mubr.f32.mxu0 0.0
    %2356 = vmatmul.mubr.f32.gmra.mxu0 %v2284
    %v2357 = vpop.f32.mrf.mxu0
    %v2358 = vadd.f32 0.0, %v2357
    %v2359 = vpop.f32.mrf.mxu0
    %2360 = vdwg.mxu0
    %v2362 = vsel %vm114, %v303, 0
    %v2365 = vsel %vm114, %v304, 0
    %2367 = vmatprep.subr.mxu0 0.0
    %2368 = vmatpush1.msra.mxu0 0.0
    %2369 = vmatprep.subr.mxu0 0.0
    %2370 = vmatpush1.msra.mxu0 0.0
    %2371 = vmatprep.subr.mxu0 0.0
    %2372 = vmatpush1.msra.mxu0 0.0
    %2373 = vmatprep.subr.mxu0 0.0
    %2374 = vmatpush1.msra.mxu0 0.0
    %2375 = vmatprep.subr.mxu0 0.0
    %2376 = vmatpush1.msra.mxu0 0.0
    %2377 = vmatprep.subr.mxu0 0.0
    %2378 = vmatpush1.msra.mxu0 0.0
    %2379 = vmatprep.subr.mxu0 0.0
    %2380 = vmatpush1.msra.mxu0 0.0
    %2381 = vmatprep.subr.mxu0 0.0
    %2382 = vmatpush1.msra.mxu0 0.0
    %2383 = vmatprep.subr.mxu0 0.0
    %2384 = vmatpush1.msra.mxu0 0.0
    %2385 = vmatprep.subr.mxu0 0.0
    %2386 = vmatpush1.msra.mxu0 0.0
    %2387 = vmatprep.subr.mxu0 0.0
    %2388 = vmatpush1.msra.mxu0 0.0
    %2389 = vmatprep.subr.mxu0 0.0
    %2390 = vmatpush1.msra.mxu0 0.0
    %2391 = vmatprep.subr.mxu0 0.0
    %2392 = vmatpush1.msra.mxu0 0.0
    %2393 = vmatprep.subr.mxu0 0.0
    %2394 = vmatpush1.msra.mxu0 0.0
    %2395 = vmatprep.subr.mxu0 0.0
    %2396 = vmatpush1.msra.mxu0 %v334
    %2397 = vmatprep.subr.mxu0 0.0
    %2398 = vmatpush1.msra.mxu0 %v333
    %2399 = vmatprep.subr.mxu0 0.0
    %2400 = vmatpush2.msra.mxu0 0.0
    %2401 = vmatprep.subr.mxu0 0.0
    %2402 = vmatpush2.msra.mxu0 0.0
    %2403 = vmatprep.subr.mxu0 0.0
    %2404 = vmatpush2.msra.mxu0 0.0
    %2405 = vmatprep.subr.mxu0 0.0
    %2406 = vmatpush2.msra.mxu0 0.0
    %2407 = vmatprep.subr.mxu0 0.0
    %2408 = vmatpush2.msra.mxu0 0.0
    %2409 = vmatprep.subr.mxu0 0.0
    %2410 = vmatpush2.msra.mxu0 0.0
    %2411 = vmatprep.subr.mxu0 0.0
    %2412 = vmatpush2.msra.mxu0 0.0
    %2413 = vmatprep.subr.mxu0 0.0
    %2414 = vmatpush2.msra.mxu0 0.0
    %2415 = vmatprep.subr.mxu0 0.0
    %2416 = vmatpush2.msra.mxu0 0.0
    %2417 = vmatprep.subr.mxu0 0.0
    %2418 = vmatpush2.msra.mxu0 0.0
    %2419 = vmatprep.subr.mxu0 0.0
    %2420 = vmatpush2.msra.mxu0 0.0
    %2421 = vmatprep.subr.mxu0 0.0
    %2422 = vmatpush2.msra.mxu0 0.0
    %2423 = vmatprep.subr.mxu0 0.0
    %2424 = vmatpush2.msra.mxu0 0.0
    %2425 = vmatprep.subr.mxu0 0.0
    %2426 = vmatpush2.msra.mxu0 0.0
    %2427 = vmatprep.subr.mxu0 0.0
    %2428 = vmatpush2.msra.mxu0 0.0
    %2429 = vmatprep.subr.mxu0 0.0
    %2430 = vmatpush2.msra.mxu0 0.0
    %2431 = vmatprep.mubr.f32.mxu0 0.0
    %2432 = vmatmul.mubr.f32.gmra.mxu0 %v2362
    %v2433 = vpop.f32.mrf.mxu0
    %v2434 = vadd.f32 0.0, %v2433
    %v2435 = vpop.f32.mrf.mxu0
    %2436 = vmatprep.mubr.f32.mxu0 0.0
    %2437 = vmatmul.mubr.f32.gmra.mxu0 %v2365
    %v2438 = vpop.f32.mrf.mxu0
    %v2439 = vadd.f32 0.0, %v2438
    %v2440 = vpop.f32.mrf.mxu0
    %2441 = vdwg.mxu0
    %v2443 = vsel %vm114, %v305, 0
    %v2446 = vsel %vm114, %v306, 0
    %2448 = vmatprep.subr.mxu0 0.0
    %2449 = vmatpush1.msra.mxu0 0.0
    %2450 = vmatprep.subr.mxu0 0.0
    %2451 = vmatpush1.msra.mxu0 0.0
    %2452 = vmatprep.subr.mxu0 0.0
    %2453 = vmatpush1.msra.mxu0 0.0
    %2454 = vmatprep.subr.mxu0 0.0
    %2455 = vmatpush1.msra.mxu0 0.0
    %2456 = vmatprep.subr.mxu0 0.0
    %2457 = vmatpush1.msra.mxu0 0.0
    %2458 = vmatprep.subr.mxu0 0.0
    %2459 = vmatpush1.msra.mxu0 0.0
    %2460 = vmatprep.subr.mxu0 0.0
    %2461 = vmatpush1.msra.mxu0 0.0
    %2462 = vmatprep.subr.mxu0 0.0
    %2463 = vmatpush1.msra.mxu0 0.0
    %2464 = vmatprep.subr.mxu0 0.0
    %2465 = vmatpush1.msra.mxu0 0.0
    %2466 = vmatprep.subr.mxu0 0.0
    %2467 = vmatpush1.msra.mxu0 0.0
    %2468 = vmatprep.subr.mxu0 0.0
    %2469 = vmatpush1.msra.mxu0 0.0
    %2470 = vmatprep.subr.mxu0 0.0
    %2471 = vmatpush1.msra.mxu0 0.0
    %2472 = vmatprep.subr.mxu0 0.0
    %2473 = vmatpush1.msra.mxu0 0.0
    %2474 = vmatprep.subr.mxu0 0.0
    %2475 = vmatpush1.msra.mxu0 0.0
    %2476 = vmatprep.subr.mxu0 0.0
    %2477 = vmatpush1.msra.mxu0 %v334
    %2478 = vmatprep.subr.mxu0 0.0
    %2479 = vmatpush1.msra.mxu0 %v333
    %2480 = vmatprep.subr.mxu0 0.0
    %2481 = vmatpush2.msra.mxu0 0.0
    %2482 = vmatprep.subr.mxu0 0.0
    %2483 = vmatpush2.msra.mxu0 0.0
    %2484 = vmatprep.subr.mxu0 0.0
    %2485 = vmatpush2.msra.mxu0 0.0
    %2486 = vmatprep.subr.mxu0 0.0
    %2487 = vmatpush2.msra.mxu0 0.0
    %2488 = vmatprep.subr.mxu0 0.0
    %2489 = vmatpush2.msra.mxu0 0.0
    %2490 = vmatprep.subr.mxu0 0.0
    %2491 = vmatpush2.msra.mxu0 0.0
    %2492 = vmatprep.subr.mxu0 0.0
    %2493 = vmatpush2.msra.mxu0 0.0
    %2494 = vmatprep.subr.mxu0 0.0
    %2495 = vmatpush2.msra.mxu0 0.0
    %2496 = vmatprep.subr.mxu0 0.0
    %2497 = vmatpush2.msra.mxu0 0.0
    %2498 = vmatprep.subr.mxu0 0.0
    %2499 = vmatpush2.msra.mxu0 0.0
    %2500 = vmatprep.subr.mxu0 0.0
    %2501 = vmatpush2.msra.mxu0 0.0
    %2502 = vmatprep.subr.mxu0 0.0
    %2503 = vmatpush2.msra.mxu0 0.0
    %2504 = vmatprep.subr.mxu0 0.0
    %2505 = vmatpush2.msra.mxu0 0.0
    %2506 = vmatprep.subr.mxu0 0.0
    %2507 = vmatpush2.msra.mxu0 0.0
    %2508 = vmatprep.subr.mxu0 0.0
    %2509 = vmatpush2.msra.mxu0 0.0
    %2510 = vmatprep.subr.mxu0 0.0
    %2511 = vmatpush2.msra.mxu0 0.0
    %2512 = vmatprep.mubr.f32.mxu0 0.0
    %2513 = vmatmul.mubr.f32.gmra.mxu0 %v2443
    %v2514 = vpop.f32.mrf.mxu0
    %v2515 = vadd.f32 0.0, %v2514
    %v2516 = vpop.f32.mrf.mxu0
    %2517 = vmatprep.mubr.f32.mxu0 0.0
    %2518 = vmatmul.mubr.f32.gmra.mxu0 %v2446
    %v2519 = vpop.f32.mrf.mxu0
    %v2520 = vadd.f32 0.0, %v2519
    %v2521 = vpop.f32.mrf.mxu0
    %2522 = vdwg.mxu0
    %v2524 = vsel %vm114, %v307, 0
    %v2527 = vsel %vm114, %v308, 0
    %2529 = vmatprep.subr.mxu0 0.0
    %2530 = vmatpush1.msra.mxu0 0.0
    %2531 = vmatprep.subr.mxu0 0.0
    %2532 = vmatpush1.msra.mxu0 0.0
    %2533 = vmatprep.subr.mxu0 0.0
    %2534 = vmatpush1.msra.mxu0 0.0
    %2535 = vmatprep.subr.mxu0 0.0
    %2536 = vmatpush1.msra.mxu0 0.0
    %2537 = vmatprep.subr.mxu0 0.0
    %2538 = vmatpush1.msra.mxu0 0.0
    %2539 = vmatprep.subr.mxu0 0.0
    %2540 = vmatpush1.msra.mxu0 0.0
    %2541 = vmatprep.subr.mxu0 0.0
    %2542 = vmatpush1.msra.mxu0 0.0
    %2543 = vmatprep.subr.mxu0 0.0
    %2544 = vmatpush1.msra.mxu0 0.0
    %2545 = vmatprep.subr.mxu0 0.0
    %2546 = vmatpush1.msra.mxu0 0.0
    %2547 = vmatprep.subr.mxu0 0.0
    %2548 = vmatpush1.msra.mxu0 0.0
    %2549 = vmatprep.subr.mxu0 0.0
    %2550 = vmatpush1.msra.mxu0 0.0
    %2551 = vmatprep.subr.mxu0 0.0
    %2552 = vmatpush1.msra.mxu0 0.0
    %2553 = vmatprep.subr.mxu0 0.0
    %2554 = vmatpush1.msra.mxu0 0.0
    %2555 = vmatprep.subr.mxu0 0.0
    %2556 = vmatpush1.msra.mxu0 0.0
    %2557 = vmatprep.subr.mxu0 0.0
    %2558 = vmatpush1.msra.mxu0 %v334
    %2559 = vmatprep.subr.mxu0 0.0
    %2560 = vmatpush1.msra.mxu0 %v333
    %2561 = vmatprep.subr.mxu0 0.0
    %2562 = vmatpush2.msra.mxu0 0.0
    %2563 = vmatprep.subr.mxu0 0.0
    %2564 = vmatpush2.msra.mxu0 0.0
    %2565 = vmatprep.subr.mxu0 0.0
    %2566 = vmatpush2.msra.mxu0 0.0
    %2567 = vmatprep.subr.mxu0 0.0
    %2568 = vmatpush2.msra.mxu0 0.0
    %2569 = vmatprep.subr.mxu0 0.0
    %2570 = vmatpush2.msra.mxu0 0.0
    %2571 = vmatprep.subr.mxu0 0.0
    %2572 = vmatpush2.msra.mxu0 0.0
    %2573 = vmatprep.subr.mxu0 0.0
    %2574 = vmatpush2.msra.mxu0 0.0
    %2575 = vmatprep.subr.mxu0 0.0
    %2576 = vmatpush2.msra.mxu0 0.0
    %2577 = vmatprep.subr.mxu0 0.0
    %2578 = vmatpush2.msra.mxu0 0.0
    %2579 = vmatprep.subr.mxu0 0.0
    %2580 = vmatpush2.msra.mxu0 0.0
    %2581 = vmatprep.subr.mxu0 0.0
    %2582 = vmatpush2.msra.mxu0 0.0
    %2583 = vmatprep.subr.mxu0 0.0
    %2584 = vmatpush2.msra.mxu0 0.0
    %2585 = vmatprep.subr.mxu0 0.0
    %2586 = vmatpush2.msra.mxu0 0.0
    %2587 = vmatprep.subr.mxu0 0.0
    %2588 = vmatpush2.msra.mxu0 0.0
    %2589 = vmatprep.subr.mxu0 0.0
    %2590 = vmatpush2.msra.mxu0 0.0
    %2591 = vmatprep.subr.mxu0 0.0
    %2592 = vmatpush2.msra.mxu0 0.0
    %2593 = vmatprep.mubr.f32.mxu0 0.0
    %2594 = vmatmul.mubr.f32.gmra.mxu0 %v2524
    %v2595 = vpop.f32.mrf.mxu0
    %v2596 = vadd.f32 0.0, %v2595
    %v2597 = vpop.f32.mrf.mxu0
    %2598 = vmatprep.mubr.f32.mxu0 0.0
    %2599 = vmatmul.mubr.f32.gmra.mxu0 %v2527
    %v2600 = vpop.f32.mrf.mxu0
    %v2601 = vadd.f32 0.0, %v2600
    %v2602 = vpop.f32.mrf.mxu0
    %2603 = vdwg.mxu0
    %v2605 = vsel %vm114, %v309, 0
    %v2608 = vsel %vm114, %v310, 0
    %2610 = vmatprep.subr.mxu0 0.0
    %2611 = vmatpush1.msra.mxu0 0.0
    %2612 = vmatprep.subr.mxu0 0.0
    %2613 = vmatpush1.msra.mxu0 0.0
    %2614 = vmatprep.subr.mxu0 0.0
    %2615 = vmatpush1.msra.mxu0 0.0
    %2616 = vmatprep.subr.mxu0 0.0
    %2617 = vmatpush1.msra.mxu0 0.0
    %2618 = vmatprep.subr.mxu0 0.0
    %2619 = vmatpush1.msra.mxu0 0.0
    %2620 = vmatprep.subr.mxu0 0.0
    %2621 = vmatpush1.msra.mxu0 0.0
    %2622 = vmatprep.subr.mxu0 0.0
    %2623 = vmatpush1.msra.mxu0 0.0
    %2624 = vmatprep.subr.mxu0 0.0
    %2625 = vmatpush1.msra.mxu0 0.0
    %2626 = vmatprep.subr.mxu0 0.0
    %2627 = vmatpush1.msra.mxu0 0.0
    %2628 = vmatprep.subr.mxu0 0.0
    %2629 = vmatpush1.msra.mxu0 0.0
    %2630 = vmatprep.subr.mxu0 0.0
    %2631 = vmatpush1.msra.mxu0 0.0
    %2632 = vmatprep.subr.mxu0 0.0
    %2633 = vmatpush1.msra.mxu0 0.0
    %2634 = vmatprep.subr.mxu0 0.0
    %2635 = vmatpush1.msra.mxu0 0.0
    %2636 = vmatprep.subr.mxu0 0.0
    %2637 = vmatpush1.msra.mxu0 0.0
    %2638 = vmatprep.subr.mxu0 0.0
    %2639 = vmatpush1.msra.mxu0 %v334
    %2640 = vmatprep.subr.mxu0 0.0
    %2641 = vmatpush1.msra.mxu0 %v333
    %2642 = vmatprep.subr.mxu0 0.0
    %2643 = vmatpush2.msra.mxu0 0.0
    %2644 = vmatprep.subr.mxu0 0.0
    %2645 = vmatpush2.msra.mxu0 0.0
    %2646 = vmatprep.subr.mxu0 0.0
    %2647 = vmatpush2.msra.mxu0 0.0
    %2648 = vmatprep.subr.mxu0 0.0
    %2649 = vmatpush2.msra.mxu0 0.0
    %2650 = vmatprep.subr.mxu0 0.0
    %2651 = vmatpush2.msra.mxu0 0.0
    %2652 = vmatprep.subr.mxu0 0.0
    %2653 = vmatpush2.msra.mxu0 0.0
    %2654 = vmatprep.subr.mxu0 0.0
    %2655 = vmatpush2.msra.mxu0 0.0
    %2656 = vmatprep.subr.mxu0 0.0
    %2657 = vmatpush2.msra.mxu0 0.0
    %2658 = vmatprep.subr.mxu0 0.0
    %2659 = vmatpush2.msra.mxu0 0.0
    %2660 = vmatprep.subr.mxu0 0.0
    %2661 = vmatpush2.msra.mxu0 0.0
    %2662 = vmatprep.subr.mxu0 0.0
    %2663 = vmatpush2.msra.mxu0 0.0
    %2664 = vmatprep.subr.mxu0 0.0
    %2665 = vmatpush2.msra.mxu0 0.0
    %2666 = vmatprep.subr.mxu0 0.0
    %2667 = vmatpush2.msra.mxu0 0.0
    %2668 = vmatprep.subr.mxu0 0.0
    %2669 = vmatpush2.msra.mxu0 0.0
    %2670 = vmatprep.subr.mxu0 0.0
    %2671 = vmatpush2.msra.mxu0 0.0
    %2672 = vmatprep.subr.mxu0 0.0
    %2673 = vmatpush2.msra.mxu0 0.0
    %2674 = vmatprep.mubr.f32.mxu0 0.0
    %2675 = vmatmul.mubr.f32.gmra.mxu0 %v2605
    %v2676 = vpop.f32.mrf.mxu0
    %v2677 = vadd.f32 0.0, %v2676
    %v2678 = vpop.f32.mrf.mxu0
    %2679 = vmatprep.mubr.f32.mxu0 0.0
    %2680 = vmatmul.mubr.f32.gmra.mxu0 %v2608
    %v2681 = vpop.f32.mrf.mxu0
    %v2682 = vadd.f32 0.0, %v2681
    %v2683 = vpop.f32.mrf.mxu0
    %2684 = vdwg.mxu0
    %v2686 = vsel %vm114, %v311, 0
    %v2689 = vsel %vm114, %v312, 0
    %2691 = vmatprep.subr.mxu0 0.0
    %2692 = vmatpush1.msra.mxu0 0.0
    %2693 = vmatprep.subr.mxu0 0.0
    %2694 = vmatpush1.msra.mxu0 0.0
    %2695 = vmatprep.subr.mxu0 0.0
    %2696 = vmatpush1.msra.mxu0 0.0
    %2697 = vmatprep.subr.mxu0 0.0
    %2698 = vmatpush1.msra.mxu0 0.0
    %2699 = vmatprep.subr.mxu0 0.0
    %2700 = vmatpush1.msra.mxu0 0.0
    %2701 = vmatprep.subr.mxu0 0.0
    %2702 = vmatpush1.msra.mxu0 0.0
    %2703 = vmatprep.subr.mxu0 0.0
    %2704 = vmatpush1.msra.mxu0 0.0
    %2705 = vmatprep.subr.mxu0 0.0
    %2706 = vmatpush1.msra.mxu0 0.0
    %2707 = vmatprep.subr.mxu0 0.0
    %2708 = vmatpush1.msra.mxu0 0.0
    %2709 = vmatprep.subr.mxu0 0.0
    %2710 = vmatpush1.msra.mxu0 0.0
    %2711 = vmatprep.subr.mxu0 0.0
    %2712 = vmatpush1.msra.mxu0 0.0
    %2713 = vmatprep.subr.mxu0 0.0
    %2714 = vmatpush1.msra.mxu0 0.0
    %2715 = vmatprep.subr.mxu0 0.0
    %2716 = vmatpush1.msra.mxu0 0.0
    %2717 = vmatprep.subr.mxu0 0.0
    %2718 = vmatpush1.msra.mxu0 0.0
    %2719 = vmatprep.subr.mxu0 0.0
    %2720 = vmatpush1.msra.mxu0 %v334
    %2721 = vmatprep.subr.mxu0 0.0
    %2722 = vmatpush1.msra.mxu0 %v333
    %2723 = vmatprep.subr.mxu0 0.0
    %2724 = vmatpush2.msra.mxu0 0.0
    %2725 = vmatprep.subr.mxu0 0.0
    %2726 = vmatpush2.msra.mxu0 0.0
    %2727 = vmatprep.subr.mxu0 0.0
    %2728 = vmatpush2.msra.mxu0 0.0
    %2729 = vmatprep.subr.mxu0 0.0
    %2730 = vmatpush2.msra.mxu0 0.0
    %2731 = vmatprep.subr.mxu0 0.0
    %2732 = vmatpush2.msra.mxu0 0.0
    %2733 = vmatprep.subr.mxu0 0.0
    %2734 = vmatpush2.msra.mxu0 0.0
    %2735 = vmatprep.subr.mxu0 0.0
    %2736 = vmatpush2.msra.mxu0 0.0
    %2737 = vmatprep.subr.mxu0 0.0
    %2738 = vmatpush2.msra.mxu0 0.0
    %2739 = vmatprep.subr.mxu0 0.0
    %2740 = vmatpush2.msra.mxu0 0.0
    %2741 = vmatprep.subr.mxu0 0.0
    %2742 = vmatpush2.msra.mxu0 0.0
    %2743 = vmatprep.subr.mxu0 0.0
    %2744 = vmatpush2.msra.mxu0 0.0
    %2745 = vmatprep.subr.mxu0 0.0
    %2746 = vmatpush2.msra.mxu0 0.0
    %2747 = vmatprep.subr.mxu0 0.0
    %2748 = vmatpush2.msra.mxu0 0.0
    %2749 = vmatprep.subr.mxu0 0.0
    %2750 = vmatpush2.msra.mxu0 0.0
    %2751 = vmatprep.subr.mxu0 0.0
    %2752 = vmatpush2.msra.mxu0 0.0
    %2753 = vmatprep.subr.mxu0 0.0
    %2754 = vmatpush2.msra.mxu0 0.0
    %2755 = vmatprep.mubr.f32.mxu0 0.0
    %2756 = vmatmul.mubr.f32.gmra.mxu0 %v2686
    %v2757 = vpop.f32.mrf.mxu0
    %v2758 = vadd.f32 0.0, %v2757
    %v2759 = vpop.f32.mrf.mxu0
    %2760 = vmatprep.mubr.f32.mxu0 0.0
    %2761 = vmatmul.mubr.f32.gmra.mxu0 %v2689
    %v2762 = vpop.f32.mrf.mxu0
    %v2763 = vadd.f32 0.0, %v2762
    %v2764 = vpop.f32.mrf.mxu0
    %2765 = vdwg.mxu0
    %v2767 = vsel %vm114, %v313, 0
    %v2770 = vsel %vm114, %v314, 0
    %2772 = vmatprep.subr.mxu0 0.0
    %2773 = vmatpush1.msra.mxu0 0.0
    %2774 = vmatprep.subr.mxu0 0.0
    %2775 = vmatpush1.msra.mxu0 0.0
    %2776 = vmatprep.subr.mxu0 0.0
    %2777 = vmatpush1.msra.mxu0 0.0
    %2778 = vmatprep.subr.mxu0 0.0
    %2779 = vmatpush1.msra.mxu0 0.0
    %2780 = vmatprep.subr.mxu0 0.0
    %2781 = vmatpush1.msra.mxu0 0.0
    %2782 = vmatprep.subr.mxu0 0.0
    %2783 = vmatpush1.msra.mxu0 0.0
    %2784 = vmatprep.subr.mxu0 0.0
    %2785 = vmatpush1.msra.mxu0 0.0
    %2786 = vmatprep.subr.mxu0 0.0
    %2787 = vmatpush1.msra.mxu0 0.0
    %2788 = vmatprep.subr.mxu0 0.0
    %2789 = vmatpush1.msra.mxu0 0.0
    %2790 = vmatprep.subr.mxu0 0.0
    %2791 = vmatpush1.msra.mxu0 0.0
    %2792 = vmatprep.subr.mxu0 0.0
    %2793 = vmatpush1.msra.mxu0 0.0
    %2794 = vmatprep.subr.mxu0 0.0
    %2795 = vmatpush1.msra.mxu0 0.0
    %2796 = vmatprep.subr.mxu0 0.0
    %2797 = vmatpush1.msra.mxu0 0.0
    %2798 = vmatprep.subr.mxu0 0.0
    %2799 = vmatpush1.msra.mxu0 0.0
    %2800 = vmatprep.subr.mxu0 0.0
    %2801 = vmatpush1.msra.mxu0 %v334
    %2802 = vmatprep.subr.mxu0 0.0
    %2803 = vmatpush1.msra.mxu0 %v333
    %2804 = vmatprep.subr.mxu0 0.0
    %2805 = vmatpush2.msra.mxu0 0.0
    %2806 = vmatprep.subr.mxu0 0.0
    %2807 = vmatpush2.msra.mxu0 0.0
    %2808 = vmatprep.subr.mxu0 0.0
    %2809 = vmatpush2.msra.mxu0 0.0
    %2810 = vmatprep.subr.mxu0 0.0
    %2811 = vmatpush2.msra.mxu0 0.0
    %2812 = vmatprep.subr.mxu0 0.0
    %2813 = vmatpush2.msra.mxu0 0.0
    %2814 = vmatprep.subr.mxu0 0.0
    %2815 = vmatpush2.msra.mxu0 0.0
    %2816 = vmatprep.subr.mxu0 0.0
    %2817 = vmatpush2.msra.mxu0 0.0
    %2818 = vmatprep.subr.mxu0 0.0
    %2819 = vmatpush2.msra.mxu0 0.0
    %2820 = vmatprep.subr.mxu0 0.0
    %2821 = vmatpush2.msra.mxu0 0.0
    %2822 = vmatprep.subr.mxu0 0.0
    %2823 = vmatpush2.msra.mxu0 0.0
    %2824 = vmatprep.subr.mxu0 0.0
    %2825 = vmatpush2.msra.mxu0 0.0
    %2826 = vmatprep.subr.mxu0 0.0
    %2827 = vmatpush2.msra.mxu0 0.0
    %2828 = vmatprep.subr.mxu0 0.0
    %2829 = vmatpush2.msra.mxu0 0.0
    %2830 = vmatprep.subr.mxu0 0.0
    %2831 = vmatpush2.msra.mxu0 0.0
    %2832 = vmatprep.subr.mxu0 0.0
    %2833 = vmatpush2.msra.mxu0 0.0
    %2834 = vmatprep.subr.mxu0 0.0
    %2835 = vmatpush2.msra.mxu0 0.0
    %2836 = vmatprep.mubr.f32.mxu0 0.0
    %2837 = vmatmul.mubr.f32.gmra.mxu0 %v2767
    %v2838 = vpop.f32.mrf.mxu0
    %v2839 = vadd.f32 0.0, %v2838
    %v2840 = vpop.f32.mrf.mxu0
    %2841 = vmatprep.mubr.f32.mxu0 0.0
    %2842 = vmatmul.mubr.f32.gmra.mxu0 %v2770
    %v2843 = vpop.f32.mrf.mxu0
    %v2844 = vadd.f32 0.0, %v2843
    %v2845 = vpop.f32.mrf.mxu0
    %2846 = vdwg.mxu0
    %v2848 = vsel %vm114, %v315, 0
    %v2851 = vsel %vm114, %v316, 0
    %2853 = vmatprep.subr.mxu0 0.0
    %2854 = vmatpush1.msra.mxu0 0.0
    %2855 = vmatprep.subr.mxu0 0.0
    %2856 = vmatpush1.msra.mxu0 0.0
    %2857 = vmatprep.subr.mxu0 0.0
    %2858 = vmatpush1.msra.mxu0 0.0
    %2859 = vmatprep.subr.mxu0 0.0
    %2860 = vmatpush1.msra.mxu0 0.0
    %2861 = vmatprep.subr.mxu0 0.0
    %2862 = vmatpush1.msra.mxu0 0.0
    %2863 = vmatprep.subr.mxu0 0.0
    %2864 = vmatpush1.msra.mxu0 0.0
    %2865 = vmatprep.subr.mxu0 0.0
    %2866 = vmatpush1.msra.mxu0 0.0
    %2867 = vmatprep.subr.mxu0 0.0
    %2868 = vmatpush1.msra.mxu0 0.0
    %2869 = vmatprep.subr.mxu0 0.0
    %2870 = vmatpush1.msra.mxu0 0.0
    %2871 = vmatprep.subr.mxu0 0.0
    %2872 = vmatpush1.msra.mxu0 0.0
    %2873 = vmatprep.subr.mxu0 0.0
    %2874 = vmatpush1.msra.mxu0 0.0
    %2875 = vmatprep.subr.mxu0 0.0
    %2876 = vmatpush1.msra.mxu0 0.0
    %2877 = vmatprep.subr.mxu0 0.0
    %2878 = vmatpush1.msra.mxu0 0.0
    %2879 = vmatprep.subr.mxu0 0.0
    %2880 = vmatpush1.msra.mxu0 0.0
    %2881 = vmatprep.subr.mxu0 0.0
    %2882 = vmatpush1.msra.mxu0 %v334
    %2883 = vmatprep.subr.mxu0 0.0
    %2884 = vmatpush1.msra.mxu0 %v333
    %2885 = vmatprep.subr.mxu0 0.0
    %2886 = vmatpush2.msra.mxu0 0.0
    %2887 = vmatprep.subr.mxu0 0.0
    %2888 = vmatpush2.msra.mxu0 0.0
    %2889 = vmatprep.subr.mxu0 0.0
    %2890 = vmatpush2.msra.mxu0 0.0
    %2891 = vmatprep.subr.mxu0 0.0
    %2892 = vmatpush2.msra.mxu0 0.0
    %2893 = vmatprep.subr.mxu0 0.0
    %2894 = vmatpush2.msra.mxu0 0.0
    %2895 = vmatprep.subr.mxu0 0.0
    %2896 = vmatpush2.msra.mxu0 0.0
    %2897 = vmatprep.subr.mxu0 0.0
    %2898 = vmatpush2.msra.mxu0 0.0
    %2899 = vmatprep.subr.mxu0 0.0
    %2900 = vmatpush2.msra.mxu0 0.0
    %2901 = vmatprep.subr.mxu0 0.0
    %2902 = vmatpush2.msra.mxu0 0.0
    %2903 = vmatprep.subr.mxu0 0.0
    %2904 = vmatpush2.msra.mxu0 0.0
    %2905 = vmatprep.subr.mxu0 0.0
    %2906 = vmatpush2.msra.mxu0 0.0
    %2907 = vmatprep.subr.mxu0 0.0
    %2908 = vmatpush2.msra.mxu0 0.0
    %2909 = vmatprep.subr.mxu0 0.0
    %2910 = vmatpush2.msra.mxu0 0.0
    %2911 = vmatprep.subr.mxu0 0.0
    %2912 = vmatpush2.msra.mxu0 0.0
    %2913 = vmatprep.subr.mxu0 0.0
    %2914 = vmatpush2.msra.mxu0 0.0
    %2915 = vmatprep.subr.mxu0 0.0
    %2916 = vmatpush2.msra.mxu0 0.0
    %2917 = vmatprep.mubr.f32.mxu0 0.0
    %2918 = vmatmul.mubr.f32.gmra.mxu0 %v2848
    %v2919 = vpop.f32.mrf.mxu0
    %v2920 = vadd.f32 0.0, %v2919
    %v2921 = vpop.f32.mrf.mxu0
    %2922 = vmatprep.mubr.f32.mxu0 0.0
    %2923 = vmatmul.mubr.f32.gmra.mxu0 %v2851
    %v2924 = vpop.f32.mrf.mxu0
    %v2925 = vadd.f32 0.0, %v2924
    %v2926 = vpop.f32.mrf.mxu0
    %2927 = vdwg.mxu0
    %v2929 = vsel %vm114, %v317, 0
    %v2932 = vsel %vm114, %v318, 0
    %2934 = vmatprep.subr.mxu0 0.0
    %2935 = vmatpush1.msra.mxu0 0.0
    %2936 = vmatprep.subr.mxu0 0.0
    %2937 = vmatpush1.msra.mxu0 0.0
    %2938 = vmatprep.subr.mxu0 0.0
    %2939 = vmatpush1.msra.mxu0 0.0
    %2940 = vmatprep.subr.mxu0 0.0
    %2941 = vmatpush1.msra.mxu0 0.0
    %2942 = vmatprep.subr.mxu0 0.0
    %2943 = vmatpush1.msra.mxu0 0.0
    %2944 = vmatprep.subr.mxu0 0.0
    %2945 = vmatpush1.msra.mxu0 0.0
    %2946 = vmatprep.subr.mxu0 0.0
    %2947 = vmatpush1.msra.mxu0 0.0
    %2948 = vmatprep.subr.mxu0 0.0
    %2949 = vmatpush1.msra.mxu0 0.0
    %2950 = vmatprep.subr.mxu0 0.0
    %2951 = vmatpush1.msra.mxu0 0.0
    %2952 = vmatprep.subr.mxu0 0.0
    %2953 = vmatpush1.msra.mxu0 0.0
    %2954 = vmatprep.subr.mxu0 0.0
    %2955 = vmatpush1.msra.mxu0 0.0
    %2956 = vmatprep.subr.mxu0 0.0
    %2957 = vmatpush1.msra.mxu0 0.0
    %2958 = vmatprep.subr.mxu0 0.0
    %2959 = vmatpush1.msra.mxu0 0.0
    %2960 = vmatprep.subr.mxu0 0.0
    %2961 = vmatpush1.msra.mxu0 0.0
    %2962 = vmatprep.subr.mxu0 0.0
    %2963 = vmatpush1.msra.mxu0 %v334
    %2964 = vmatprep.subr.mxu0 0.0
    %2965 = vmatpush1.msra.mxu0 %v333
    %2966 = vmatprep.subr.mxu0 0.0
    %2967 = vmatpush2.msra.mxu0 0.0
    %2968 = vmatprep.subr.mxu0 0.0
    %2969 = vmatpush2.msra.mxu0 0.0
    %2970 = vmatprep.subr.mxu0 0.0
    %2971 = vmatpush2.msra.mxu0 0.0
    %2972 = vmatprep.subr.mxu0 0.0
    %2973 = vmatpush2.msra.mxu0 0.0
    %2974 = vmatprep.subr.mxu0 0.0
    %2975 = vmatpush2.msra.mxu0 0.0
    %2976 = vmatprep.subr.mxu0 0.0
    %2977 = vmatpush2.msra.mxu0 0.0
    %2978 = vmatprep.subr.mxu0 0.0
    %2979 = vmatpush2.msra.mxu0 0.0
    %2980 = vmatprep.subr.mxu0 0.0
    %2981 = vmatpush2.msra.mxu0 0.0
    %2982 = vmatprep.subr.mxu0 0.0
    %2983 = vmatpush2.msra.mxu0 0.0
    %2984 = vmatprep.subr.mxu0 0.0
    %2985 = vmatpush2.msra.mxu0 0.0
    %2986 = vmatprep.subr.mxu0 0.0
    %2987 = vmatpush2.msra.mxu0 0.0
    %2988 = vmatprep.subr.mxu0 0.0
    %2989 = vmatpush2.msra.mxu0 0.0
    %2990 = vmatprep.subr.mxu0 0.0
    %2991 = vmatpush2.msra.mxu0 0.0
    %2992 = vmatprep.subr.mxu0 0.0
    %2993 = vmatpush2.msra.mxu0 0.0
    %2994 = vmatprep.subr.mxu0 0.0
    %2995 = vmatpush2.msra.mxu0 0.0
    %2996 = vmatprep.subr.mxu0 0.0
    %2997 = vmatpush2.msra.mxu0 0.0
    %2998 = vmatprep.mubr.f32.mxu0 0.0
    %2999 = vmatmul.mubr.f32.gmra.mxu0 %v2929
    %v3000 = vpop.f32.mrf.mxu0
    %v3001 = vadd.f32 0.0, %v3000
    %v3002 = vpop.f32.mrf.mxu0
    %3003 = vmatprep.mubr.f32.mxu0 0.0
    %3004 = vmatmul.mubr.f32.gmra.mxu0 %v2932
    %v3005 = vpop.f32.mrf.mxu0
    %v3006 = vadd.f32 0.0, %v3005
    %v3007 = vpop.f32.mrf.mxu0
    %3008 = vdwg.mxu0
    %v3010 = vsel %vm114, %v319, 0
    %v3013 = vsel %vm114, %v320, 0
    %3015 = vmatprep.subr.mxu0 0.0
    %3016 = vmatpush1.msra.mxu0 0.0
    %3017 = vmatprep.subr.mxu0 0.0
    %3018 = vmatpush1.msra.mxu0 0.0
    %3019 = vmatprep.subr.mxu0 0.0
    %3020 = vmatpush1.msra.mxu0 0.0
    %3021 = vmatprep.subr.mxu0 0.0
    %3022 = vmatpush1.msra.mxu0 0.0
    %3023 = vmatprep.subr.mxu0 0.0
    %3024 = vmatpush1.msra.mxu0 0.0
    %3025 = vmatprep.subr.mxu0 0.0
    %3026 = vmatpush1.msra.mxu0 0.0
    %3027 = vmatprep.subr.mxu0 0.0
    %3028 = vmatpush1.msra.mxu0 0.0
    %3029 = vmatprep.subr.mxu0 0.0
    %3030 = vmatpush1.msra.mxu0 0.0
    %3031 = vmatprep.subr.mxu0 0.0
    %3032 = vmatpush1.msra.mxu0 0.0
    %3033 = vmatprep.subr.mxu0 0.0
    %3034 = vmatpush1.msra.mxu0 0.0
    %3035 = vmatprep.subr.mxu0 0.0
    %3036 = vmatpush1.msra.mxu0 0.0
    %3037 = vmatprep.subr.mxu0 0.0
    %3038 = vmatpush1.msra.mxu0 0.0
    %3039 = vmatprep.subr.mxu0 0.0
    %3040 = vmatpush1.msra.mxu0 0.0
    %3041 = vmatprep.subr.mxu0 0.0
    %3042 = vmatpush1.msra.mxu0 0.0
    %3043 = vmatprep.subr.mxu0 0.0
    %3044 = vmatpush1.msra.mxu0 %v334
    %3045 = vmatprep.subr.mxu0 0.0
    %3046 = vmatpush1.msra.mxu0 %v333
    %3047 = vmatprep.subr.mxu0 0.0
    %3048 = vmatpush2.msra.mxu0 0.0
    %3049 = vmatprep.subr.mxu0 0.0
    %3050 = vmatpush2.msra.mxu0 0.0
    %3051 = vmatprep.subr.mxu0 0.0
    %3052 = vmatpush2.msra.mxu0 0.0
    %3053 = vmatprep.subr.mxu0 0.0
    %3054 = vmatpush2.msra.mxu0 0.0
    %3055 = vmatprep.subr.mxu0 0.0
    %3056 = vmatpush2.msra.mxu0 0.0
    %3057 = vmatprep.subr.mxu0 0.0
    %3058 = vmatpush2.msra.mxu0 0.0
    %3059 = vmatprep.subr.mxu0 0.0
    %3060 = vmatpush2.msra.mxu0 0.0
    %3061 = vmatprep.subr.mxu0 0.0
    %3062 = vmatpush2.msra.mxu0 0.0
    %3063 = vmatprep.subr.mxu0 0.0
    %3064 = vmatpush2.msra.mxu0 0.0
    %3065 = vmatprep.subr.mxu0 0.0
    %3066 = vmatpush2.msra.mxu0 0.0
    %3067 = vmatprep.subr.mxu0 0.0
    %3068 = vmatpush2.msra.mxu0 0.0
    %3069 = vmatprep.subr.mxu0 0.0
    %3070 = vmatpush2.msra.mxu0 0.0
    %3071 = vmatprep.subr.mxu0 0.0
    %3072 = vmatpush2.msra.mxu0 0.0
    %3073 = vmatprep.subr.mxu0 0.0
    %3074 = vmatpush2.msra.mxu0 0.0
    %3075 = vmatprep.subr.mxu0 0.0
    %3076 = vmatpush2.msra.mxu0 0.0
    %3077 = vmatprep.subr.mxu0 0.0
    %3078 = vmatpush2.msra.mxu0 0.0
    %3079 = vmatprep.mubr.f32.mxu0 0.0
    %3080 = vmatmul.mubr.f32.gmra.mxu0 %v3010
    %v3081 = vpop.f32.mrf.mxu0
    %v3082 = vadd.f32 0.0, %v3081
    %v3083 = vpop.f32.mrf.mxu0
    %3084 = vmatprep.mubr.f32.mxu0 0.0
    %3085 = vmatmul.mubr.f32.gmra.mxu0 %v3013
    %v3086 = vpop.f32.mrf.mxu0
    %v3087 = vadd.f32 0.0, %v3086
    %v3088 = vpop.f32.mrf.mxu0
    %3089 = vdwg.mxu0
    %v3091 = vsel %vm114, %v321, 0
    %v3094 = vsel %vm114, %v322, 0
    %3096 = vmatprep.subr.mxu0 0.0
    %3097 = vmatpush1.msra.mxu0 0.0
    %3098 = vmatprep.subr.mxu0 0.0
    %3099 = vmatpush1.msra.mxu0 0.0
    %3100 = vmatprep.subr.mxu0 0.0
    %3101 = vmatpush1.msra.mxu0 0.0
    %3102 = vmatprep.subr.mxu0 0.0
    %3103 = vmatpush1.msra.mxu0 0.0
    %3104 = vmatprep.subr.mxu0 0.0
    %3105 = vmatpush1.msra.mxu0 0.0
    %3106 = vmatprep.subr.mxu0 0.0
    %3107 = vmatpush1.msra.mxu0 0.0
    %3108 = vmatprep.subr.mxu0 0.0
    %3109 = vmatpush1.msra.mxu0 0.0
    %3110 = vmatprep.subr.mxu0 0.0
    %3111 = vmatpush1.msra.mxu0 0.0
    %3112 = vmatprep.subr.mxu0 0.0
    %3113 = vmatpush1.msra.mxu0 0.0
    %3114 = vmatprep.subr.mxu0 0.0
    %3115 = vmatpush1.msra.mxu0 0.0
    %3116 = vmatprep.subr.mxu0 0.0
    %3117 = vmatpush1.msra.mxu0 0.0
    %3118 = vmatprep.subr.mxu0 0.0
    %3119 = vmatpush1.msra.mxu0 0.0
    %3120 = vmatprep.subr.mxu0 0.0
    %3121 = vmatpush1.msra.mxu0 0.0
    %3122 = vmatprep.subr.mxu0 0.0
    %3123 = vmatpush1.msra.mxu0 0.0
    %3124 = vmatprep.subr.mxu0 0.0
    %3125 = vmatpush1.msra.mxu0 %v334
    %3126 = vmatprep.subr.mxu0 0.0
    %3127 = vmatpush1.msra.mxu0 %v333
    %3128 = vmatprep.subr.mxu0 0.0
    %3129 = vmatpush2.msra.mxu0 0.0
    %3130 = vmatprep.subr.mxu0 0.0
    %3131 = vmatpush2.msra.mxu0 0.0
    %3132 = vmatprep.subr.mxu0 0.0
    %3133 = vmatpush2.msra.mxu0 0.0
    %3134 = vmatprep.subr.mxu0 0.0
    %3135 = vmatpush2.msra.mxu0 0.0
    %3136 = vmatprep.subr.mxu0 0.0
    %3137 = vmatpush2.msra.mxu0 0.0
    %3138 = vmatprep.subr.mxu0 0.0
    %3139 = vmatpush2.msra.mxu0 0.0
    %3140 = vmatprep.subr.mxu0 0.0
    %3141 = vmatpush2.msra.mxu0 0.0
    %3142 = vmatprep.subr.mxu0 0.0
    %3143 = vmatpush2.msra.mxu0 0.0
    %3144 = vmatprep.subr.mxu0 0.0
    %3145 = vmatpush2.msra.mxu0 0.0
    %3146 = vmatprep.subr.mxu0 0.0
    %3147 = vmatpush2.msra.mxu0 0.0
    %3148 = vmatprep.subr.mxu0 0.0
    %3149 = vmatpush2.msra.mxu0 0.0
    %3150 = vmatprep.subr.mxu0 0.0
    %3151 = vmatpush2.msra.mxu0 0.0
    %3152 = vmatprep.subr.mxu0 0.0
    %3153 = vmatpush2.msra.mxu0 0.0
    %3154 = vmatprep.subr.mxu0 0.0
    %3155 = vmatpush2.msra.mxu0 0.0
    %3156 = vmatprep.subr.mxu0 0.0
    %3157 = vmatpush2.msra.mxu0 0.0
    %3158 = vmatprep.subr.mxu0 0.0
    %3159 = vmatpush2.msra.mxu0 0.0
    %3160 = vmatprep.mubr.f32.mxu0 0.0
    %3161 = vmatmul.mubr.f32.gmra.mxu0 %v3091
    %v3162 = vpop.f32.mrf.mxu0
    %v3163 = vadd.f32 0.0, %v3162
    %v3164 = vpop.f32.mrf.mxu0
    %3165 = vmatprep.mubr.f32.mxu0 0.0
    %3166 = vmatmul.mubr.f32.gmra.mxu0 %v3094
    %v3167 = vpop.f32.mrf.mxu0
    %v3168 = vadd.f32 0.0, %v3167
    %v3169 = vpop.f32.mrf.mxu0
    %3170 = vdwg.mxu0
    %v3172 = vsel %vm114, %v323, 0
    %v3175 = vsel %vm114, %v324, 0
    %3177 = vmatprep.subr.mxu0 0.0
    %3178 = vmatpush1.msra.mxu0 0.0
    %3179 = vmatprep.subr.mxu0 0.0
    %3180 = vmatpush1.msra.mxu0 0.0
    %3181 = vmatprep.subr.mxu0 0.0
    %3182 = vmatpush1.msra.mxu0 0.0
    %3183 = vmatprep.subr.mxu0 0.0
    %3184 = vmatpush1.msra.mxu0 0.0
    %3185 = vmatprep.subr.mxu0 0.0
    %3186 = vmatpush1.msra.mxu0 0.0
    %3187 = vmatprep.subr.mxu0 0.0
    %3188 = vmatpush1.msra.mxu0 0.0
    %3189 = vmatprep.subr.mxu0 0.0
    %3190 = vmatpush1.msra.mxu0 0.0
    %3191 = vmatprep.subr.mxu0 0.0
    %3192 = vmatpush1.msra.mxu0 0.0
    %3193 = vmatprep.subr.mxu0 0.0
    %3194 = vmatpush1.msra.mxu0 0.0
    %3195 = vmatprep.subr.mxu0 0.0
    %3196 = vmatpush1.msra.mxu0 0.0
    %3197 = vmatprep.subr.mxu0 0.0
    %3198 = vmatpush1.msra.mxu0 0.0
    %3199 = vmatprep.subr.mxu0 0.0
    %3200 = vmatpush1.msra.mxu0 0.0
    %3201 = vmatprep.subr.mxu0 0.0
    %3202 = vmatpush1.msra.mxu0 0.0
    %3203 = vmatprep.subr.mxu0 0.0
    %3204 = vmatpush1.msra.mxu0 0.0
    %3205 = vmatprep.subr.mxu0 0.0
    %3206 = vmatpush1.msra.mxu0 %v334
    %3207 = vmatprep.subr.mxu0 0.0
    %3208 = vmatpush1.msra.mxu0 %v333
    %3209 = vmatprep.subr.mxu0 0.0
    %3210 = vmatpush2.msra.mxu0 0.0
    %3211 = vmatprep.subr.mxu0 0.0
    %3212 = vmatpush2.msra.mxu0 0.0
    %3213 = vmatprep.subr.mxu0 0.0
    %3214 = vmatpush2.msra.mxu0 0.0
    %3215 = vmatprep.subr.mxu0 0.0
    %3216 = vmatpush2.msra.mxu0 0.0
    %3217 = vmatprep.subr.mxu0 0.0
    %3218 = vmatpush2.msra.mxu0 0.0
    %3219 = vmatprep.subr.mxu0 0.0
    %3220 = vmatpush2.msra.mxu0 0.0
    %3221 = vmatprep.subr.mxu0 0.0
    %3222 = vmatpush2.msra.mxu0 0.0
    %3223 = vmatprep.subr.mxu0 0.0
    %3224 = vmatpush2.msra.mxu0 0.0
    %3225 = vmatprep.subr.mxu0 0.0
    %3226 = vmatpush2.msra.mxu0 0.0
    %3227 = vmatprep.subr.mxu0 0.0
    %3228 = vmatpush2.msra.mxu0 0.0
    %3229 = vmatprep.subr.mxu0 0.0
    %3230 = vmatpush2.msra.mxu0 0.0
    %3231 = vmatprep.subr.mxu0 0.0
    %3232 = vmatpush2.msra.mxu0 0.0
    %3233 = vmatprep.subr.mxu0 0.0
    %3234 = vmatpush2.msra.mxu0 0.0
    %3235 = vmatprep.subr.mxu0 0.0
    %3236 = vmatpush2.msra.mxu0 0.0
    %3237 = vmatprep.subr.mxu0 0.0
    %3238 = vmatpush2.msra.mxu0 0.0
    %3239 = vmatprep.subr.mxu0 0.0
    %3240 = vmatpush2.msra.mxu0 0.0
    %3241 = vmatprep.mubr.f32.mxu0 0.0
    %3242 = vmatmul.mubr.f32.gmra.mxu0 %v3172
    %v3243 = vpop.f32.mrf.mxu0
    %v3244 = vadd.f32 0.0, %v3243
    %v3245 = vpop.f32.mrf.mxu0
    %3246 = vmatprep.mubr.f32.mxu0 0.0
    %3247 = vmatmul.mubr.f32.gmra.mxu0 %v3175
    %v3248 = vpop.f32.mrf.mxu0
    %v3249 = vadd.f32 0.0, %v3248
    %v3250 = vpop.f32.mrf.mxu0
    %3251 = vdwg.mxu0
    %v3253 = vsel %vm114, %v325, 0
    %v3256 = vsel %vm114, %v326, 0
    %3258 = vmatprep.subr.mxu0 0.0
    %3259 = vmatpush1.msra.mxu0 0.0
    %3260 = vmatprep.subr.mxu0 0.0
    %3261 = vmatpush1.msra.mxu0 0.0
    %3262 = vmatprep.subr.mxu0 0.0
    %3263 = vmatpush1.msra.mxu0 0.0
    %3264 = vmatprep.subr.mxu0 0.0
    %3265 = vmatpush1.msra.mxu0 0.0
    %3266 = vmatprep.subr.mxu0 0.0
    %3267 = vmatpush1.msra.mxu0 0.0
    %3268 = vmatprep.subr.mxu0 0.0
    %3269 = vmatpush1.msra.mxu0 0.0
    %3270 = vmatprep.subr.mxu0 0.0
    %3271 = vmatpush1.msra.mxu0 0.0
    %3272 = vmatprep.subr.mxu0 0.0
    %3273 = vmatpush1.msra.mxu0 0.0
    %3274 = vmatprep.subr.mxu0 0.0
    %3275 = vmatpush1.msra.mxu0 0.0
    %3276 = vmatprep.subr.mxu0 0.0
    %3277 = vmatpush1.msra.mxu0 0.0
    %3278 = vmatprep.subr.mxu0 0.0
    %3279 = vmatpush1.msra.mxu0 0.0
    %3280 = vmatprep.subr.mxu0 0.0
    %3281 = vmatpush1.msra.mxu0 0.0
    %3282 = vmatprep.subr.mxu0 0.0
    %3283 = vmatpush1.msra.mxu0 0.0
    %3284 = vmatprep.subr.mxu0 0.0
    %3285 = vmatpush1.msra.mxu0 0.0
    %3286 = vmatprep.subr.mxu0 0.0
    %3287 = vmatpush1.msra.mxu0 %v334
    %3288 = vmatprep.subr.mxu0 0.0
    %3289 = vmatpush1.msra.mxu0 %v333
    %3290 = vmatprep.subr.mxu0 0.0
    %3291 = vmatpush2.msra.mxu0 0.0
    %3292 = vmatprep.subr.mxu0 0.0
    %3293 = vmatpush2.msra.mxu0 0.0
    %3294 = vmatprep.subr.mxu0 0.0
    %3295 = vmatpush2.msra.mxu0 0.0
    %3296 = vmatprep.subr.mxu0 0.0
    %3297 = vmatpush2.msra.mxu0 0.0
    %3298 = vmatprep.subr.mxu0 0.0
    %3299 = vmatpush2.msra.mxu0 0.0
    %3300 = vmatprep.subr.mxu0 0.0
    %3301 = vmatpush2.msra.mxu0 0.0
    %3302 = vmatprep.subr.mxu0 0.0
    %3303 = vmatpush2.msra.mxu0 0.0
    %3304 = vmatprep.subr.mxu0 0.0
    %3305 = vmatpush2.msra.mxu0 0.0
    %3306 = vmatprep.subr.mxu0 0.0
    %3307 = vmatpush2.msra.mxu0 0.0
    %3308 = vmatprep.subr.mxu0 0.0
    %3309 = vmatpush2.msra.mxu0 0.0
    %3310 = vmatprep.subr.mxu0 0.0
    %3311 = vmatpush2.msra.mxu0 0.0
    %3312 = vmatprep.subr.mxu0 0.0
    %3313 = vmatpush2.msra.mxu0 0.0
    %3314 = vmatprep.subr.mxu0 0.0
    %3315 = vmatpush2.msra.mxu0 0.0
    %3316 = vmatprep.subr.mxu0 0.0
    %3317 = vmatpush2.msra.mxu0 0.0
    %3318 = vmatprep.subr.mxu0 0.0
    %3319 = vmatpush2.msra.mxu0 0.0
    %3320 = vmatprep.subr.mxu0 0.0
    %3321 = vmatpush2.msra.mxu0 0.0
    %3322 = vmatprep.mubr.f32.mxu0 0.0
    %3323 = vmatmul.mubr.f32.gmra.mxu0 %v3253
    %v3324 = vpop.f32.mrf.mxu0
    %v3325 = vadd.f32 0.0, %v3324
    %v3326 = vpop.f32.mrf.mxu0
    %3327 = vmatprep.mubr.f32.mxu0 0.0
    %3328 = vmatmul.mubr.f32.gmra.mxu0 %v3256
    %v3329 = vpop.f32.mrf.mxu0
    %v3330 = vadd.f32 0.0, %v3329
    %v3331 = vpop.f32.mrf.mxu0
    %3332 = vdwg.mxu0
    %v3334 = vsel %vm114, %v327, 0
    %v3337 = vsel %vm114, %v328, 0
    %3339 = vmatprep.subr.mxu0 0.0
    %3340 = vmatpush1.msra.mxu0 0.0
    %3341 = vmatprep.subr.mxu0 0.0
    %3342 = vmatpush1.msra.mxu0 0.0
    %3343 = vmatprep.subr.mxu0 0.0
    %3344 = vmatpush1.msra.mxu0 0.0
    %3345 = vmatprep.subr.mxu0 0.0
    %3346 = vmatpush1.msra.mxu0 0.0
    %3347 = vmatprep.subr.mxu0 0.0
    %3348 = vmatpush1.msra.mxu0 0.0
    %3349 = vmatprep.subr.mxu0 0.0
    %3350 = vmatpush1.msra.mxu0 0.0
    %3351 = vmatprep.subr.mxu0 0.0
    %3352 = vmatpush1.msra.mxu0 0.0
    %3353 = vmatprep.subr.mxu0 0.0
    %3354 = vmatpush1.msra.mxu0 0.0
    %3355 = vmatprep.subr.mxu0 0.0
    %3356 = vmatpush1.msra.mxu0 0.0
    %3357 = vmatprep.subr.mxu0 0.0
    %3358 = vmatpush1.msra.mxu0 0.0
    %3359 = vmatprep.subr.mxu0 0.0
    %3360 = vmatpush1.msra.mxu0 0.0
    %3361 = vmatprep.subr.mxu0 0.0
    %3362 = vmatpush1.msra.mxu0 0.0
    %3363 = vmatprep.subr.mxu0 0.0
    %3364 = vmatpush1.msra.mxu0 0.0
    %3365 = vmatprep.subr.mxu0 0.0
    %3366 = vmatpush1.msra.mxu0 0.0
    %3367 = vmatprep.subr.mxu0 0.0
    %3368 = vmatpush1.msra.mxu0 %v334
    %3369 = vmatprep.subr.mxu0 0.0
    %3370 = vmatpush1.msra.mxu0 %v333
    %3371 = vmatprep.subr.mxu0 0.0
    %3372 = vmatpush2.msra.mxu0 0.0
    %3373 = vmatprep.subr.mxu0 0.0
    %3374 = vmatpush2.msra.mxu0 0.0
    %3375 = vmatprep.subr.mxu0 0.0
    %3376 = vmatpush2.msra.mxu0 0.0
    %3377 = vmatprep.subr.mxu0 0.0
    %3378 = vmatpush2.msra.mxu0 0.0
    %3379 = vmatprep.subr.mxu0 0.0
    %3380 = vmatpush2.msra.mxu0 0.0
    %3381 = vmatprep.subr.mxu0 0.0
    %3382 = vmatpush2.msra.mxu0 0.0
    %3383 = vmatprep.subr.mxu0 0.0
    %3384 = vmatpush2.msra.mxu0 0.0
    %3385 = vmatprep.subr.mxu0 0.0
    %3386 = vmatpush2.msra.mxu0 0.0
    %3387 = vmatprep.subr.mxu0 0.0
    %3388 = vmatpush2.msra.mxu0 0.0
    %3389 = vmatprep.subr.mxu0 0.0
    %3390 = vmatpush2.msra.mxu0 0.0
    %3391 = vmatprep.subr.mxu0 0.0
    %3392 = vmatpush2.msra.mxu0 0.0
    %3393 = vmatprep.subr.mxu0 0.0
    %3394 = vmatpush2.msra.mxu0 0.0
    %3395 = vmatprep.subr.mxu0 0.0
    %3396 = vmatpush2.msra.mxu0 0.0
    %3397 = vmatprep.subr.mxu0 0.0
    %3398 = vmatpush2.msra.mxu0 0.0
    %3399 = vmatprep.subr.mxu0 0.0
    %3400 = vmatpush2.msra.mxu0 0.0
    %3401 = vmatprep.subr.mxu0 0.0
    %3402 = vmatpush2.msra.mxu0 0.0
    %3403 = vmatprep.mubr.f32.mxu0 0.0
    %3404 = vmatmul.mubr.f32.gmra.mxu0 %v3334
    %v3405 = vpop.f32.mrf.mxu0
    %v3406 = vadd.f32 0.0, %v3405
    %v3407 = vpop.f32.mrf.mxu0
    %3408 = vmatprep.mubr.f32.mxu0 0.0
    %3409 = vmatmul.mubr.f32.gmra.mxu0 %v3337
    %v3410 = vpop.f32.mrf.mxu0
    %v3411 = vadd.f32 0.0, %v3410
    %v3412 = vpop.f32.mrf.mxu0
    %3413 = vdwg.mxu0
    %v3415 = vsel %vm114, %v329, 0
    %v3418 = vsel %vm114, %v330, 0
    %3420 = vmatprep.subr.mxu0 0.0
    %3421 = vmatpush1.msra.mxu0 0.0
    %3422 = vmatprep.subr.mxu0 0.0
    %3423 = vmatpush1.msra.mxu0 0.0
    %3424 = vmatprep.subr.mxu0 0.0
    %3425 = vmatpush1.msra.mxu0 0.0
    %3426 = vmatprep.subr.mxu0 0.0
    %3427 = vmatpush1.msra.mxu0 0.0
    %3428 = vmatprep.subr.mxu0 0.0
    %3429 = vmatpush1.msra.mxu0 0.0
    %3430 = vmatprep.subr.mxu0 0.0
    %3431 = vmatpush1.msra.mxu0 0.0
    %3432 = vmatprep.subr.mxu0 0.0
    %3433 = vmatpush1.msra.mxu0 0.0
    %3434 = vmatprep.subr.mxu0 0.0
    %3435 = vmatpush1.msra.mxu0 0.0
    %3436 = vmatprep.subr.mxu0 0.0
    %3437 = vmatpush1.msra.mxu0 0.0
    %3438 = vmatprep.subr.mxu0 0.0
    %3439 = vmatpush1.msra.mxu0 0.0
    %3440 = vmatprep.subr.mxu0 0.0
    %3441 = vmatpush1.msra.mxu0 0.0
    %3442 = vmatprep.subr.mxu0 0.0
    %3443 = vmatpush1.msra.mxu0 0.0
    %3444 = vmatprep.subr.mxu0 0.0
    %3445 = vmatpush1.msra.mxu0 0.0
    %3446 = vmatprep.subr.mxu0 0.0
    %3447 = vmatpush1.msra.mxu0 0.0
    %3448 = vmatprep.subr.mxu0 0.0
    %3449 = vmatpush1.msra.mxu0 %v334
    %3450 = vmatprep.subr.mxu0 0.0
    %3451 = vmatpush1.msra.mxu0 %v333
    %3452 = vmatprep.subr.mxu0 0.0
    %3453 = vmatpush2.msra.mxu0 0.0
    %3454 = vmatprep.subr.mxu0 0.0
    %3455 = vmatpush2.msra.mxu0 0.0
    %3456 = vmatprep.subr.mxu0 0.0
    %3457 = vmatpush2.msra.mxu0 0.0
    %3458 = vmatprep.subr.mxu0 0.0
    %3459 = vmatpush2.msra.mxu0 0.0
    %3460 = vmatprep.subr.mxu0 0.0
    %3461 = vmatpush2.msra.mxu0 0.0
    %3462 = vmatprep.subr.mxu0 0.0
    %3463 = vmatpush2.msra.mxu0 0.0
    %3464 = vmatprep.subr.mxu0 0.0
    %3465 = vmatpush2.msra.mxu0 0.0
    %3466 = vmatprep.subr.mxu0 0.0
    %3467 = vmatpush2.msra.mxu0 0.0
    %3468 = vmatprep.subr.mxu0 0.0
    %3469 = vmatpush2.msra.mxu0 0.0
    %3470 = vmatprep.subr.mxu0 0.0
    %3471 = vmatpush2.msra.mxu0 0.0
    %3472 = vmatprep.subr.mxu0 0.0
    %3473 = vmatpush2.msra.mxu0 0.0
    %3474 = vmatprep.subr.mxu0 0.0
    %3475 = vmatpush2.msra.mxu0 0.0
    %3476 = vmatprep.subr.mxu0 0.0
    %3477 = vmatpush2.msra.mxu0 0.0
    %3478 = vmatprep.subr.mxu0 0.0
    %3479 = vmatpush2.msra.mxu0 0.0
    %3480 = vmatprep.subr.mxu0 0.0
    %3481 = vmatpush2.msra.mxu0 0.0
    %3482 = vmatprep.subr.mxu0 0.0
    %3483 = vmatpush2.msra.mxu0 0.0
    %3484 = vmatprep.mubr.f32.mxu0 0.0
    %3485 = vmatmul.mubr.f32.gmra.mxu0 %v3415
    %v3486 = vpop.f32.mrf.mxu0
    %v3487 = vadd.f32 0.0, %v3486
    %v3488 = vpop.f32.mrf.mxu0
    %3489 = vmatprep.mubr.f32.mxu0 0.0
    %3490 = vmatmul.mubr.f32.gmra.mxu0 %v3418
    %v3491 = vpop.f32.mrf.mxu0
    %v3492 = vadd.f32 0.0, %v3491
    %v3493 = vpop.f32.mrf.mxu0
    %3494 = vdwg.mxu0
    %v3496 = vsel %vm114, %v331, 0
    %v3499 = vsel %vm114, %v332, 0
    %3501 = vmatprep.subr.mxu0 0.0
    %3502 = vmatpush1.msra.mxu0 0.0
    %3503 = vmatprep.subr.mxu0 0.0
    %3504 = vmatpush1.msra.mxu0 0.0
    %3505 = vmatprep.subr.mxu0 0.0
    %3506 = vmatpush1.msra.mxu0 0.0
    %3507 = vmatprep.subr.mxu0 0.0
    %3508 = vmatpush1.msra.mxu0 0.0
    %3509 = vmatprep.subr.mxu0 0.0
    %3510 = vmatpush1.msra.mxu0 0.0
    %3511 = vmatprep.subr.mxu0 0.0
    %3512 = vmatpush1.msra.mxu0 0.0
    %3513 = vmatprep.subr.mxu0 0.0
    %3514 = vmatpush1.msra.mxu0 0.0
    %3515 = vmatprep.subr.mxu0 0.0
    %3516 = vmatpush1.msra.mxu0 0.0
    %3517 = vmatprep.subr.mxu0 0.0
    %3518 = vmatpush1.msra.mxu0 0.0
    %3519 = vmatprep.subr.mxu0 0.0
    %3520 = vmatpush1.msra.mxu0 0.0
    %3521 = vmatprep.subr.mxu0 0.0
    %3522 = vmatpush1.msra.mxu0 0.0
    %3523 = vmatprep.subr.mxu0 0.0
    %3524 = vmatpush1.msra.mxu0 0.0
    %3525 = vmatprep.subr.mxu0 0.0
    %3526 = vmatpush1.msra.mxu0 0.0
    %3527 = vmatprep.subr.mxu0 0.0
    %3528 = vmatpush1.msra.mxu0 0.0
    %3529 = vmatprep.subr.mxu0 0.0
    %3530 = vmatpush1.msra.mxu0 %v334
    %3531 = vmatprep.subr.mxu0 0.0
    %3532 = vmatpush1.msra.mxu0 %v333
    %3533 = vmatprep.subr.mxu0 0.0
    %3534 = vmatpush2.msra.mxu0 0.0
    %3535 = vmatprep.subr.mxu0 0.0
    %3536 = vmatpush2.msra.mxu0 0.0
    %3537 = vmatprep.subr.mxu0 0.0
    %3538 = vmatpush2.msra.mxu0 0.0
    %3539 = vmatprep.subr.mxu0 0.0
    %3540 = vmatpush2.msra.mxu0 0.0
    %3541 = vmatprep.subr.mxu0 0.0
    %3542 = vmatpush2.msra.mxu0 0.0
    %3543 = vmatprep.subr.mxu0 0.0
    %3544 = vmatpush2.msra.mxu0 0.0
    %3545 = vmatprep.subr.mxu0 0.0
    %3546 = vmatpush2.msra.mxu0 0.0
    %3547 = vmatprep.subr.mxu0 0.0
    %3548 = vmatpush2.msra.mxu0 0.0
    %3549 = vmatprep.subr.mxu0 0.0
    %3550 = vmatpush2.msra.mxu0 0.0
    %3551 = vmatprep.subr.mxu0 0.0
    %3552 = vmatpush2.msra.mxu0 0.0
    %3553 = vmatprep.subr.mxu0 0.0
    %3554 = vmatpush2.msra.mxu0 0.0
    %3555 = vmatprep.subr.mxu0 0.0
    %3556 = vmatpush2.msra.mxu0 0.0
    %3557 = vmatprep.subr.mxu0 0.0
    %3558 = vmatpush2.msra.mxu0 0.0
    %3559 = vmatprep.subr.mxu0 0.0
    %3560 = vmatpush2.msra.mxu0 0.0
    %3561 = vmatprep.subr.mxu0 0.0
    %3562 = vmatpush2.msra.mxu0 0.0
    %3563 = vmatprep.subr.mxu0 0.0
    %3564 = vmatpush2.msra.mxu0 0.0
    %3565 = vmatprep.mubr.f32.mxu0 0.0
    %3566 = vmatmul.mubr.f32.gmra.mxu0 %v3496
    %v3567 = vpop.f32.mrf.mxu0
    %v3568 = vadd.f32 0.0, %v3567
    %v3569 = vpop.f32.mrf.mxu0
    %3570 = vmatprep.mubr.f32.mxu0 0.0
    %3571 = vmatmul.mubr.f32.gmra.mxu0 %v3499
    %v3572 = vpop.f32.mrf.mxu0
    %v3573 = vadd.f32 0.0, %v3572
    %v3574 = vpop.f32.mrf.mxu0
    %3575 = vdwg.mxu0
    %v3577 = vsel %vm114, %v335, 0
    %3579 = vmatprep.subr.mxu0 0.0
    %3580 = vmatpush1.msra.mxu0 0.0
    %3581 = vmatprep.subr.mxu0 0.0
    %3582 = vmatpush1.msra.mxu0 0.0
    %3583 = vmatprep.subr.mxu0 0.0
    %3584 = vmatpush1.msra.mxu0 0.0
    %3585 = vmatprep.subr.mxu0 0.0
    %3586 = vmatpush1.msra.mxu0 0.0
    %3587 = vmatprep.subr.mxu0 0.0
    %3588 = vmatpush1.msra.mxu0 0.0
    %3589 = vmatprep.subr.mxu0 0.0
    %3590 = vmatpush1.msra.mxu0 0.0
    %3591 = vmatprep.subr.mxu0 0.0
    %3592 = vmatpush1.msra.mxu0 0.0
    %3593 = vmatprep.subr.mxu0 0.0
    %3594 = vmatpush1.msra.mxu0 0.0
    %3595 = vmatprep.subr.mxu0 0.0
    %3596 = vmatpush1.msra.mxu0 0.0
    %3597 = vmatprep.subr.mxu0 0.0
    %3598 = vmatpush1.msra.mxu0 0.0
    %3599 = vmatprep.subr.mxu0 0.0
    %3600 = vmatpush1.msra.mxu0 0.0
    %3601 = vmatprep.subr.mxu0 0.0
    %3602 = vmatpush1.msra.mxu0 0.0
    %3603 = vmatprep.subr.mxu0 0.0
    %3604 = vmatpush1.msra.mxu0 0.0
    %3605 = vmatprep.subr.mxu0 0.0
    %3606 = vmatpush1.msra.mxu0 0.0
    %3607 = vmatprep.subr.mxu0 0.0
    %3608 = vmatpush1.msra.mxu0 %v414
    %3609 = vmatprep.subr.mxu0 0.0
    %3610 = vmatpush1.msra.mxu0 %v409
    %3611 = vmatprep.subr.mxu0 0.0
    %3612 = vmatpush2.msra.mxu0 0.0
    %3613 = vmatprep.subr.mxu0 0.0
    %3614 = vmatpush2.msra.mxu0 0.0
    %3615 = vmatprep.subr.mxu0 0.0
    %3616 = vmatpush2.msra.mxu0 0.0
    %3617 = vmatprep.subr.mxu0 0.0
    %3618 = vmatpush2.msra.mxu0 0.0
    %3619 = vmatprep.subr.mxu0 0.0
    %3620 = vmatpush2.msra.mxu0 0.0
    %3621 = vmatprep.subr.mxu0 0.0
    %3622 = vmatpush2.msra.mxu0 0.0
    %3623 = vmatprep.subr.mxu0 0.0
    %3624 = vmatpush2.msra.mxu0 0.0
    %3625 = vmatprep.subr.mxu0 0.0
    %3626 = vmatpush2.msra.mxu0 0.0
    %3627 = vmatprep.subr.mxu0 0.0
    %3628 = vmatpush2.msra.mxu0 0.0
    %3629 = vmatprep.subr.mxu0 0.0
    %3630 = vmatpush2.msra.mxu0 0.0
    %3631 = vmatprep.subr.mxu0 0.0
    %3632 = vmatpush2.msra.mxu0 0.0
    %3633 = vmatprep.subr.mxu0 0.0
    %3634 = vmatpush2.msra.mxu0 0.0
    %3635 = vmatprep.subr.mxu0 0.0
    %3636 = vmatpush2.msra.mxu0 0.0
    %3637 = vmatprep.subr.mxu0 0.0
    %3638 = vmatpush2.msra.mxu0 0.0
    %3639 = vmatprep.subr.mxu0 0.0
    %3640 = vmatpush2.msra.mxu0 0.0
    %3641 = vmatprep.subr.mxu0 0.0
    %3642 = vmatpush2.msra.mxu0 0.0
    %3643 = vmatprep.mubr.f32.mxu0 0.0
    %3644 = vmatmul.mubr.f32.gmra.mxu0 %v3577
    %v3645 = vpop.f32.mrf.mxu0
    %v3646 = vadd.f32 0.0, %v3645
    %v3647 = vpop.f32.mrf.mxu0
    %3648 = vdwg.mxu0
    %3649 = vmatprep.subr.mxu0 0.0
    %3650 = vmatpush1.msra.mxu0 0.0
    %3651 = vmatprep.subr.mxu0 0.0
    %3652 = vmatpush1.msra.mxu0 0.0
    %3653 = vmatprep.subr.mxu0 0.0
    %3654 = vmatpush1.msra.mxu0 0.0
    %3655 = vmatprep.subr.mxu0 0.0
    %3656 = vmatpush1.msra.mxu0 0.0
    %3657 = vmatprep.subr.mxu0 0.0
    %3658 = vmatpush1.msra.mxu0 0.0
    %3659 = vmatprep.subr.mxu0 0.0
    %3660 = vmatpush1.msra.mxu0 0.0
    %3661 = vmatprep.subr.mxu0 0.0
    %3662 = vmatpush1.msra.mxu0 0.0
    %3663 = vmatprep.subr.mxu0 0.0
    %3664 = vmatpush1.msra.mxu0 0.0
    %3665 = vmatprep.subr.mxu0 0.0
    %3666 = vmatpush1.msra.mxu0 0.0
    %3667 = vmatprep.subr.mxu0 0.0
    %3668 = vmatpush1.msra.mxu0 0.0
    %3669 = vmatprep.subr.mxu0 0.0
    %3670 = vmatpush1.msra.mxu0 0.0
    %3671 = vmatprep.subr.mxu0 0.0
    %3672 = vmatpush1.msra.mxu0 0.0
    %3673 = vmatprep.subr.mxu0 0.0
    %3674 = vmatpush1.msra.mxu0 0.0
    %3675 = vmatprep.subr.mxu0 0.0
    %3676 = vmatpush1.msra.mxu0 0.0
    %3677 = vmatprep.subr.mxu0 0.0
    %3678 = vmatpush1.msra.mxu0 %v495
    %3679 = vmatprep.subr.mxu0 0.0
    %3680 = vmatpush1.msra.mxu0 %v490
    %3681 = vmatprep.subr.mxu0 0.0
    %3682 = vmatpush2.msra.mxu0 0.0
    %3683 = vmatprep.subr.mxu0 0.0
    %3684 = vmatpush2.msra.mxu0 0.0
    %3685 = vmatprep.subr.mxu0 0.0
    %3686 = vmatpush2.msra.mxu0 0.0
    %3687 = vmatprep.subr.mxu0 0.0
    %3688 = vmatpush2.msra.mxu0 0.0
    %3689 = vmatprep.subr.mxu0 0.0
    %3690 = vmatpush2.msra.mxu0 0.0
    %3691 = vmatprep.subr.mxu0 0.0
    %3692 = vmatpush2.msra.mxu0 0.0
    %3693 = vmatprep.subr.mxu0 0.0
    %3694 = vmatpush2.msra.mxu0 0.0
    %3695 = vmatprep.subr.mxu0 0.0
    %3696 = vmatpush2.msra.mxu0 0.0
    %3697 = vmatprep.subr.mxu0 0.0
    %3698 = vmatpush2.msra.mxu0 0.0
    %3699 = vmatprep.subr.mxu0 0.0
    %3700 = vmatpush2.msra.mxu0 0.0
    %3701 = vmatprep.subr.mxu0 0.0
    %3702 = vmatpush2.msra.mxu0 0.0
    %3703 = vmatprep.subr.mxu0 0.0
    %3704 = vmatpush2.msra.mxu0 0.0
    %3705 = vmatprep.subr.mxu0 0.0
    %3706 = vmatpush2.msra.mxu0 0.0
    %3707 = vmatprep.subr.mxu0 0.0
    %3708 = vmatpush2.msra.mxu0 0.0
    %3709 = vmatprep.subr.mxu0 0.0
    %3710 = vmatpush2.msra.mxu0 0.0
    %3711 = vmatprep.subr.mxu0 0.0
    %3712 = vmatpush2.msra.mxu0 0.0
    %3713 = vmatprep.mubr.f32.mxu0 0.0
    %3714 = vmatmul.mubr.f32.gmra.mxu0 %v3577
    %v3715 = vpop.f32.mrf.mxu0
    %v3716 = vadd.f32 0.0, %v3715
    %v3717 = vpop.f32.mrf.mxu0
    %3718 = vdwg.mxu0
    %3719 = vmatprep.subr.mxu0 0.0
    %3720 = vmatpush1.msra.mxu0 0.0
    %3721 = vmatprep.subr.mxu0 0.0
    %3722 = vmatpush1.msra.mxu0 0.0
    %3723 = vmatprep.subr.mxu0 0.0
    %3724 = vmatpush1.msra.mxu0 0.0
    %3725 = vmatprep.subr.mxu0 0.0
    %3726 = vmatpush1.msra.mxu0 0.0
    %3727 = vmatprep.subr.mxu0 0.0
    %3728 = vmatpush1.msra.mxu0 0.0
    %3729 = vmatprep.subr.mxu0 0.0
    %3730 = vmatpush1.msra.mxu0 0.0
    %3731 = vmatprep.subr.mxu0 0.0
    %3732 = vmatpush1.msra.mxu0 0.0
    %3733 = vmatprep.subr.mxu0 0.0
    %3734 = vmatpush1.msra.mxu0 0.0
    %3735 = vmatprep.subr.mxu0 0.0
    %3736 = vmatpush1.msra.mxu0 0.0
    %3737 = vmatprep.subr.mxu0 0.0
    %3738 = vmatpush1.msra.mxu0 0.0
    %3739 = vmatprep.subr.mxu0 0.0
    %3740 = vmatpush1.msra.mxu0 0.0
    %3741 = vmatprep.subr.mxu0 0.0
    %3742 = vmatpush1.msra.mxu0 0.0
    %3743 = vmatprep.subr.mxu0 0.0
    %3744 = vmatpush1.msra.mxu0 0.0
    %3745 = vmatprep.subr.mxu0 0.0
    %3746 = vmatpush1.msra.mxu0 0.0
    %3747 = vmatprep.subr.mxu0 0.0
    %3748 = vmatpush1.msra.mxu0 %v576
    %3749 = vmatprep.subr.mxu0 0.0
    %3750 = vmatpush1.msra.mxu0 %v571
    %3751 = vmatprep.subr.mxu0 0.0
    %3752 = vmatpush2.msra.mxu0 0.0
    %3753 = vmatprep.subr.mxu0 0.0
    %3754 = vmatpush2.msra.mxu0 0.0
    %3755 = vmatprep.subr.mxu0 0.0
    %3756 = vmatpush2.msra.mxu0 0.0
    %3757 = vmatprep.subr.mxu0 0.0
    %3758 = vmatpush2.msra.mxu0 0.0
    %3759 = vmatprep.subr.mxu0 0.0
    %3760 = vmatpush2.msra.mxu0 0.0
    %3761 = vmatprep.subr.mxu0 0.0
    %3762 = vmatpush2.msra.mxu0 0.0
    %3763 = vmatprep.subr.mxu0 0.0
    %3764 = vmatpush2.msra.mxu0 0.0
    %3765 = vmatprep.subr.mxu0 0.0
    %3766 = vmatpush2.msra.mxu0 0.0
    %3767 = vmatprep.subr.mxu0 0.0
    %3768 = vmatpush2.msra.mxu0 0.0
    %3769 = vmatprep.subr.mxu0 0.0
    %3770 = vmatpush2.msra.mxu0 0.0
    %3771 = vmatprep.subr.mxu0 0.0
    %3772 = vmatpush2.msra.mxu0 0.0
    %3773 = vmatprep.subr.mxu0 0.0
    %3774 = vmatpush2.msra.mxu0 0.0
    %3775 = vmatprep.subr.mxu0 0.0
    %3776 = vmatpush2.msra.mxu0 0.0
    %3777 = vmatprep.subr.mxu0 0.0
    %3778 = vmatpush2.msra.mxu0 0.0
    %3779 = vmatprep.subr.mxu0 0.0
    %3780 = vmatpush2.msra.mxu0 0.0
    %3781 = vmatprep.subr.mxu0 0.0
    %3782 = vmatpush2.msra.mxu0 0.0
    %3783 = vmatprep.mubr.f32.mxu0 0.0
    %3784 = vmatmul.mubr.f32.gmra.mxu0 %v3577
    %v3785 = vpop.f32.mrf.mxu0
    %v3786 = vadd.f32 0.0, %v3785
    %v3787 = vpop.f32.mrf.mxu0
    %3788 = vdwg.mxu0
    %3789 = vmatprep.subr.mxu0 0.0
    %3790 = vmatpush1.msra.mxu0 0.0
    %3791 = vmatprep.subr.mxu0 0.0
    %3792 = vmatpush1.msra.mxu0 0.0
    %3793 = vmatprep.subr.mxu0 0.0
    %3794 = vmatpush1.msra.mxu0 0.0
    %3795 = vmatprep.subr.mxu0 0.0
    %3796 = vmatpush1.msra.mxu0 0.0
    %3797 = vmatprep.subr.mxu0 0.0
    %3798 = vmatpush1.msra.mxu0 0.0
    %3799 = vmatprep.subr.mxu0 0.0
    %3800 = vmatpush1.msra.mxu0 0.0
    %3801 = vmatprep.subr.mxu0 0.0
    %3802 = vmatpush1.msra.mxu0 0.0
    %3803 = vmatprep.subr.mxu0 0.0
    %3804 = vmatpush1.msra.mxu0 0.0
    %3805 = vmatprep.subr.mxu0 0.0
    %3806 = vmatpush1.msra.mxu0 0.0
    %3807 = vmatprep.subr.mxu0 0.0
    %3808 = vmatpush1.msra.mxu0 0.0
    %3809 = vmatprep.subr.mxu0 0.0
    %3810 = vmatpush1.msra.mxu0 0.0
    %3811 = vmatprep.subr.mxu0 0.0
    %3812 = vmatpush1.msra.mxu0 0.0
    %3813 = vmatprep.subr.mxu0 0.0
    %3814 = vmatpush1.msra.mxu0 0.0
    %3815 = vmatprep.subr.mxu0 0.0
    %3816 = vmatpush1.msra.mxu0 0.0
    %3817 = vmatprep.subr.mxu0 0.0
    %3818 = vmatpush1.msra.mxu0 %v657
    %3819 = vmatprep.subr.mxu0 0.0
    %3820 = vmatpush1.msra.mxu0 %v652
    %3821 = vmatprep.subr.mxu0 0.0
    %3822 = vmatpush2.msra.mxu0 0.0
    %3823 = vmatprep.subr.mxu0 0.0
    %3824 = vmatpush2.msra.mxu0 0.0
    %3825 = vmatprep.subr.mxu0 0.0
    %3826 = vmatpush2.msra.mxu0 0.0
    %3827 = vmatprep.subr.mxu0 0.0
    %3828 = vmatpush2.msra.mxu0 0.0
    %3829 = vmatprep.subr.mxu0 0.0
    %3830 = vmatpush2.msra.mxu0 0.0
    %3831 = vmatprep.subr.mxu0 0.0
    %3832 = vmatpush2.msra.mxu0 0.0
    %3833 = vmatprep.subr.mxu0 0.0
    %3834 = vmatpush2.msra.mxu0 0.0
    %3835 = vmatprep.subr.mxu0 0.0
    %3836 = vmatpush2.msra.mxu0 0.0
    %3837 = vmatprep.subr.mxu0 0.0
    %3838 = vmatpush2.msra.mxu0 0.0
    %3839 = vmatprep.subr.mxu0 0.0
    %3840 = vmatpush2.msra.mxu0 0.0
    %3841 = vmatprep.subr.mxu0 0.0
    %3842 = vmatpush2.msra.mxu0 0.0
    %3843 = vmatprep.subr.mxu0 0.0
    %3844 = vmatpush2.msra.mxu0 0.0
    %3845 = vmatprep.subr.mxu0 0.0
    %3846 = vmatpush2.msra.mxu0 0.0
    %3847 = vmatprep.subr.mxu0 0.0
    %3848 = vmatpush2.msra.mxu0 0.0
    %3849 = vmatprep.subr.mxu0 0.0
    %3850 = vmatpush2.msra.mxu0 0.0
    %3851 = vmatprep.subr.mxu0 0.0
    %3852 = vmatpush2.msra.mxu0 0.0
    %3853 = vmatprep.mubr.f32.mxu0 0.0
    %3854 = vmatmul.mubr.f32.gmra.mxu0 %v3577
    %v3855 = vpop.f32.mrf.mxu0
    %v3856 = vadd.f32 0.0, %v3855
    %v3857 = vpop.f32.mrf.mxu0
    %3858 = vdwg.mxu0
    %3859 = vmatprep.subr.mxu0 0.0
    %3860 = vmatpush1.msra.mxu0 0.0
    %3861 = vmatprep.subr.mxu0 0.0
    %3862 = vmatpush1.msra.mxu0 0.0
    %3863 = vmatprep.subr.mxu0 0.0
    %3864 = vmatpush1.msra.mxu0 0.0
    %3865 = vmatprep.subr.mxu0 0.0
    %3866 = vmatpush1.msra.mxu0 0.0
    %3867 = vmatprep.subr.mxu0 0.0
    %3868 = vmatpush1.msra.mxu0 0.0
    %3869 = vmatprep.subr.mxu0 0.0
    %3870 = vmatpush1.msra.mxu0 0.0
    %3871 = vmatprep.subr.mxu0 0.0
    %3872 = vmatpush1.msra.mxu0 0.0
    %3873 = vmatprep.subr.mxu0 0.0
    %3874 = vmatpush1.msra.mxu0 0.0
    %3875 = vmatprep.subr.mxu0 0.0
    %3876 = vmatpush1.msra.mxu0 0.0
    %3877 = vmatprep.subr.mxu0 0.0
    %3878 = vmatpush1.msra.mxu0 0.0
    %3879 = vmatprep.subr.mxu0 0.0
    %3880 = vmatpush1.msra.mxu0 0.0
    %3881 = vmatprep.subr.mxu0 0.0
    %3882 = vmatpush1.msra.mxu0 0.0
    %3883 = vmatprep.subr.mxu0 0.0
    %3884 = vmatpush1.msra.mxu0 0.0
    %3885 = vmatprep.subr.mxu0 0.0
    %3886 = vmatpush1.msra.mxu0 0.0
    %3887 = vmatprep.subr.mxu0 0.0
    %3888 = vmatpush1.msra.mxu0 %v738
    %3889 = vmatprep.subr.mxu0 0.0
    %3890 = vmatpush1.msra.mxu0 %v733
    %3891 = vmatprep.subr.mxu0 0.0
    %3892 = vmatpush2.msra.mxu0 0.0
    %3893 = vmatprep.subr.mxu0 0.0
    %3894 = vmatpush2.msra.mxu0 0.0
    %3895 = vmatprep.subr.mxu0 0.0
    %3896 = vmatpush2.msra.mxu0 0.0
    %3897 = vmatprep.subr.mxu0 0.0
    %3898 = vmatpush2.msra.mxu0 0.0
    %3899 = vmatprep.subr.mxu0 0.0
    %3900 = vmatpush2.msra.mxu0 0.0
    %3901 = vmatprep.subr.mxu0 0.0
    %3902 = vmatpush2.msra.mxu0 0.0
    %3903 = vmatprep.subr.mxu0 0.0
    %3904 = vmatpush2.msra.mxu0 0.0
    %3905 = vmatprep.subr.mxu0 0.0
    %3906 = vmatpush2.msra.mxu0 0.0
    %3907 = vmatprep.subr.mxu0 0.0
    %3908 = vmatpush2.msra.mxu0 0.0
    %3909 = vmatprep.subr.mxu0 0.0
    %3910 = vmatpush2.msra.mxu0 0.0
    %3911 = vmatprep.subr.mxu0 0.0
    %3912 = vmatpush2.msra.mxu0 0.0
    %3913 = vmatprep.subr.mxu0 0.0
    %3914 = vmatpush2.msra.mxu0 0.0
    %3915 = vmatprep.subr.mxu0 0.0
    %3916 = vmatpush2.msra.mxu0 0.0
    %3917 = vmatprep.subr.mxu0 0.0
    %3918 = vmatpush2.msra.mxu0 0.0
    %3919 = vmatprep.subr.mxu0 0.0
    %3920 = vmatpush2.msra.mxu0 0.0
    %3921 = vmatprep.subr.mxu0 0.0
    %3922 = vmatpush2.msra.mxu0 0.0
    %3923 = vmatprep.mubr.f32.mxu0 0.0
    %3924 = vmatmul.mubr.f32.gmra.mxu0 %v3577
    %v3925 = vpop.f32.mrf.mxu0
    %v3926 = vadd.f32 0.0, %v3925
    %v3927 = vpop.f32.mrf.mxu0
    %3928 = vdwg.mxu0
    %3929 = vmatprep.subr.mxu0 0.0
    %3930 = vmatpush1.msra.mxu0 0.0
    %3931 = vmatprep.subr.mxu0 0.0
    %3932 = vmatpush1.msra.mxu0 0.0
    %3933 = vmatprep.subr.mxu0 0.0
    %3934 = vmatpush1.msra.mxu0 0.0
    %3935 = vmatprep.subr.mxu0 0.0
    %3936 = vmatpush1.msra.mxu0 0.0
    %3937 = vmatprep.subr.mxu0 0.0
    %3938 = vmatpush1.msra.mxu0 0.0
    %3939 = vmatprep.subr.mxu0 0.0
    %3940 = vmatpush1.msra.mxu0 0.0
    %3941 = vmatprep.subr.mxu0 0.0
    %3942 = vmatpush1.msra.mxu0 0.0
    %3943 = vmatprep.subr.mxu0 0.0
    %3944 = vmatpush1.msra.mxu0 0.0
    %3945 = vmatprep.subr.mxu0 0.0
    %3946 = vmatpush1.msra.mxu0 0.0
    %3947 = vmatprep.subr.mxu0 0.0
    %3948 = vmatpush1.msra.mxu0 0.0
    %3949 = vmatprep.subr.mxu0 0.0
    %3950 = vmatpush1.msra.mxu0 0.0
    %3951 = vmatprep.subr.mxu0 0.0
    %3952 = vmatpush1.msra.mxu0 0.0
    %3953 = vmatprep.subr.mxu0 0.0
    %3954 = vmatpush1.msra.mxu0 0.0
    %3955 = vmatprep.subr.mxu0 0.0
    %3956 = vmatpush1.msra.mxu0 0.0
    %3957 = vmatprep.subr.mxu0 0.0
    %3958 = vmatpush1.msra.mxu0 %v819
    %3959 = vmatprep.subr.mxu0 0.0
    %3960 = vmatpush1.msra.mxu0 %v814
    %3961 = vmatprep.subr.mxu0 0.0
    %3962 = vmatpush2.msra.mxu0 0.0
    %3963 = vmatprep.subr.mxu0 0.0
    %3964 = vmatpush2.msra.mxu0 0.0
    %3965 = vmatprep.subr.mxu0 0.0
    %3966 = vmatpush2.msra.mxu0 0.0
    %3967 = vmatprep.subr.mxu0 0.0
    %3968 = vmatpush2.msra.mxu0 0.0
    %3969 = vmatprep.subr.mxu0 0.0
    %3970 = vmatpush2.msra.mxu0 0.0
    %3971 = vmatprep.subr.mxu0 0.0
    %3972 = vmatpush2.msra.mxu0 0.0
    %3973 = vmatprep.subr.mxu0 0.0
    %3974 = vmatpush2.msra.mxu0 0.0
    %3975 = vmatprep.subr.mxu0 0.0
    %3976 = vmatpush2.msra.mxu0 0.0
    %3977 = vmatprep.subr.mxu0 0.0
    %3978 = vmatpush2.msra.mxu0 0.0
    %3979 = vmatprep.subr.mxu0 0.0
    %3980 = vmatpush2.msra.mxu0 0.0
    %3981 = vmatprep.subr.mxu0 0.0
    %3982 = vmatpush2.msra.mxu0 0.0
    %3983 = vmatprep.subr.mxu0 0.0
    %3984 = vmatpush2.msra.mxu0 0.0
    %3985 = vmatprep.subr.mxu0 0.0
    %3986 = vmatpush2.msra.mxu0 0.0
    %3987 = vmatprep.subr.mxu0 0.0
    %3988 = vmatpush2.msra.mxu0 0.0
    %3989 = vmatprep.subr.mxu0 0.0
    %3990 = vmatpush2.msra.mxu0 0.0
    %3991 = vmatprep.subr.mxu0 0.0
    %3992 = vmatpush2.msra.mxu0 0.0
    %3993 = vmatprep.mubr.f32.mxu0 0.0
    %3994 = vmatmul.mubr.f32.gmra.mxu0 %v3577
    %v3995 = vpop.f32.mrf.mxu0
    %v3996 = vadd.f32 0.0, %v3995
    %v3997 = vpop.f32.mrf.mxu0
    %3998 = vdwg.mxu0
    %3999 = vmatprep.subr.mxu0 0.0
    %4000 = vmatpush1.msra.mxu0 0.0
    %4001 = vmatprep.subr.mxu0 0.0
    %4002 = vmatpush1.msra.mxu0 0.0
    %4003 = vmatprep.subr.mxu0 0.0
    %4004 = vmatpush1.msra.mxu0 0.0
    %4005 = vmatprep.subr.mxu0 0.0
    %4006 = vmatpush1.msra.mxu0 0.0
    %4007 = vmatprep.subr.mxu0 0.0
    %4008 = vmatpush1.msra.mxu0 0.0
    %4009 = vmatprep.subr.mxu0 0.0
    %4010 = vmatpush1.msra.mxu0 0.0
    %4011 = vmatprep.subr.mxu0 0.0
    %4012 = vmatpush1.msra.mxu0 0.0
    %4013 = vmatprep.subr.mxu0 0.0
    %4014 = vmatpush1.msra.mxu0 0.0
    %4015 = vmatprep.subr.mxu0 0.0
    %4016 = vmatpush1.msra.mxu0 0.0
    %4017 = vmatprep.subr.mxu0 0.0
    %4018 = vmatpush1.msra.mxu0 0.0
    %4019 = vmatprep.subr.mxu0 0.0
    %4020 = vmatpush1.msra.mxu0 0.0
    %4021 = vmatprep.subr.mxu0 0.0
    %4022 = vmatpush1.msra.mxu0 0.0
    %4023 = vmatprep.subr.mxu0 0.0
    %4024 = vmatpush1.msra.mxu0 0.0
    %4025 = vmatprep.subr.mxu0 0.0
    %4026 = vmatpush1.msra.mxu0 0.0
    %4027 = vmatprep.subr.mxu0 0.0
    %4028 = vmatpush1.msra.mxu0 %v900
    %4029 = vmatprep.subr.mxu0 0.0
    %4030 = vmatpush1.msra.mxu0 %v895
    %4031 = vmatprep.subr.mxu0 0.0
    %4032 = vmatpush2.msra.mxu0 0.0
    %4033 = vmatprep.subr.mxu0 0.0
    %4034 = vmatpush2.msra.mxu0 0.0
    %4035 = vmatprep.subr.mxu0 0.0
    %4036 = vmatpush2.msra.mxu0 0.0
    %4037 = vmatprep.subr.mxu0 0.0
    %4038 = vmatpush2.msra.mxu0 0.0
    %4039 = vmatprep.subr.mxu0 0.0
    %4040 = vmatpush2.msra.mxu0 0.0
    %4041 = vmatprep.subr.mxu0 0.0
    %4042 = vmatpush2.msra.mxu0 0.0
    %4043 = vmatprep.subr.mxu0 0.0
    %4044 = vmatpush2.msra.mxu0 0.0
    %4045 = vmatprep.subr.mxu0 0.0
    %4046 = vmatpush2.msra.mxu0 0.0
    %4047 = vmatprep.subr.mxu0 0.0
    %4048 = vmatpush2.msra.mxu0 0.0
    %4049 = vmatprep.subr.mxu0 0.0
    %4050 = vmatpush2.msra.mxu0 0.0
    %4051 = vmatprep.subr.mxu0 0.0
    %4052 = vmatpush2.msra.mxu0 0.0
    %4053 = vmatprep.subr.mxu0 0.0
    %4054 = vmatpush2.msra.mxu0 0.0
    %4055 = vmatprep.subr.mxu0 0.0
    %4056 = vmatpush2.msra.mxu0 0.0
    %4057 = vmatprep.subr.mxu0 0.0
    %4058 = vmatpush2.msra.mxu0 0.0
    %4059 = vmatprep.subr.mxu0 0.0
    %4060 = vmatpush2.msra.mxu0 0.0
    %4061 = vmatprep.subr.mxu0 0.0
    %4062 = vmatpush2.msra.mxu0 0.0
    %4063 = vmatprep.mubr.f32.mxu0 0.0
    %4064 = vmatmul.mubr.f32.gmra.mxu0 %v3577
    %v4065 = vpop.f32.mrf.mxu0
    %v4066 = vadd.f32 0.0, %v4065
    %v4067 = vpop.f32.mrf.mxu0
    %4068 = vdwg.mxu0
    %4069 = vmatprep.subr.mxu0 0.0
    %4070 = vmatpush1.msra.mxu0 0.0
    %4071 = vmatprep.subr.mxu0 0.0
    %4072 = vmatpush1.msra.mxu0 0.0
    %4073 = vmatprep.subr.mxu0 0.0
    %4074 = vmatpush1.msra.mxu0 0.0
    %4075 = vmatprep.subr.mxu0 0.0
    %4076 = vmatpush1.msra.mxu0 0.0
    %4077 = vmatprep.subr.mxu0 0.0
    %4078 = vmatpush1.msra.mxu0 0.0
    %4079 = vmatprep.subr.mxu0 0.0
    %4080 = vmatpush1.msra.mxu0 0.0
    %4081 = vmatprep.subr.mxu0 0.0
    %4082 = vmatpush1.msra.mxu0 0.0
    %4083 = vmatprep.subr.mxu0 0.0
    %4084 = vmatpush1.msra.mxu0 0.0
    %4085 = vmatprep.subr.mxu0 0.0
    %4086 = vmatpush1.msra.mxu0 0.0
    %4087 = vmatprep.subr.mxu0 0.0
    %4088 = vmatpush1.msra.mxu0 0.0
    %4089 = vmatprep.subr.mxu0 0.0
    %4090 = vmatpush1.msra.mxu0 0.0
    %4091 = vmatprep.subr.mxu0 0.0
    %4092 = vmatpush1.msra.mxu0 0.0
    %4093 = vmatprep.subr.mxu0 0.0
    %4094 = vmatpush1.msra.mxu0 0.0
    %4095 = vmatprep.subr.mxu0 0.0
    %4096 = vmatpush1.msra.mxu0 0.0
    %4097 = vmatprep.subr.mxu0 0.0
    %4098 = vmatpush1.msra.mxu0 %v981
    %4099 = vmatprep.subr.mxu0 0.0
    %4100 = vmatpush1.msra.mxu0 %v976
    %4101 = vmatprep.subr.mxu0 0.0
    %4102 = vmatpush2.msra.mxu0 0.0
    %4103 = vmatprep.subr.mxu0 0.0
    %4104 = vmatpush2.msra.mxu0 0.0
    %4105 = vmatprep.subr.mxu0 0.0
    %4106 = vmatpush2.msra.mxu0 0.0
    %4107 = vmatprep.subr.mxu0 0.0
    %4108 = vmatpush2.msra.mxu0 0.0
    %4109 = vmatprep.subr.mxu0 0.0
    %4110 = vmatpush2.msra.mxu0 0.0
    %4111 = vmatprep.subr.mxu0 0.0
    %4112 = vmatpush2.msra.mxu0 0.0
    %4113 = vmatprep.subr.mxu0 0.0
    %4114 = vmatpush2.msra.mxu0 0.0
    %4115 = vmatprep.subr.mxu0 0.0
    %4116 = vmatpush2.msra.mxu0 0.0
    %4117 = vmatprep.subr.mxu0 0.0
    %4118 = vmatpush2.msra.mxu0 0.0
    %4119 = vmatprep.subr.mxu0 0.0
    %4120 = vmatpush2.msra.mxu0 0.0
    %4121 = vmatprep.subr.mxu0 0.0
    %4122 = vmatpush2.msra.mxu0 0.0
    %4123 = vmatprep.subr.mxu0 0.0
    %4124 = vmatpush2.msra.mxu0 0.0
    %4125 = vmatprep.subr.mxu0 0.0
    %4126 = vmatpush2.msra.mxu0 0.0
    %4127 = vmatprep.subr.mxu0 0.0
    %4128 = vmatpush2.msra.mxu0 0.0
    %4129 = vmatprep.subr.mxu0 0.0
    %4130 = vmatpush2.msra.mxu0 0.0
    %4131 = vmatprep.subr.mxu0 0.0
    %4132 = vmatpush2.msra.mxu0 0.0
    %4133 = vmatprep.mubr.f32.mxu0 0.0
    %4134 = vmatmul.mubr.f32.gmra.mxu0 %v3577
    %v4135 = vpop.f32.mrf.mxu0
    %v4136 = vadd.f32 0.0, %v4135
    %v4137 = vpop.f32.mrf.mxu0
    %4138 = vdwg.mxu0
    %4139 = vmatprep.subr.mxu0 0.0
    %4140 = vmatpush1.msra.mxu0 0.0
    %4141 = vmatprep.subr.mxu0 0.0
    %4142 = vmatpush1.msra.mxu0 0.0
    %4143 = vmatprep.subr.mxu0 0.0
    %4144 = vmatpush1.msra.mxu0 0.0
    %4145 = vmatprep.subr.mxu0 0.0
    %4146 = vmatpush1.msra.mxu0 0.0
    %4147 = vmatprep.subr.mxu0 0.0
    %4148 = vmatpush1.msra.mxu0 0.0
    %4149 = vmatprep.subr.mxu0 0.0
    %4150 = vmatpush1.msra.mxu0 0.0
    %4151 = vmatprep.subr.mxu0 0.0
    %4152 = vmatpush1.msra.mxu0 0.0
    %4153 = vmatprep.subr.mxu0 0.0
    %4154 = vmatpush1.msra.mxu0 0.0
    %4155 = vmatprep.subr.mxu0 0.0
    %4156 = vmatpush1.msra.mxu0 0.0
    %4157 = vmatprep.subr.mxu0 0.0
    %4158 = vmatpush1.msra.mxu0 0.0
    %4159 = vmatprep.subr.mxu0 0.0
    %4160 = vmatpush1.msra.mxu0 0.0
    %4161 = vmatprep.subr.mxu0 0.0
    %4162 = vmatpush1.msra.mxu0 0.0
    %4163 = vmatprep.subr.mxu0 0.0
    %4164 = vmatpush1.msra.mxu0 0.0
    %4165 = vmatprep.subr.mxu0 0.0
    %4166 = vmatpush1.msra.mxu0 0.0
    %4167 = vmatprep.subr.mxu0 0.0
    %4168 = vmatpush1.msra.mxu0 %v1062
    %4169 = vmatprep.subr.mxu0 0.0
    %4170 = vmatpush1.msra.mxu0 %v1057
    %4171 = vmatprep.subr.mxu0 0.0
    %4172 = vmatpush2.msra.mxu0 0.0
    %4173 = vmatprep.subr.mxu0 0.0
    %4174 = vmatpush2.msra.mxu0 0.0
    %4175 = vmatprep.subr.mxu0 0.0
    %4176 = vmatpush2.msra.mxu0 0.0
    %4177 = vmatprep.subr.mxu0 0.0
    %4178 = vmatpush2.msra.mxu0 0.0
    %4179 = vmatprep.subr.mxu0 0.0
    %4180 = vmatpush2.msra.mxu0 0.0
    %4181 = vmatprep.subr.mxu0 0.0
    %4182 = vmatpush2.msra.mxu0 0.0
    %4183 = vmatprep.subr.mxu0 0.0
    %4184 = vmatpush2.msra.mxu0 0.0
    %4185 = vmatprep.subr.mxu0 0.0
    %4186 = vmatpush2.msra.mxu0 0.0
    %4187 = vmatprep.subr.mxu0 0.0
    %4188 = vmatpush2.msra.mxu0 0.0
    %4189 = vmatprep.subr.mxu0 0.0
    %4190 = vmatpush2.msra.mxu0 0.0
    %4191 = vmatprep.subr.mxu0 0.0
    %4192 = vmatpush2.msra.mxu0 0.0
    %4193 = vmatprep.subr.mxu0 0.0
    %4194 = vmatpush2.msra.mxu0 0.0
    %4195 = vmatprep.subr.mxu0 0.0
    %4196 = vmatpush2.msra.mxu0 0.0
    %4197 = vmatprep.subr.mxu0 0.0
    %4198 = vmatpush2.msra.mxu0 0.0
    %4199 = vmatprep.subr.mxu0 0.0
    %4200 = vmatpush2.msra.mxu0 0.0
    %4201 = vmatprep.subr.mxu0 0.0
    %4202 = vmatpush2.msra.mxu0 0.0
    %4203 = vmatprep.mubr.f32.mxu0 0.0
    %4204 = vmatmul.mubr.f32.gmra.mxu0 %v3577
    %v4205 = vpop.f32.mrf.mxu0
    %v4206 = vadd.f32 0.0, %v4205
    %v4207 = vpop.f32.mrf.mxu0
    %4208 = vdwg.mxu0
    %4209 = vmatprep.subr.mxu0 0.0
    %4210 = vmatpush1.msra.mxu0 0.0
    %4211 = vmatprep.subr.mxu0 0.0
    %4212 = vmatpush1.msra.mxu0 0.0
    %4213 = vmatprep.subr.mxu0 0.0
    %4214 = vmatpush1.msra.mxu0 0.0
    %4215 = vmatprep.subr.mxu0 0.0
    %4216 = vmatpush1.msra.mxu0 0.0
    %4217 = vmatprep.subr.mxu0 0.0
    %4218 = vmatpush1.msra.mxu0 0.0
    %4219 = vmatprep.subr.mxu0 0.0
    %4220 = vmatpush1.msra.mxu0 0.0
    %4221 = vmatprep.subr.mxu0 0.0
    %4222 = vmatpush1.msra.mxu0 0.0
    %4223 = vmatprep.subr.mxu0 0.0
    %4224 = vmatpush1.msra.mxu0 0.0
    %4225 = vmatprep.subr.mxu0 0.0
    %4226 = vmatpush1.msra.mxu0 0.0
    %4227 = vmatprep.subr.mxu0 0.0
    %4228 = vmatpush1.msra.mxu0 0.0
    %4229 = vmatprep.subr.mxu0 0.0
    %4230 = vmatpush1.msra.mxu0 0.0
    %4231 = vmatprep.subr.mxu0 0.0
    %4232 = vmatpush1.msra.mxu0 0.0
    %4233 = vmatprep.subr.mxu0 0.0
    %4234 = vmatpush1.msra.mxu0 0.0
    %4235 = vmatprep.subr.mxu0 0.0
    %4236 = vmatpush1.msra.mxu0 0.0
    %4237 = vmatprep.subr.mxu0 0.0
    %4238 = vmatpush1.msra.mxu0 %v1143
    %4239 = vmatprep.subr.mxu0 0.0
    %4240 = vmatpush1.msra.mxu0 %v1138
    %4241 = vmatprep.subr.mxu0 0.0
    %4242 = vmatpush2.msra.mxu0 0.0
    %4243 = vmatprep.subr.mxu0 0.0
    %4244 = vmatpush2.msra.mxu0 0.0
    %4245 = vmatprep.subr.mxu0 0.0
    %4246 = vmatpush2.msra.mxu0 0.0
    %4247 = vmatprep.subr.mxu0 0.0
    %4248 = vmatpush2.msra.mxu0 0.0
    %4249 = vmatprep.subr.mxu0 0.0
    %4250 = vmatpush2.msra.mxu0 0.0
    %4251 = vmatprep.subr.mxu0 0.0
    %4252 = vmatpush2.msra.mxu0 0.0
    %4253 = vmatprep.subr.mxu0 0.0
    %4254 = vmatpush2.msra.mxu0 0.0
    %4255 = vmatprep.subr.mxu0 0.0
    %4256 = vmatpush2.msra.mxu0 0.0
    %4257 = vmatprep.subr.mxu0 0.0
    %4258 = vmatpush2.msra.mxu0 0.0
    %4259 = vmatprep.subr.mxu0 0.0
    %4260 = vmatpush2.msra.mxu0 0.0
    %4261 = vmatprep.subr.mxu0 0.0
    %4262 = vmatpush2.msra.mxu0 0.0
    %4263 = vmatprep.subr.mxu0 0.0
    %4264 = vmatpush2.msra.mxu0 0.0
    %4265 = vmatprep.subr.mxu0 0.0
    %4266 = vmatpush2.msra.mxu0 0.0
    %4267 = vmatprep.subr.mxu0 0.0
    %4268 = vmatpush2.msra.mxu0 0.0
    %4269 = vmatprep.subr.mxu0 0.0
    %4270 = vmatpush2.msra.mxu0 0.0
    %4271 = vmatprep.subr.mxu0 0.0
    %4272 = vmatpush2.msra.mxu0 0.0
    %4273 = vmatprep.mubr.f32.mxu0 0.0
    %4274 = vmatmul.mubr.f32.gmra.mxu0 %v3577
    %v4275 = vpop.f32.mrf.mxu0
    %v4276 = vadd.f32 0.0, %v4275
    %v4277 = vpop.f32.mrf.mxu0
    %4278 = vdwg.mxu0
    %4279 = vmatprep.subr.mxu0 0.0
    %4280 = vmatpush1.msra.mxu0 0.0
    %4281 = vmatprep.subr.mxu0 0.0
    %4282 = vmatpush1.msra.mxu0 0.0
    %4283 = vmatprep.subr.mxu0 0.0
    %4284 = vmatpush1.msra.mxu0 0.0
    %4285 = vmatprep.subr.mxu0 0.0
    %4286 = vmatpush1.msra.mxu0 0.0
    %4287 = vmatprep.subr.mxu0 0.0
    %4288 = vmatpush1.msra.mxu0 0.0
    %4289 = vmatprep.subr.mxu0 0.0
    %4290 = vmatpush1.msra.mxu0 0.0
    %4291 = vmatprep.subr.mxu0 0.0
    %4292 = vmatpush1.msra.mxu0 0.0
    %4293 = vmatprep.subr.mxu0 0.0
    %4294 = vmatpush1.msra.mxu0 0.0
    %4295 = vmatprep.subr.mxu0 0.0
    %4296 = vmatpush1.msra.mxu0 0.0
    %4297 = vmatprep.subr.mxu0 0.0
    %4298 = vmatpush1.msra.mxu0 0.0
    %4299 = vmatprep.subr.mxu0 0.0
    %4300 = vmatpush1.msra.mxu0 0.0
    %4301 = vmatprep.subr.mxu0 0.0
    %4302 = vmatpush1.msra.mxu0 0.0
    %4303 = vmatprep.subr.mxu0 0.0
    %4304 = vmatpush1.msra.mxu0 0.0
    %4305 = vmatprep.subr.mxu0 0.0
    %4306 = vmatpush1.msra.mxu0 0.0
    %4307 = vmatprep.subr.mxu0 0.0
    %4308 = vmatpush1.msra.mxu0 %v1224
    %4309 = vmatprep.subr.mxu0 0.0
    %4310 = vmatpush1.msra.mxu0 %v1219
    %4311 = vmatprep.subr.mxu0 0.0
    %4312 = vmatpush2.msra.mxu0 0.0
    %4313 = vmatprep.subr.mxu0 0.0
    %4314 = vmatpush2.msra.mxu0 0.0
    %4315 = vmatprep.subr.mxu0 0.0
    %4316 = vmatpush2.msra.mxu0 0.0
    %4317 = vmatprep.subr.mxu0 0.0
    %4318 = vmatpush2.msra.mxu0 0.0
    %4319 = vmatprep.subr.mxu0 0.0
    %4320 = vmatpush2.msra.mxu0 0.0
    %4321 = vmatprep.subr.mxu0 0.0
    %4322 = vmatpush2.msra.mxu0 0.0
    %4323 = vmatprep.subr.mxu0 0.0
    %4324 = vmatpush2.msra.mxu0 0.0
    %4325 = vmatprep.subr.mxu0 0.0
    %4326 = vmatpush2.msra.mxu0 0.0
    %4327 = vmatprep.subr.mxu0 0.0
    %4328 = vmatpush2.msra.mxu0 0.0
    %4329 = vmatprep.subr.mxu0 0.0
    %4330 = vmatpush2.msra.mxu0 0.0
    %4331 = vmatprep.subr.mxu0 0.0
    %4332 = vmatpush2.msra.mxu0 0.0
    %4333 = vmatprep.subr.mxu0 0.0
    %4334 = vmatpush2.msra.mxu0 0.0
    %4335 = vmatprep.subr.mxu0 0.0
    %4336 = vmatpush2.msra.mxu0 0.0
    %4337 = vmatprep.subr.mxu0 0.0
    %4338 = vmatpush2.msra.mxu0 0.0
    %4339 = vmatprep.subr.mxu0 0.0
    %4340 = vmatpush2.msra.mxu0 0.0
    %4341 = vmatprep.subr.mxu0 0.0
    %4342 = vmatpush2.msra.mxu0 0.0
    %4343 = vmatprep.mubr.f32.mxu0 0.0
    %4344 = vmatmul.mubr.f32.gmra.mxu0 %v3577
    %v4345 = vpop.f32.mrf.mxu0
    %v4346 = vadd.f32 0.0, %v4345
    %v4347 = vpop.f32.mrf.mxu0
    %4348 = vdwg.mxu0
    %4349 = vmatprep.subr.mxu0 0.0
    %4350 = vmatpush1.msra.mxu0 0.0
    %4351 = vmatprep.subr.mxu0 0.0
    %4352 = vmatpush1.msra.mxu0 0.0
    %4353 = vmatprep.subr.mxu0 0.0
    %4354 = vmatpush1.msra.mxu0 0.0
    %4355 = vmatprep.subr.mxu0 0.0
    %4356 = vmatpush1.msra.mxu0 0.0
    %4357 = vmatprep.subr.mxu0 0.0
    %4358 = vmatpush1.msra.mxu0 0.0
    %4359 = vmatprep.subr.mxu0 0.0
    %4360 = vmatpush1.msra.mxu0 0.0
    %4361 = vmatprep.subr.mxu0 0.0
    %4362 = vmatpush1.msra.mxu0 0.0
    %4363 = vmatprep.subr.mxu0 0.0
    %4364 = vmatpush1.msra.mxu0 0.0
    %4365 = vmatprep.subr.mxu0 0.0
    %4366 = vmatpush1.msra.mxu0 0.0
    %4367 = vmatprep.subr.mxu0 0.0
    %4368 = vmatpush1.msra.mxu0 0.0
    %4369 = vmatprep.subr.mxu0 0.0
    %4370 = vmatpush1.msra.mxu0 0.0
    %4371 = vmatprep.subr.mxu0 0.0
    %4372 = vmatpush1.msra.mxu0 0.0
    %4373 = vmatprep.subr.mxu0 0.0
    %4374 = vmatpush1.msra.mxu0 0.0
    %4375 = vmatprep.subr.mxu0 0.0
    %4376 = vmatpush1.msra.mxu0 0.0
    %4377 = vmatprep.subr.mxu0 0.0
    %4378 = vmatpush1.msra.mxu0 %v1305
    %4379 = vmatprep.subr.mxu0 0.0
    %4380 = vmatpush1.msra.mxu0 %v1300
    %4381 = vmatprep.subr.mxu0 0.0
    %4382 = vmatpush2.msra.mxu0 0.0
    %4383 = vmatprep.subr.mxu0 0.0
    %4384 = vmatpush2.msra.mxu0 0.0
    %4385 = vmatprep.subr.mxu0 0.0
    %4386 = vmatpush2.msra.mxu0 0.0
    %4387 = vmatprep.subr.mxu0 0.0
    %4388 = vmatpush2.msra.mxu0 0.0
    %4389 = vmatprep.subr.mxu0 0.0
    %4390 = vmatpush2.msra.mxu0 0.0
    %4391 = vmatprep.subr.mxu0 0.0
    %4392 = vmatpush2.msra.mxu0 0.0
    %4393 = vmatprep.subr.mxu0 0.0
    %4394 = vmatpush2.msra.mxu0 0.0
    %4395 = vmatprep.subr.mxu0 0.0
    %4396 = vmatpush2.msra.mxu0 0.0
    %4397 = vmatprep.subr.mxu0 0.0
    %4398 = vmatpush2.msra.mxu0 0.0
    %4399 = vmatprep.subr.mxu0 0.0
    %4400 = vmatpush2.msra.mxu0 0.0
    %4401 = vmatprep.subr.mxu0 0.0
    %4402 = vmatpush2.msra.mxu0 0.0
    %4403 = vmatprep.subr.mxu0 0.0
    %4404 = vmatpush2.msra.mxu0 0.0
    %4405 = vmatprep.subr.mxu0 0.0
    %4406 = vmatpush2.msra.mxu0 0.0
    %4407 = vmatprep.subr.mxu0 0.0
    %4408 = vmatpush2.msra.mxu0 0.0
    %4409 = vmatprep.subr.mxu0 0.0
    %4410 = vmatpush2.msra.mxu0 0.0
    %4411 = vmatprep.subr.mxu0 0.0
    %4412 = vmatpush2.msra.mxu0 0.0
    %4413 = vmatprep.mubr.f32.mxu0 0.0
    %4414 = vmatmul.mubr.f32.gmra.mxu0 %v3577
    %v4415 = vpop.f32.mrf.mxu0
    %v4416 = vadd.f32 0.0, %v4415
    %v4417 = vpop.f32.mrf.mxu0
    %4418 = vdwg.mxu0
    %4419 = vmatprep.subr.mxu0 0.0
    %4420 = vmatpush1.msra.mxu0 0.0
    %4421 = vmatprep.subr.mxu0 0.0
    %4422 = vmatpush1.msra.mxu0 0.0
    %4423 = vmatprep.subr.mxu0 0.0
    %4424 = vmatpush1.msra.mxu0 0.0
    %4425 = vmatprep.subr.mxu0 0.0
    %4426 = vmatpush1.msra.mxu0 0.0
    %4427 = vmatprep.subr.mxu0 0.0
    %4428 = vmatpush1.msra.mxu0 0.0
    %4429 = vmatprep.subr.mxu0 0.0
    %4430 = vmatpush1.msra.mxu0 0.0
    %4431 = vmatprep.subr.mxu0 0.0
    %4432 = vmatpush1.msra.mxu0 0.0
    %4433 = vmatprep.subr.mxu0 0.0
    %4434 = vmatpush1.msra.mxu0 0.0
    %4435 = vmatprep.subr.mxu0 0.0
    %4436 = vmatpush1.msra.mxu0 0.0
    %4437 = vmatprep.subr.mxu0 0.0
    %4438 = vmatpush1.msra.mxu0 0.0
    %4439 = vmatprep.subr.mxu0 0.0
    %4440 = vmatpush1.msra.mxu0 0.0
    %4441 = vmatprep.subr.mxu0 0.0
    %4442 = vmatpush1.msra.mxu0 0.0
    %4443 = vmatprep.subr.mxu0 0.0
    %4444 = vmatpush1.msra.mxu0 0.0
    %4445 = vmatprep.subr.mxu0 0.0
    %4446 = vmatpush1.msra.mxu0 0.0
    %4447 = vmatprep.subr.mxu0 0.0
    %4448 = vmatpush1.msra.mxu0 %v1386
    %4449 = vmatprep.subr.mxu0 0.0
    %4450 = vmatpush1.msra.mxu0 %v1381
    %4451 = vmatprep.subr.mxu0 0.0
    %4452 = vmatpush2.msra.mxu0 0.0
    %4453 = vmatprep.subr.mxu0 0.0
    %4454 = vmatpush2.msra.mxu0 0.0
    %4455 = vmatprep.subr.mxu0 0.0
    %4456 = vmatpush2.msra.mxu0 0.0
    %4457 = vmatprep.subr.mxu0 0.0
    %4458 = vmatpush2.msra.mxu0 0.0
    %4459 = vmatprep.subr.mxu0 0.0
    %4460 = vmatpush2.msra.mxu0 0.0
    %4461 = vmatprep.subr.mxu0 0.0
    %4462 = vmatpush2.msra.mxu0 0.0
    %4463 = vmatprep.subr.mxu0 0.0
    %4464 = vmatpush2.msra.mxu0 0.0
    %4465 = vmatprep.subr.mxu0 0.0
    %4466 = vmatpush2.msra.mxu0 0.0
    %4467 = vmatprep.subr.mxu0 0.0
    %4468 = vmatpush2.msra.mxu0 0.0
    %4469 = vmatprep.subr.mxu0 0.0
    %4470 = vmatpush2.msra.mxu0 0.0
    %4471 = vmatprep.subr.mxu0 0.0
    %4472 = vmatpush2.msra.mxu0 0.0
    %4473 = vmatprep.subr.mxu0 0.0
    %4474 = vmatpush2.msra.mxu0 0.0
    %4475 = vmatprep.subr.mxu0 0.0
    %4476 = vmatpush2.msra.mxu0 0.0
    %4477 = vmatprep.subr.mxu0 0.0
    %4478 = vmatpush2.msra.mxu0 0.0
    %4479 = vmatprep.subr.mxu0 0.0
    %4480 = vmatpush2.msra.mxu0 0.0
    %4481 = vmatprep.subr.mxu0 0.0
    %4482 = vmatpush2.msra.mxu0 0.0
    %4483 = vmatprep.mubr.f32.mxu0 0.0
    %4484 = vmatmul.mubr.f32.gmra.mxu0 %v3577
    %v4485 = vpop.f32.mrf.mxu0
    %v4486 = vadd.f32 0.0, %v4485
    %v4487 = vpop.f32.mrf.mxu0
    %4488 = vdwg.mxu0
    %4489 = vmatprep.subr.mxu0 0.0
    %4490 = vmatpush1.msra.mxu0 0.0
    %4491 = vmatprep.subr.mxu0 0.0
    %4492 = vmatpush1.msra.mxu0 0.0
    %4493 = vmatprep.subr.mxu0 0.0
    %4494 = vmatpush1.msra.mxu0 0.0
    %4495 = vmatprep.subr.mxu0 0.0
    %4496 = vmatpush1.msra.mxu0 0.0
    %4497 = vmatprep.subr.mxu0 0.0
    %4498 = vmatpush1.msra.mxu0 0.0
    %4499 = vmatprep.subr.mxu0 0.0
    %4500 = vmatpush1.msra.mxu0 0.0
    %4501 = vmatprep.subr.mxu0 0.0
    %4502 = vmatpush1.msra.mxu0 0.0
    %4503 = vmatprep.subr.mxu0 0.0
    %4504 = vmatpush1.msra.mxu0 0.0
    %4505 = vmatprep.subr.mxu0 0.0
    %4506 = vmatpush1.msra.mxu0 0.0
    %4507 = vmatprep.subr.mxu0 0.0
    %4508 = vmatpush1.msra.mxu0 0.0
    %4509 = vmatprep.subr.mxu0 0.0
    %4510 = vmatpush1.msra.mxu0 0.0
    %4511 = vmatprep.subr.mxu0 0.0
    %4512 = vmatpush1.msra.mxu0 0.0
    %4513 = vmatprep.subr.mxu0 0.0
    %4514 = vmatpush1.msra.mxu0 0.0
    %4515 = vmatprep.subr.mxu0 0.0
    %4516 = vmatpush1.msra.mxu0 0.0
    %4517 = vmatprep.subr.mxu0 0.0
    %4518 = vmatpush1.msra.mxu0 %v1467
    %4519 = vmatprep.subr.mxu0 0.0
    %4520 = vmatpush1.msra.mxu0 %v1462
    %4521 = vmatprep.subr.mxu0 0.0
    %4522 = vmatpush2.msra.mxu0 0.0
    %4523 = vmatprep.subr.mxu0 0.0
    %4524 = vmatpush2.msra.mxu0 0.0
    %4525 = vmatprep.subr.mxu0 0.0
    %4526 = vmatpush2.msra.mxu0 0.0
    %4527 = vmatprep.subr.mxu0 0.0
    %4528 = vmatpush2.msra.mxu0 0.0
    %4529 = vmatprep.subr.mxu0 0.0
    %4530 = vmatpush2.msra.mxu0 0.0
    %4531 = vmatprep.subr.mxu0 0.0
    %4532 = vmatpush2.msra.mxu0 0.0
    %4533 = vmatprep.subr.mxu0 0.0
    %4534 = vmatpush2.msra.mxu0 0.0
    %4535 = vmatprep.subr.mxu0 0.0
    %4536 = vmatpush2.msra.mxu0 0.0
    %4537 = vmatprep.subr.mxu0 0.0
    %4538 = vmatpush2.msra.mxu0 0.0
    %4539 = vmatprep.subr.mxu0 0.0
    %4540 = vmatpush2.msra.mxu0 0.0
    %4541 = vmatprep.subr.mxu0 0.0
    %4542 = vmatpush2.msra.mxu0 0.0
    %4543 = vmatprep.subr.mxu0 0.0
    %4544 = vmatpush2.msra.mxu0 0.0
    %4545 = vmatprep.subr.mxu0 0.0
    %4546 = vmatpush2.msra.mxu0 0.0
    %4547 = vmatprep.subr.mxu0 0.0
    %4548 = vmatpush2.msra.mxu0 0.0
    %4549 = vmatprep.subr.mxu0 0.0
    %4550 = vmatpush2.msra.mxu0 0.0
    %4551 = vmatprep.subr.mxu0 0.0
    %4552 = vmatpush2.msra.mxu0 0.0
    %4553 = vmatprep.mubr.f32.mxu0 0.0
    %4554 = vmatmul.mubr.f32.gmra.mxu0 %v3577
    %v4555 = vpop.f32.mrf.mxu0
    %v4556 = vadd.f32 0.0, %v4555
    %v4557 = vpop.f32.mrf.mxu0
    %4558 = vdwg.mxu0
    %4559 = vmatprep.subr.mxu0 0.0
    %4560 = vmatpush1.msra.mxu0 0.0
    %4561 = vmatprep.subr.mxu0 0.0
    %4562 = vmatpush1.msra.mxu0 0.0
    %4563 = vmatprep.subr.mxu0 0.0
    %4564 = vmatpush1.msra.mxu0 0.0
    %4565 = vmatprep.subr.mxu0 0.0
    %4566 = vmatpush1.msra.mxu0 0.0
    %4567 = vmatprep.subr.mxu0 0.0
    %4568 = vmatpush1.msra.mxu0 0.0
    %4569 = vmatprep.subr.mxu0 0.0
    %4570 = vmatpush1.msra.mxu0 0.0
    %4571 = vmatprep.subr.mxu0 0.0
    %4572 = vmatpush1.msra.mxu0 0.0
    %4573 = vmatprep.subr.mxu0 0.0
    %4574 = vmatpush1.msra.mxu0 0.0
    %4575 = vmatprep.subr.mxu0 0.0
    %4576 = vmatpush1.msra.mxu0 0.0
    %4577 = vmatprep.subr.mxu0 0.0
    %4578 = vmatpush1.msra.mxu0 0.0
    %4579 = vmatprep.subr.mxu0 0.0
    %4580 = vmatpush1.msra.mxu0 0.0
    %4581 = vmatprep.subr.mxu0 0.0
    %4582 = vmatpush1.msra.mxu0 0.0
    %4583 = vmatprep.subr.mxu0 0.0
    %4584 = vmatpush1.msra.mxu0 0.0
    %4585 = vmatprep.subr.mxu0 0.0
    %4586 = vmatpush1.msra.mxu0 0.0
    %4587 = vmatprep.subr.mxu0 0.0
    %4588 = vmatpush1.msra.mxu0 %v1548
    %4589 = vmatprep.subr.mxu0 0.0
    %4590 = vmatpush1.msra.mxu0 %v1543
    %4591 = vmatprep.subr.mxu0 0.0
    %4592 = vmatpush2.msra.mxu0 0.0
    %4593 = vmatprep.subr.mxu0 0.0
    %4594 = vmatpush2.msra.mxu0 0.0
    %4595 = vmatprep.subr.mxu0 0.0
    %4596 = vmatpush2.msra.mxu0 0.0
    %4597 = vmatprep.subr.mxu0 0.0
    %4598 = vmatpush2.msra.mxu0 0.0
    %4599 = vmatprep.subr.mxu0 0.0
    %4600 = vmatpush2.msra.mxu0 0.0
    %4601 = vmatprep.subr.mxu0 0.0
    %4602 = vmatpush2.msra.mxu0 0.0
    %4603 = vmatprep.subr.mxu0 0.0
    %4604 = vmatpush2.msra.mxu0 0.0
    %4605 = vmatprep.subr.mxu0 0.0
    %4606 = vmatpush2.msra.mxu0 0.0
    %4607 = vmatprep.subr.mxu0 0.0
    %4608 = vmatpush2.msra.mxu0 0.0
    %4609 = vmatprep.subr.mxu0 0.0
    %4610 = vmatpush2.msra.mxu0 0.0
    %4611 = vmatprep.subr.mxu0 0.0
    %4612 = vmatpush2.msra.mxu0 0.0
    %4613 = vmatprep.subr.mxu0 0.0
    %4614 = vmatpush2.msra.mxu0 0.0
    %4615 = vmatprep.subr.mxu0 0.0
    %4616 = vmatpush2.msra.mxu0 0.0
    %4617 = vmatprep.subr.mxu0 0.0
    %4618 = vmatpush2.msra.mxu0 0.0
    %4619 = vmatprep.subr.mxu0 0.0
    %4620 = vmatpush2.msra.mxu0 0.0
    %4621 = vmatprep.subr.mxu0 0.0
    %4622 = vmatpush2.msra.mxu0 0.0
    %4623 = vmatprep.mubr.f32.mxu0 0.0
    %4624 = vmatmul.mubr.f32.gmra.mxu0 %v3577
    %v4625 = vpop.f32.mrf.mxu0
    %v4626 = vadd.f32 0.0, %v4625
    %v4627 = vpop.f32.mrf.mxu0
    %4628 = vdwg.mxu0
    %4629 = vmatprep.subr.mxu0 0.0
    %4630 = vmatpush1.msra.mxu0 0.0
    %4631 = vmatprep.subr.mxu0 0.0
    %4632 = vmatpush1.msra.mxu0 0.0
    %4633 = vmatprep.subr.mxu0 0.0
    %4634 = vmatpush1.msra.mxu0 0.0
    %4635 = vmatprep.subr.mxu0 0.0
    %4636 = vmatpush1.msra.mxu0 0.0
    %4637 = vmatprep.subr.mxu0 0.0
    %4638 = vmatpush1.msra.mxu0 0.0
    %4639 = vmatprep.subr.mxu0 0.0
    %4640 = vmatpush1.msra.mxu0 0.0
    %4641 = vmatprep.subr.mxu0 0.0
    %4642 = vmatpush1.msra.mxu0 0.0
    %4643 = vmatprep.subr.mxu0 0.0
    %4644 = vmatpush1.msra.mxu0 0.0
    %4645 = vmatprep.subr.mxu0 0.0
    %4646 = vmatpush1.msra.mxu0 0.0
    %4647 = vmatprep.subr.mxu0 0.0
    %4648 = vmatpush1.msra.mxu0 0.0
    %4649 = vmatprep.subr.mxu0 0.0
    %4650 = vmatpush1.msra.mxu0 0.0
    %4651 = vmatprep.subr.mxu0 0.0
    %4652 = vmatpush1.msra.mxu0 0.0
    %4653 = vmatprep.subr.mxu0 0.0
    %4654 = vmatpush1.msra.mxu0 0.0
    %4655 = vmatprep.subr.mxu0 0.0
    %4656 = vmatpush1.msra.mxu0 0.0
    %4657 = vmatprep.subr.mxu0 0.0
    %4658 = vmatpush1.msra.mxu0 %v1629
    %4659 = vmatprep.subr.mxu0 0.0
    %4660 = vmatpush1.msra.mxu0 %v1624
    %4661 = vmatprep.subr.mxu0 0.0
    %4662 = vmatpush2.msra.mxu0 0.0
    %4663 = vmatprep.subr.mxu0 0.0
    %4664 = vmatpush2.msra.mxu0 0.0
    %4665 = vmatprep.subr.mxu0 0.0
    %4666 = vmatpush2.msra.mxu0 0.0
    %4667 = vmatprep.subr.mxu0 0.0
    %4668 = vmatpush2.msra.mxu0 0.0
    %4669 = vmatprep.subr.mxu0 0.0
    %4670 = vmatpush2.msra.mxu0 0.0
    %4671 = vmatprep.subr.mxu0 0.0
    %4672 = vmatpush2.msra.mxu0 0.0
    %4673 = vmatprep.subr.mxu0 0.0
    %4674 = vmatpush2.msra.mxu0 0.0
    %4675 = vmatprep.subr.mxu0 0.0
    %4676 = vmatpush2.msra.mxu0 0.0
    %4677 = vmatprep.subr.mxu0 0.0
    %4678 = vmatpush2.msra.mxu0 0.0
    %4679 = vmatprep.subr.mxu0 0.0
    %4680 = vmatpush2.msra.mxu0 0.0
    %4681 = vmatprep.subr.mxu0 0.0
    %4682 = vmatpush2.msra.mxu0 0.0
    %4683 = vmatprep.subr.mxu0 0.0
    %4684 = vmatpush2.msra.mxu0 0.0
    %4685 = vmatprep.subr.mxu0 0.0
    %4686 = vmatpush2.msra.mxu0 0.0
    %4687 = vmatprep.subr.mxu0 0.0
    %4688 = vmatpush2.msra.mxu0 0.0
    %4689 = vmatprep.subr.mxu0 0.0
    %4690 = vmatpush2.msra.mxu0 0.0
    %4691 = vmatprep.subr.mxu0 0.0
    %4692 = vmatpush2.msra.mxu0 0.0
    %4693 = vmatprep.mubr.f32.mxu0 0.0
    %4694 = vmatmul.mubr.f32.gmra.mxu0 %v3577
    %v4695 = vpop.f32.mrf.mxu0
    %v4696 = vadd.f32 0.0, %v4695
    %v4697 = vpop.f32.mrf.mxu0
    %4698 = vdwg.mxu0
    %4699 = vmatprep.subr.mxu0 0.0
    %4700 = vmatpush1.msra.mxu0 0.0
    %4701 = vmatprep.subr.mxu0 0.0
    %4702 = vmatpush1.msra.mxu0 0.0
    %4703 = vmatprep.subr.mxu0 0.0
    %4704 = vmatpush1.msra.mxu0 0.0
    %4705 = vmatprep.subr.mxu0 0.0
    %4706 = vmatpush1.msra.mxu0 0.0
    %4707 = vmatprep.subr.mxu0 0.0
    %4708 = vmatpush1.msra.mxu0 0.0
    %4709 = vmatprep.subr.mxu0 0.0
    %4710 = vmatpush1.msra.mxu0 0.0
    %4711 = vmatprep.subr.mxu0 0.0
    %4712 = vmatpush1.msra.mxu0 0.0
    %4713 = vmatprep.subr.mxu0 0.0
    %4714 = vmatpush1.msra.mxu0 0.0
    %4715 = vmatprep.subr.mxu0 0.0
    %4716 = vmatpush1.msra.mxu0 0.0
    %4717 = vmatprep.subr.mxu0 0.0
    %4718 = vmatpush1.msra.mxu0 0.0
    %4719 = vmatprep.subr.mxu0 0.0
    %4720 = vmatpush1.msra.mxu0 0.0
    %4721 = vmatprep.subr.mxu0 0.0
    %4722 = vmatpush1.msra.mxu0 0.0
    %4723 = vmatprep.subr.mxu0 0.0
    %4724 = vmatpush1.msra.mxu0 0.0
    %4725 = vmatprep.subr.mxu0 0.0
    %4726 = vmatpush1.msra.mxu0 0.0
    %4727 = vmatprep.subr.mxu0 0.0
    %4728 = vmatpush1.msra.mxu0 %v1710
    %4729 = vmatprep.subr.mxu0 0.0
    %4730 = vmatpush1.msra.mxu0 %v1705
    %4731 = vmatprep.subr.mxu0 0.0
    %4732 = vmatpush2.msra.mxu0 0.0
    %4733 = vmatprep.subr.mxu0 0.0
    %4734 = vmatpush2.msra.mxu0 0.0
    %4735 = vmatprep.subr.mxu0 0.0
    %4736 = vmatpush2.msra.mxu0 0.0
    %4737 = vmatprep.subr.mxu0 0.0
    %4738 = vmatpush2.msra.mxu0 0.0
    %4739 = vmatprep.subr.mxu0 0.0
    %4740 = vmatpush2.msra.mxu0 0.0
    %4741 = vmatprep.subr.mxu0 0.0
    %4742 = vmatpush2.msra.mxu0 0.0
    %4743 = vmatprep.subr.mxu0 0.0
    %4744 = vmatpush2.msra.mxu0 0.0
    %4745 = vmatprep.subr.mxu0 0.0
    %4746 = vmatpush2.msra.mxu0 0.0
    %4747 = vmatprep.subr.mxu0 0.0
    %4748 = vmatpush2.msra.mxu0 0.0
    %4749 = vmatprep.subr.mxu0 0.0
    %4750 = vmatpush2.msra.mxu0 0.0
    %4751 = vmatprep.subr.mxu0 0.0
    %4752 = vmatpush2.msra.mxu0 0.0
    %4753 = vmatprep.subr.mxu0 0.0
    %4754 = vmatpush2.msra.mxu0 0.0
    %4755 = vmatprep.subr.mxu0 0.0
    %4756 = vmatpush2.msra.mxu0 0.0
    %4757 = vmatprep.subr.mxu0 0.0
    %4758 = vmatpush2.msra.mxu0 0.0
    %4759 = vmatprep.subr.mxu0 0.0
    %4760 = vmatpush2.msra.mxu0 0.0
    %4761 = vmatprep.subr.mxu0 0.0
    %4762 = vmatpush2.msra.mxu0 0.0
    %4763 = vmatprep.mubr.f32.mxu0 0.0
    %4764 = vmatmul.mubr.f32.gmra.mxu0 %v3577
    %v4765 = vpop.f32.mrf.mxu0
    %v4766 = vadd.f32 0.0, %v4765
    %v4767 = vpop.f32.mrf.mxu0
    %4768 = vdwg.mxu0
    %4769 = vmatprep.subr.mxu0 0.0
    %4770 = vmatpush1.msra.mxu0 0.0
    %4771 = vmatprep.subr.mxu0 0.0
    %4772 = vmatpush1.msra.mxu0 0.0
    %4773 = vmatprep.subr.mxu0 0.0
    %4774 = vmatpush1.msra.mxu0 0.0
    %4775 = vmatprep.subr.mxu0 0.0
    %4776 = vmatpush1.msra.mxu0 0.0
    %4777 = vmatprep.subr.mxu0 0.0
    %4778 = vmatpush1.msra.mxu0 0.0
    %4779 = vmatprep.subr.mxu0 0.0
    %4780 = vmatpush1.msra.mxu0 0.0
    %4781 = vmatprep.subr.mxu0 0.0
    %4782 = vmatpush1.msra.mxu0 0.0
    %4783 = vmatprep.subr.mxu0 0.0
    %4784 = vmatpush1.msra.mxu0 0.0
    %4785 = vmatprep.subr.mxu0 0.0
    %4786 = vmatpush1.msra.mxu0 0.0
    %4787 = vmatprep.subr.mxu0 0.0
    %4788 = vmatpush1.msra.mxu0 0.0
    %4789 = vmatprep.subr.mxu0 0.0
    %4790 = vmatpush1.msra.mxu0 0.0
    %4791 = vmatprep.subr.mxu0 0.0
    %4792 = vmatpush1.msra.mxu0 0.0
    %4793 = vmatprep.subr.mxu0 0.0
    %4794 = vmatpush1.msra.mxu0 0.0
    %4795 = vmatprep.subr.mxu0 0.0
    %4796 = vmatpush1.msra.mxu0 0.0
    %4797 = vmatprep.subr.mxu0 0.0
    %4798 = vmatpush1.msra.mxu0 %v1791
    %4799 = vmatprep.subr.mxu0 0.0
    %4800 = vmatpush1.msra.mxu0 %v1786
    %4801 = vmatprep.subr.mxu0 0.0
    %4802 = vmatpush2.msra.mxu0 0.0
    %4803 = vmatprep.subr.mxu0 0.0
    %4804 = vmatpush2.msra.mxu0 0.0
    %4805 = vmatprep.subr.mxu0 0.0
    %4806 = vmatpush2.msra.mxu0 0.0
    %4807 = vmatprep.subr.mxu0 0.0
    %4808 = vmatpush2.msra.mxu0 0.0
    %4809 = vmatprep.subr.mxu0 0.0
    %4810 = vmatpush2.msra.mxu0 0.0
    %4811 = vmatprep.subr.mxu0 0.0
    %4812 = vmatpush2.msra.mxu0 0.0
    %4813 = vmatprep.subr.mxu0 0.0
    %4814 = vmatpush2.msra.mxu0 0.0
    %4815 = vmatprep.subr.mxu0 0.0
    %4816 = vmatpush2.msra.mxu0 0.0
    %4817 = vmatprep.subr.mxu0 0.0
    %4818 = vmatpush2.msra.mxu0 0.0
    %4819 = vmatprep.subr.mxu0 0.0
    %4820 = vmatpush2.msra.mxu0 0.0
    %4821 = vmatprep.subr.mxu0 0.0
    %4822 = vmatpush2.msra.mxu0 0.0
    %4823 = vmatprep.subr.mxu0 0.0
    %4824 = vmatpush2.msra.mxu0 0.0
    %4825 = vmatprep.subr.mxu0 0.0
    %4826 = vmatpush2.msra.mxu0 0.0
    %4827 = vmatprep.subr.mxu0 0.0
    %4828 = vmatpush2.msra.mxu0 0.0
    %4829 = vmatprep.subr.mxu0 0.0
    %4830 = vmatpush2.msra.mxu0 0.0
    %4831 = vmatprep.subr.mxu0 0.0
    %4832 = vmatpush2.msra.mxu0 0.0
    %4833 = vmatprep.mubr.f32.mxu0 0.0
    %4834 = vmatmul.mubr.f32.gmra.mxu0 %v3577
    %v4835 = vpop.f32.mrf.mxu0
    %v4836 = vadd.f32 0.0, %v4835
    %v4837 = vpop.f32.mrf.mxu0
    %4838 = vdwg.mxu0
    %4839 = vmatprep.subr.mxu0 0.0
    %4840 = vmatpush1.msra.mxu0 0.0
    %4841 = vmatprep.subr.mxu0 0.0
    %4842 = vmatpush1.msra.mxu0 0.0
    %4843 = vmatprep.subr.mxu0 0.0
    %4844 = vmatpush1.msra.mxu0 0.0
    %4845 = vmatprep.subr.mxu0 0.0
    %4846 = vmatpush1.msra.mxu0 0.0
    %4847 = vmatprep.subr.mxu0 0.0
    %4848 = vmatpush1.msra.mxu0 0.0
    %4849 = vmatprep.subr.mxu0 0.0
    %4850 = vmatpush1.msra.mxu0 0.0
    %4851 = vmatprep.subr.mxu0 0.0
    %4852 = vmatpush1.msra.mxu0 0.0
    %4853 = vmatprep.subr.mxu0 0.0
    %4854 = vmatpush1.msra.mxu0 0.0
    %4855 = vmatprep.subr.mxu0 0.0
    %4856 = vmatpush1.msra.mxu0 0.0
    %4857 = vmatprep.subr.mxu0 0.0
    %4858 = vmatpush1.msra.mxu0 0.0
    %4859 = vmatprep.subr.mxu0 0.0
    %4860 = vmatpush1.msra.mxu0 0.0
    %4861 = vmatprep.subr.mxu0 0.0
    %4862 = vmatpush1.msra.mxu0 0.0
    %4863 = vmatprep.subr.mxu0 0.0
    %4864 = vmatpush1.msra.mxu0 0.0
    %4865 = vmatprep.subr.mxu0 0.0
    %4866 = vmatpush1.msra.mxu0 0.0
    %4867 = vmatprep.subr.mxu0 0.0
    %4868 = vmatpush1.msra.mxu0 %v1872
    %4869 = vmatprep.subr.mxu0 0.0
    %4870 = vmatpush1.msra.mxu0 %v1867
    %4871 = vmatprep.subr.mxu0 0.0
    %4872 = vmatpush2.msra.mxu0 0.0
    %4873 = vmatprep.subr.mxu0 0.0
    %4874 = vmatpush2.msra.mxu0 0.0
    %4875 = vmatprep.subr.mxu0 0.0
    %4876 = vmatpush2.msra.mxu0 0.0
    %4877 = vmatprep.subr.mxu0 0.0
    %4878 = vmatpush2.msra.mxu0 0.0
    %4879 = vmatprep.subr.mxu0 0.0
    %4880 = vmatpush2.msra.mxu0 0.0
    %4881 = vmatprep.subr.mxu0 0.0
    %4882 = vmatpush2.msra.mxu0 0.0
    %4883 = vmatprep.subr.mxu0 0.0
    %4884 = vmatpush2.msra.mxu0 0.0
    %4885 = vmatprep.subr.mxu0 0.0
    %4886 = vmatpush2.msra.mxu0 0.0
    %4887 = vmatprep.subr.mxu0 0.0
    %4888 = vmatpush2.msra.mxu0 0.0
    %4889 = vmatprep.subr.mxu0 0.0
    %4890 = vmatpush2.msra.mxu0 0.0
    %4891 = vmatprep.subr.mxu0 0.0
    %4892 = vmatpush2.msra.mxu0 0.0
    %4893 = vmatprep.subr.mxu0 0.0
    %4894 = vmatpush2.msra.mxu0 0.0
    %4895 = vmatprep.subr.mxu0 0.0
    %4896 = vmatpush2.msra.mxu0 0.0
    %4897 = vmatprep.subr.mxu0 0.0
    %4898 = vmatpush2.msra.mxu0 0.0
    %4899 = vmatprep.subr.mxu0 0.0
    %4900 = vmatpush2.msra.mxu0 0.0
    %4901 = vmatprep.subr.mxu0 0.0
    %4902 = vmatpush2.msra.mxu0 0.0
    %4903 = vmatprep.mubr.f32.mxu0 0.0
    %4904 = vmatmul.mubr.f32.gmra.mxu0 %v3577
    %v4905 = vpop.f32.mrf.mxu0
    %v4906 = vadd.f32 0.0, %v4905
    %v4907 = vpop.f32.mrf.mxu0
    %4908 = vdwg.mxu0
    %4909 = vmatprep.subr.mxu0 0.0
    %4910 = vmatpush1.msra.mxu0 0.0
    %4911 = vmatprep.subr.mxu0 0.0
    %4912 = vmatpush1.msra.mxu0 0.0
    %4913 = vmatprep.subr.mxu0 0.0
    %4914 = vmatpush1.msra.mxu0 0.0
    %4915 = vmatprep.subr.mxu0 0.0
    %4916 = vmatpush1.msra.mxu0 0.0
    %4917 = vmatprep.subr.mxu0 0.0
    %4918 = vmatpush1.msra.mxu0 0.0
    %4919 = vmatprep.subr.mxu0 0.0
    %4920 = vmatpush1.msra.mxu0 0.0
    %4921 = vmatprep.subr.mxu0 0.0
    %4922 = vmatpush1.msra.mxu0 0.0
    %4923 = vmatprep.subr.mxu0 0.0
    %4924 = vmatpush1.msra.mxu0 0.0
    %4925 = vmatprep.subr.mxu0 0.0
    %4926 = vmatpush1.msra.mxu0 0.0
    %4927 = vmatprep.subr.mxu0 0.0
    %4928 = vmatpush1.msra.mxu0 0.0
    %4929 = vmatprep.subr.mxu0 0.0
    %4930 = vmatpush1.msra.mxu0 0.0
    %4931 = vmatprep.subr.mxu0 0.0
    %4932 = vmatpush1.msra.mxu0 0.0
    %4933 = vmatprep.subr.mxu0 0.0
    %4934 = vmatpush1.msra.mxu0 0.0
    %4935 = vmatprep.subr.mxu0 0.0
    %4936 = vmatpush1.msra.mxu0 0.0
    %4937 = vmatprep.subr.mxu0 0.0
    %4938 = vmatpush1.msra.mxu0 %v1953
    %4939 = vmatprep.subr.mxu0 0.0
    %4940 = vmatpush1.msra.mxu0 %v1948
    %4941 = vmatprep.subr.mxu0 0.0
    %4942 = vmatpush2.msra.mxu0 0.0
    %4943 = vmatprep.subr.mxu0 0.0
    %4944 = vmatpush2.msra.mxu0 0.0
    %4945 = vmatprep.subr.mxu0 0.0
    %4946 = vmatpush2.msra.mxu0 0.0
    %4947 = vmatprep.subr.mxu0 0.0
    %4948 = vmatpush2.msra.mxu0 0.0
    %4949 = vmatprep.subr.mxu0 0.0
    %4950 = vmatpush2.msra.mxu0 0.0
    %4951 = vmatprep.subr.mxu0 0.0
    %4952 = vmatpush2.msra.mxu0 0.0
    %4953 = vmatprep.subr.mxu0 0.0
    %4954 = vmatpush2.msra.mxu0 0.0
    %4955 = vmatprep.subr.mxu0 0.0
    %4956 = vmatpush2.msra.mxu0 0.0
    %4957 = vmatprep.subr.mxu0 0.0
    %4958 = vmatpush2.msra.mxu0 0.0
    %4959 = vmatprep.subr.mxu0 0.0
    %4960 = vmatpush2.msra.mxu0 0.0
    %4961 = vmatprep.subr.mxu0 0.0
    %4962 = vmatpush2.msra.mxu0 0.0
    %4963 = vmatprep.subr.mxu0 0.0
    %4964 = vmatpush2.msra.mxu0 0.0
    %4965 = vmatprep.subr.mxu0 0.0
    %4966 = vmatpush2.msra.mxu0 0.0
    %4967 = vmatprep.subr.mxu0 0.0
    %4968 = vmatpush2.msra.mxu0 0.0
    %4969 = vmatprep.subr.mxu0 0.0
    %4970 = vmatpush2.msra.mxu0 0.0
    %4971 = vmatprep.subr.mxu0 0.0
    %4972 = vmatpush2.msra.mxu0 0.0
    %4973 = vmatprep.mubr.f32.mxu0 0.0
    %4974 = vmatmul.mubr.f32.gmra.mxu0 %v3577
    %v4975 = vpop.f32.mrf.mxu0
    %v4976 = vadd.f32 0.0, %v4975
    %v4977 = vpop.f32.mrf.mxu0
    %4978 = vdwg.mxu0
    %4979 = vmatprep.subr.mxu0 0.0
    %4980 = vmatpush1.msra.mxu0 0.0
    %4981 = vmatprep.subr.mxu0 0.0
    %4982 = vmatpush1.msra.mxu0 0.0
    %4983 = vmatprep.subr.mxu0 0.0
    %4984 = vmatpush1.msra.mxu0 0.0
    %4985 = vmatprep.subr.mxu0 0.0
    %4986 = vmatpush1.msra.mxu0 0.0
    %4987 = vmatprep.subr.mxu0 0.0
    %4988 = vmatpush1.msra.mxu0 0.0
    %4989 = vmatprep.subr.mxu0 0.0
    %4990 = vmatpush1.msra.mxu0 0.0
    %4991 = vmatprep.subr.mxu0 0.0
    %4992 = vmatpush1.msra.mxu0 0.0
    %4993 = vmatprep.subr.mxu0 0.0
    %4994 = vmatpush1.msra.mxu0 0.0
    %4995 = vmatprep.subr.mxu0 0.0
    %4996 = vmatpush1.msra.mxu0 0.0
    %4997 = vmatprep.subr.mxu0 0.0
    %4998 = vmatpush1.msra.mxu0 0.0
    %4999 = vmatprep.subr.mxu0 0.0
    %5000 = vmatpush1.msra.mxu0 0.0
    %5001 = vmatprep.subr.mxu0 0.0
    %5002 = vmatpush1.msra.mxu0 0.0
    %5003 = vmatprep.subr.mxu0 0.0
    %5004 = vmatpush1.msra.mxu0 0.0
    %5005 = vmatprep.subr.mxu0 0.0
    %5006 = vmatpush1.msra.mxu0 0.0
    %5007 = vmatprep.subr.mxu0 0.0
    %5008 = vmatpush1.msra.mxu0 %v2034
    %5009 = vmatprep.subr.mxu0 0.0
    %5010 = vmatpush1.msra.mxu0 %v2029
    %5011 = vmatprep.subr.mxu0 0.0
    %5012 = vmatpush2.msra.mxu0 0.0
    %5013 = vmatprep.subr.mxu0 0.0
    %5014 = vmatpush2.msra.mxu0 0.0
    %5015 = vmatprep.subr.mxu0 0.0
    %5016 = vmatpush2.msra.mxu0 0.0
    %5017 = vmatprep.subr.mxu0 0.0
    %5018 = vmatpush2.msra.mxu0 0.0
    %5019 = vmatprep.subr.mxu0 0.0
    %5020 = vmatpush2.msra.mxu0 0.0
    %5021 = vmatprep.subr.mxu0 0.0
    %5022 = vmatpush2.msra.mxu0 0.0
    %5023 = vmatprep.subr.mxu0 0.0
    %5024 = vmatpush2.msra.mxu0 0.0
    %5025 = vmatprep.subr.mxu0 0.0
    %5026 = vmatpush2.msra.mxu0 0.0
    %5027 = vmatprep.subr.mxu0 0.0
    %5028 = vmatpush2.msra.mxu0 0.0
    %5029 = vmatprep.subr.mxu0 0.0
    %5030 = vmatpush2.msra.mxu0 0.0
    %5031 = vmatprep.subr.mxu0 0.0
    %5032 = vmatpush2.msra.mxu0 0.0
    %5033 = vmatprep.subr.mxu0 0.0
    %5034 = vmatpush2.msra.mxu0 0.0
    %5035 = vmatprep.subr.mxu0 0.0
    %5036 = vmatpush2.msra.mxu0 0.0
    %5037 = vmatprep.subr.mxu0 0.0
    %5038 = vmatpush2.msra.mxu0 0.0
    %5039 = vmatprep.subr.mxu0 0.0
    %5040 = vmatpush2.msra.mxu0 0.0
    %5041 = vmatprep.subr.mxu0 0.0
    %5042 = vmatpush2.msra.mxu0 0.0
    %5043 = vmatprep.mubr.f32.mxu0 0.0
    %5044 = vmatmul.mubr.f32.gmra.mxu0 %v3577
    %v5045 = vpop.f32.mrf.mxu0
    %v5046 = vadd.f32 0.0, %v5045
    %v5047 = vpop.f32.mrf.mxu0
    %5048 = vdwg.mxu0
    %5049 = vmatprep.subr.mxu0 0.0
    %5050 = vmatpush1.msra.mxu0 0.0
    %5051 = vmatprep.subr.mxu0 0.0
    %5052 = vmatpush1.msra.mxu0 0.0
    %5053 = vmatprep.subr.mxu0 0.0
    %5054 = vmatpush1.msra.mxu0 0.0
    %5055 = vmatprep.subr.mxu0 0.0
    %5056 = vmatpush1.msra.mxu0 0.0
    %5057 = vmatprep.subr.mxu0 0.0
    %5058 = vmatpush1.msra.mxu0 0.0
    %5059 = vmatprep.subr.mxu0 0.0
    %5060 = vmatpush1.msra.mxu0 0.0
    %5061 = vmatprep.subr.mxu0 0.0
    %5062 = vmatpush1.msra.mxu0 0.0
    %5063 = vmatprep.subr.mxu0 0.0
    %5064 = vmatpush1.msra.mxu0 0.0
    %5065 = vmatprep.subr.mxu0 0.0
    %5066 = vmatpush1.msra.mxu0 0.0
    %5067 = vmatprep.subr.mxu0 0.0
    %5068 = vmatpush1.msra.mxu0 0.0
    %5069 = vmatprep.subr.mxu0 0.0
    %5070 = vmatpush1.msra.mxu0 0.0
    %5071 = vmatprep.subr.mxu0 0.0
    %5072 = vmatpush1.msra.mxu0 0.0
    %5073 = vmatprep.subr.mxu0 0.0
    %5074 = vmatpush1.msra.mxu0 0.0
    %5075 = vmatprep.subr.mxu0 0.0
    %5076 = vmatpush1.msra.mxu0 0.0
    %5077 = vmatprep.subr.mxu0 0.0
    %5078 = vmatpush1.msra.mxu0 %v2115
    %5079 = vmatprep.subr.mxu0 0.0
    %5080 = vmatpush1.msra.mxu0 %v2110
    %5081 = vmatprep.subr.mxu0 0.0
    %5082 = vmatpush2.msra.mxu0 0.0
    %5083 = vmatprep.subr.mxu0 0.0
    %5084 = vmatpush2.msra.mxu0 0.0
    %5085 = vmatprep.subr.mxu0 0.0
    %5086 = vmatpush2.msra.mxu0 0.0
    %5087 = vmatprep.subr.mxu0 0.0
    %5088 = vmatpush2.msra.mxu0 0.0
    %5089 = vmatprep.subr.mxu0 0.0
    %5090 = vmatpush2.msra.mxu0 0.0
    %5091 = vmatprep.subr.mxu0 0.0
    %5092 = vmatpush2.msra.mxu0 0.0
    %5093 = vmatprep.subr.mxu0 0.0
    %5094 = vmatpush2.msra.mxu0 0.0
    %5095 = vmatprep.subr.mxu0 0.0
    %5096 = vmatpush2.msra.mxu0 0.0
    %5097 = vmatprep.subr.mxu0 0.0
    %5098 = vmatpush2.msra.mxu0 0.0
    %5099 = vmatprep.subr.mxu0 0.0
    %5100 = vmatpush2.msra.mxu0 0.0
    %5101 = vmatprep.subr.mxu0 0.0
    %5102 = vmatpush2.msra.mxu0 0.0
    %5103 = vmatprep.subr.mxu0 0.0
    %5104 = vmatpush2.msra.mxu0 0.0
    %5105 = vmatprep.subr.mxu0 0.0
    %5106 = vmatpush2.msra.mxu0 0.0
    %5107 = vmatprep.subr.mxu0 0.0
    %5108 = vmatpush2.msra.mxu0 0.0
    %5109 = vmatprep.subr.mxu0 0.0
    %5110 = vmatpush2.msra.mxu0 0.0
    %5111 = vmatprep.subr.mxu0 0.0
    %5112 = vmatpush2.msra.mxu0 0.0
    %5113 = vmatprep.mubr.f32.mxu0 0.0
    %5114 = vmatmul.mubr.f32.gmra.mxu0 %v3577
    %v5115 = vpop.f32.mrf.mxu0
    %v5116 = vadd.f32 0.0, %v5115
    %v5117 = vpop.f32.mrf.mxu0
    %5118 = vdwg.mxu0
    %5119 = vmatprep.subr.mxu0 0.0
    %5120 = vmatpush1.msra.mxu0 0.0
    %5121 = vmatprep.subr.mxu0 0.0
    %5122 = vmatpush1.msra.mxu0 0.0
    %5123 = vmatprep.subr.mxu0 0.0
    %5124 = vmatpush1.msra.mxu0 0.0
    %5125 = vmatprep.subr.mxu0 0.0
    %5126 = vmatpush1.msra.mxu0 0.0
    %5127 = vmatprep.subr.mxu0 0.0
    %5128 = vmatpush1.msra.mxu0 0.0
    %5129 = vmatprep.subr.mxu0 0.0
    %5130 = vmatpush1.msra.mxu0 0.0
    %5131 = vmatprep.subr.mxu0 0.0
    %5132 = vmatpush1.msra.mxu0 0.0
    %5133 = vmatprep.subr.mxu0 0.0
    %5134 = vmatpush1.msra.mxu0 0.0
    %5135 = vmatprep.subr.mxu0 0.0
    %5136 = vmatpush1.msra.mxu0 0.0
    %5137 = vmatprep.subr.mxu0 0.0
    %5138 = vmatpush1.msra.mxu0 0.0
    %5139 = vmatprep.subr.mxu0 0.0
    %5140 = vmatpush1.msra.mxu0 0.0
    %5141 = vmatprep.subr.mxu0 0.0
    %5142 = vmatpush1.msra.mxu0 0.0
    %5143 = vmatprep.subr.mxu0 0.0
    %5144 = vmatpush1.msra.mxu0 0.0
    %5145 = vmatprep.subr.mxu0 0.0
    %5146 = vmatpush1.msra.mxu0 0.0
    %5147 = vmatprep.subr.mxu0 0.0
    %5148 = vmatpush1.msra.mxu0 %v2196
    %5149 = vmatprep.subr.mxu0 0.0
    %5150 = vmatpush1.msra.mxu0 %v2191
    %5151 = vmatprep.subr.mxu0 0.0
    %5152 = vmatpush2.msra.mxu0 0.0
    %5153 = vmatprep.subr.mxu0 0.0
    %5154 = vmatpush2.msra.mxu0 0.0
    %5155 = vmatprep.subr.mxu0 0.0
    %5156 = vmatpush2.msra.mxu0 0.0
    %5157 = vmatprep.subr.mxu0 0.0
    %5158 = vmatpush2.msra.mxu0 0.0
    %5159 = vmatprep.subr.mxu0 0.0
    %5160 = vmatpush2.msra.mxu0 0.0
    %5161 = vmatprep.subr.mxu0 0.0
    %5162 = vmatpush2.msra.mxu0 0.0
    %5163 = vmatprep.subr.mxu0 0.0
    %5164 = vmatpush2.msra.mxu0 0.0
    %5165 = vmatprep.subr.mxu0 0.0
    %5166 = vmatpush2.msra.mxu0 0.0
    %5167 = vmatprep.subr.mxu0 0.0
    %5168 = vmatpush2.msra.mxu0 0.0
    %5169 = vmatprep.subr.mxu0 0.0
    %5170 = vmatpush2.msra.mxu0 0.0
    %5171 = vmatprep.subr.mxu0 0.0
    %5172 = vmatpush2.msra.mxu0 0.0
    %5173 = vmatprep.subr.mxu0 0.0
    %5174 = vmatpush2.msra.mxu0 0.0
    %5175 = vmatprep.subr.mxu0 0.0
    %5176 = vmatpush2.msra.mxu0 0.0
    %5177 = vmatprep.subr.mxu0 0.0
    %5178 = vmatpush2.msra.mxu0 0.0
    %5179 = vmatprep.subr.mxu0 0.0
    %5180 = vmatpush2.msra.mxu0 0.0
    %5181 = vmatprep.subr.mxu0 0.0
    %5182 = vmatpush2.msra.mxu0 0.0
    %5183 = vmatprep.mubr.f32.mxu0 0.0
    %5184 = vmatmul.mubr.f32.gmra.mxu0 %v3577
    %v5185 = vpop.f32.mrf.mxu0
    %v5186 = vadd.f32 0.0, %v5185
    %v5187 = vpop.f32.mrf.mxu0
    %5188 = vdwg.mxu0
    %5189 = vmatprep.subr.mxu0 0.0
    %5190 = vmatpush1.msra.mxu0 0.0
    %5191 = vmatprep.subr.mxu0 0.0
    %5192 = vmatpush1.msra.mxu0 0.0
    %5193 = vmatprep.subr.mxu0 0.0
    %5194 = vmatpush1.msra.mxu0 0.0
    %5195 = vmatprep.subr.mxu0 0.0
    %5196 = vmatpush1.msra.mxu0 0.0
    %5197 = vmatprep.subr.mxu0 0.0
    %5198 = vmatpush1.msra.mxu0 0.0
    %5199 = vmatprep.subr.mxu0 0.0
    %5200 = vmatpush1.msra.mxu0 0.0
    %5201 = vmatprep.subr.mxu0 0.0
    %5202 = vmatpush1.msra.mxu0 0.0
    %5203 = vmatprep.subr.mxu0 0.0
    %5204 = vmatpush1.msra.mxu0 0.0
    %5205 = vmatprep.subr.mxu0 0.0
    %5206 = vmatpush1.msra.mxu0 0.0
    %5207 = vmatprep.subr.mxu0 0.0
    %5208 = vmatpush1.msra.mxu0 0.0
    %5209 = vmatprep.subr.mxu0 0.0
    %5210 = vmatpush1.msra.mxu0 0.0
    %5211 = vmatprep.subr.mxu0 0.0
    %5212 = vmatpush1.msra.mxu0 0.0
    %5213 = vmatprep.subr.mxu0 0.0
    %5214 = vmatpush1.msra.mxu0 0.0
    %5215 = vmatprep.subr.mxu0 0.0
    %5216 = vmatpush1.msra.mxu0 0.0
    %5217 = vmatprep.subr.mxu0 0.0
    %5218 = vmatpush1.msra.mxu0 %v2277
    %5219 = vmatprep.subr.mxu0 0.0
    %5220 = vmatpush1.msra.mxu0 %v2272
    %5221 = vmatprep.subr.mxu0 0.0
    %5222 = vmatpush2.msra.mxu0 0.0
    %5223 = vmatprep.subr.mxu0 0.0
    %5224 = vmatpush2.msra.mxu0 0.0
    %5225 = vmatprep.subr.mxu0 0.0
    %5226 = vmatpush2.msra.mxu0 0.0
    %5227 = vmatprep.subr.mxu0 0.0
    %5228 = vmatpush2.msra.mxu0 0.0
    %5229 = vmatprep.subr.mxu0 0.0
    %5230 = vmatpush2.msra.mxu0 0.0
    %5231 = vmatprep.subr.mxu0 0.0
    %5232 = vmatpush2.msra.mxu0 0.0
    %5233 = vmatprep.subr.mxu0 0.0
    %5234 = vmatpush2.msra.mxu0 0.0
    %5235 = vmatprep.subr.mxu0 0.0
    %5236 = vmatpush2.msra.mxu0 0.0
    %5237 = vmatprep.subr.mxu0 0.0
    %5238 = vmatpush2.msra.mxu0 0.0
    %5239 = vmatprep.subr.mxu0 0.0
    %5240 = vmatpush2.msra.mxu0 0.0
    %5241 = vmatprep.subr.mxu0 0.0
    %5242 = vmatpush2.msra.mxu0 0.0
    %5243 = vmatprep.subr.mxu0 0.0
    %5244 = vmatpush2.msra.mxu0 0.0
    %5245 = vmatprep.subr.mxu0 0.0
    %5246 = vmatpush2.msra.mxu0 0.0
    %5247 = vmatprep.subr.mxu0 0.0
    %5248 = vmatpush2.msra.mxu0 0.0
    %5249 = vmatprep.subr.mxu0 0.0
    %5250 = vmatpush2.msra.mxu0 0.0
    %5251 = vmatprep.subr.mxu0 0.0
    %5252 = vmatpush2.msra.mxu0 0.0
    %5253 = vmatprep.mubr.f32.mxu0 0.0
    %5254 = vmatmul.mubr.f32.gmra.mxu0 %v3577
    %v5255 = vpop.f32.mrf.mxu0
    %v5256 = vadd.f32 0.0, %v5255
    %v5257 = vpop.f32.mrf.mxu0
    %5258 = vdwg.mxu0
    %5259 = vmatprep.subr.mxu0 0.0
    %5260 = vmatpush1.msra.mxu0 0.0
    %5261 = vmatprep.subr.mxu0 0.0
    %5262 = vmatpush1.msra.mxu0 0.0
    %5263 = vmatprep.subr.mxu0 0.0
    %5264 = vmatpush1.msra.mxu0 0.0
    %5265 = vmatprep.subr.mxu0 0.0
    %5266 = vmatpush1.msra.mxu0 0.0
    %5267 = vmatprep.subr.mxu0 0.0
    %5268 = vmatpush1.msra.mxu0 0.0
    %5269 = vmatprep.subr.mxu0 0.0
    %5270 = vmatpush1.msra.mxu0 0.0
    %5271 = vmatprep.subr.mxu0 0.0
    %5272 = vmatpush1.msra.mxu0 0.0
    %5273 = vmatprep.subr.mxu0 0.0
    %5274 = vmatpush1.msra.mxu0 0.0
    %5275 = vmatprep.subr.mxu0 0.0
    %5276 = vmatpush1.msra.mxu0 0.0
    %5277 = vmatprep.subr.mxu0 0.0
    %5278 = vmatpush1.msra.mxu0 0.0
    %5279 = vmatprep.subr.mxu0 0.0
    %5280 = vmatpush1.msra.mxu0 0.0
    %5281 = vmatprep.subr.mxu0 0.0
    %5282 = vmatpush1.msra.mxu0 0.0
    %5283 = vmatprep.subr.mxu0 0.0
    %5284 = vmatpush1.msra.mxu0 0.0
    %5285 = vmatprep.subr.mxu0 0.0
    %5286 = vmatpush1.msra.mxu0 0.0
    %5287 = vmatprep.subr.mxu0 0.0
    %5288 = vmatpush1.msra.mxu0 %v2358
    %5289 = vmatprep.subr.mxu0 0.0
    %5290 = vmatpush1.msra.mxu0 %v2353
    %5291 = vmatprep.subr.mxu0 0.0
    %5292 = vmatpush2.msra.mxu0 0.0
    %5293 = vmatprep.subr.mxu0 0.0
    %5294 = vmatpush2.msra.mxu0 0.0
    %5295 = vmatprep.subr.mxu0 0.0
    %5296 = vmatpush2.msra.mxu0 0.0
    %5297 = vmatprep.subr.mxu0 0.0
    %5298 = vmatpush2.msra.mxu0 0.0
    %5299 = vmatprep.subr.mxu0 0.0
    %5300 = vmatpush2.msra.mxu0 0.0
    %5301 = vmatprep.subr.mxu0 0.0
    %5302 = vmatpush2.msra.mxu0 0.0
    %5303 = vmatprep.subr.mxu0 0.0
    %5304 = vmatpush2.msra.mxu0 0.0
    %5305 = vmatprep.subr.mxu0 0.0
    %5306 = vmatpush2.msra.mxu0 0.0
    %5307 = vmatprep.subr.mxu0 0.0
    %5308 = vmatpush2.msra.mxu0 0.0
    %5309 = vmatprep.subr.mxu0 0.0
    %5310 = vmatpush2.msra.mxu0 0.0
    %5311 = vmatprep.subr.mxu0 0.0
    %5312 = vmatpush2.msra.mxu0 0.0
    %5313 = vmatprep.subr.mxu0 0.0
    %5314 = vmatpush2.msra.mxu0 0.0
    %5315 = vmatprep.subr.mxu0 0.0
    %5316 = vmatpush2.msra.mxu0 0.0
    %5317 = vmatprep.subr.mxu0 0.0
    %5318 = vmatpush2.msra.mxu0 0.0
    %5319 = vmatprep.subr.mxu0 0.0
    %5320 = vmatpush2.msra.mxu0 0.0
    %5321 = vmatprep.subr.mxu0 0.0
    %5322 = vmatpush2.msra.mxu0 0.0
    %5323 = vmatprep.mubr.f32.mxu0 0.0
    %5324 = vmatmul.mubr.f32.gmra.mxu0 %v3577
    %v5325 = vpop.f32.mrf.mxu0
    %v5326 = vadd.f32 0.0, %v5325
    %v5327 = vpop.f32.mrf.mxu0
    %5328 = vdwg.mxu0
    %5329 = vmatprep.subr.mxu0 0.0
    %5330 = vmatpush1.msra.mxu0 0.0
    %5331 = vmatprep.subr.mxu0 0.0
    %5332 = vmatpush1.msra.mxu0 0.0
    %5333 = vmatprep.subr.mxu0 0.0
    %5334 = vmatpush1.msra.mxu0 0.0
    %5335 = vmatprep.subr.mxu0 0.0
    %5336 = vmatpush1.msra.mxu0 0.0
    %5337 = vmatprep.subr.mxu0 0.0
    %5338 = vmatpush1.msra.mxu0 0.0
    %5339 = vmatprep.subr.mxu0 0.0
    %5340 = vmatpush1.msra.mxu0 0.0
    %5341 = vmatprep.subr.mxu0 0.0
    %5342 = vmatpush1.msra.mxu0 0.0
    %5343 = vmatprep.subr.mxu0 0.0
    %5344 = vmatpush1.msra.mxu0 0.0
    %5345 = vmatprep.subr.mxu0 0.0
    %5346 = vmatpush1.msra.mxu0 0.0
    %5347 = vmatprep.subr.mxu0 0.0
    %5348 = vmatpush1.msra.mxu0 0.0
    %5349 = vmatprep.subr.mxu0 0.0
    %5350 = vmatpush1.msra.mxu0 0.0
    %5351 = vmatprep.subr.mxu0 0.0
    %5352 = vmatpush1.msra.mxu0 0.0
    %5353 = vmatprep.subr.mxu0 0.0
    %5354 = vmatpush1.msra.mxu0 0.0
    %5355 = vmatprep.subr.mxu0 0.0
    %5356 = vmatpush1.msra.mxu0 0.0
    %5357 = vmatprep.subr.mxu0 0.0
    %5358 = vmatpush1.msra.mxu0 %v2439
    %5359 = vmatprep.subr.mxu0 0.0
    %5360 = vmatpush1.msra.mxu0 %v2434
    %5361 = vmatprep.subr.mxu0 0.0
    %5362 = vmatpush2.msra.mxu0 0.0
    %5363 = vmatprep.subr.mxu0 0.0
    %5364 = vmatpush2.msra.mxu0 0.0
    %5365 = vmatprep.subr.mxu0 0.0
    %5366 = vmatpush2.msra.mxu0 0.0
    %5367 = vmatprep.subr.mxu0 0.0
    %5368 = vmatpush2.msra.mxu0 0.0
    %5369 = vmatprep.subr.mxu0 0.0
    %5370 = vmatpush2.msra.mxu0 0.0
    %5371 = vmatprep.subr.mxu0 0.0
    %5372 = vmatpush2.msra.mxu0 0.0
    %5373 = vmatprep.subr.mxu0 0.0
    %5374 = vmatpush2.msra.mxu0 0.0
    %5375 = vmatprep.subr.mxu0 0.0
    %5376 = vmatpush2.msra.mxu0 0.0
    %5377 = vmatprep.subr.mxu0 0.0
    %5378 = vmatpush2.msra.mxu0 0.0
    %5379 = vmatprep.subr.mxu0 0.0
    %5380 = vmatpush2.msra.mxu0 0.0
    %5381 = vmatprep.subr.mxu0 0.0
    %5382 = vmatpush2.msra.mxu0 0.0
    %5383 = vmatprep.subr.mxu0 0.0
    %5384 = vmatpush2.msra.mxu0 0.0
    %5385 = vmatprep.subr.mxu0 0.0
    %5386 = vmatpush2.msra.mxu0 0.0
    %5387 = vmatprep.subr.mxu0 0.0
    %5388 = vmatpush2.msra.mxu0 0.0
    %5389 = vmatprep.subr.mxu0 0.0
    %5390 = vmatpush2.msra.mxu0 0.0
    %5391 = vmatprep.subr.mxu0 0.0
    %5392 = vmatpush2.msra.mxu0 0.0
    %5393 = vmatprep.mubr.f32.mxu0 0.0
    %5394 = vmatmul.mubr.f32.gmra.mxu0 %v3577
    %v5395 = vpop.f32.mrf.mxu0
    %v5396 = vadd.f32 0.0, %v5395
    %v5397 = vpop.f32.mrf.mxu0
    %5398 = vdwg.mxu0
    %5399 = vmatprep.subr.mxu0 0.0
    %5400 = vmatpush1.msra.mxu0 0.0
    %5401 = vmatprep.subr.mxu0 0.0
    %5402 = vmatpush1.msra.mxu0 0.0
    %5403 = vmatprep.subr.mxu0 0.0
    %5404 = vmatpush1.msra.mxu0 0.0
    %5405 = vmatprep.subr.mxu0 0.0
    %5406 = vmatpush1.msra.mxu0 0.0
    %5407 = vmatprep.subr.mxu0 0.0
    %5408 = vmatpush1.msra.mxu0 0.0
    %5409 = vmatprep.subr.mxu0 0.0
    %5410 = vmatpush1.msra.mxu0 0.0
    %5411 = vmatprep.subr.mxu0 0.0
    %5412 = vmatpush1.msra.mxu0 0.0
    %5413 = vmatprep.subr.mxu0 0.0
    %5414 = vmatpush1.msra.mxu0 0.0
    %5415 = vmatprep.subr.mxu0 0.0
    %5416 = vmatpush1.msra.mxu0 0.0
    %5417 = vmatprep.subr.mxu0 0.0
    %5418 = vmatpush1.msra.mxu0 0.0
    %5419 = vmatprep.subr.mxu0 0.0
    %5420 = vmatpush1.msra.mxu0 0.0
    %5421 = vmatprep.subr.mxu0 0.0
    %5422 = vmatpush1.msra.mxu0 0.0
    %5423 = vmatprep.subr.mxu0 0.0
    %5424 = vmatpush1.msra.mxu0 0.0
    %5425 = vmatprep.subr.mxu0 0.0
    %5426 = vmatpush1.msra.mxu0 0.0
    %5427 = vmatprep.subr.mxu0 0.0
    %5428 = vmatpush1.msra.mxu0 %v2520
    %5429 = vmatprep.subr.mxu0 0.0
    %5430 = vmatpush1.msra.mxu0 %v2515
    %5431 = vmatprep.subr.mxu0 0.0
    %5432 = vmatpush2.msra.mxu0 0.0
    %5433 = vmatprep.subr.mxu0 0.0
    %5434 = vmatpush2.msra.mxu0 0.0
    %5435 = vmatprep.subr.mxu0 0.0
    %5436 = vmatpush2.msra.mxu0 0.0
    %5437 = vmatprep.subr.mxu0 0.0
    %5438 = vmatpush2.msra.mxu0 0.0
    %5439 = vmatprep.subr.mxu0 0.0
    %5440 = vmatpush2.msra.mxu0 0.0
    %5441 = vmatprep.subr.mxu0 0.0
    %5442 = vmatpush2.msra.mxu0 0.0
    %5443 = vmatprep.subr.mxu0 0.0
    %5444 = vmatpush2.msra.mxu0 0.0
    %5445 = vmatprep.subr.mxu0 0.0
    %5446 = vmatpush2.msra.mxu0 0.0
    %5447 = vmatprep.subr.mxu0 0.0
    %5448 = vmatpush2.msra.mxu0 0.0
    %5449 = vmatprep.subr.mxu0 0.0
    %5450 = vmatpush2.msra.mxu0 0.0
    %5451 = vmatprep.subr.mxu0 0.0
    %5452 = vmatpush2.msra.mxu0 0.0
    %5453 = vmatprep.subr.mxu0 0.0
    %5454 = vmatpush2.msra.mxu0 0.0
    %5455 = vmatprep.subr.mxu0 0.0
    %5456 = vmatpush2.msra.mxu0 0.0
    %5457 = vmatprep.subr.mxu0 0.0
    %5458 = vmatpush2.msra.mxu0 0.0
    %5459 = vmatprep.subr.mxu0 0.0
    %5460 = vmatpush2.msra.mxu0 0.0
    %5461 = vmatprep.subr.mxu0 0.0
    %5462 = vmatpush2.msra.mxu0 0.0
    %5463 = vmatprep.mubr.f32.mxu0 0.0
    %5464 = vmatmul.mubr.f32.gmra.mxu0 %v3577
    %v5465 = vpop.f32.mrf.mxu0
    %v5466 = vadd.f32 0.0, %v5465
    %v5467 = vpop.f32.mrf.mxu0
    %5468 = vdwg.mxu0
    %5469 = vmatprep.subr.mxu0 0.0
    %5470 = vmatpush1.msra.mxu0 0.0
    %5471 = vmatprep.subr.mxu0 0.0
    %5472 = vmatpush1.msra.mxu0 0.0
    %5473 = vmatprep.subr.mxu0 0.0
    %5474 = vmatpush1.msra.mxu0 0.0
    %5475 = vmatprep.subr.mxu0 0.0
    %5476 = vmatpush1.msra.mxu0 0.0
    %5477 = vmatprep.subr.mxu0 0.0
    %5478 = vmatpush1.msra.mxu0 0.0
    %5479 = vmatprep.subr.mxu0 0.0
    %5480 = vmatpush1.msra.mxu0 0.0
    %5481 = vmatprep.subr.mxu0 0.0
    %5482 = vmatpush1.msra.mxu0 0.0
    %5483 = vmatprep.subr.mxu0 0.0
    %5484 = vmatpush1.msra.mxu0 0.0
    %5485 = vmatprep.subr.mxu0 0.0
    %5486 = vmatpush1.msra.mxu0 0.0
    %5487 = vmatprep.subr.mxu0 0.0
    %5488 = vmatpush1.msra.mxu0 0.0
    %5489 = vmatprep.subr.mxu0 0.0
    %5490 = vmatpush1.msra.mxu0 0.0
    %5491 = vmatprep.subr.mxu0 0.0
    %5492 = vmatpush1.msra.mxu0 0.0
    %5493 = vmatprep.subr.mxu0 0.0
    %5494 = vmatpush1.msra.mxu0 0.0
    %5495 = vmatprep.subr.mxu0 0.0
    %5496 = vmatpush1.msra.mxu0 0.0
    %5497 = vmatprep.subr.mxu0 0.0
    %5498 = vmatpush1.msra.mxu0 %v2601
    %5499 = vmatprep.subr.mxu0 0.0
    %5500 = vmatpush1.msra.mxu0 %v2596
    %5501 = vmatprep.subr.mxu0 0.0
    %5502 = vmatpush2.msra.mxu0 0.0
    %5503 = vmatprep.subr.mxu0 0.0
    %5504 = vmatpush2.msra.mxu0 0.0
    %5505 = vmatprep.subr.mxu0 0.0
    %5506 = vmatpush2.msra.mxu0 0.0
    %5507 = vmatprep.subr.mxu0 0.0
    %5508 = vmatpush2.msra.mxu0 0.0
    %5509 = vmatprep.subr.mxu0 0.0
    %5510 = vmatpush2.msra.mxu0 0.0
    %5511 = vmatprep.subr.mxu0 0.0
    %5512 = vmatpush2.msra.mxu0 0.0
    %5513 = vmatprep.subr.mxu0 0.0
    %5514 = vmatpush2.msra.mxu0 0.0
    %5515 = vmatprep.subr.mxu0 0.0
    %5516 = vmatpush2.msra.mxu0 0.0
    %5517 = vmatprep.subr.mxu0 0.0
    %5518 = vmatpush2.msra.mxu0 0.0
    %5519 = vmatprep.subr.mxu0 0.0
    %5520 = vmatpush2.msra.mxu0 0.0
    %5521 = vmatprep.subr.mxu0 0.0
    %5522 = vmatpush2.msra.mxu0 0.0
    %5523 = vmatprep.subr.mxu0 0.0
    %5524 = vmatpush2.msra.mxu0 0.0
    %5525 = vmatprep.subr.mxu0 0.0
    %5526 = vmatpush2.msra.mxu0 0.0
    %5527 = vmatprep.subr.mxu0 0.0
    %5528 = vmatpush2.msra.mxu0 0.0
    %5529 = vmatprep.subr.mxu0 0.0
    %5530 = vmatpush2.msra.mxu0 0.0
    %5531 = vmatprep.subr.mxu0 0.0
    %5532 = vmatpush2.msra.mxu0 0.0
    %5533 = vmatprep.mubr.f32.mxu0 0.0
    %5534 = vmatmul.mubr.f32.gmra.mxu0 %v3577
    %v5535 = vpop.f32.mrf.mxu0
    %v5536 = vadd.f32 0.0, %v5535
    %v5537 = vpop.f32.mrf.mxu0
    %5538 = vdwg.mxu0
    %5539 = vmatprep.subr.mxu0 0.0
    %5540 = vmatpush1.msra.mxu0 0.0
    %5541 = vmatprep.subr.mxu0 0.0
    %5542 = vmatpush1.msra.mxu0 0.0
    %5543 = vmatprep.subr.mxu0 0.0
    %5544 = vmatpush1.msra.mxu0 0.0
    %5545 = vmatprep.subr.mxu0 0.0
    %5546 = vmatpush1.msra.mxu0 0.0
    %5547 = vmatprep.subr.mxu0 0.0
    %5548 = vmatpush1.msra.mxu0 0.0
    %5549 = vmatprep.subr.mxu0 0.0
    %5550 = vmatpush1.msra.mxu0 0.0
    %5551 = vmatprep.subr.mxu0 0.0
    %5552 = vmatpush1.msra.mxu0 0.0
    %5553 = vmatprep.subr.mxu0 0.0
    %5554 = vmatpush1.msra.mxu0 0.0
    %5555 = vmatprep.subr.mxu0 0.0
    %5556 = vmatpush1.msra.mxu0 0.0
    %5557 = vmatprep.subr.mxu0 0.0
    %5558 = vmatpush1.msra.mxu0 0.0
    %5559 = vmatprep.subr.mxu0 0.0
    %5560 = vmatpush1.msra.mxu0 0.0
    %5561 = vmatprep.subr.mxu0 0.0
    %5562 = vmatpush1.msra.mxu0 0.0
    %5563 = vmatprep.subr.mxu0 0.0
    %5564 = vmatpush1.msra.mxu0 0.0
    %5565 = vmatprep.subr.mxu0 0.0
    %5566 = vmatpush1.msra.mxu0 0.0
    %5567 = vmatprep.subr.mxu0 0.0
    %5568 = vmatpush1.msra.mxu0 %v2682
    %5569 = vmatprep.subr.mxu0 0.0
    %5570 = vmatpush1.msra.mxu0 %v2677
    %5571 = vmatprep.subr.mxu0 0.0
    %5572 = vmatpush2.msra.mxu0 0.0
    %5573 = vmatprep.subr.mxu0 0.0
    %5574 = vmatpush2.msra.mxu0 0.0
    %5575 = vmatprep.subr.mxu0 0.0
    %5576 = vmatpush2.msra.mxu0 0.0
    %5577 = vmatprep.subr.mxu0 0.0
    %5578 = vmatpush2.msra.mxu0 0.0
    %5579 = vmatprep.subr.mxu0 0.0
    %5580 = vmatpush2.msra.mxu0 0.0
    %5581 = vmatprep.subr.mxu0 0.0
    %5582 = vmatpush2.msra.mxu0 0.0
    %5583 = vmatprep.subr.mxu0 0.0
    %5584 = vmatpush2.msra.mxu0 0.0
    %5585 = vmatprep.subr.mxu0 0.0
    %5586 = vmatpush2.msra.mxu0 0.0
    %5587 = vmatprep.subr.mxu0 0.0
    %5588 = vmatpush2.msra.mxu0 0.0
    %5589 = vmatprep.subr.mxu0 0.0
    %5590 = vmatpush2.msra.mxu0 0.0
    %5591 = vmatprep.subr.mxu0 0.0
    %5592 = vmatpush2.msra.mxu0 0.0
    %5593 = vmatprep.subr.mxu0 0.0
    %5594 = vmatpush2.msra.mxu0 0.0
    %5595 = vmatprep.subr.mxu0 0.0
    %5596 = vmatpush2.msra.mxu0 0.0
    %5597 = vmatprep.subr.mxu0 0.0
    %5598 = vmatpush2.msra.mxu0 0.0
    %5599 = vmatprep.subr.mxu0 0.0
    %5600 = vmatpush2.msra.mxu0 0.0
    %5601 = vmatprep.subr.mxu0 0.0
    %5602 = vmatpush2.msra.mxu0 0.0
    %5603 = vmatprep.mubr.f32.mxu0 0.0
    %5604 = vmatmul.mubr.f32.gmra.mxu0 %v3577
    %v5605 = vpop.f32.mrf.mxu0
    %v5606 = vadd.f32 0.0, %v5605
    %v5607 = vpop.f32.mrf.mxu0
    %5608 = vdwg.mxu0
    %5609 = vmatprep.subr.mxu0 0.0
    %5610 = vmatpush1.msra.mxu0 0.0
    %5611 = vmatprep.subr.mxu0 0.0
    %5612 = vmatpush1.msra.mxu0 0.0
    %5613 = vmatprep.subr.mxu0 0.0
    %5614 = vmatpush1.msra.mxu0 0.0
    %5615 = vmatprep.subr.mxu0 0.0
    %5616 = vmatpush1.msra.mxu0 0.0
    %5617 = vmatprep.subr.mxu0 0.0
    %5618 = vmatpush1.msra.mxu0 0.0
    %5619 = vmatprep.subr.mxu0 0.0
    %5620 = vmatpush1.msra.mxu0 0.0
    %5621 = vmatprep.subr.mxu0 0.0
    %5622 = vmatpush1.msra.mxu0 0.0
    %5623 = vmatprep.subr.mxu0 0.0
    %5624 = vmatpush1.msra.mxu0 0.0
    %5625 = vmatprep.subr.mxu0 0.0
    %5626 = vmatpush1.msra.mxu0 0.0
    %5627 = vmatprep.subr.mxu0 0.0
    %5628 = vmatpush1.msra.mxu0 0.0
    %5629 = vmatprep.subr.mxu0 0.0
    %5630 = vmatpush1.msra.mxu0 0.0
    %5631 = vmatprep.subr.mxu0 0.0
    %5632 = vmatpush1.msra.mxu0 0.0
    %5633 = vmatprep.subr.mxu0 0.0
    %5634 = vmatpush1.msra.mxu0 0.0
    %5635 = vmatprep.subr.mxu0 0.0
    %5636 = vmatpush1.msra.mxu0 0.0
    %5637 = vmatprep.subr.mxu0 0.0
    %5638 = vmatpush1.msra.mxu0 %v2763
    %5639 = vmatprep.subr.mxu0 0.0
    %5640 = vmatpush1.msra.mxu0 %v2758
    %5641 = vmatprep.subr.mxu0 0.0
    %5642 = vmatpush2.msra.mxu0 0.0
    %5643 = vmatprep.subr.mxu0 0.0
    %5644 = vmatpush2.msra.mxu0 0.0
    %5645 = vmatprep.subr.mxu0 0.0
    %5646 = vmatpush2.msra.mxu0 0.0
    %5647 = vmatprep.subr.mxu0 0.0
    %5648 = vmatpush2.msra.mxu0 0.0
    %5649 = vmatprep.subr.mxu0 0.0
    %5650 = vmatpush2.msra.mxu0 0.0
    %5651 = vmatprep.subr.mxu0 0.0
    %5652 = vmatpush2.msra.mxu0 0.0
    %5653 = vmatprep.subr.mxu0 0.0
    %5654 = vmatpush2.msra.mxu0 0.0
    %5655 = vmatprep.subr.mxu0 0.0
    %5656 = vmatpush2.msra.mxu0 0.0
    %5657 = vmatprep.subr.mxu0 0.0
    %5658 = vmatpush2.msra.mxu0 0.0
    %5659 = vmatprep.subr.mxu0 0.0
    %5660 = vmatpush2.msra.mxu0 0.0
    %5661 = vmatprep.subr.mxu0 0.0
    %5662 = vmatpush2.msra.mxu0 0.0
    %5663 = vmatprep.subr.mxu0 0.0
    %5664 = vmatpush2.msra.mxu0 0.0
    %5665 = vmatprep.subr.mxu0 0.0
    %5666 = vmatpush2.msra.mxu0 0.0
    %5667 = vmatprep.subr.mxu0 0.0
    %5668 = vmatpush2.msra.mxu0 0.0
    %5669 = vmatprep.subr.mxu0 0.0
    %5670 = vmatpush2.msra.mxu0 0.0
    %5671 = vmatprep.subr.mxu0 0.0
    %5672 = vmatpush2.msra.mxu0 0.0
    %5673 = vmatprep.mubr.f32.mxu0 0.0
    %5674 = vmatmul.mubr.f32.gmra.mxu0 %v3577
    %v5675 = vpop.f32.mrf.mxu0
    %v5676 = vadd.f32 0.0, %v5675
    %v5677 = vpop.f32.mrf.mxu0
    %5678 = vdwg.mxu0
    %5679 = vmatprep.subr.mxu0 0.0
    %5680 = vmatpush1.msra.mxu0 0.0
    %5681 = vmatprep.subr.mxu0 0.0
    %5682 = vmatpush1.msra.mxu0 0.0
    %5683 = vmatprep.subr.mxu0 0.0
    %5684 = vmatpush1.msra.mxu0 0.0
    %5685 = vmatprep.subr.mxu0 0.0
    %5686 = vmatpush1.msra.mxu0 0.0
    %5687 = vmatprep.subr.mxu0 0.0
    %5688 = vmatpush1.msra.mxu0 0.0
    %5689 = vmatprep.subr.mxu0 0.0
    %5690 = vmatpush1.msra.mxu0 0.0
    %5691 = vmatprep.subr.mxu0 0.0
    %5692 = vmatpush1.msra.mxu0 0.0
    %5693 = vmatprep.subr.mxu0 0.0
    %5694 = vmatpush1.msra.mxu0 0.0
    %5695 = vmatprep.subr.mxu0 0.0
    %5696 = vmatpush1.msra.mxu0 0.0
    %5697 = vmatprep.subr.mxu0 0.0
    %5698 = vmatpush1.msra.mxu0 0.0
    %5699 = vmatprep.subr.mxu0 0.0
    %5700 = vmatpush1.msra.mxu0 0.0
    %5701 = vmatprep.subr.mxu0 0.0
    %5702 = vmatpush1.msra.mxu0 0.0
    %5703 = vmatprep.subr.mxu0 0.0
    %5704 = vmatpush1.msra.mxu0 0.0
    %5705 = vmatprep.subr.mxu0 0.0
    %5706 = vmatpush1.msra.mxu0 0.0
    %5707 = vmatprep.subr.mxu0 0.0
    %5708 = vmatpush1.msra.mxu0 %v2844
    %5709 = vmatprep.subr.mxu0 0.0
    %5710 = vmatpush1.msra.mxu0 %v2839
    %5711 = vmatprep.subr.mxu0 0.0
    %5712 = vmatpush2.msra.mxu0 0.0
    %5713 = vmatprep.subr.mxu0 0.0
    %5714 = vmatpush2.msra.mxu0 0.0
    %5715 = vmatprep.subr.mxu0 0.0
    %5716 = vmatpush2.msra.mxu0 0.0
    %5717 = vmatprep.subr.mxu0 0.0
    %5718 = vmatpush2.msra.mxu0 0.0
    %5719 = vmatprep.subr.mxu0 0.0
    %5720 = vmatpush2.msra.mxu0 0.0
    %5721 = vmatprep.subr.mxu0 0.0
    %5722 = vmatpush2.msra.mxu0 0.0
    %5723 = vmatprep.subr.mxu0 0.0
    %5724 = vmatpush2.msra.mxu0 0.0
    %5725 = vmatprep.subr.mxu0 0.0
    %5726 = vmatpush2.msra.mxu0 0.0
    %5727 = vmatprep.subr.mxu0 0.0
    %5728 = vmatpush2.msra.mxu0 0.0
    %5729 = vmatprep.subr.mxu0 0.0
    %5730 = vmatpush2.msra.mxu0 0.0
    %5731 = vmatprep.subr.mxu0 0.0
    %5732 = vmatpush2.msra.mxu0 0.0
    %5733 = vmatprep.subr.mxu0 0.0
    %5734 = vmatpush2.msra.mxu0 0.0
    %5735 = vmatprep.subr.mxu0 0.0
    %5736 = vmatpush2.msra.mxu0 0.0
    %5737 = vmatprep.subr.mxu0 0.0
    %5738 = vmatpush2.msra.mxu0 0.0
    %5739 = vmatprep.subr.mxu0 0.0
    %5740 = vmatpush2.msra.mxu0 0.0
    %5741 = vmatprep.subr.mxu0 0.0
    %5742 = vmatpush2.msra.mxu0 0.0
    %5743 = vmatprep.mubr.f32.mxu0 0.0
    %5744 = vmatmul.mubr.f32.gmra.mxu0 %v3577
    %v5745 = vpop.f32.mrf.mxu0
    %v5746 = vadd.f32 0.0, %v5745
    %v5747 = vpop.f32.mrf.mxu0
    %5748 = vdwg.mxu0
    %5749 = vmatprep.subr.mxu0 0.0
    %5750 = vmatpush1.msra.mxu0 0.0
    %5751 = vmatprep.subr.mxu0 0.0
    %5752 = vmatpush1.msra.mxu0 0.0
    %5753 = vmatprep.subr.mxu0 0.0
    %5754 = vmatpush1.msra.mxu0 0.0
    %5755 = vmatprep.subr.mxu0 0.0
    %5756 = vmatpush1.msra.mxu0 0.0
    %5757 = vmatprep.subr.mxu0 0.0
    %5758 = vmatpush1.msra.mxu0 0.0
    %5759 = vmatprep.subr.mxu0 0.0
    %5760 = vmatpush1.msra.mxu0 0.0
    %5761 = vmatprep.subr.mxu0 0.0
    %5762 = vmatpush1.msra.mxu0 0.0
    %5763 = vmatprep.subr.mxu0 0.0
    %5764 = vmatpush1.msra.mxu0 0.0
    %5765 = vmatprep.subr.mxu0 0.0
    %5766 = vmatpush1.msra.mxu0 0.0
    %5767 = vmatprep.subr.mxu0 0.0
    %5768 = vmatpush1.msra.mxu0 0.0
    %5769 = vmatprep.subr.mxu0 0.0
    %5770 = vmatpush1.msra.mxu0 0.0
    %5771 = vmatprep.subr.mxu0 0.0
    %5772 = vmatpush1.msra.mxu0 0.0
    %5773 = vmatprep.subr.mxu0 0.0
    %5774 = vmatpush1.msra.mxu0 0.0
    %5775 = vmatprep.subr.mxu0 0.0
    %5776 = vmatpush1.msra.mxu0 0.0
    %5777 = vmatprep.subr.mxu0 0.0
    %5778 = vmatpush1.msra.mxu0 %v2925
    %5779 = vmatprep.subr.mxu0 0.0
    %5780 = vmatpush1.msra.mxu0 %v2920
    %5781 = vmatprep.subr.mxu0 0.0
    %5782 = vmatpush2.msra.mxu0 0.0
    %5783 = vmatprep.subr.mxu0 0.0
    %5784 = vmatpush2.msra.mxu0 0.0
    %5785 = vmatprep.subr.mxu0 0.0
    %5786 = vmatpush2.msra.mxu0 0.0
    %5787 = vmatprep.subr.mxu0 0.0
    %5788 = vmatpush2.msra.mxu0 0.0
    %5789 = vmatprep.subr.mxu0 0.0
    %5790 = vmatpush2.msra.mxu0 0.0
    %5791 = vmatprep.subr.mxu0 0.0
    %5792 = vmatpush2.msra.mxu0 0.0
    %5793 = vmatprep.subr.mxu0 0.0
    %5794 = vmatpush2.msra.mxu0 0.0
    %5795 = vmatprep.subr.mxu0 0.0
    %5796 = vmatpush2.msra.mxu0 0.0
    %5797 = vmatprep.subr.mxu0 0.0
    %5798 = vmatpush2.msra.mxu0 0.0
    %5799 = vmatprep.subr.mxu0 0.0
    %5800 = vmatpush2.msra.mxu0 0.0
    %5801 = vmatprep.subr.mxu0 0.0
    %5802 = vmatpush2.msra.mxu0 0.0
    %5803 = vmatprep.subr.mxu0 0.0
    %5804 = vmatpush2.msra.mxu0 0.0
    %5805 = vmatprep.subr.mxu0 0.0
    %5806 = vmatpush2.msra.mxu0 0.0
    %5807 = vmatprep.subr.mxu0 0.0
    %5808 = vmatpush2.msra.mxu0 0.0
    %5809 = vmatprep.subr.mxu0 0.0
    %5810 = vmatpush2.msra.mxu0 0.0
    %5811 = vmatprep.subr.mxu0 0.0
    %5812 = vmatpush2.msra.mxu0 0.0
    %5813 = vmatprep.mubr.f32.mxu0 0.0
    %5814 = vmatmul.mubr.f32.gmra.mxu0 %v3577
    %v5815 = vpop.f32.mrf.mxu0
    %v5816 = vadd.f32 0.0, %v5815
    %v5817 = vpop.f32.mrf.mxu0
    %5818 = vdwg.mxu0
    %5819 = vmatprep.subr.mxu0 0.0
    %5820 = vmatpush1.msra.mxu0 0.0
    %5821 = vmatprep.subr.mxu0 0.0
    %5822 = vmatpush1.msra.mxu0 0.0
    %5823 = vmatprep.subr.mxu0 0.0
    %5824 = vmatpush1.msra.mxu0 0.0
    %5825 = vmatprep.subr.mxu0 0.0
    %5826 = vmatpush1.msra.mxu0 0.0
    %5827 = vmatprep.subr.mxu0 0.0
    %5828 = vmatpush1.msra.mxu0 0.0
    %5829 = vmatprep.subr.mxu0 0.0
    %5830 = vmatpush1.msra.mxu0 0.0
    %5831 = vmatprep.subr.mxu0 0.0
    %5832 = vmatpush1.msra.mxu0 0.0
    %5833 = vmatprep.subr.mxu0 0.0
    %5834 = vmatpush1.msra.mxu0 0.0
    %5835 = vmatprep.subr.mxu0 0.0
    %5836 = vmatpush1.msra.mxu0 0.0
    %5837 = vmatprep.subr.mxu0 0.0
    %5838 = vmatpush1.msra.mxu0 0.0
    %5839 = vmatprep.subr.mxu0 0.0
    %5840 = vmatpush1.msra.mxu0 0.0
    %5841 = vmatprep.subr.mxu0 0.0
    %5842 = vmatpush1.msra.mxu0 0.0
    %5843 = vmatprep.subr.mxu0 0.0
    %5844 = vmatpush1.msra.mxu0 0.0
    %5845 = vmatprep.subr.mxu0 0.0
    %5846 = vmatpush1.msra.mxu0 0.0
    %5847 = vmatprep.subr.mxu0 0.0
    %5848 = vmatpush1.msra.mxu0 %v3006
    %5849 = vmatprep.subr.mxu0 0.0
    %5850 = vmatpush1.msra.mxu0 %v3001
    %5851 = vmatprep.subr.mxu0 0.0
    %5852 = vmatpush2.msra.mxu0 0.0
    %5853 = vmatprep.subr.mxu0 0.0
    %5854 = vmatpush2.msra.mxu0 0.0
    %5855 = vmatprep.subr.mxu0 0.0
    %5856 = vmatpush2.msra.mxu0 0.0
    %5857 = vmatprep.subr.mxu0 0.0
    %5858 = vmatpush2.msra.mxu0 0.0
    %5859 = vmatprep.subr.mxu0 0.0
    %5860 = vmatpush2.msra.mxu0 0.0
    %5861 = vmatprep.subr.mxu0 0.0
    %5862 = vmatpush2.msra.mxu0 0.0
    %5863 = vmatprep.subr.mxu0 0.0
    %5864 = vmatpush2.msra.mxu0 0.0
    %5865 = vmatprep.subr.mxu0 0.0
    %5866 = vmatpush2.msra.mxu0 0.0
    %5867 = vmatprep.subr.mxu0 0.0
    %5868 = vmatpush2.msra.mxu0 0.0
    %5869 = vmatprep.subr.mxu0 0.0
    %5870 = vmatpush2.msra.mxu0 0.0
    %5871 = vmatprep.subr.mxu0 0.0
    %5872 = vmatpush2.msra.mxu0 0.0
    %5873 = vmatprep.subr.mxu0 0.0
    %5874 = vmatpush2.msra.mxu0 0.0
    %5875 = vmatprep.subr.mxu0 0.0
    %5876 = vmatpush2.msra.mxu0 0.0
    %5877 = vmatprep.subr.mxu0 0.0
    %5878 = vmatpush2.msra.mxu0 0.0
    %5879 = vmatprep.subr.mxu0 0.0
    %5880 = vmatpush2.msra.mxu0 0.0
    %5881 = vmatprep.subr.mxu0 0.0
    %5882 = vmatpush2.msra.mxu0 0.0
    %5883 = vmatprep.mubr.f32.mxu0 0.0
    %5884 = vmatmul.mubr.f32.gmra.mxu0 %v3577
    %v5885 = vpop.f32.mrf.mxu0
    %v5886 = vadd.f32 0.0, %v5885
    %v5887 = vpop.f32.mrf.mxu0
    %5888 = vdwg.mxu0
    %5889 = vmatprep.subr.mxu0 0.0
    %5890 = vmatpush1.msra.mxu0 0.0
    %5891 = vmatprep.subr.mxu0 0.0
    %5892 = vmatpush1.msra.mxu0 0.0
    %5893 = vmatprep.subr.mxu0 0.0
    %5894 = vmatpush1.msra.mxu0 0.0
    %5895 = vmatprep.subr.mxu0 0.0
    %5896 = vmatpush1.msra.mxu0 0.0
    %5897 = vmatprep.subr.mxu0 0.0
    %5898 = vmatpush1.msra.mxu0 0.0
    %5899 = vmatprep.subr.mxu0 0.0
    %5900 = vmatpush1.msra.mxu0 0.0
    %5901 = vmatprep.subr.mxu0 0.0
    %5902 = vmatpush1.msra.mxu0 0.0
    %5903 = vmatprep.subr.mxu0 0.0
    %5904 = vmatpush1.msra.mxu0 0.0
    %5905 = vmatprep.subr.mxu0 0.0
    %5906 = vmatpush1.msra.mxu0 0.0
    %5907 = vmatprep.subr.mxu0 0.0
    %5908 = vmatpush1.msra.mxu0 0.0
    %5909 = vmatprep.subr.mxu0 0.0
    %5910 = vmatpush1.msra.mxu0 0.0
    %5911 = vmatprep.subr.mxu0 0.0
    %5912 = vmatpush1.msra.mxu0 0.0
    %5913 = vmatprep.subr.mxu0 0.0
    %5914 = vmatpush1.msra.mxu0 0.0
    %5915 = vmatprep.subr.mxu0 0.0
    %5916 = vmatpush1.msra.mxu0 0.0
    %5917 = vmatprep.subr.mxu0 0.0
    %5918 = vmatpush1.msra.mxu0 %v3087
    %5919 = vmatprep.subr.mxu0 0.0
    %5920 = vmatpush1.msra.mxu0 %v3082
    %5921 = vmatprep.subr.mxu0 0.0
    %5922 = vmatpush2.msra.mxu0 0.0
    %5923 = vmatprep.subr.mxu0 0.0
    %5924 = vmatpush2.msra.mxu0 0.0
    %5925 = vmatprep.subr.mxu0 0.0
    %5926 = vmatpush2.msra.mxu0 0.0
    %5927 = vmatprep.subr.mxu0 0.0
    %5928 = vmatpush2.msra.mxu0 0.0
    %5929 = vmatprep.subr.mxu0 0.0
    %5930 = vmatpush2.msra.mxu0 0.0
    %5931 = vmatprep.subr.mxu0 0.0
    %5932 = vmatpush2.msra.mxu0 0.0
    %5933 = vmatprep.subr.mxu0 0.0
    %5934 = vmatpush2.msra.mxu0 0.0
    %5935 = vmatprep.subr.mxu0 0.0
    %5936 = vmatpush2.msra.mxu0 0.0
    %5937 = vmatprep.subr.mxu0 0.0
    %5938 = vmatpush2.msra.mxu0 0.0
    %5939 = vmatprep.subr.mxu0 0.0
    %5940 = vmatpush2.msra.mxu0 0.0
    %5941 = vmatprep.subr.mxu0 0.0
    %5942 = vmatpush2.msra.mxu0 0.0
    %5943 = vmatprep.subr.mxu0 0.0
    %5944 = vmatpush2.msra.mxu0 0.0
    %5945 = vmatprep.subr.mxu0 0.0
    %5946 = vmatpush2.msra.mxu0 0.0
    %5947 = vmatprep.subr.mxu0 0.0
    %5948 = vmatpush2.msra.mxu0 0.0
    %5949 = vmatprep.subr.mxu0 0.0
    %5950 = vmatpush2.msra.mxu0 0.0
    %5951 = vmatprep.subr.mxu0 0.0
    %5952 = vmatpush2.msra.mxu0 0.0
    %5953 = vmatprep.mubr.f32.mxu0 0.0
    %5954 = vmatmul.mubr.f32.gmra.mxu0 %v3577
    %v5955 = vpop.f32.mrf.mxu0
    %v5956 = vadd.f32 0.0, %v5955
    %v5957 = vpop.f32.mrf.mxu0
    %5958 = vdwg.mxu0
    %5959 = vmatprep.subr.mxu0 0.0
    %5960 = vmatpush1.msra.mxu0 0.0
    %5961 = vmatprep.subr.mxu0 0.0
    %5962 = vmatpush1.msra.mxu0 0.0
    %5963 = vmatprep.subr.mxu0 0.0
    %5964 = vmatpush1.msra.mxu0 0.0
    %5965 = vmatprep.subr.mxu0 0.0
    %5966 = vmatpush1.msra.mxu0 0.0
    %5967 = vmatprep.subr.mxu0 0.0
    %5968 = vmatpush1.msra.mxu0 0.0
    %5969 = vmatprep.subr.mxu0 0.0
    %5970 = vmatpush1.msra.mxu0 0.0
    %5971 = vmatprep.subr.mxu0 0.0
    %5972 = vmatpush1.msra.mxu0 0.0
    %5973 = vmatprep.subr.mxu0 0.0
    %5974 = vmatpush1.msra.mxu0 0.0
    %5975 = vmatprep.subr.mxu0 0.0
    %5976 = vmatpush1.msra.mxu0 0.0
    %5977 = vmatprep.subr.mxu0 0.0
    %5978 = vmatpush1.msra.mxu0 0.0
    %5979 = vmatprep.subr.mxu0 0.0
    %5980 = vmatpush1.msra.mxu0 0.0
    %5981 = vmatprep.subr.mxu0 0.0
    %5982 = vmatpush1.msra.mxu0 0.0
    %5983 = vmatprep.subr.mxu0 0.0
    %5984 = vmatpush1.msra.mxu0 0.0
    %5985 = vmatprep.subr.mxu0 0.0
    %5986 = vmatpush1.msra.mxu0 0.0
    %5987 = vmatprep.subr.mxu0 0.0
    %5988 = vmatpush1.msra.mxu0 %v3168
    %5989 = vmatprep.subr.mxu0 0.0
    %5990 = vmatpush1.msra.mxu0 %v3163
    %5991 = vmatprep.subr.mxu0 0.0
    %5992 = vmatpush2.msra.mxu0 0.0
    %5993 = vmatprep.subr.mxu0 0.0
    %5994 = vmatpush2.msra.mxu0 0.0
    %5995 = vmatprep.subr.mxu0 0.0
    %5996 = vmatpush2.msra.mxu0 0.0
    %5997 = vmatprep.subr.mxu0 0.0
    %5998 = vmatpush2.msra.mxu0 0.0
    %5999 = vmatprep.subr.mxu0 0.0
    %6000 = vmatpush2.msra.mxu0 0.0
    %6001 = vmatprep.subr.mxu0 0.0
    %6002 = vmatpush2.msra.mxu0 0.0
    %6003 = vmatprep.subr.mxu0 0.0
    %6004 = vmatpush2.msra.mxu0 0.0
    %6005 = vmatprep.subr.mxu0 0.0
    %6006 = vmatpush2.msra.mxu0 0.0
    %6007 = vmatprep.subr.mxu0 0.0
    %6008 = vmatpush2.msra.mxu0 0.0
    %6009 = vmatprep.subr.mxu0 0.0
    %6010 = vmatpush2.msra.mxu0 0.0
    %6011 = vmatprep.subr.mxu0 0.0
    %6012 = vmatpush2.msra.mxu0 0.0
    %6013 = vmatprep.subr.mxu0 0.0
    %6014 = vmatpush2.msra.mxu0 0.0
    %6015 = vmatprep.subr.mxu0 0.0
    %6016 = vmatpush2.msra.mxu0 0.0
    %6017 = vmatprep.subr.mxu0 0.0
    %6018 = vmatpush2.msra.mxu0 0.0
    %6019 = vmatprep.subr.mxu0 0.0
    %6020 = vmatpush2.msra.mxu0 0.0
    %6021 = vmatprep.subr.mxu0 0.0
    %6022 = vmatpush2.msra.mxu0 0.0
    %6023 = vmatprep.mubr.f32.mxu0 0.0
    %6024 = vmatmul.mubr.f32.gmra.mxu0 %v3577
    %v6025 = vpop.f32.mrf.mxu0
    %v6026 = vadd.f32 0.0, %v6025
    %v6027 = vpop.f32.mrf.mxu0
    %6028 = vdwg.mxu0
    %6029 = vmatprep.subr.mxu0 0.0
    %6030 = vmatpush1.msra.mxu0 0.0
    %6031 = vmatprep.subr.mxu0 0.0
    %6032 = vmatpush1.msra.mxu0 0.0
    %6033 = vmatprep.subr.mxu0 0.0
    %6034 = vmatpush1.msra.mxu0 0.0
    %6035 = vmatprep.subr.mxu0 0.0
    %6036 = vmatpush1.msra.mxu0 0.0
    %6037 = vmatprep.subr.mxu0 0.0
    %6038 = vmatpush1.msra.mxu0 0.0
    %6039 = vmatprep.subr.mxu0 0.0
    %6040 = vmatpush1.msra.mxu0 0.0
    %6041 = vmatprep.subr.mxu0 0.0
    %6042 = vmatpush1.msra.mxu0 0.0
    %6043 = vmatprep.subr.mxu0 0.0
    %6044 = vmatpush1.msra.mxu0 0.0
    %6045 = vmatprep.subr.mxu0 0.0
    %6046 = vmatpush1.msra.mxu0 0.0
    %6047 = vmatprep.subr.mxu0 0.0
    %6048 = vmatpush1.msra.mxu0 0.0
    %6049 = vmatprep.subr.mxu0 0.0
    %6050 = vmatpush1.msra.mxu0 0.0
    %6051 = vmatprep.subr.mxu0 0.0
    %6052 = vmatpush1.msra.mxu0 0.0
    %6053 = vmatprep.subr.mxu0 0.0
    %6054 = vmatpush1.msra.mxu0 0.0
    %6055 = vmatprep.subr.mxu0 0.0
    %6056 = vmatpush1.msra.mxu0 0.0
    %6057 = vmatprep.subr.mxu0 0.0
    %6058 = vmatpush1.msra.mxu0 %v3249
    %6059 = vmatprep.subr.mxu0 0.0
    %6060 = vmatpush1.msra.mxu0 %v3244
    %6061 = vmatprep.subr.mxu0 0.0
    %6062 = vmatpush2.msra.mxu0 0.0
    %6063 = vmatprep.subr.mxu0 0.0
    %6064 = vmatpush2.msra.mxu0 0.0
    %6065 = vmatprep.subr.mxu0 0.0
    %6066 = vmatpush2.msra.mxu0 0.0
    %6067 = vmatprep.subr.mxu0 0.0
    %6068 = vmatpush2.msra.mxu0 0.0
    %6069 = vmatprep.subr.mxu0 0.0
    %6070 = vmatpush2.msra.mxu0 0.0
    %6071 = vmatprep.subr.mxu0 0.0
    %6072 = vmatpush2.msra.mxu0 0.0
    %6073 = vmatprep.subr.mxu0 0.0
    %6074 = vmatpush2.msra.mxu0 0.0
    %6075 = vmatprep.subr.mxu0 0.0
    %6076 = vmatpush2.msra.mxu0 0.0
    %6077 = vmatprep.subr.mxu0 0.0
    %6078 = vmatpush2.msra.mxu0 0.0
    %6079 = vmatprep.subr.mxu0 0.0
    %6080 = vmatpush2.msra.mxu0 0.0
    %6081 = vmatprep.subr.mxu0 0.0
    %6082 = vmatpush2.msra.mxu0 0.0
    %6083 = vmatprep.subr.mxu0 0.0
    %6084 = vmatpush2.msra.mxu0 0.0
    %6085 = vmatprep.subr.mxu0 0.0
    %6086 = vmatpush2.msra.mxu0 0.0
    %6087 = vmatprep.subr.mxu0 0.0
    %6088 = vmatpush2.msra.mxu0 0.0
    %6089 = vmatprep.subr.mxu0 0.0
    %6090 = vmatpush2.msra.mxu0 0.0
    %6091 = vmatprep.subr.mxu0 0.0
    %6092 = vmatpush2.msra.mxu0 0.0
    %6093 = vmatprep.mubr.f32.mxu0 0.0
    %6094 = vmatmul.mubr.f32.gmra.mxu0 %v3577
    %v6095 = vpop.f32.mrf.mxu0
    %v6096 = vadd.f32 0.0, %v6095
    %v6097 = vpop.f32.mrf.mxu0
    %6098 = vdwg.mxu0
    %6099 = vmatprep.subr.mxu0 0.0
    %6100 = vmatpush1.msra.mxu0 0.0
    %6101 = vmatprep.subr.mxu0 0.0
    %6102 = vmatpush1.msra.mxu0 0.0
    %6103 = vmatprep.subr.mxu0 0.0
    %6104 = vmatpush1.msra.mxu0 0.0
    %6105 = vmatprep.subr.mxu0 0.0
    %6106 = vmatpush1.msra.mxu0 0.0
    %6107 = vmatprep.subr.mxu0 0.0
    %6108 = vmatpush1.msra.mxu0 0.0
    %6109 = vmatprep.subr.mxu0 0.0
    %6110 = vmatpush1.msra.mxu0 0.0
    %6111 = vmatprep.subr.mxu0 0.0
    %6112 = vmatpush1.msra.mxu0 0.0
    %6113 = vmatprep.subr.mxu0 0.0
    %6114 = vmatpush1.msra.mxu0 0.0
    %6115 = vmatprep.subr.mxu0 0.0
    %6116 = vmatpush1.msra.mxu0 0.0
    %6117 = vmatprep.subr.mxu0 0.0
    %6118 = vmatpush1.msra.mxu0 0.0
    %6119 = vmatprep.subr.mxu0 0.0
    %6120 = vmatpush1.msra.mxu0 0.0
    %6121 = vmatprep.subr.mxu0 0.0
    %6122 = vmatpush1.msra.mxu0 0.0
    %6123 = vmatprep.subr.mxu0 0.0
    %6124 = vmatpush1.msra.mxu0 0.0
    %6125 = vmatprep.subr.mxu0 0.0
    %6126 = vmatpush1.msra.mxu0 0.0
    %6127 = vmatprep.subr.mxu0 0.0
    %6128 = vmatpush1.msra.mxu0 %v3330
    %6129 = vmatprep.subr.mxu0 0.0
    %6130 = vmatpush1.msra.mxu0 %v3325
    %6131 = vmatprep.subr.mxu0 0.0
    %6132 = vmatpush2.msra.mxu0 0.0
    %6133 = vmatprep.subr.mxu0 0.0
    %6134 = vmatpush2.msra.mxu0 0.0
    %6135 = vmatprep.subr.mxu0 0.0
    %6136 = vmatpush2.msra.mxu0 0.0
    %6137 = vmatprep.subr.mxu0 0.0
    %6138 = vmatpush2.msra.mxu0 0.0
    %6139 = vmatprep.subr.mxu0 0.0
    %6140 = vmatpush2.msra.mxu0 0.0
    %6141 = vmatprep.subr.mxu0 0.0
    %6142 = vmatpush2.msra.mxu0 0.0
    %6143 = vmatprep.subr.mxu0 0.0
    %6144 = vmatpush2.msra.mxu0 0.0
    %6145 = vmatprep.subr.mxu0 0.0
    %6146 = vmatpush2.msra.mxu0 0.0
    %6147 = vmatprep.subr.mxu0 0.0
    %6148 = vmatpush2.msra.mxu0 0.0
    %6149 = vmatprep.subr.mxu0 0.0
    %6150 = vmatpush2.msra.mxu0 0.0
    %6151 = vmatprep.subr.mxu0 0.0
    %6152 = vmatpush2.msra.mxu0 0.0
    %6153 = vmatprep.subr.mxu0 0.0
    %6154 = vmatpush2.msra.mxu0 0.0
    %6155 = vmatprep.subr.mxu0 0.0
    %6156 = vmatpush2.msra.mxu0 0.0
    %6157 = vmatprep.subr.mxu0 0.0
    %6158 = vmatpush2.msra.mxu0 0.0
    %6159 = vmatprep.subr.mxu0 0.0
    %6160 = vmatpush2.msra.mxu0 0.0
    %6161 = vmatprep.subr.mxu0 0.0
    %6162 = vmatpush2.msra.mxu0 0.0
    %6163 = vmatprep.mubr.f32.mxu0 0.0
    %6164 = vmatmul.mubr.f32.gmra.mxu0 %v3577
    %v6165 = vpop.f32.mrf.mxu0
    %v6166 = vadd.f32 0.0, %v6165
    %v6167 = vpop.f32.mrf.mxu0
    %6168 = vdwg.mxu0
    %6169 = vmatprep.subr.mxu0 0.0
    %6170 = vmatpush1.msra.mxu0 0.0
    %6171 = vmatprep.subr.mxu0 0.0
    %6172 = vmatpush1.msra.mxu0 0.0
    %6173 = vmatprep.subr.mxu0 0.0
    %6174 = vmatpush1.msra.mxu0 0.0
    %6175 = vmatprep.subr.mxu0 0.0
    %6176 = vmatpush1.msra.mxu0 0.0
    %6177 = vmatprep.subr.mxu0 0.0
    %6178 = vmatpush1.msra.mxu0 0.0
    %6179 = vmatprep.subr.mxu0 0.0
    %6180 = vmatpush1.msra.mxu0 0.0
    %6181 = vmatprep.subr.mxu0 0.0
    %6182 = vmatpush1.msra.mxu0 0.0
    %6183 = vmatprep.subr.mxu0 0.0
    %6184 = vmatpush1.msra.mxu0 0.0
    %6185 = vmatprep.subr.mxu0 0.0
    %6186 = vmatpush1.msra.mxu0 0.0
    %6187 = vmatprep.subr.mxu0 0.0
    %6188 = vmatpush1.msra.mxu0 0.0
    %6189 = vmatprep.subr.mxu0 0.0
    %6190 = vmatpush1.msra.mxu0 0.0
    %6191 = vmatprep.subr.mxu0 0.0
    %6192 = vmatpush1.msra.mxu0 0.0
    %6193 = vmatprep.subr.mxu0 0.0
    %6194 = vmatpush1.msra.mxu0 0.0
    %6195 = vmatprep.subr.mxu0 0.0
    %6196 = vmatpush1.msra.mxu0 0.0
    %6197 = vmatprep.subr.mxu0 0.0
    %6198 = vmatpush1.msra.mxu0 %v3411
    %6199 = vmatprep.subr.mxu0 0.0
    %6200 = vmatpush1.msra.mxu0 %v3406
    %6201 = vmatprep.subr.mxu0 0.0
    %6202 = vmatpush2.msra.mxu0 0.0
    %6203 = vmatprep.subr.mxu0 0.0
    %6204 = vmatpush2.msra.mxu0 0.0
    %6205 = vmatprep.subr.mxu0 0.0
    %6206 = vmatpush2.msra.mxu0 0.0
    %6207 = vmatprep.subr.mxu0 0.0
    %6208 = vmatpush2.msra.mxu0 0.0
    %6209 = vmatprep.subr.mxu0 0.0
    %6210 = vmatpush2.msra.mxu0 0.0
    %6211 = vmatprep.subr.mxu0 0.0
    %6212 = vmatpush2.msra.mxu0 0.0
    %6213 = vmatprep.subr.mxu0 0.0
    %6214 = vmatpush2.msra.mxu0 0.0
    %6215 = vmatprep.subr.mxu0 0.0
    %6216 = vmatpush2.msra.mxu0 0.0
    %6217 = vmatprep.subr.mxu0 0.0
    %6218 = vmatpush2.msra.mxu0 0.0
    %6219 = vmatprep.subr.mxu0 0.0
    %6220 = vmatpush2.msra.mxu0 0.0
    %6221 = vmatprep.subr.mxu0 0.0
    %6222 = vmatpush2.msra.mxu0 0.0
    %6223 = vmatprep.subr.mxu0 0.0
    %6224 = vmatpush2.msra.mxu0 0.0
    %6225 = vmatprep.subr.mxu0 0.0
    %6226 = vmatpush2.msra.mxu0 0.0
    %6227 = vmatprep.subr.mxu0 0.0
    %6228 = vmatpush2.msra.mxu0 0.0
    %6229 = vmatprep.subr.mxu0 0.0
    %6230 = vmatpush2.msra.mxu0 0.0
    %6231 = vmatprep.subr.mxu0 0.0
    %6232 = vmatpush2.msra.mxu0 0.0
    %6233 = vmatprep.mubr.f32.mxu0 0.0
    %6234 = vmatmul.mubr.f32.gmra.mxu0 %v3577
    %v6235 = vpop.f32.mrf.mxu0
    %v6236 = vadd.f32 0.0, %v6235
    %v6237 = vpop.f32.mrf.mxu0
    %6238 = vdwg.mxu0
    %6239 = vmatprep.subr.mxu0 0.0
    %6240 = vmatpush1.msra.mxu0 0.0
    %6241 = vmatprep.subr.mxu0 0.0
    %6242 = vmatpush1.msra.mxu0 0.0
    %6243 = vmatprep.subr.mxu0 0.0
    %6244 = vmatpush1.msra.mxu0 0.0
    %6245 = vmatprep.subr.mxu0 0.0
    %6246 = vmatpush1.msra.mxu0 0.0
    %6247 = vmatprep.subr.mxu0 0.0
    %6248 = vmatpush1.msra.mxu0 0.0
    %6249 = vmatprep.subr.mxu0 0.0
    %6250 = vmatpush1.msra.mxu0 0.0
    %6251 = vmatprep.subr.mxu0 0.0
    %6252 = vmatpush1.msra.mxu0 0.0
    %6253 = vmatprep.subr.mxu0 0.0
    %6254 = vmatpush1.msra.mxu0 0.0
    %6255 = vmatprep.subr.mxu0 0.0
    %6256 = vmatpush1.msra.mxu0 0.0
    %6257 = vmatprep.subr.mxu0 0.0
    %6258 = vmatpush1.msra.mxu0 0.0
    %6259 = vmatprep.subr.mxu0 0.0
    %6260 = vmatpush1.msra.mxu0 0.0
    %6261 = vmatprep.subr.mxu0 0.0
    %6262 = vmatpush1.msra.mxu0 0.0
    %6263 = vmatprep.subr.mxu0 0.0
    %6264 = vmatpush1.msra.mxu0 0.0
    %6265 = vmatprep.subr.mxu0 0.0
    %6266 = vmatpush1.msra.mxu0 0.0
    %6267 = vmatprep.subr.mxu0 0.0
    %6268 = vmatpush1.msra.mxu0 %v3492
    %6269 = vmatprep.subr.mxu0 0.0
    %6270 = vmatpush1.msra.mxu0 %v3487
    %6271 = vmatprep.subr.mxu0 0.0
    %6272 = vmatpush2.msra.mxu0 0.0
    %6273 = vmatprep.subr.mxu0 0.0
    %6274 = vmatpush2.msra.mxu0 0.0
    %6275 = vmatprep.subr.mxu0 0.0
    %6276 = vmatpush2.msra.mxu0 0.0
    %6277 = vmatprep.subr.mxu0 0.0
    %6278 = vmatpush2.msra.mxu0 0.0
    %6279 = vmatprep.subr.mxu0 0.0
    %6280 = vmatpush2.msra.mxu0 0.0
    %6281 = vmatprep.subr.mxu0 0.0
    %6282 = vmatpush2.msra.mxu0 0.0
    %6283 = vmatprep.subr.mxu0 0.0
    %6284 = vmatpush2.msra.mxu0 0.0
    %6285 = vmatprep.subr.mxu0 0.0
    %6286 = vmatpush2.msra.mxu0 0.0
    %6287 = vmatprep.subr.mxu0 0.0
    %6288 = vmatpush2.msra.mxu0 0.0
    %6289 = vmatprep.subr.mxu0 0.0
    %6290 = vmatpush2.msra.mxu0 0.0
    %6291 = vmatprep.subr.mxu0 0.0
    %6292 = vmatpush2.msra.mxu0 0.0
    %6293 = vmatprep.subr.mxu0 0.0
    %6294 = vmatpush2.msra.mxu0 0.0
    %6295 = vmatprep.subr.mxu0 0.0
    %6296 = vmatpush2.msra.mxu0 0.0
    %6297 = vmatprep.subr.mxu0 0.0
    %6298 = vmatpush2.msra.mxu0 0.0
    %6299 = vmatprep.subr.mxu0 0.0
    %6300 = vmatpush2.msra.mxu0 0.0
    %6301 = vmatprep.subr.mxu0 0.0
    %6302 = vmatpush2.msra.mxu0 0.0
    %6303 = vmatprep.mubr.f32.mxu0 0.0
    %6304 = vmatmul.mubr.f32.gmra.mxu0 %v3577
    %v6305 = vpop.f32.mrf.mxu0
    %v6306 = vadd.f32 0.0, %v6305
    %v6307 = vpop.f32.mrf.mxu0
    %6308 = vdwg.mxu0
    %6309 = vmatprep.subr.mxu0 0.0
    %6310 = vmatpush1.msra.mxu0 0.0
    %6311 = vmatprep.subr.mxu0 0.0
    %6312 = vmatpush1.msra.mxu0 0.0
    %6313 = vmatprep.subr.mxu0 0.0
    %6314 = vmatpush1.msra.mxu0 0.0
    %6315 = vmatprep.subr.mxu0 0.0
    %6316 = vmatpush1.msra.mxu0 0.0
    %6317 = vmatprep.subr.mxu0 0.0
    %6318 = vmatpush1.msra.mxu0 0.0
    %6319 = vmatprep.subr.mxu0 0.0
    %6320 = vmatpush1.msra.mxu0 0.0
    %6321 = vmatprep.subr.mxu0 0.0
    %6322 = vmatpush1.msra.mxu0 0.0
    %6323 = vmatprep.subr.mxu0 0.0
    %6324 = vmatpush1.msra.mxu0 0.0
    %6325 = vmatprep.subr.mxu0 0.0
    %6326 = vmatpush1.msra.mxu0 0.0
    %6327 = vmatprep.subr.mxu0 0.0
    %6328 = vmatpush1.msra.mxu0 0.0
    %6329 = vmatprep.subr.mxu0 0.0
    %6330 = vmatpush1.msra.mxu0 0.0
    %6331 = vmatprep.subr.mxu0 0.0
    %6332 = vmatpush1.msra.mxu0 0.0
    %6333 = vmatprep.subr.mxu0 0.0
    %6334 = vmatpush1.msra.mxu0 0.0
    %6335 = vmatprep.subr.mxu0 0.0
    %6336 = vmatpush1.msra.mxu0 0.0
    %6337 = vmatprep.subr.mxu0 0.0
    %6338 = vmatpush1.msra.mxu0 %v3573
    %6339 = vmatprep.subr.mxu0 0.0
    %6340 = vmatpush1.msra.mxu0 %v3568
    %6341 = vmatprep.subr.mxu0 0.0
    %6342 = vmatpush2.msra.mxu0 0.0
    %6343 = vmatprep.subr.mxu0 0.0
    %6344 = vmatpush2.msra.mxu0 0.0
    %6345 = vmatprep.subr.mxu0 0.0
    %6346 = vmatpush2.msra.mxu0 0.0
    %6347 = vmatprep.subr.mxu0 0.0
    %6348 = vmatpush2.msra.mxu0 0.0
    %6349 = vmatprep.subr.mxu0 0.0
    %6350 = vmatpush2.msra.mxu0 0.0
    %6351 = vmatprep.subr.mxu0 0.0
    %6352 = vmatpush2.msra.mxu0 0.0
    %6353 = vmatprep.subr.mxu0 0.0
    %6354 = vmatpush2.msra.mxu0 0.0
    %6355 = vmatprep.subr.mxu0 0.0
    %6356 = vmatpush2.msra.mxu0 0.0
    %6357 = vmatprep.subr.mxu0 0.0
    %6358 = vmatpush2.msra.mxu0 0.0
    %6359 = vmatprep.subr.mxu0 0.0
    %6360 = vmatpush2.msra.mxu0 0.0
    %6361 = vmatprep.subr.mxu0 0.0
    %6362 = vmatpush2.msra.mxu0 0.0
    %6363 = vmatprep.subr.mxu0 0.0
    %6364 = vmatpush2.msra.mxu0 0.0
    %6365 = vmatprep.subr.mxu0 0.0
    %6366 = vmatpush2.msra.mxu0 0.0
    %6367 = vmatprep.subr.mxu0 0.0
    %6368 = vmatpush2.msra.mxu0 0.0
    %6369 = vmatprep.subr.mxu0 0.0
    %6370 = vmatpush2.msra.mxu0 0.0
    %6371 = vmatprep.subr.mxu0 0.0
    %6372 = vmatpush2.msra.mxu0 0.0
    %6373 = vmatprep.mubr.f32.mxu0 0.0
    %6374 = vmatmul.mubr.f32.gmra.mxu0 %v3577
    %v6375 = vpop.f32.mrf.mxu0
    %v6376 = vadd.f32 0.0, %v6375
    %v6377 = vpop.f32.mrf.mxu0
    %6378 = vdwg.mxu0
    %v6379 = vmul.f32 %v3646, %v3646
    %v6380 = vmul.f32 %v3716, %v3716
    %v6381 = vmul.f32 %v3786, %v3786
    %v6382 = vmul.f32 %v3856, %v3856
    %v6383 = vmul.f32 %v3926, %v3926
    %v6384 = vmul.f32 %v3996, %v3996
    %v6385 = vmul.f32 %v4066, %v4066
    %v6386 = vmul.f32 %v4136, %v4136
    %v6387 = vmul.f32 %v4206, %v4206
    %v6388 = vmul.f32 %v4276, %v4276
    %v6389 = vmul.f32 %v4346, %v4346
    %v6390 = vmul.f32 %v4416, %v4416
    %v6391 = vmul.f32 %v4486, %v4486
    %v6392 = vmul.f32 %v4556, %v4556
    %v6393 = vmul.f32 %v4626, %v4626
    %v6394 = vmul.f32 %v4696, %v4696
    %v6395 = vmul.f32 %v3646, %v4206
    %v6396 = vmul.f32 %v3716, %v4276
    %v6397 = vmul.f32 %v3786, %v4346
    %v6398 = vmul.f32 %v3856, %v4416
    %v6399 = vmul.f32 %v3926, %v4486
    %v6400 = vmul.f32 %v3996, %v4556
    %v6401 = vmul.f32 %v4066, %v4626
    %v6402 = vmul.f32 %v4136, %v4696
    %v6403 = vsub.f32 %v4766, %v6379
    %v6404 = vsub.f32 %v4836, %v6380
    %v6405 = vsub.f32 %v4906, %v6381
    %v6406 = vsub.f32 %v4976, %v6382
    %v6407 = vsub.f32 %v5046, %v6383
    %v6408 = vsub.f32 %v5116, %v6384
    %v6409 = vsub.f32 %v5186, %v6385
    %v6410 = vsub.f32 %v5256, %v6386
    %v6411 = vsub.f32 %v5326, %v6387
    %v6412 = vsub.f32 %v5396, %v6388
    %v6413 = vsub.f32 %v5466, %v6389
    %v6414 = vsub.f32 %v5536, %v6390
    %v6415 = vsub.f32 %v5606, %v6391
    %v6416 = vsub.f32 %v5676, %v6392
    %v6417 = vsub.f32 %v5746, %v6393
    %v6418 = vsub.f32 %v5816, %v6394
    %v6419 = vsub.f32 %v5886, %v6395
    %v6420 = vsub.f32 %v5956, %v6396
    %v6421 = vsub.f32 %v6026, %v6397
    %v6422 = vsub.f32 %v6096, %v6398
    %v6423 = vsub.f32 %v6166, %v6399
    %v6424 = vsub.f32 %v6236, %v6400
    %v6425 = vsub.f32 %v6306, %v6401
    %v6426 = vsub.f32 %v6376, %v6402
    %v6427 = vadd.f32 %v6379, %v6387
    %v6428 = vadd.f32 %v6380, %v6388
    %v6429 = vadd.f32 %v6381, %v6389
    %v6430 = vadd.f32 %v6382, %v6390
    %v6431 = vadd.f32 %v6383, %v6391
    %v6432 = vadd.f32 %v6384, %v6392
    %v6433 = vadd.f32 %v6385, %v6393
    %v6434 = vadd.f32 %v6386, %v6394
    %v6435 = vadd.f32 %v6427, 0.0001
    %v6436 = vadd.f32 %v6428, 0.0001
    %v6437 = vadd.f32 %v6429, 0.0001
    %v6438 = vadd.f32 %v6430, 0.0001
    %v6439 = vadd.f32 %v6431, 0.0001
    %v6440 = vadd.f32 %v6432, 0.0001
    %v6441 = vadd.f32 %v6433, 0.0001
    %v6442 = vadd.f32 %v6434, 0.0001
    %v6443 = vadd.f32 %v6403, %v6411
    %v6444 = vadd.f32 %v6404, %v6412
    %v6445 = vadd.f32 %v6405, %v6413
    %v6446 = vadd.f32 %v6406, %v6414
    %v6447 = vadd.f32 %v6407, %v6415
    %v6448 = vadd.f32 %v6408, %v6416
    %v6449 = vadd.f32 %v6409, %v6417
    %v6450 = vadd.f32 %v6410, %v6418
    %v6451 = vadd.f32 %v6443, 0.0009
    %v6452 = vadd.f32 %v6444, 0.0009
    %v6453 = vadd.f32 %v6445, 0.0009
    %v6454 = vadd.f32 %v6446, 0.0009
    %v6455 = vadd.f32 %v6447, 0.0009
    %v6456 = vadd.f32 %v6448, 0.0009
    %v6457 = vadd.f32 %v6449, 0.0009
    %v6458 = vadd.f32 %v6450, 0.0009
    %v6459 = vrcp.pop %v6435
    %v6460 = vrcp.pop %v6436
    %v6461 = vrcp.pop %v6437
    %v6462 = vrcp.pop %v6438
    %v6463 = vrcp.pop %v6439
    %v6464 = vrcp.pop %v6440
    %v6465 = vrcp.pop %v6441
    %v6466 = vrcp.pop %v6442
    %v6467 = vmul.f32 %v6435, %v6459
    %v6468 = vmul.f32 %v6436, %v6460
    %v6469 = vmul.f32 %v6437, %v6461
    %v6470 = vmul.f32 %v6438, %v6462
    %v6471 = vmul.f32 %v6439, %v6463
    %v6472 = vmul.f32 %v6440, %v6464
    %v6473 = vmul.f32 %v6441, %v6465
    %v6474 = vmul.f32 %v6442, %v6466
    %v6475 = vsub.f32 2.0, %v6467
    %v6476 = vsub.f32 2.0, %v6468
    %v6477 = vsub.f32 2.0, %v6469
    %v6478 = vsub.f32 2.0, %v6470
    %v6479 = vsub.f32 2.0, %v6471
    %v6480 = vsub.f32 2.0, %v6472
    %v6481 = vsub.f32 2.0, %v6473
    %v6482 = vsub.f32 2.0, %v6474
    %v6483 = vmul.f32 %v6459, %v6475
    %v6484 = vmul.f32 %v6460, %v6476
    %v6485 = vmul.f32 %v6461, %v6477
    %v6486 = vmul.f32 %v6462, %v6478
    %v6487 = vmul.f32 %v6463, %v6479
    %v6488 = vmul.f32 %v6464, %v6480
    %v6489 = vmul.f32 %v6465, %v6481
    %v6490 = vmul.f32 %v6466, %v6482
    %v6491 = vrcp.pop %v6451
    %v6492 = vrcp.pop %v6452
    %v6493 = vrcp.pop %v6453
    %v6494 = vrcp.pop %v6454
    %v6495 = vrcp.pop %v6455
    %v6496 = vrcp.pop %v6456
    %v6497 = vrcp.pop %v6457
    %v6498 = vrcp.pop %v6458
    %v6499 = vmul.f32 %v6451, %v6491
    %v6500 = vmul.f32 %v6452, %v6492
    %v6501 = vmul.f32 %v6453, %v6493
    %v6502 = vmul.f32 %v6454, %v6494
    %v6503 = vmul.f32 %v6455, %v6495
    %v6504 = vmul.f32 %v6456, %v6496
    %v6505 = vmul.f32 %v6457, %v6497
    %v6506 = vmul.f32 %v6458, %v6498
    %v6507 = vsub.f32 2.0, %v6499
    %v6508 = vsub.f32 2.0, %v6500
    %v6509 = vsub.f32 2.0, %v6501
    %v6510 = vsub.f32 2.0, %v6502
    %v6511 = vsub.f32 2.0, %v6503
    %v6512 = vsub.f32 2.0, %v6504
    %v6513 = vsub.f32 2.0, %v6505
    %v6514 = vsub.f32 2.0, %v6506
    %v6515 = vmul.f32 %v6491, %v6507
    %v6516 = vmul.f32 %v6492, %v6508
    %v6517 = vmul.f32 %v6493, %v6509
    %v6518 = vmul.f32 %v6494, %v6510
    %v6519 = vmul.f32 %v6495, %v6511
    %v6520 = vmul.f32 %v6496, %v6512
    %v6521 = vmul.f32 %v6497, %v6513
    %v6522 = vmul.f32 %v6498, %v6514
    %v6523 = vmul.f32 %v6395, 2.0
    %v6524 = vmul.f32 %v6396, 2.0
    %v6525 = vmul.f32 %v6397, 2.0
    %v6526 = vmul.f32 %v6398, 2.0
    %v6527 = vmul.f32 %v6399, 2.0
    %v6528 = vmul.f32 %v6400, 2.0
    %v6529 = vmul.f32 %v6401, 2.0
    %v6530 = vmul.f32 %v6402, 2.0
    %v6531 = vadd.f32 %v6523, 0.0001
    %v6532 = vadd.f32 %v6524, 0.0001
    %v6533 = vadd.f32 %v6525, 0.0001
    %v6534 = vadd.f32 %v6526, 0.0001
    %v6535 = vadd.f32 %v6527, 0.0001
    %v6536 = vadd.f32 %v6528, 0.0001
    %v6537 = vadd.f32 %v6529, 0.0001
    %v6538 = vadd.f32 %v6530, 0.0001
    %v6539 = vmul.f32 %v6419, 2.0
    %v6540 = vmul.f32 %v6420, 2.0
    %v6541 = vmul.f32 %v6421, 2.0
    %v6542 = vmul.f32 %v6422, 2.0
    %v6543 = vmul.f32 %v6423, 2.0
    %v6544 = vmul.f32 %v6424, 2.0
    %v6545 = vmul.f32 %v6425, 2.0
    %v6546 = vmul.f32 %v6426, 2.0
    %v6547 = vadd.f32 %v6539, 0.0009
    %v6548 = vadd.f32 %v6540, 0.0009
    %v6549 = vadd.f32 %v6541, 0.0009
    %v6550 = vadd.f32 %v6542, 0.0009
    %v6551 = vadd.f32 %v6543, 0.0009
    %v6552 = vadd.f32 %v6544, 0.0009
    %v6553 = vadd.f32 %v6545, 0.0009
    %v6554 = vadd.f32 %v6546, 0.0009
    %v6555 = vmul.f32 %v6531, %v6547
    %v6556 = vmul.f32 %v6532, %v6548
    %v6557 = vmul.f32 %v6533, %v6549
    %v6558 = vmul.f32 %v6534, %v6550
    %v6559 = vmul.f32 %v6535, %v6551
    %v6560 = vmul.f32 %v6536, %v6552
    %v6561 = vmul.f32 %v6537, %v6553
    %v6562 = vmul.f32 %v6538, %v6554
    %v6563 = vmul.f32 %v6483, %v6515
    %v6564 = vmul.f32 %v6484, %v6516
    %v6565 = vmul.f32 %v6485, %v6517
    %v6566 = vmul.f32 %v6486, %v6518
    %v6567 = vmul.f32 %v6487, %v6519
    %v6568 = vmul.f32 %v6488, %v6520
    %v6569 = vmul.f32 %v6489, %v6521
    %v6570 = vmul.f32 %v6490, %v6522
    %v6571 = vmul.f32 %v6555, %v6563
    %v6572 = vmul.f32 %v6556, %v6564
    %v6573 = vmul.f32 %v6557, %v6565
    %v6574 = vmul.f32 %v6558, %v6566
    %v6575 = vmul.f32 %v6559, %v6567
    %v6576 = vmul.f32 %v6560, %v6568
    %v6577 = vmul.f32 %v6561, %v6569
    %v6578 = vmul.f32 %v6562, %v6570
    %vm6579 = vcmask 46080
    %v6580 = vsel %vm6579, %v6571, 0.0
    %6581 = vadd.xlane.f32.xlu0 %v6580
    %v6582 = vpop.xlane.xlu0 %6581
    %v6583 = vsel %vm6579, %v6572, 0.0
    %6584 = vadd.xlane.f32.xlu0 %v6583
    %v6585 = vpop.xlane.xlu0 %6584
    %v6586 = vsel %vm6579, %v6573, 0.0
    %6587 = vadd.xlane.f32.xlu0 %v6586
    %v6588 = vpop.xlane.xlu0 %6587
    %v6589 = vsel %vm6579, %v6574, 0.0
    %6590 = vadd.xlane.f32.xlu0 %v6589
    %v6591 = vpop.xlane.xlu0 %6590
    %v6592 = vsel %vm6579, %v6575, 0.0
    %6593 = vadd.xlane.f32.xlu0 %v6592
    %v6594 = vpop.xlane.xlu0 %6593
    %v6595 = vsel %vm6579, %v6576, 0.0
    %6596 = vadd.xlane.f32.xlu0 %v6595
    %v6597 = vpop.xlane.xlu0 %6596
    %v6598 = vsel %vm6579, %v6577, 0.0
    %6599 = vadd.xlane.f32.xlu0 %v6598
    %v6600 = vpop.xlane.xlu0 %6599
    %v6601 = vsel %vm6579, %v6578, 0.0
    %6602 = vadd.xlane.f32.xlu0 %v6601
    %v6603 = vpop.xlane.xlu0 %6602
    %v6612 = vlaneseq
    %v6613 = vshrl.u32 %v6612, 7
    %v6614 = vsub.s32 %v184, %v6613
    %v6615 = vrot.slane %v6582, %v6614
    %v6616 = vlaneseq
    %v6617 = vshrl.u32 %v6616, 7
    %v6618 = vsub.s32 %v184, %v6617
    %v6619 = vrot.slane %v6585, %v6618
    %v6620 = vlaneseq
    %v6621 = vshrl.u32 %v6620, 7
    %v6622 = vsub.s32 %v184, %v6621
    %v6623 = vrot.slane %v6588, %v6622
    %v6624 = vlaneseq
    %v6625 = vshrl.u32 %v6624, 7
    %v6626 = vsub.s32 %v184, %v6625
    %v6627 = vrot.slane %v6591, %v6626
    %v6628 = vlaneseq
    %v6629 = vshrl.u32 %v6628, 7
    %v6630 = vsub.s32 %v184, %v6629
    %v6631 = vrot.slane %v6594, %v6630
    %v6632 = vlaneseq
    %v6633 = vshrl.u32 %v6632, 7
    %v6634 = vsub.s32 %v184, %v6633
    %v6635 = vrot.slane %v6597, %v6634
    %v6636 = vlaneseq
    %v6637 = vshrl.u32 %v6636, 7
    %v6638 = vsub.s32 %v184, %v6637
    %v6639 = vrot.slane %v6600, %v6638
    %v6640 = vlaneseq
    %v6641 = vshrl.u32 %v6640, 7
    %v6642 = vsub.s32 %v184, %v6641
    %v6643 = vrot.slane %v6603, %v6642
    %v6644 = vsel %vm259, %v6619, %v6615
    %v6645 = vsel %vm261, %v6623, %v6644
    %v6646 = vsel %vm263, %v6627, %v6645
    %v6647 = vsel %vm265, %v6631, %v6646
    %v6648 = vsel %vm267, %v6635, %v6647
    %v6649 = vsel %vm269, %v6639, %v6648
    %v6650 = vsel %vm271, %v6643, %v6649
    %v6652 = vsel %vm166, %v6650, 0.0
    %vm6653 = vcmask 48128
    %v6654 = vsel %vm6653, %v6652, 0.0
    %6655 = vadd.xlane.f32.xlu0 %v6654
    %v6656 = vpop.xlane.xlu0 %6655
    %v6657 = vrot.slane %v6656, 4
    %v6658 = vadd.f32 %v6656, %v6657
    %v6659 = vrot.slane %v6658, 2
    %v6660 = vadd.f32 %v6658, %v6659
    %v6661 = vrot.slane %v6660, 1
    %v6662 = vadd.f32 %v6660, %v6661
    %s6663 = vtos %v6662
    %vm6664 = vcmp.eq.s32.totalorder %v184, 0
    %v6665 = vstv %s284
    %v6666 = vsel %vm6664, %v6665, 0.0
    %vm6667 = vcmp.eq.s32.totalorder %v184, 1
    %v6668 = vstv %s6663
    %v6669 = vsel %vm6667, %v6668, 0.0
    %v6670 = vadd.f32 %v6666, %v6669
    %6671 = vst [vmem:[#allocation7] sm:$0xff] %v6670
    // Predicated region
    $region26: #{tpu_custom_call.1} parent=1 // pred_check
      _
    $region27: #{tpu_custom_call.1} parent=1 // pred_check_branch
      %6673 = sbr.rel (0) target = $region29
    $region28: #{tpu_custom_call.1} parent=1 // pred_region
      %s6675 = ssub.s32 128, 128
      %6676 = vsyncadd [#allocation4], %s6675
      %s6678 = sshll.u32 [#allocation7], 4
      %s6679 = int_to_ptr.vmem [resolvable:$true] %s6678
      %6681 = dma.vmem_to_hbm [thread:$0]  %s6679, 128, %s4, [#allocation4]
    $region29: #{tpu_custom_call.1} parent=1 // pred_fallthru
      _
    // Predicated region
    $region30: #{tpu_custom_call.1} parent=1 // pred_check
      _
    $region31: #{tpu_custom_call.1} parent=1 // pred_check_branch
      %6683 = sbr.rel (0) target = $region33
    $region32: #{tpu_custom_call.1} parent=1 // pred_region
      %6684 = dma.done [#allocation4], 128
    $region33: #{tpu_custom_call.1} parent=1 // pred_fallthru
      _
    %6685 = vsyncpa [#allocation3], 1
    %6686 = vsyncpa [#allocation6], 1
    %6687 = vsyncpa [#allocation4], 1

</llo_original>
